<compile_context>
chip_gen: v7x
topology: tpu7x:2x2x1
jax: 0.10.0
libtpu: 0.0.40
codegen_flags: <defaults>
</compile_context>

<pallas_src>
import jax
import jax.numpy as jnp
from jax.experimental import pallas as pl
from jax.experimental.pallas import tpu as pltpu


# ----------------------------------------------------------------------------
# Pallas kernel
# ----------------------------------------------------------------------------
def objencoder_kernel(
    # inputs
    gv_ref,        # (B, E)
    att_ref,       # (B, N, E)
    obj_ref,       # (L1, B, E)   obj_feat (bos already prepended), time-major
    mask_ref,      # (B, N)       att_mask[:, 1:]
    pW_ref, pb_ref,                       # p_att_feats linear   (E,E), (1,E)
    w1h2_ref, w1gv_ref, w1x_ref,          # lstm1 Wx split by input chunk, each (E,4E)
    w1h_ref, b1_ref,                      # lstm1 Wh (E,4E), bias (1,4E)
    w2a_ref, w2h1_ref,                    # lstm2 Wx split: att part, h1 part, each (E,4E)
    w2h_ref, b2_ref,                      # lstm2 Wh (E,4E), bias (1,4E)
    wah_ref, bah_ref,                     # attention hidden proj (E,E), (1,E)
    wal_ref, bal_ref,                     # attention score vec   (1,E), (1,1)
    aW_ref, ab_ref,                       # att_feat_embed linear (E,E), (1,E)
    oW_ref, ob_ref,                       # obj_feat_embed linear (E,E), (1,E)
    eos_ref,                              # (1, E)
    # outputs
    out_ref,       # (B, L1, E)   per-step h2
    nce_ref,       # (B, L1, N+1) nce_logit
):
    B, N, E = att_ref.shape
    L1 = obj_ref.shape[0]
    f32 = jnp.float32

    gv = gv_ref[...]                          # (B, E)
    att_feats = att_ref[...]                  # (B, N, E)
    att_flat = att_feats.reshape(B * N, E)
    obj_flat = obj_ref[...].reshape(L1 * B, E)
    mask = mask_ref[...]                      # (B, N)

    # ---------------- hoisted, time-invariant work ----------------
    # p_att_feats = att_feats @ pW + pb
    p_att = (jnp.dot(att_flat, pW_ref[...], preferred_element_type=f32)
             + pb_ref[...]).reshape(B, N, E)

    # lstm1 gate contributions that do not depend on the recurrent state:
    #   gv-side (constant over t) and x-side (all timesteps in one matmul).
    base1 = jnp.dot(gv, w1gv_ref[...], preferred_element_type=f32) + b1_ref[...]   # (B, 4E)
    xg_all = jnp.dot(obj_flat, w1x_ref[...], preferred_element_type=f32)           # (L1*B, 4E)

    # attention invariants
    wal_full = jnp.broadcast_to(wal_ref[...].reshape(1, 1, E), (B, N, E))
    bal = bal_ref[0, 0]
    score_bias = jnp.where(mask > 0, bal, -1e30)                                   # (B, N)

    # loop-invariant weight / bias loads
    w1h2 = w1h2_ref[...]
    w1h = w1h_ref[...]
    w2a = w2a_ref[...]
    w2h1 = w2h1_ref[...]
    w2h = w2h_ref[...]
    b2 = b2_ref[...]
    wah = wah_ref[...]
    bah = bah_ref[...]

    def gate_apply(gates, c):
        i = jax.nn.sigmoid(gates[:, 0:E])
        f = jax.nn.sigmoid(gates[:, E:2 * E])
        g = jnp.tanh(gates[:, 2 * E:3 * E])
        o = jax.nn.sigmoid(gates[:, 3 * E:4 * E])
        c_new = f * c + i * g
        h_new = o * jnp.tanh(c_new)
        return h_new, c_new

    # ---------------- fully-unrolled recurrence ----------------
    zeros = jnp.zeros((B, E), f32)
    h1, c1, h2, c2 = zeros, zeros, zeros, zeros
    h2_steps = []

    for t in range(L1):  # L1 is small & static: full unroll for LLO visibility
        # lstm1: only the state-dependent dots remain on the critical path
        gates1 = (xg_all[t * B:(t + 1) * B, :] + base1
                  + jnp.dot(h2, w1h2, preferred_element_type=f32)
                  + jnp.dot(h1, w1h, preferred_element_type=f32))
        h1, c1 = gate_apply(gates1, c1)

        # ObjAttention: masked additive attention over att_feats
        ah = jnp.dot(h1, wah, preferred_element_type=f32) + bah          # (B, E)
        e = jnp.tanh(ah[:, None, :] + p_att)                             # (B, N, E)
        scores = jnp.sum(e * wal_full, axis=2) + score_bias              # (B, N)
        scores = scores - jnp.max(scores, axis=1, keepdims=True)
        wexp = jnp.exp(scores)
        wnorm = wexp * pl.reciprocal(jnp.sum(wexp, axis=1, keepdims=True),
                                     approx=True)
        att = jnp.einsum('bqn,bne->bqe', wnorm[:, None, :], att_feats,
                         preferred_element_type=f32)[:, 0, :]            # (B, E)

        # lstm2: split-weight dots instead of concat([att, h1]) @ W
        gates2 = (jnp.dot(att, w2a, preferred_element_type=f32)
                  + jnp.dot(h1, w2h1, preferred_element_type=f32)
                  + jnp.dot(h2, w2h, preferred_element_type=f32)
                  + b2)
        h2, c2 = gate_apply(gates2, c2)
        h2_steps.append(h2)

    outputs = jnp.stack(h2_steps, axis=1)                                # (B, L1, E)
    out_ref[...] = outputs                                               # single full store

    # ---------------- batched NCE heads ----------------
    afe = (jnp.dot(att_flat, aW_ref[...], preferred_element_type=f32)
           + ab_ref[...]).reshape(B, N, E)
    eos_b = jnp.broadcast_to(eos_ref[...][None, :, :], (B, 1, E))
    afe_full = jnp.concatenate([eos_b, afe], axis=1)                     # (B, N+1, E)
    ofe = (jnp.dot(outputs.reshape(B * L1, E), oW_ref[...],
                   preferred_element_type=f32)
           + ob_ref[...]).reshape(B, L1, E)
    nce_ref[...] = jnp.einsum('ble,bne->bln', ofe, afe_full,
                              preferred_element_type=f32)                # (B, L1, N+1)


# ----------------------------------------------------------------------------
# Wrapper (glue): gather of obj features, bos concat, layout transpose,
# weight-block splits.
# ----------------------------------------------------------------------------
def obj_encoder_forward(params, encoder_out, obj_seq, att_mask):
    B, T1, E = encoder_out.shape
    N = T1 - 1
    L = obj_seq.shape[1]
    L1 = L + 1

    gv = encoder_out[:, 0, :]
    att_feats = encoder_out[:, 1:, :]

    # torch.gather(att_feats, 1, obj_seq.expand(..., E))  (glue)
    idx = jnp.broadcast_to(obj_seq[:, :, None].astype(jnp.int32), (B, L, E))
    gathered = jnp.take_along_axis(att_feats, idx, axis=1)
    bos = jnp.broadcast_to(params['bos'][None, :, :], (B, 1, E))
    obj_feat = jnp.concatenate([bos, gathered], axis=1)        # (B, L1, E)
    obj_feat_t = jnp.transpose(obj_feat, (1, 0, 2))            # (L1, B, E) time-major

    mask = att_mask[:, 1:]

    # split the LSTM input-weight matrices by input chunk (row blocks)
    w1x = params['w1x']                                        # (3E, 4E)
    w1x_h2, w1x_gv, w1x_x = w1x[0:E], w1x[E:2 * E], w1x[2 * E:3 * E]
    w2x = params['w2x']                                        # (2E, 4E)
    w2x_att, w2x_h1 = w2x[0:E], w2x[E:2 * E]

    vmem = pl.BlockSpec(memory_space=pltpu.MemorySpace.VMEM)
    args = (gv, att_feats, obj_feat_t, mask,
            params['pW'], params['pb'],
            w1x_h2, w1x_gv, w1x_x, params['w1h'], params['b1'],
            w2x_att, w2x_h1, params['w2h'], params['b2'],
            params['wah'], params['bah'], params['wal'], params['bal'],
            params['aW'], params['ab'], params['oW'], params['ob'],
            params['eos'])

    outputs, nce_logit = pl.pallas_call(
        objencoder_kernel,
        out_shape=(jax.ShapeDtypeStruct((B, L1, E), jnp.float32),
                   jax.ShapeDtypeStruct((B, L1, N + 1), jnp.float32)),
        in_specs=[vmem] * len(args),
        out_specs=(vmem, vmem),
    )(*args)
    return outputs, nce_logit


# ----------------------------------------------------------------------------
# Pure-JAX reference (mirrors the PyTorch forward) for correctness check.
# ----------------------------------------------------------------------------
def ref_forward(p, encoder_out, obj_seq, att_mask):
    B, T1, E = encoder_out.shape
    L = obj_seq.shape[1]
    gv = encoder_out[:, 0, :]
    att_feats = encoder_out[:, 1:, :]
    idx = jnp.broadcast_to(obj_seq[:, :, None].astype(jnp.int32), (B, L, E))
    gathered = jnp.take_along_axis(att_feats, idx, axis=1)
    bos = jnp.broadcast_to(p['bos'][None, :, :], (B, 1, E))
    obj_feat = jnp.concatenate([bos, gathered], axis=1)
    p_att = att_feats @ p['pW'] + p['pb']
    mask = att_mask[:, 1:]

    def cell(x, h, c, wx, wh, b):
        gates = x @ wx + h @ wh + b
        i = jax.nn.sigmoid(gates[:, 0:E])
        f = jax.nn.sigmoid(gates[:, E:2 * E])
        g = jnp.tanh(gates[:, 2 * E:3 * E])
        o = jax.nn.sigmoid(gates[:, 3 * E:4 * E])
        c_new = f * c + i * g
        return o * jnp.tanh(c_new), c_new

    h1 = jnp.zeros((B, E)); c1 = jnp.zeros((B, E))
    h2 = jnp.zeros((B, E)); c2 = jnp.zeros((B, E))
    outs = []
    for t in range(L + 1):
        xt = obj_feat[:, t, :]
        inp1 = jnp.concatenate([h2, gv, xt], axis=1)
        h1, c1 = cell(inp1, h1, c1, p['w1x'], p['w1h'], p['b1'])
        ah = h1 @ p['wah'] + p['bah']
        e = jnp.tanh(ah[:, None, :] + p_att)
        sc = jnp.sum(e * p['wal'][None, :, :], axis=2) + p['bal'][0, 0]
        sc = jnp.where(mask > 0, sc, -1e30)
        w = jax.nn.softmax(sc, axis=-1)
        att = jnp.sum(w[:, :, None] * att_feats, axis=1)
        inp2 = jnp.concatenate([att, h1], axis=1)
        h2, c2 = cell(inp2, h2, c2, p['w2x'], p['w2h'], p['b2'])
        outs.append(h2)
    outputs = jnp.stack(outs, axis=1)                           # (B, L+1, E)
    afe = att_feats @ p['aW'] + p['ab']
    eos = jnp.broadcast_to(p['eos'][None, :, :], (B, 1, E))
    afe_full = jnp.concatenate([eos, afe], axis=1)              # (B, N+1, E)
    ofe = outputs @ p['oW'] + p['ob']
    nce = jnp.einsum('ble,bne->bln', ofe, afe_full)
    return outputs, nce


def init_params(key, E):
    ks = jax.random.split(key, 18)
    s = 0.1
    w = lambda k, shape: jax.random.normal(k, shape, jnp.float32) * s
    # All weights in (in, out) layout; LSTM biases are b_ih + b_hh combined.
    return dict(
        bos=w(ks[0], (1, E)),
        eos=w(ks[1], (1, E)),
        pW=w(ks[2], (E, E)), pb=w(ks[3], (1, E)),
        w1x=w(ks[4], (3 * E, 4 * E)), w1h=w(ks[5], (E, 4 * E)), b1=w(ks[6], (1, 4 * E)),
        w2x=w(ks[7], (2 * E, 4 * E)), w2h=w(ks[8], (E, 4 * E)), b2=w(ks[9], (1, 4 * E)),
        wah=w(ks[10], (E, E)), bah=w(ks[11], (1, E)),
        wal=w(ks[12], (1, E)), bal=w(ks[13], (1, 1)),
        aW=w(ks[14], (E, E)), ab=w(ks[15], (1, E)),   # cfg.LOSSES.NCE.MLP = [E]
        oW=w(ks[16], (E, E)), ob=w(ks[17], (1, E)),
    )


if __name__ == "__main__":
    B, E, N, L = 2, 32, 15, 8           # encoder_out has N+1=16 tokens, obj_len=L+1=9
    key = jax.random.PRNGKey(0)
    kp, k1, k2 = jax.random.split(key, 3)

    params = init_params(kp, E)
    encoder_out = jax.random.normal(k1, (B, N + 1, E), jnp.float32)
    obj_seq = jax.random.randint(k2, (B, L), 0, N, dtype=jnp.int32)
    att_mask = jnp.ones((B, N + 1), jnp.float32).at[1, N - 2:].set(0.0)

    outputs, nce_logit = jax.block_until_ready(
        obj_encoder_forward(params, encoder_out, obj_seq, att_mask))

    out_ref, nce_ref = ref_forward(params, encoder_out, obj_seq, att_mask)
    assert outputs.shape == (B, L + 1, E)
    assert nce_logit.shape == (B, L + 1, N + 1)
    assert jnp.allclose(outputs, out_ref, rtol=1e-3, atol=1e-3)
    assert jnp.allclose(nce_logit, nce_ref, rtol=1e-3, atol=1e-3)
    print("KERNEL_OK")
</pallas_src>

<mosaic_0001>
module attributes {stable_mosaic.version = 11 : i64} {
  func.func @objencoder_kernel(%arg0: memref<2x32xf32, #tpu.memory_space<vmem>>, %arg1: memref<2x15x32xf32, #tpu.memory_space<vmem>>, %arg2: memref<9x2x32xf32, #tpu.memory_space<vmem>>, %arg3: memref<2x15xf32, #tpu.memory_space<vmem>>, %arg4: memref<32x32xf32, #tpu.memory_space<vmem>>, %arg5: memref<1x32xf32, #tpu.memory_space<vmem>>, %arg6: memref<32x128xf32, #tpu.memory_space<vmem>>, %arg7: memref<32x128xf32, #tpu.memory_space<vmem>>, %arg8: memref<32x128xf32, #tpu.memory_space<vmem>>, %arg9: memref<32x128xf32, #tpu.memory_space<vmem>>, %arg10: memref<1x128xf32, #tpu.memory_space<vmem>>, %arg11: memref<32x128xf32, #tpu.memory_space<vmem>>, %arg12: memref<32x128xf32, #tpu.memory_space<vmem>>, %arg13: memref<32x128xf32, #tpu.memory_space<vmem>>, %arg14: memref<1x128xf32, #tpu.memory_space<vmem>>, %arg15: memref<32x32xf32, #tpu.memory_space<vmem>>, %arg16: memref<1x32xf32, #tpu.memory_space<vmem>>, %arg17: memref<1x32xf32, #tpu.memory_space<vmem>>, %arg18: memref<1x1xf32, #tpu.memory_space<vmem>>, %arg19: memref<32x32xf32, #tpu.memory_space<vmem>>, %arg20: memref<1x32xf32, #tpu.memory_space<vmem>>, %arg21: memref<32x32xf32, #tpu.memory_space<vmem>>, %arg22: memref<1x32xf32, #tpu.memory_space<vmem>>, %arg23: memref<1x32xf32, #tpu.memory_space<vmem>>, %arg24: memref<2x9x32xf32, #tpu.memory_space<vmem>>, %arg25: memref<2x9x16xf32, #tpu.memory_space<vmem>>) attributes {dimension_semantics = [], scalar_prefetch = 0 : i64, scratch_operands = 0 : i64, tpu.core_type = #tpu.core_type<tc>} {
    %c0 = arith.constant 0 : index
    %c0_0 = arith.constant 0 : index
    %0 = vector.load %arg0[%c0, %c0_0] : memref<2x32xf32, #tpu.memory_space<vmem>>, vector<2x32xf32>
    %c0_1 = arith.constant 0 : index
    %c0_2 = arith.constant 0 : index
    %c0_3 = arith.constant 0 : index
    %1 = vector.load %arg1[%c0_1, %c0_2, %c0_3] : memref<2x15x32xf32, #tpu.memory_space<vmem>>, vector<2x15x32xf32>
    %2 = vector.shape_cast %1 : vector<2x15x32xf32> to vector<30x32xf32>
    %c0_4 = arith.constant 0 : index
    %c0_5 = arith.constant 0 : index
    %c0_6 = arith.constant 0 : index
    %3 = vector.load %arg2[%c0_4, %c0_5, %c0_6] : memref<9x2x32xf32, #tpu.memory_space<vmem>>, vector<9x2x32xf32>
    %4 = vector.shape_cast %3 : vector<9x2x32xf32> to vector<18x32xf32>
    %c0_7 = arith.constant 0 : index
    %c0_8 = arith.constant 0 : index
    %5 = vector.load %arg3[%c0_7, %c0_8] : memref<2x15xf32, #tpu.memory_space<vmem>>, vector<2x15xf32>
    %c0_9 = arith.constant 0 : index
    %c0_10 = arith.constant 0 : index
    %6 = vector.load %arg4[%c0_9, %c0_10] : memref<32x32xf32, #tpu.memory_space<vmem>>, vector<32x32xf32>
    %cst = arith.constant dense<0.000000e+00> : vector<30x32xf32>
    %7 = tpu.matmul %2, %6, %cst {dimension_numbers = #tpu.dot_dimension_numbers<[1], [0], [0], [1], [0, 0, 1, 1], [], []>} : vector<30x32xf32>, vector<32x32xf32>, vector<30x32xf32> -> vector<30x32xf32>
    %c0_11 = arith.constant 0 : index
    %c0_12 = arith.constant 0 : index
    %8 = vector.load %arg5[%c0_11, %c0_12] : memref<1x32xf32, #tpu.memory_space<vmem>>, vector<1x32xf32>
    %9 = vector.broadcast %8 : vector<1x32xf32> to vector<30x32xf32>
    %10 = arith.addf %7, %9 : vector<30x32xf32>
    %11 = vector.shape_cast %10 : vector<30x32xf32> to vector<2x15x32xf32>
    %c0_13 = arith.constant 0 : index
    %c0_14 = arith.constant 0 : index
    %12 = vector.load %arg7[%c0_13, %c0_14] : memref<32x128xf32, #tpu.memory_space<vmem>>, vector<32x128xf32>
    %cst_15 = arith.constant dense<0.000000e+00> : vector<2x128xf32>
    %13 = tpu.matmul %0, %12, %cst_15 {dimension_numbers = #tpu.dot_dimension_numbers<[1], [0], [0], [1], [0, 0, 1, 1], [], []>} : vector<2x32xf32>, vector<32x128xf32>, vector<2x128xf32> -> vector<2x128xf32>
    %c0_16 = arith.constant 0 : index
    %c0_17 = arith.constant 0 : index
    %14 = vector.load %arg10[%c0_16, %c0_17] : memref<1x128xf32, #tpu.memory_space<vmem>>, vector<1x128xf32>
    %15 = vector.broadcast %14 : vector<1x128xf32> to vector<2x128xf32>
    %16 = arith.addf %13, %15 : vector<2x128xf32>
    %c0_18 = arith.constant 0 : index
    %c0_19 = arith.constant 0 : index
    %17 = vector.load %arg8[%c0_18, %c0_19] : memref<32x128xf32, #tpu.memory_space<vmem>>, vector<32x128xf32>
    %cst_20 = arith.constant dense<0.000000e+00> : vector<18x128xf32>
    %18 = tpu.matmul %4, %17, %cst_20 {dimension_numbers = #tpu.dot_dimension_numbers<[1], [0], [0], [1], [0, 0, 1, 1], [], []>} : vector<18x32xf32>, vector<32x128xf32>, vector<18x128xf32> -> vector<18x128xf32>
    %c0_21 = arith.constant 0 : index
    %c0_22 = arith.constant 0 : index
    %19 = vector.load %arg17[%c0_21, %c0_22] : memref<1x32xf32, #tpu.memory_space<vmem>>, vector<1x32xf32>
    %20 = vector.shape_cast %19 : vector<1x32xf32> to vector<1x1x32xf32>
    %21 = vector.shape_cast %20 : vector<1x1x32xf32> to vector<1x1x32xf32>
    %22 = vector.broadcast %21 : vector<1x1x32xf32> to vector<2x15x32xf32>
    %c0_23 = arith.constant 0 : index
    %c0_24 = arith.constant 0 : index
    %23 = vector.load %arg18[%c0_23, %c0_24] : memref<1x1xf32, #tpu.memory_space<vmem>>, vector<1x1xf32>
    %24 = vector.extract %23[0, 0] : f32 from vector<1x1xf32>
    %cst_25 = arith.constant 0.000000e+00 : f32
    %25 = vector.broadcast %cst_25 : f32 to vector<2x15xf32>
    %26 = arith.cmpf ogt, %5, %25 : vector<2x15xf32>
    %cst_26 = arith.constant -1.000000e+30 : f32
    %27 = vector.broadcast %24 : f32 to vector<2x15xf32>
    %28 = vector.broadcast %cst_26 : f32 to vector<2x15xf32>
    %29 = arith.select %26, %27, %28 : vector<2x15xi1>, vector<2x15xf32>
    %c0_27 = arith.constant 0 : index
    %c0_28 = arith.constant 0 : index
    %30 = vector.load %arg6[%c0_27, %c0_28] : memref<32x128xf32, #tpu.memory_space<vmem>>, vector<32x128xf32>
    %c0_29 = arith.constant 0 : index
    %c0_30 = arith.constant 0 : index
    %31 = vector.load %arg9[%c0_29, %c0_30] : memref<32x128xf32, #tpu.memory_space<vmem>>, vector<32x128xf32>
    %c0_31 = arith.constant 0 : index
    %c0_32 = arith.constant 0 : index
    %32 = vector.load %arg11[%c0_31, %c0_32] : memref<32x128xf32, #tpu.memory_space<vmem>>, vector<32x128xf32>
    %c0_33 = arith.constant 0 : index
    %c0_34 = arith.constant 0 : index
    %33 = vector.load %arg12[%c0_33, %c0_34] : memref<32x128xf32, #tpu.memory_space<vmem>>, vector<32x128xf32>
    %c0_35 = arith.constant 0 : index
    %c0_36 = arith.constant 0 : index
    %34 = vector.load %arg13[%c0_35, %c0_36] : memref<32x128xf32, #tpu.memory_space<vmem>>, vector<32x128xf32>
    %c0_37 = arith.constant 0 : index
    %c0_38 = arith.constant 0 : index
    %35 = vector.load %arg14[%c0_37, %c0_38] : memref<1x128xf32, #tpu.memory_space<vmem>>, vector<1x128xf32>
    %c0_39 = arith.constant 0 : index
    %c0_40 = arith.constant 0 : index
    %36 = vector.load %arg15[%c0_39, %c0_40] : memref<32x32xf32, #tpu.memory_space<vmem>>, vector<32x32xf32>
    %c0_41 = arith.constant 0 : index
    %c0_42 = arith.constant 0 : index
    %37 = vector.load %arg16[%c0_41, %c0_42] : memref<1x32xf32, #tpu.memory_space<vmem>>, vector<1x32xf32>
    %cst_43 = arith.constant 0.000000e+00 : f32
    %38 = vector.broadcast %cst_43 : f32 to vector<2x32xf32>
    %39 = vector.extract_strided_slice %18 {offsets = [0, 0], sizes = [2, 128], strides = [1, 1]} : vector<18x128xf32> to vector<2x128xf32>
    %40 = arith.addf %39, %16 : vector<2x128xf32>
    %cst_44 = arith.constant dense<0.000000e+00> : vector<2x128xf32>
    %41 = tpu.matmul %38, %30, %cst_44 {dimension_numbers = #tpu.dot_dimension_numbers<[1], [0], [0], [1], [0, 0, 1, 1], [], []>} : vector<2x32xf32>, vector<32x128xf32>, vector<2x128xf32> -> vector<2x128xf32>
    %42 = arith.addf %40, %41 : vector<2x128xf32>
    %cst_45 = arith.constant dense<0.000000e+00> : vector<2x128xf32>
    %43 = tpu.matmul %38, %31, %cst_45 {dimension_numbers = #tpu.dot_dimension_numbers<[1], [0], [0], [1], [0, 0, 1, 1], [], []>} : vector<2x32xf32>, vector<32x128xf32>, vector<2x128xf32> -> vector<2x128xf32>
    %44 = arith.addf %42, %43 : vector<2x128xf32>
    %45 = vector.extract_strided_slice %44 {offsets = [0, 0], sizes = [2, 32], strides = [1, 1]} : vector<2x128xf32> to vector<2x32xf32>
    %46 = arith.negf %45 : vector<2x32xf32>
    %47 = math.exp %46 : vector<2x32xf32>
    %cst_46 = arith.constant 1.000000e+00 : f32
    %48 = vector.broadcast %cst_46 : f32 to vector<2x32xf32>
    %49 = arith.addf %48, %47 : vector<2x32xf32>
    %50 = arith.divf %48, %49 : vector<2x32xf32>
    %51 = vector.extract_strided_slice %44 {offsets = [0, 32], sizes = [2, 32], strides = [1, 1]} : vector<2x128xf32> to vector<2x32xf32>
    %52 = arith.negf %51 : vector<2x32xf32>
    %53 = math.exp %52 : vector<2x32xf32>
    %cst_47 = arith.constant 1.000000e+00 : f32
    %54 = vector.broadcast %cst_47 : f32 to vector<2x32xf32>
    %55 = arith.addf %54, %53 : vector<2x32xf32>
    %56 = arith.divf %54, %55 : vector<2x32xf32>
    %57 = vector.extract_strided_slice %44 {offsets = [0, 64], sizes = [2, 32], strides = [1, 1]} : vector<2x128xf32> to vector<2x32xf32>
    %58 = math.tanh %57 : vector<2x32xf32>
    %59 = vector.extract_strided_slice %44 {offsets = [0, 96], sizes = [2, 32], strides = [1, 1]} : vector<2x128xf32> to vector<2x32xf32>
    %60 = arith.negf %59 : vector<2x32xf32>
    %61 = math.exp %60 : vector<2x32xf32>
    %cst_48 = arith.constant 1.000000e+00 : f32
    %62 = vector.broadcast %cst_48 : f32 to vector<2x32xf32>
    %63 = arith.addf %62, %61 : vector<2x32xf32>
    %64 = arith.divf %62, %63 : vector<2x32xf32>
    %65 = arith.mulf %56, %38 : vector<2x32xf32>
    %66 = arith.mulf %50, %58 : vector<2x32xf32>
    %67 = arith.addf %65, %66 : vector<2x32xf32>
    %68 = math.tanh %67 : vector<2x32xf32>
    %69 = arith.mulf %64, %68 : vector<2x32xf32>
    %cst_49 = arith.constant dense<0.000000e+00> : vector<2x32xf32>
    %70 = tpu.matmul %69, %36, %cst_49 {dimension_numbers = #tpu.dot_dimension_numbers<[1], [0], [0], [1], [0, 0, 1, 1], [], []>} : vector<2x32xf32>, vector<32x32xf32>, vector<2x32xf32> -> vector<2x32xf32>
    %71 = vector.broadcast %37 : vector<1x32xf32> to vector<2x32xf32>
    %72 = arith.addf %70, %71 : vector<2x32xf32>
    %73 = vector.shape_cast %72 : vector<2x32xf32> to vector<2x1x32xf32>
    %74 = vector.broadcast %73 : vector<2x1x32xf32> to vector<2x15x32xf32>
    %75 = arith.addf %74, %11 : vector<2x15x32xf32>
    %76 = math.tanh %75 : vector<2x15x32xf32>
    %77 = arith.mulf %76, %22 : vector<2x15x32xf32>
    %cst_50 = arith.constant dense<0.000000e+00> : vector<2x15xf32>
    %78 = vector.multi_reduction <add>, %77, %cst_50 [2] : vector<2x15x32xf32> to vector<2x15xf32>
    %79 = arith.addf %78, %29 : vector<2x15xf32>
    %cst_51 = arith.constant dense<0xFF800000> : vector<2xf32>
    %80 = vector.multi_reduction <maximumf>, %79, %cst_51 [1] : vector<2x15xf32> to vector<2xf32>
    %81 = vector.shape_cast %80 : vector<2xf32> to vector<2x1xf32>
    %82 = vector.broadcast %81 : vector<2x1xf32> to vector<2x15xf32>
    %83 = arith.subf %79, %82 : vector<2x15xf32>
    %84 = math.exp %83 : vector<2x15xf32>
    %cst_52 = arith.constant dense<0.000000e+00> : vector<2xf32>
    %85 = vector.multi_reduction <add>, %84, %cst_52 [1] : vector<2x15xf32> to vector<2xf32>
    %86 = vector.shape_cast %85 : vector<2xf32> to vector<2x1xf32>
    %87 = tpu.reciprocal %86 {approx = true} : vector<2x1xf32> -> vector<2x1xf32>
    %88 = vector.broadcast %87 : vector<2x1xf32> to vector<2x15xf32>
    %89 = arith.mulf %84, %88 : vector<2x15xf32>
    %90 = vector.shape_cast %89 : vector<2x15xf32> to vector<2x1x15xf32>
    "tpu.trace_start"() <{level = 10 : i32, message = "bqn,bne->bqe"}> : () -> ()
    %cst_53 = arith.constant dense<0.000000e+00> : vector<2x1x32xf32>
    %91 = tpu.matmul %90, %1, %cst_53 {dimension_numbers = #tpu.dot_dimension_numbers<[2], [1], [1], [2], [0, 0, 0, 1, 1, 2], [0], [0]>} : vector<2x1x15xf32>, vector<2x15x32xf32>, vector<2x1x32xf32> -> vector<2x1x32xf32>
    "tpu.trace_stop"() : () -> ()
    %92 = vector.shape_cast %91 : vector<2x1x32xf32> to vector<2x32xf32>
    %cst_54 = arith.constant dense<0.000000e+00> : vector<2x128xf32>
    %93 = tpu.matmul %92, %32, %cst_54 {dimension_numbers = #tpu.dot_dimension_numbers<[1], [0], [0], [1], [0, 0, 1, 1], [], []>} : vector<2x32xf32>, vector<32x128xf32>, vector<2x128xf32> -> vector<2x128xf32>
    %cst_55 = arith.constant dense<0.000000e+00> : vector<2x128xf32>
    %94 = tpu.matmul %69, %33, %cst_55 {dimension_numbers = #tpu.dot_dimension_numbers<[1], [0], [0], [1], [0, 0, 1, 1], [], []>} : vector<2x32xf32>, vector<32x128xf32>, vector<2x128xf32> -> vector<2x128xf32>
    %95 = arith.addf %93, %94 : vector<2x128xf32>
    %cst_56 = arith.constant dense<0.000000e+00> : vector<2x128xf32>
    %96 = tpu.matmul %38, %34, %cst_56 {dimension_numbers = #tpu.dot_dimension_numbers<[1], [0], [0], [1], [0, 0, 1, 1], [], []>} : vector<2x32xf32>, vector<32x128xf32>, vector<2x128xf32> -> vector<2x128xf32>
    %97 = arith.addf %95, %96 : vector<2x128xf32>
    %98 = vector.broadcast %35 : vector<1x128xf32> to vector<2x128xf32>
    %99 = arith.addf %97, %98 : vector<2x128xf32>
    %100 = vector.extract_strided_slice %99 {offsets = [0, 0], sizes = [2, 32], strides = [1, 1]} : vector<2x128xf32> to vector<2x32xf32>
    %101 = arith.negf %100 : vector<2x32xf32>
    %102 = math.exp %101 : vector<2x32xf32>
    %cst_57 = arith.constant 1.000000e+00 : f32
    %103 = vector.broadcast %cst_57 : f32 to vector<2x32xf32>
    %104 = arith.addf %103, %102 : vector<2x32xf32>
    %105 = arith.divf %103, %104 : vector<2x32xf32>
    %106 = vector.extract_strided_slice %99 {offsets = [0, 32], sizes = [2, 32], strides = [1, 1]} : vector<2x128xf32> to vector<2x32xf32>
    %107 = arith.negf %106 : vector<2x32xf32>
    %108 = math.exp %107 : vector<2x32xf32>
    %cst_58 = arith.constant 1.000000e+00 : f32
    %109 = vector.broadcast %cst_58 : f32 to vector<2x32xf32>
    %110 = arith.addf %109, %108 : vector<2x32xf32>
    %111 = arith.divf %109, %110 : vector<2x32xf32>
    %112 = vector.extract_strided_slice %99 {offsets = [0, 64], sizes = [2, 32], strides = [1, 1]} : vector<2x128xf32> to vector<2x32xf32>
    %113 = math.tanh %112 : vector<2x32xf32>
    %114 = vector.extract_strided_slice %99 {offsets = [0, 96], sizes = [2, 32], strides = [1, 1]} : vector<2x128xf32> to vector<2x32xf32>
    %115 = arith.negf %114 : vector<2x32xf32>
    %116 = math.exp %115 : vector<2x32xf32>
    %cst_59 = arith.constant 1.000000e+00 : f32
    %117 = vector.broadcast %cst_59 : f32 to vector<2x32xf32>
    %118 = arith.addf %117, %116 : vector<2x32xf32>
    %119 = arith.divf %117, %118 : vector<2x32xf32>
    %120 = arith.mulf %111, %38 : vector<2x32xf32>
    %121 = arith.mulf %105, %113 : vector<2x32xf32>
    %122 = arith.addf %120, %121 : vector<2x32xf32>
    %123 = math.tanh %122 : vector<2x32xf32>
    %124 = arith.mulf %119, %123 : vector<2x32xf32>
    %125 = vector.extract_strided_slice %18 {offsets = [2, 0], sizes = [2, 128], strides = [1, 1]} : vector<18x128xf32> to vector<2x128xf32>
    %126 = arith.addf %125, %16 : vector<2x128xf32>
    %cst_60 = arith.constant dense<0.000000e+00> : vector<2x128xf32>
    %127 = tpu.matmul %124, %30, %cst_60 {dimension_numbers = #tpu.dot_dimension_numbers<[1], [0], [0], [1], [0, 0, 1, 1], [], []>} : vector<2x32xf32>, vector<32x128xf32>, vector<2x128xf32> -> vector<2x128xf32>
    %128 = arith.addf %126, %127 : vector<2x128xf32>
    %cst_61 = arith.constant dense<0.000000e+00> : vector<2x128xf32>
    %129 = tpu.matmul %69, %31, %cst_61 {dimension_numbers = #tpu.dot_dimension_numbers<[1], [0], [0], [1], [0, 0, 1, 1], [], []>} : vector<2x32xf32>, vector<32x128xf32>, vector<2x128xf32> -> vector<2x128xf32>
    %130 = arith.addf %128, %129 : vector<2x128xf32>
    %131 = vector.extract_strided_slice %130 {offsets = [0, 0], sizes = [2, 32], strides = [1, 1]} : vector<2x128xf32> to vector<2x32xf32>
    %132 = arith.negf %131 : vector<2x32xf32>
    %133 = math.exp %132 : vector<2x32xf32>
    %cst_62 = arith.constant 1.000000e+00 : f32
    %134 = vector.broadcast %cst_62 : f32 to vector<2x32xf32>
    %135 = arith.addf %134, %133 : vector<2x32xf32>
    %136 = arith.divf %134, %135 : vector<2x32xf32>
    %137 = vector.extract_strided_slice %130 {offsets = [0, 32], sizes = [2, 32], strides = [1, 1]} : vector<2x128xf32> to vector<2x32xf32>
    %138 = arith.negf %137 : vector<2x32xf32>
    %139 = math.exp %138 : vector<2x32xf32>
    %cst_63 = arith.constant 1.000000e+00 : f32
    %140 = vector.broadcast %cst_63 : f32 to vector<2x32xf32>
    %141 = arith.addf %140, %139 : vector<2x32xf32>
    %142 = arith.divf %140, %141 : vector<2x32xf32>
    %143 = vector.extract_strided_slice %130 {offsets = [0, 64], sizes = [2, 32], strides = [1, 1]} : vector<2x128xf32> to vector<2x32xf32>
    %144 = math.tanh %143 : vector<2x32xf32>
    %145 = vector.extract_strided_slice %130 {offsets = [0, 96], sizes = [2, 32], strides = [1, 1]} : vector<2x128xf32> to vector<2x32xf32>
    %146 = arith.negf %145 : vector<2x32xf32>
    %147 = math.exp %146 : vector<2x32xf32>
    %cst_64 = arith.constant 1.000000e+00 : f32
    %148 = vector.broadcast %cst_64 : f32 to vector<2x32xf32>
    %149 = arith.addf %148, %147 : vector<2x32xf32>
    %150 = arith.divf %148, %149 : vector<2x32xf32>
    %151 = arith.mulf %142, %67 : vector<2x32xf32>
    %152 = arith.mulf %136, %144 : vector<2x32xf32>
    %153 = arith.addf %151, %152 : vector<2x32xf32>
    %154 = math.tanh %153 : vector<2x32xf32>
    %155 = arith.mulf %150, %154 : vector<2x32xf32>
    %cst_65 = arith.constant dense<0.000000e+00> : vector<2x32xf32>
    %156 = tpu.matmul %155, %36, %cst_65 {dimension_numbers = #tpu.dot_dimension_numbers<[1], [0], [0], [1], [0, 0, 1, 1], [], []>} : vector<2x32xf32>, vector<32x32xf32>, vector<2x32xf32> -> vector<2x32xf32>
    %157 = vector.broadcast %37 : vector<1x32xf32> to vector<2x32xf32>
    %158 = arith.addf %156, %157 : vector<2x32xf32>
    %159 = vector.shape_cast %158 : vector<2x32xf32> to vector<2x1x32xf32>
    %160 = vector.broadcast %159 : vector<2x1x32xf32> to vector<2x15x32xf32>
    %161 = arith.addf %160, %11 : vector<2x15x32xf32>
    %162 = math.tanh %161 : vector<2x15x32xf32>
    %163 = arith.mulf %162, %22 : vector<2x15x32xf32>
    %cst_66 = arith.constant dense<0.000000e+00> : vector<2x15xf32>
    %164 = vector.multi_reduction <add>, %163, %cst_66 [2] : vector<2x15x32xf32> to vector<2x15xf32>
    %165 = arith.addf %164, %29 : vector<2x15xf32>
    %cst_67 = arith.constant dense<0xFF800000> : vector<2xf32>
    %166 = vector.multi_reduction <maximumf>, %165, %cst_67 [1] : vector<2x15xf32> to vector<2xf32>
    %167 = vector.shape_cast %166 : vector<2xf32> to vector<2x1xf32>
    %168 = vector.broadcast %167 : vector<2x1xf32> to vector<2x15xf32>
    %169 = arith.subf %165, %168 : vector<2x15xf32>
    %170 = math.exp %169 : vector<2x15xf32>
    %cst_68 = arith.constant dense<0.000000e+00> : vector<2xf32>
    %171 = vector.multi_reduction <add>, %170, %cst_68 [1] : vector<2x15xf32> to vector<2xf32>
    %172 = vector.shape_cast %171 : vector<2xf32> to vector<2x1xf32>
    %173 = tpu.reciprocal %172 {approx = true} : vector<2x1xf32> -> vector<2x1xf32>
    %174 = vector.broadcast %173 : vector<2x1xf32> to vector<2x15xf32>
    %175 = arith.mulf %170, %174 : vector<2x15xf32>
    %176 = vector.shape_cast %175 : vector<2x15xf32> to vector<2x1x15xf32>
    "tpu.trace_start"() <{level = 10 : i32, message = "bqn,bne->bqe"}> : () -> ()
    %cst_69 = arith.constant dense<0.000000e+00> : vector<2x1x32xf32>
    %177 = tpu.matmul %176, %1, %cst_69 {dimension_numbers = #tpu.dot_dimension_numbers<[2], [1], [1], [2], [0, 0, 0, 1, 1, 2], [0], [0]>} : vector<2x1x15xf32>, vector<2x15x32xf32>, vector<2x1x32xf32> -> vector<2x1x32xf32>
    "tpu.trace_stop"() : () -> ()
    %178 = vector.shape_cast %177 : vector<2x1x32xf32> to vector<2x32xf32>
    %cst_70 = arith.constant dense<0.000000e+00> : vector<2x128xf32>
    %179 = tpu.matmul %178, %32, %cst_70 {dimension_numbers = #tpu.dot_dimension_numbers<[1], [0], [0], [1], [0, 0, 1, 1], [], []>} : vector<2x32xf32>, vector<32x128xf32>, vector<2x128xf32> -> vector<2x128xf32>
    %cst_71 = arith.constant dense<0.000000e+00> : vector<2x128xf32>
    %180 = tpu.matmul %155, %33, %cst_71 {dimension_numbers = #tpu.dot_dimension_numbers<[1], [0], [0], [1], [0, 0, 1, 1], [], []>} : vector<2x32xf32>, vector<32x128xf32>, vector<2x128xf32> -> vector<2x128xf32>
    %181 = arith.addf %179, %180 : vector<2x128xf32>
    %cst_72 = arith.constant dense<0.000000e+00> : vector<2x128xf32>
    %182 = tpu.matmul %124, %34, %cst_72 {dimension_numbers = #tpu.dot_dimension_numbers<[1], [0], [0], [1], [0, 0, 1, 1], [], []>} : vector<2x32xf32>, vector<32x128xf32>, vector<2x128xf32> -> vector<2x128xf32>
    %183 = arith.addf %181, %182 : vector<2x128xf32>
    %184 = vector.broadcast %35 : vector<1x128xf32> to vector<2x128xf32>
    %185 = arith.addf %183, %184 : vector<2x128xf32>
    %186 = vector.extract_strided_slice %185 {offsets = [0, 0], sizes = [2, 32], strides = [1, 1]} : vector<2x128xf32> to vector<2x32xf32>
    %187 = arith.negf %186 : vector<2x32xf32>
    %188 = math.exp %187 : vector<2x32xf32>
    %cst_73 = arith.constant 1.000000e+00 : f32
    %189 = vector.broadcast %cst_73 : f32 to vector<2x32xf32>
    %190 = arith.addf %189, %188 : vector<2x32xf32>
    %191 = arith.divf %189, %190 : vector<2x32xf32>
    %192 = vector.extract_strided_slice %185 {offsets = [0, 32], sizes = [2, 32], strides = [1, 1]} : vector<2x128xf32> to vector<2x32xf32>
    %193 = arith.negf %192 : vector<2x32xf32>
    %194 = math.exp %193 : vector<2x32xf32>
    %cst_74 = arith.constant 1.000000e+00 : f32
    %195 = vector.broadcast %cst_74 : f32 to vector<2x32xf32>
    %196 = arith.addf %195, %194 : vector<2x32xf32>
    %197 = arith.divf %195, %196 : vector<2x32xf32>
    %198 = vector.extract_strided_slice %185 {offsets = [0, 64], sizes = [2, 32], strides = [1, 1]} : vector<2x128xf32> to vector<2x32xf32>
    %199 = math.tanh %198 : vector<2x32xf32>
    %200 = vector.extract_strided_slice %185 {offsets = [0, 96], sizes = [2, 32], strides = [1, 1]} : vector<2x128xf32> to vector<2x32xf32>
    %201 = arith.negf %200 : vector<2x32xf32>
    %202 = math.exp %201 : vector<2x32xf32>
    %cst_75 = arith.constant 1.000000e+00 : f32
    %203 = vector.broadcast %cst_75 : f32 to vector<2x32xf32>
    %204 = arith.addf %203, %202 : vector<2x32xf32>
    %205 = arith.divf %203, %204 : vector<2x32xf32>
    %206 = arith.mulf %197, %122 : vector<2x32xf32>
    %207 = arith.mulf %191, %199 : vector<2x32xf32>
    %208 = arith.addf %206, %207 : vector<2x32xf32>
    %209 = math.tanh %208 : vector<2x32xf32>
    %210 = arith.mulf %205, %209 : vector<2x32xf32>
    %211 = vector.extract_strided_slice %18 {offsets = [4, 0], sizes = [2, 128], strides = [1, 1]} : vector<18x128xf32> to vector<2x128xf32>
    %212 = arith.addf %211, %16 : vector<2x128xf32>
    %cst_76 = arith.constant dense<0.000000e+00> : vector<2x128xf32>
    %213 = tpu.matmul %210, %30, %cst_76 {dimension_numbers = #tpu.dot_dimension_numbers<[1], [0], [0], [1], [0, 0, 1, 1], [], []>} : vector<2x32xf32>, vector<32x128xf32>, vector<2x128xf32> -> vector<2x128xf32>
    %214 = arith.addf %212, %213 : vector<2x128xf32>
    %cst_77 = arith.constant dense<0.000000e+00> : vector<2x128xf32>
    %215 = tpu.matmul %155, %31, %cst_77 {dimension_numbers = #tpu.dot_dimension_numbers<[1], [0], [0], [1], [0, 0, 1, 1], [], []>} : vector<2x32xf32>, vector<32x128xf32>, vector<2x128xf32> -> vector<2x128xf32>
    %216 = arith.addf %214, %215 : vector<2x128xf32>
    %217 = vector.extract_strided_slice %216 {offsets = [0, 0], sizes = [2, 32], strides = [1, 1]} : vector<2x128xf32> to vector<2x32xf32>
    %218 = arith.negf %217 : vector<2x32xf32>
    %219 = math.exp %218 : vector<2x32xf32>
    %cst_78 = arith.constant 1.000000e+00 : f32
    %220 = vector.broadcast %cst_78 : f32 to vector<2x32xf32>
    %221 = arith.addf %220, %219 : vector<2x32xf32>
    %222 = arith.divf %220, %221 : vector<2x32xf32>
    %223 = vector.extract_strided_slice %216 {offsets = [0, 32], sizes = [2, 32], strides = [1, 1]} : vector<2x128xf32> to vector<2x32xf32>
    %224 = arith.negf %223 : vector<2x32xf32>
    %225 = math.exp %224 : vector<2x32xf32>
    %cst_79 = arith.constant 1.000000e+00 : f32
    %226 = vector.broadcast %cst_79 : f32 to vector<2x32xf32>
    %227 = arith.addf %226, %225 : vector<2x32xf32>
    %228 = arith.divf %226, %227 : vector<2x32xf32>
    %229 = vector.extract_strided_slice %216 {offsets = [0, 64], sizes = [2, 32], strides = [1, 1]} : vector<2x128xf32> to vector<2x32xf32>
    %230 = math.tanh %229 : vector<2x32xf32>
    %231 = vector.extract_strided_slice %216 {offsets = [0, 96], sizes = [2, 32], strides = [1, 1]} : vector<2x128xf32> to vector<2x32xf32>
    %232 = arith.negf %231 : vector<2x32xf32>
    %233 = math.exp %232 : vector<2x32xf32>
    %cst_80 = arith.constant 1.000000e+00 : f32
    %234 = vector.broadcast %cst_80 : f32 to vector<2x32xf32>
    %235 = arith.addf %234, %233 : vector<2x32xf32>
    %236 = arith.divf %234, %235 : vector<2x32xf32>
    %237 = arith.mulf %228, %153 : vector<2x32xf32>
    %238 = arith.mulf %222, %230 : vector<2x32xf32>
    %239 = arith.addf %237, %238 : vector<2x32xf32>
    %240 = math.tanh %239 : vector<2x32xf32>
    %241 = arith.mulf %236, %240 : vector<2x32xf32>
    %cst_81 = arith.constant dense<0.000000e+00> : vector<2x32xf32>
    %242 = tpu.matmul %241, %36, %cst_81 {dimension_numbers = #tpu.dot_dimension_numbers<[1], [0], [0], [1], [0, 0, 1, 1], [], []>} : vector<2x32xf32>, vector<32x32xf32>, vector<2x32xf32> -> vector<2x32xf32>
    %243 = vector.broadcast %37 : vector<1x32xf32> to vector<2x32xf32>
    %244 = arith.addf %242, %243 : vector<2x32xf32>
    %245 = vector.shape_cast %244 : vector<2x32xf32> to vector<2x1x32xf32>
    %246 = vector.broadcast %245 : vector<2x1x32xf32> to vector<2x15x32xf32>
    %247 = arith.addf %246, %11 : vector<2x15x32xf32>
    %248 = math.tanh %247 : vector<2x15x32xf32>
    %249 = arith.mulf %248, %22 : vector<2x15x32xf32>
    %cst_82 = arith.constant dense<0.000000e+00> : vector<2x15xf32>
    %250 = vector.multi_reduction <add>, %249, %cst_82 [2] : vector<2x15x32xf32> to vector<2x15xf32>
    %251 = arith.addf %250, %29 : vector<2x15xf32>
    %cst_83 = arith.constant dense<0xFF800000> : vector<2xf32>
    %252 = vector.multi_reduction <maximumf>, %251, %cst_83 [1] : vector<2x15xf32> to vector<2xf32>
    %253 = vector.shape_cast %252 : vector<2xf32> to vector<2x1xf32>
    %254 = vector.broadcast %253 : vector<2x1xf32> to vector<2x15xf32>
    %255 = arith.subf %251, %254 : vector<2x15xf32>
    %256 = math.exp %255 : vector<2x15xf32>
    %cst_84 = arith.constant dense<0.000000e+00> : vector<2xf32>
    %257 = vector.multi_reduction <add>, %256, %cst_84 [1] : vector<2x15xf32> to vector<2xf32>
    %258 = vector.shape_cast %257 : vector<2xf32> to vector<2x1xf32>
    %259 = tpu.reciprocal %258 {approx = true} : vector<2x1xf32> -> vector<2x1xf32>
    %260 = vector.broadcast %259 : vector<2x1xf32> to vector<2x15xf32>
    %261 = arith.mulf %256, %260 : vector<2x15xf32>
    %262 = vector.shape_cast %261 : vector<2x15xf32> to vector<2x1x15xf32>
    "tpu.trace_start"() <{level = 10 : i32, message = "bqn,bne->bqe"}> : () -> ()
    %cst_85 = arith.constant dense<0.000000e+00> : vector<2x1x32xf32>
    %263 = tpu.matmul %262, %1, %cst_85 {dimension_numbers = #tpu.dot_dimension_numbers<[2], [1], [1], [2], [0, 0, 0, 1, 1, 2], [0], [0]>} : vector<2x1x15xf32>, vector<2x15x32xf32>, vector<2x1x32xf32> -> vector<2x1x32xf32>
    "tpu.trace_stop"() : () -> ()
    %264 = vector.shape_cast %263 : vector<2x1x32xf32> to vector<2x32xf32>
    %cst_86 = arith.constant dense<0.000000e+00> : vector<2x128xf32>
    %265 = tpu.matmul %264, %32, %cst_86 {dimension_numbers = #tpu.dot_dimension_numbers<[1], [0], [0], [1], [0, 0, 1, 1], [], []>} : vector<2x32xf32>, vector<32x128xf32>, vector<2x128xf32> -> vector<2x128xf32>
    %cst_87 = arith.constant dense<0.000000e+00> : vector<2x128xf32>
    %266 = tpu.matmul %241, %33, %cst_87 {dimension_numbers = #tpu.dot_dimension_numbers<[1], [0], [0], [1], [0, 0, 1, 1], [], []>} : vector<2x32xf32>, vector<32x128xf32>, vector<2x128xf32> -> vector<2x128xf32>
    %267 = arith.addf %265, %266 : vector<2x128xf32>
    %cst_88 = arith.constant dense<0.000000e+00> : vector<2x128xf32>
    %268 = tpu.matmul %210, %34, %cst_88 {dimension_numbers = #tpu.dot_dimension_numbers<[1], [0], [0], [1], [0, 0, 1, 1], [], []>} : vector<2x32xf32>, vector<32x128xf32>, vector<2x128xf32> -> vector<2x128xf32>
    %269 = arith.addf %267, %268 : vector<2x128xf32>
    %270 = vector.broadcast %35 : vector<1x128xf32> to vector<2x128xf32>
    %271 = arith.addf %269, %270 : vector<2x128xf32>
    %272 = vector.extract_strided_slice %271 {offsets = [0, 0], sizes = [2, 32], strides = [1, 1]} : vector<2x128xf32> to vector<2x32xf32>
    %273 = arith.negf %272 : vector<2x32xf32>
    %274 = math.exp %273 : vector<2x32xf32>
    %cst_89 = arith.constant 1.000000e+00 : f32
    %275 = vector.broadcast %cst_89 : f32 to vector<2x32xf32>
    %276 = arith.addf %275, %274 : vector<2x32xf32>
    %277 = arith.divf %275, %276 : vector<2x32xf32>
    %278 = vector.extract_strided_slice %271 {offsets = [0, 32], sizes = [2, 32], strides = [1, 1]} : vector<2x128xf32> to vector<2x32xf32>
    %279 = arith.negf %278 : vector<2x32xf32>
    %280 = math.exp %279 : vector<2x32xf32>
    %cst_90 = arith.constant 1.000000e+00 : f32
    %281 = vector.broadcast %cst_90 : f32 to vector<2x32xf32>
    %282 = arith.addf %281, %280 : vector<2x32xf32>
    %283 = arith.divf %281, %282 : vector<2x32xf32>
    %284 = vector.extract_strided_slice %271 {offsets = [0, 64], sizes = [2, 32], strides = [1, 1]} : vector<2x128xf32> to vector<2x32xf32>
    %285 = math.tanh %284 : vector<2x32xf32>
    %286 = vector.extract_strided_slice %271 {offsets = [0, 96], sizes = [2, 32], strides = [1, 1]} : vector<2x128xf32> to vector<2x32xf32>
    %287 = arith.negf %286 : vector<2x32xf32>
    %288 = math.exp %287 : vector<2x32xf32>
    %cst_91 = arith.constant 1.000000e+00 : f32
    %289 = vector.broadcast %cst_91 : f32 to vector<2x32xf32>
    %290 = arith.addf %289, %288 : vector<2x32xf32>
    %291 = arith.divf %289, %290 : vector<2x32xf32>
    %292 = arith.mulf %283, %208 : vector<2x32xf32>
    %293 = arith.mulf %277, %285 : vector<2x32xf32>
    %294 = arith.addf %292, %293 : vector<2x32xf32>
    %295 = math.tanh %294 : vector<2x32xf32>
    %296 = arith.mulf %291, %295 : vector<2x32xf32>
    %297 = vector.extract_strided_slice %18 {offsets = [6, 0], sizes = [2, 128], strides = [1, 1]} : vector<18x128xf32> to vector<2x128xf32>
    %298 = arith.addf %297, %16 : vector<2x128xf32>
    %cst_92 = arith.constant dense<0.000000e+00> : vector<2x128xf32>
    %299 = tpu.matmul %296, %30, %cst_92 {dimension_numbers = #tpu.dot_dimension_numbers<[1], [0], [0], [1], [0, 0, 1, 1], [], []>} : vector<2x32xf32>, vector<32x128xf32>, vector<2x128xf32> -> vector<2x128xf32>
    %300 = arith.addf %298, %299 : vector<2x128xf32>
    %cst_93 = arith.constant dense<0.000000e+00> : vector<2x128xf32>
    %301 = tpu.matmul %241, %31, %cst_93 {dimension_numbers = #tpu.dot_dimension_numbers<[1], [0], [0], [1], [0, 0, 1, 1], [], []>} : vector<2x32xf32>, vector<32x128xf32>, vector<2x128xf32> -> vector<2x128xf32>
    %302 = arith.addf %300, %301 : vector<2x128xf32>
    %303 = vector.extract_strided_slice %302 {offsets = [0, 0], sizes = [2, 32], strides = [1, 1]} : vector<2x128xf32> to vector<2x32xf32>
    %304 = arith.negf %303 : vector<2x32xf32>
    %305 = math.exp %304 : vector<2x32xf32>
    %cst_94 = arith.constant 1.000000e+00 : f32
    %306 = vector.broadcast %cst_94 : f32 to vector<2x32xf32>
    %307 = arith.addf %306, %305 : vector<2x32xf32>
    %308 = arith.divf %306, %307 : vector<2x32xf32>
    %309 = vector.extract_strided_slice %302 {offsets = [0, 32], sizes = [2, 32], strides = [1, 1]} : vector<2x128xf32> to vector<2x32xf32>
    %310 = arith.negf %309 : vector<2x32xf32>
    %311 = math.exp %310 : vector<2x32xf32>
    %cst_95 = arith.constant 1.000000e+00 : f32
    %312 = vector.broadcast %cst_95 : f32 to vector<2x32xf32>
    %313 = arith.addf %312, %311 : vector<2x32xf32>
    %314 = arith.divf %312, %313 : vector<2x32xf32>
    %315 = vector.extract_strided_slice %302 {offsets = [0, 64], sizes = [2, 32], strides = [1, 1]} : vector<2x128xf32> to vector<2x32xf32>
    %316 = math.tanh %315 : vector<2x32xf32>
    %317 = vector.extract_strided_slice %302 {offsets = [0, 96], sizes = [2, 32], strides = [1, 1]} : vector<2x128xf32> to vector<2x32xf32>
    %318 = arith.negf %317 : vector<2x32xf32>
    %319 = math.exp %318 : vector<2x32xf32>
    %cst_96 = arith.constant 1.000000e+00 : f32
    %320 = vector.broadcast %cst_96 : f32 to vector<2x32xf32>
    %321 = arith.addf %320, %319 : vector<2x32xf32>
    %322 = arith.divf %320, %321 : vector<2x32xf32>
    %323 = arith.mulf %314, %239 : vector<2x32xf32>
    %324 = arith.mulf %308, %316 : vector<2x32xf32>
    %325 = arith.addf %323, %324 : vector<2x32xf32>
    %326 = math.tanh %325 : vector<2x32xf32>
    %327 = arith.mulf %322, %326 : vector<2x32xf32>
    %cst_97 = arith.constant dense<0.000000e+00> : vector<2x32xf32>
    %328 = tpu.matmul %327, %36, %cst_97 {dimension_numbers = #tpu.dot_dimension_numbers<[1], [0], [0], [1], [0, 0, 1, 1], [], []>} : vector<2x32xf32>, vector<32x32xf32>, vector<2x32xf32> -> vector<2x32xf32>
    %329 = vector.broadcast %37 : vector<1x32xf32> to vector<2x32xf32>
    %330 = arith.addf %328, %329 : vector<2x32xf32>
    %331 = vector.shape_cast %330 : vector<2x32xf32> to vector<2x1x32xf32>
    %332 = vector.broadcast %331 : vector<2x1x32xf32> to vector<2x15x32xf32>
    %333 = arith.addf %332, %11 : vector<2x15x32xf32>
    %334 = math.tanh %333 : vector<2x15x32xf32>
    %335 = arith.mulf %334, %22 : vector<2x15x32xf32>
    %cst_98 = arith.constant dense<0.000000e+00> : vector<2x15xf32>
    %336 = vector.multi_reduction <add>, %335, %cst_98 [2] : vector<2x15x32xf32> to vector<2x15xf32>
    %337 = arith.addf %336, %29 : vector<2x15xf32>
    %cst_99 = arith.constant dense<0xFF800000> : vector<2xf32>
    %338 = vector.multi_reduction <maximumf>, %337, %cst_99 [1] : vector<2x15xf32> to vector<2xf32>
    %339 = vector.shape_cast %338 : vector<2xf32> to vector<2x1xf32>
    %340 = vector.broadcast %339 : vector<2x1xf32> to vector<2x15xf32>
    %341 = arith.subf %337, %340 : vector<2x15xf32>
    %342 = math.exp %341 : vector<2x15xf32>
    %cst_100 = arith.constant dense<0.000000e+00> : vector<2xf32>
    %343 = vector.multi_reduction <add>, %342, %cst_100 [1] : vector<2x15xf32> to vector<2xf32>
    %344 = vector.shape_cast %343 : vector<2xf32> to vector<2x1xf32>
    %345 = tpu.reciprocal %344 {approx = true} : vector<2x1xf32> -> vector<2x1xf32>
    %346 = vector.broadcast %345 : vector<2x1xf32> to vector<2x15xf32>
    %347 = arith.mulf %342, %346 : vector<2x15xf32>
    %348 = vector.shape_cast %347 : vector<2x15xf32> to vector<2x1x15xf32>
    "tpu.trace_start"() <{level = 10 : i32, message = "bqn,bne->bqe"}> : () -> ()
    %cst_101 = arith.constant dense<0.000000e+00> : vector<2x1x32xf32>
    %349 = tpu.matmul %348, %1, %cst_101 {dimension_numbers = #tpu.dot_dimension_numbers<[2], [1], [1], [2], [0, 0, 0, 1, 1, 2], [0], [0]>} : vector<2x1x15xf32>, vector<2x15x32xf32>, vector<2x1x32xf32> -> vector<2x1x32xf32>
    "tpu.trace_stop"() : () -> ()
    %350 = vector.shape_cast %349 : vector<2x1x32xf32> to vector<2x32xf32>
    %cst_102 = arith.constant dense<0.000000e+00> : vector<2x128xf32>
    %351 = tpu.matmul %350, %32, %cst_102 {dimension_numbers = #tpu.dot_dimension_numbers<[1], [0], [0], [1], [0, 0, 1, 1], [], []>} : vector<2x32xf32>, vector<32x128xf32>, vector<2x128xf32> -> vector<2x128xf32>
    %cst_103 = arith.constant dense<0.000000e+00> : vector<2x128xf32>
    %352 = tpu.matmul %327, %33, %cst_103 {dimension_numbers = #tpu.dot_dimension_numbers<[1], [0], [0], [1], [0, 0, 1, 1], [], []>} : vector<2x32xf32>, vector<32x128xf32>, vector<2x128xf32> -> vector<2x128xf32>
    %353 = arith.addf %351, %352 : vector<2x128xf32>
    %cst_104 = arith.constant dense<0.000000e+00> : vector<2x128xf32>
    %354 = tpu.matmul %296, %34, %cst_104 {dimension_numbers = #tpu.dot_dimension_numbers<[1], [0], [0], [1], [0, 0, 1, 1], [], []>} : vector<2x32xf32>, vector<32x128xf32>, vector<2x128xf32> -> vector<2x128xf32>
    %355 = arith.addf %353, %354 : vector<2x128xf32>
    %356 = vector.broadcast %35 : vector<1x128xf32> to vector<2x128xf32>
    %357 = arith.addf %355, %356 : vector<2x128xf32>
    %358 = vector.extract_strided_slice %357 {offsets = [0, 0], sizes = [2, 32], strides = [1, 1]} : vector<2x128xf32> to vector<2x32xf32>
    %359 = arith.negf %358 : vector<2x32xf32>
    %360 = math.exp %359 : vector<2x32xf32>
    %cst_105 = arith.constant 1.000000e+00 : f32
    %361 = vector.broadcast %cst_105 : f32 to vector<2x32xf32>
    %362 = arith.addf %361, %360 : vector<2x32xf32>
    %363 = arith.divf %361, %362 : vector<2x32xf32>
    %364 = vector.extract_strided_slice %357 {offsets = [0, 32], sizes = [2, 32], strides = [1, 1]} : vector<2x128xf32> to vector<2x32xf32>
    %365 = arith.negf %364 : vector<2x32xf32>
    %366 = math.exp %365 : vector<2x32xf32>
    %cst_106 = arith.constant 1.000000e+00 : f32
    %367 = vector.broadcast %cst_106 : f32 to vector<2x32xf32>
    %368 = arith.addf %367, %366 : vector<2x32xf32>
    %369 = arith.divf %367, %368 : vector<2x32xf32>
    %370 = vector.extract_strided_slice %357 {offsets = [0, 64], sizes = [2, 32], strides = [1, 1]} : vector<2x128xf32> to vector<2x32xf32>
    %371 = math.tanh %370 : vector<2x32xf32>
    %372 = vector.extract_strided_slice %357 {offsets = [0, 96], sizes = [2, 32], strides = [1, 1]} : vector<2x128xf32> to vector<2x32xf32>
    %373 = arith.negf %372 : vector<2x32xf32>
    %374 = math.exp %373 : vector<2x32xf32>
    %cst_107 = arith.constant 1.000000e+00 : f32
    %375 = vector.broadcast %cst_107 : f32 to vector<2x32xf32>
    %376 = arith.addf %375, %374 : vector<2x32xf32>
    %377 = arith.divf %375, %376 : vector<2x32xf32>
    %378 = arith.mulf %369, %294 : vector<2x32xf32>
    %379 = arith.mulf %363, %371 : vector<2x32xf32>
    %380 = arith.addf %378, %379 : vector<2x32xf32>
    %381 = math.tanh %380 : vector<2x32xf32>
    %382 = arith.mulf %377, %381 : vector<2x32xf32>
    %383 = vector.extract_strided_slice %18 {offsets = [8, 0], sizes = [2, 128], strides = [1, 1]} : vector<18x128xf32> to vector<2x128xf32>
    %384 = arith.addf %383, %16 : vector<2x128xf32>
    %cst_108 = arith.constant dense<0.000000e+00> : vector<2x128xf32>
    %385 = tpu.matmul %382, %30, %cst_108 {dimension_numbers = #tpu.dot_dimension_numbers<[1], [0], [0], [1], [0, 0, 1, 1], [], []>} : vector<2x32xf32>, vector<32x128xf32>, vector<2x128xf32> -> vector<2x128xf32>
    %386 = arith.addf %384, %385 : vector<2x128xf32>
    %cst_109 = arith.constant dense<0.000000e+00> : vector<2x128xf32>
    %387 = tpu.matmul %327, %31, %cst_109 {dimension_numbers = #tpu.dot_dimension_numbers<[1], [0], [0], [1], [0, 0, 1, 1], [], []>} : vector<2x32xf32>, vector<32x128xf32>, vector<2x128xf32> -> vector<2x128xf32>
    %388 = arith.addf %386, %387 : vector<2x128xf32>
    %389 = vector.extract_strided_slice %388 {offsets = [0, 0], sizes = [2, 32], strides = [1, 1]} : vector<2x128xf32> to vector<2x32xf32>
    %390 = arith.negf %389 : vector<2x32xf32>
    %391 = math.exp %390 : vector<2x32xf32>
    %cst_110 = arith.constant 1.000000e+00 : f32
    %392 = vector.broadcast %cst_110 : f32 to vector<2x32xf32>
    %393 = arith.addf %392, %391 : vector<2x32xf32>
    %394 = arith.divf %392, %393 : vector<2x32xf32>
    %395 = vector.extract_strided_slice %388 {offsets = [0, 32], sizes = [2, 32], strides = [1, 1]} : vector<2x128xf32> to vector<2x32xf32>
    %396 = arith.negf %395 : vector<2x32xf32>
    %397 = math.exp %396 : vector<2x32xf32>
    %cst_111 = arith.constant 1.000000e+00 : f32
    %398 = vector.broadcast %cst_111 : f32 to vector<2x32xf32>
    %399 = arith.addf %398, %397 : vector<2x32xf32>
    %400 = arith.divf %398, %399 : vector<2x32xf32>
    %401 = vector.extract_strided_slice %388 {offsets = [0, 64], sizes = [2, 32], strides = [1, 1]} : vector<2x128xf32> to vector<2x32xf32>
    %402 = math.tanh %401 : vector<2x32xf32>
    %403 = vector.extract_strided_slice %388 {offsets = [0, 96], sizes = [2, 32], strides = [1, 1]} : vector<2x128xf32> to vector<2x32xf32>
    %404 = arith.negf %403 : vector<2x32xf32>
    %405 = math.exp %404 : vector<2x32xf32>
    %cst_112 = arith.constant 1.000000e+00 : f32
    %406 = vector.broadcast %cst_112 : f32 to vector<2x32xf32>
    %407 = arith.addf %406, %405 : vector<2x32xf32>
    %408 = arith.divf %406, %407 : vector<2x32xf32>
    %409 = arith.mulf %400, %325 : vector<2x32xf32>
    %410 = arith.mulf %394, %402 : vector<2x32xf32>
    %411 = arith.addf %409, %410 : vector<2x32xf32>
    %412 = math.tanh %411 : vector<2x32xf32>
    %413 = arith.mulf %408, %412 : vector<2x32xf32>
    %cst_113 = arith.constant dense<0.000000e+00> : vector<2x32xf32>
    %414 = tpu.matmul %413, %36, %cst_113 {dimension_numbers = #tpu.dot_dimension_numbers<[1], [0], [0], [1], [0, 0, 1, 1], [], []>} : vector<2x32xf32>, vector<32x32xf32>, vector<2x32xf32> -> vector<2x32xf32>
    %415 = vector.broadcast %37 : vector<1x32xf32> to vector<2x32xf32>
    %416 = arith.addf %414, %415 : vector<2x32xf32>
    %417 = vector.shape_cast %416 : vector<2x32xf32> to vector<2x1x32xf32>
    %418 = vector.broadcast %417 : vector<2x1x32xf32> to vector<2x15x32xf32>
    %419 = arith.addf %418, %11 : vector<2x15x32xf32>
    %420 = math.tanh %419 : vector<2x15x32xf32>
    %421 = arith.mulf %420, %22 : vector<2x15x32xf32>
    %cst_114 = arith.constant dense<0.000000e+00> : vector<2x15xf32>
    %422 = vector.multi_reduction <add>, %421, %cst_114 [2] : vector<2x15x32xf32> to vector<2x15xf32>
    %423 = arith.addf %422, %29 : vector<2x15xf32>
    %cst_115 = arith.constant dense<0xFF800000> : vector<2xf32>
    %424 = vector.multi_reduction <maximumf>, %423, %cst_115 [1] : vector<2x15xf32> to vector<2xf32>
    %425 = vector.shape_cast %424 : vector<2xf32> to vector<2x1xf32>
    %426 = vector.broadcast %425 : vector<2x1xf32> to vector<2x15xf32>
    %427 = arith.subf %423, %426 : vector<2x15xf32>
    %428 = math.exp %427 : vector<2x15xf32>
    %cst_116 = arith.constant dense<0.000000e+00> : vector<2xf32>
    %429 = vector.multi_reduction <add>, %428, %cst_116 [1] : vector<2x15xf32> to vector<2xf32>
    %430 = vector.shape_cast %429 : vector<2xf32> to vector<2x1xf32>
    %431 = tpu.reciprocal %430 {approx = true} : vector<2x1xf32> -> vector<2x1xf32>
    %432 = vector.broadcast %431 : vector<2x1xf32> to vector<2x15xf32>
    %433 = arith.mulf %428, %432 : vector<2x15xf32>
    %434 = vector.shape_cast %433 : vector<2x15xf32> to vector<2x1x15xf32>
    "tpu.trace_start"() <{level = 10 : i32, message = "bqn,bne->bqe"}> : () -> ()
    %cst_117 = arith.constant dense<0.000000e+00> : vector<2x1x32xf32>
    %435 = tpu.matmul %434, %1, %cst_117 {dimension_numbers = #tpu.dot_dimension_numbers<[2], [1], [1], [2], [0, 0, 0, 1, 1, 2], [0], [0]>} : vector<2x1x15xf32>, vector<2x15x32xf32>, vector<2x1x32xf32> -> vector<2x1x32xf32>
    "tpu.trace_stop"() : () -> ()
    %436 = vector.shape_cast %435 : vector<2x1x32xf32> to vector<2x32xf32>
    %cst_118 = arith.constant dense<0.000000e+00> : vector<2x128xf32>
    %437 = tpu.matmul %436, %32, %cst_118 {dimension_numbers = #tpu.dot_dimension_numbers<[1], [0], [0], [1], [0, 0, 1, 1], [], []>} : vector<2x32xf32>, vector<32x128xf32>, vector<2x128xf32> -> vector<2x128xf32>
    %cst_119 = arith.constant dense<0.000000e+00> : vector<2x128xf32>
    %438 = tpu.matmul %413, %33, %cst_119 {dimension_numbers = #tpu.dot_dimension_numbers<[1], [0], [0], [1], [0, 0, 1, 1], [], []>} : vector<2x32xf32>, vector<32x128xf32>, vector<2x128xf32> -> vector<2x128xf32>
    %439 = arith.addf %437, %438 : vector<2x128xf32>
    %cst_120 = arith.constant dense<0.000000e+00> : vector<2x128xf32>
    %440 = tpu.matmul %382, %34, %cst_120 {dimension_numbers = #tpu.dot_dimension_numbers<[1], [0], [0], [1], [0, 0, 1, 1], [], []>} : vector<2x32xf32>, vector<32x128xf32>, vector<2x128xf32> -> vector<2x128xf32>
    %441 = arith.addf %439, %440 : vector<2x128xf32>
    %442 = vector.broadcast %35 : vector<1x128xf32> to vector<2x128xf32>
    %443 = arith.addf %441, %442 : vector<2x128xf32>
    %444 = vector.extract_strided_slice %443 {offsets = [0, 0], sizes = [2, 32], strides = [1, 1]} : vector<2x128xf32> to vector<2x32xf32>
    %445 = arith.negf %444 : vector<2x32xf32>
    %446 = math.exp %445 : vector<2x32xf32>
    %cst_121 = arith.constant 1.000000e+00 : f32
    %447 = vector.broadcast %cst_121 : f32 to vector<2x32xf32>
    %448 = arith.addf %447, %446 : vector<2x32xf32>
    %449 = arith.divf %447, %448 : vector<2x32xf32>
    %450 = vector.extract_strided_slice %443 {offsets = [0, 32], sizes = [2, 32], strides = [1, 1]} : vector<2x128xf32> to vector<2x32xf32>
    %451 = arith.negf %450 : vector<2x32xf32>
    %452 = math.exp %451 : vector<2x32xf32>
    %cst_122 = arith.constant 1.000000e+00 : f32
    %453 = vector.broadcast %cst_122 : f32 to vector<2x32xf32>
    %454 = arith.addf %453, %452 : vector<2x32xf32>
    %455 = arith.divf %453, %454 : vector<2x32xf32>
    %456 = vector.extract_strided_slice %443 {offsets = [0, 64], sizes = [2, 32], strides = [1, 1]} : vector<2x128xf32> to vector<2x32xf32>
    %457 = math.tanh %456 : vector<2x32xf32>
    %458 = vector.extract_strided_slice %443 {offsets = [0, 96], sizes = [2, 32], strides = [1, 1]} : vector<2x128xf32> to vector<2x32xf32>
    %459 = arith.negf %458 : vector<2x32xf32>
    %460 = math.exp %459 : vector<2x32xf32>
    %cst_123 = arith.constant 1.000000e+00 : f32
    %461 = vector.broadcast %cst_123 : f32 to vector<2x32xf32>
    %462 = arith.addf %461, %460 : vector<2x32xf32>
    %463 = arith.divf %461, %462 : vector<2x32xf32>
    %464 = arith.mulf %455, %380 : vector<2x32xf32>
    %465 = arith.mulf %449, %457 : vector<2x32xf32>
    %466 = arith.addf %464, %465 : vector<2x32xf32>
    %467 = math.tanh %466 : vector<2x32xf32>
    %468 = arith.mulf %463, %467 : vector<2x32xf32>
    %469 = vector.extract_strided_slice %18 {offsets = [10, 0], sizes = [2, 128], strides = [1, 1]} : vector<18x128xf32> to vector<2x128xf32>
    %470 = arith.addf %469, %16 : vector<2x128xf32>
    %cst_124 = arith.constant dense<0.000000e+00> : vector<2x128xf32>
    %471 = tpu.matmul %468, %30, %cst_124 {dimension_numbers = #tpu.dot_dimension_numbers<[1], [0], [0], [1], [0, 0, 1, 1], [], []>} : vector<2x32xf32>, vector<32x128xf32>, vector<2x128xf32> -> vector<2x128xf32>
    %472 = arith.addf %470, %471 : vector<2x128xf32>
    %cst_125 = arith.constant dense<0.000000e+00> : vector<2x128xf32>
    %473 = tpu.matmul %413, %31, %cst_125 {dimension_numbers = #tpu.dot_dimension_numbers<[1], [0], [0], [1], [0, 0, 1, 1], [], []>} : vector<2x32xf32>, vector<32x128xf32>, vector<2x128xf32> -> vector<2x128xf32>
    %474 = arith.addf %472, %473 : vector<2x128xf32>
    %475 = vector.extract_strided_slice %474 {offsets = [0, 0], sizes = [2, 32], strides = [1, 1]} : vector<2x128xf32> to vector<2x32xf32>
    %476 = arith.negf %475 : vector<2x32xf32>
    %477 = math.exp %476 : vector<2x32xf32>
    %cst_126 = arith.constant 1.000000e+00 : f32
    %478 = vector.broadcast %cst_126 : f32 to vector<2x32xf32>
    %479 = arith.addf %478, %477 : vector<2x32xf32>
    %480 = arith.divf %478, %479 : vector<2x32xf32>
    %481 = vector.extract_strided_slice %474 {offsets = [0, 32], sizes = [2, 32], strides = [1, 1]} : vector<2x128xf32> to vector<2x32xf32>
    %482 = arith.negf %481 : vector<2x32xf32>
    %483 = math.exp %482 : vector<2x32xf32>
    %cst_127 = arith.constant 1.000000e+00 : f32
    %484 = vector.broadcast %cst_127 : f32 to vector<2x32xf32>
    %485 = arith.addf %484, %483 : vector<2x32xf32>
    %486 = arith.divf %484, %485 : vector<2x32xf32>
    %487 = vector.extract_strided_slice %474 {offsets = [0, 64], sizes = [2, 32], strides = [1, 1]} : vector<2x128xf32> to vector<2x32xf32>
    %488 = math.tanh %487 : vector<2x32xf32>
    %489 = vector.extract_strided_slice %474 {offsets = [0, 96], sizes = [2, 32], strides = [1, 1]} : vector<2x128xf32> to vector<2x32xf32>
    %490 = arith.negf %489 : vector<2x32xf32>
    %491 = math.exp %490 : vector<2x32xf32>
    %cst_128 = arith.constant 1.000000e+00 : f32
    %492 = vector.broadcast %cst_128 : f32 to vector<2x32xf32>
    %493 = arith.addf %492, %491 : vector<2x32xf32>
    %494 = arith.divf %492, %493 : vector<2x32xf32>
    %495 = arith.mulf %486, %411 : vector<2x32xf32>
    %496 = arith.mulf %480, %488 : vector<2x32xf32>
    %497 = arith.addf %495, %496 : vector<2x32xf32>
    %498 = math.tanh %497 : vector<2x32xf32>
    %499 = arith.mulf %494, %498 : vector<2x32xf32>
    %cst_129 = arith.constant dense<0.000000e+00> : vector<2x32xf32>
    %500 = tpu.matmul %499, %36, %cst_129 {dimension_numbers = #tpu.dot_dimension_numbers<[1], [0], [0], [1], [0, 0, 1, 1], [], []>} : vector<2x32xf32>, vector<32x32xf32>, vector<2x32xf32> -> vector<2x32xf32>
    %501 = vector.broadcast %37 : vector<1x32xf32> to vector<2x32xf32>
    %502 = arith.addf %500, %501 : vector<2x32xf32>
    %503 = vector.shape_cast %502 : vector<2x32xf32> to vector<2x1x32xf32>
    %504 = vector.broadcast %503 : vector<2x1x32xf32> to vector<2x15x32xf32>
    %505 = arith.addf %504, %11 : vector<2x15x32xf32>
    %506 = math.tanh %505 : vector<2x15x32xf32>
    %507 = arith.mulf %506, %22 : vector<2x15x32xf32>
    %cst_130 = arith.constant dense<0.000000e+00> : vector<2x15xf32>
    %508 = vector.multi_reduction <add>, %507, %cst_130 [2] : vector<2x15x32xf32> to vector<2x15xf32>
    %509 = arith.addf %508, %29 : vector<2x15xf32>
    %cst_131 = arith.constant dense<0xFF800000> : vector<2xf32>
    %510 = vector.multi_reduction <maximumf>, %509, %cst_131 [1] : vector<2x15xf32> to vector<2xf32>
    %511 = vector.shape_cast %510 : vector<2xf32> to vector<2x1xf32>
    %512 = vector.broadcast %511 : vector<2x1xf32> to vector<2x15xf32>
    %513 = arith.subf %509, %512 : vector<2x15xf32>
    %514 = math.exp %513 : vector<2x15xf32>
    %cst_132 = arith.constant dense<0.000000e+00> : vector<2xf32>
    %515 = vector.multi_reduction <add>, %514, %cst_132 [1] : vector<2x15xf32> to vector<2xf32>
    %516 = vector.shape_cast %515 : vector<2xf32> to vector<2x1xf32>
    %517 = tpu.reciprocal %516 {approx = true} : vector<2x1xf32> -> vector<2x1xf32>
    %518 = vector.broadcast %517 : vector<2x1xf32> to vector<2x15xf32>
    %519 = arith.mulf %514, %518 : vector<2x15xf32>
    %520 = vector.shape_cast %519 : vector<2x15xf32> to vector<2x1x15xf32>
    "tpu.trace_start"() <{level = 10 : i32, message = "bqn,bne->bqe"}> : () -> ()
    %cst_133 = arith.constant dense<0.000000e+00> : vector<2x1x32xf32>
    %521 = tpu.matmul %520, %1, %cst_133 {dimension_numbers = #tpu.dot_dimension_numbers<[2], [1], [1], [2], [0, 0, 0, 1, 1, 2], [0], [0]>} : vector<2x1x15xf32>, vector<2x15x32xf32>, vector<2x1x32xf32> -> vector<2x1x32xf32>
    "tpu.trace_stop"() : () -> ()
    %522 = vector.shape_cast %521 : vector<2x1x32xf32> to vector<2x32xf32>
    %cst_134 = arith.constant dense<0.000000e+00> : vector<2x128xf32>
    %523 = tpu.matmul %522, %32, %cst_134 {dimension_numbers = #tpu.dot_dimension_numbers<[1], [0], [0], [1], [0, 0, 1, 1], [], []>} : vector<2x32xf32>, vector<32x128xf32>, vector<2x128xf32> -> vector<2x128xf32>
    %cst_135 = arith.constant dense<0.000000e+00> : vector<2x128xf32>
    %524 = tpu.matmul %499, %33, %cst_135 {dimension_numbers = #tpu.dot_dimension_numbers<[1], [0], [0], [1], [0, 0, 1, 1], [], []>} : vector<2x32xf32>, vector<32x128xf32>, vector<2x128xf32> -> vector<2x128xf32>
    %525 = arith.addf %523, %524 : vector<2x128xf32>
    %cst_136 = arith.constant dense<0.000000e+00> : vector<2x128xf32>
    %526 = tpu.matmul %468, %34, %cst_136 {dimension_numbers = #tpu.dot_dimension_numbers<[1], [0], [0], [1], [0, 0, 1, 1], [], []>} : vector<2x32xf32>, vector<32x128xf32>, vector<2x128xf32> -> vector<2x128xf32>
    %527 = arith.addf %525, %526 : vector<2x128xf32>
    %528 = vector.broadcast %35 : vector<1x128xf32> to vector<2x128xf32>
    %529 = arith.addf %527, %528 : vector<2x128xf32>
    %530 = vector.extract_strided_slice %529 {offsets = [0, 0], sizes = [2, 32], strides = [1, 1]} : vector<2x128xf32> to vector<2x32xf32>
    %531 = arith.negf %530 : vector<2x32xf32>
    %532 = math.exp %531 : vector<2x32xf32>
    %cst_137 = arith.constant 1.000000e+00 : f32
    %533 = vector.broadcast %cst_137 : f32 to vector<2x32xf32>
    %534 = arith.addf %533, %532 : vector<2x32xf32>
    %535 = arith.divf %533, %534 : vector<2x32xf32>
    %536 = vector.extract_strided_slice %529 {offsets = [0, 32], sizes = [2, 32], strides = [1, 1]} : vector<2x128xf32> to vector<2x32xf32>
    %537 = arith.negf %536 : vector<2x32xf32>
    %538 = math.exp %537 : vector<2x32xf32>
    %cst_138 = arith.constant 1.000000e+00 : f32
    %539 = vector.broadcast %cst_138 : f32 to vector<2x32xf32>
    %540 = arith.addf %539, %538 : vector<2x32xf32>
    %541 = arith.divf %539, %540 : vector<2x32xf32>
    %542 = vector.extract_strided_slice %529 {offsets = [0, 64], sizes = [2, 32], strides = [1, 1]} : vector<2x128xf32> to vector<2x32xf32>
    %543 = math.tanh %542 : vector<2x32xf32>
    %544 = vector.extract_strided_slice %529 {offsets = [0, 96], sizes = [2, 32], strides = [1, 1]} : vector<2x128xf32> to vector<2x32xf32>
    %545 = arith.negf %544 : vector<2x32xf32>
    %546 = math.exp %545 : vector<2x32xf32>
    %cst_139 = arith.constant 1.000000e+00 : f32
    %547 = vector.broadcast %cst_139 : f32 to vector<2x32xf32>
    %548 = arith.addf %547, %546 : vector<2x32xf32>
    %549 = arith.divf %547, %548 : vector<2x32xf32>
    %550 = arith.mulf %541, %466 : vector<2x32xf32>
    %551 = arith.mulf %535, %543 : vector<2x32xf32>
    %552 = arith.addf %550, %551 : vector<2x32xf32>
    %553 = math.tanh %552 : vector<2x32xf32>
    %554 = arith.mulf %549, %553 : vector<2x32xf32>
    %555 = vector.extract_strided_slice %18 {offsets = [12, 0], sizes = [2, 128], strides = [1, 1]} : vector<18x128xf32> to vector<2x128xf32>
    %556 = arith.addf %555, %16 : vector<2x128xf32>
    %cst_140 = arith.constant dense<0.000000e+00> : vector<2x128xf32>
    %557 = tpu.matmul %554, %30, %cst_140 {dimension_numbers = #tpu.dot_dimension_numbers<[1], [0], [0], [1], [0, 0, 1, 1], [], []>} : vector<2x32xf32>, vector<32x128xf32>, vector<2x128xf32> -> vector<2x128xf32>
    %558 = arith.addf %556, %557 : vector<2x128xf32>
    %cst_141 = arith.constant dense<0.000000e+00> : vector<2x128xf32>
    %559 = tpu.matmul %499, %31, %cst_141 {dimension_numbers = #tpu.dot_dimension_numbers<[1], [0], [0], [1], [0, 0, 1, 1], [], []>} : vector<2x32xf32>, vector<32x128xf32>, vector<2x128xf32> -> vector<2x128xf32>
    %560 = arith.addf %558, %559 : vector<2x128xf32>
    %561 = vector.extract_strided_slice %560 {offsets = [0, 0], sizes = [2, 32], strides = [1, 1]} : vector<2x128xf32> to vector<2x32xf32>
    %562 = arith.negf %561 : vector<2x32xf32>
    %563 = math.exp %562 : vector<2x32xf32>
    %cst_142 = arith.constant 1.000000e+00 : f32
    %564 = vector.broadcast %cst_142 : f32 to vector<2x32xf32>
    %565 = arith.addf %564, %563 : vector<2x32xf32>
    %566 = arith.divf %564, %565 : vector<2x32xf32>
    %567 = vector.extract_strided_slice %560 {offsets = [0, 32], sizes = [2, 32], strides = [1, 1]} : vector<2x128xf32> to vector<2x32xf32>
    %568 = arith.negf %567 : vector<2x32xf32>
    %569 = math.exp %568 : vector<2x32xf32>
    %cst_143 = arith.constant 1.000000e+00 : f32
    %570 = vector.broadcast %cst_143 : f32 to vector<2x32xf32>
    %571 = arith.addf %570, %569 : vector<2x32xf32>
    %572 = arith.divf %570, %571 : vector<2x32xf32>
    %573 = vector.extract_strided_slice %560 {offsets = [0, 64], sizes = [2, 32], strides = [1, 1]} : vector<2x128xf32> to vector<2x32xf32>
    %574 = math.tanh %573 : vector<2x32xf32>
    %575 = vector.extract_strided_slice %560 {offsets = [0, 96], sizes = [2, 32], strides = [1, 1]} : vector<2x128xf32> to vector<2x32xf32>
    %576 = arith.negf %575 : vector<2x32xf32>
    %577 = math.exp %576 : vector<2x32xf32>
    %cst_144 = arith.constant 1.000000e+00 : f32
    %578 = vector.broadcast %cst_144 : f32 to vector<2x32xf32>
    %579 = arith.addf %578, %577 : vector<2x32xf32>
    %580 = arith.divf %578, %579 : vector<2x32xf32>
    %581 = arith.mulf %572, %497 : vector<2x32xf32>
    %582 = arith.mulf %566, %574 : vector<2x32xf32>
    %583 = arith.addf %581, %582 : vector<2x32xf32>
    %584 = math.tanh %583 : vector<2x32xf32>
    %585 = arith.mulf %580, %584 : vector<2x32xf32>
    %cst_145 = arith.constant dense<0.000000e+00> : vector<2x32xf32>
    %586 = tpu.matmul %585, %36, %cst_145 {dimension_numbers = #tpu.dot_dimension_numbers<[1], [0], [0], [1], [0, 0, 1, 1], [], []>} : vector<2x32xf32>, vector<32x32xf32>, vector<2x32xf32> -> vector<2x32xf32>
    %587 = vector.broadcast %37 : vector<1x32xf32> to vector<2x32xf32>
    %588 = arith.addf %586, %587 : vector<2x32xf32>
    %589 = vector.shape_cast %588 : vector<2x32xf32> to vector<2x1x32xf32>
    %590 = vector.broadcast %589 : vector<2x1x32xf32> to vector<2x15x32xf32>
    %591 = arith.addf %590, %11 : vector<2x15x32xf32>
    %592 = math.tanh %591 : vector<2x15x32xf32>
    %593 = arith.mulf %592, %22 : vector<2x15x32xf32>
    %cst_146 = arith.constant dense<0.000000e+00> : vector<2x15xf32>
    %594 = vector.multi_reduction <add>, %593, %cst_146 [2] : vector<2x15x32xf32> to vector<2x15xf32>
    %595 = arith.addf %594, %29 : vector<2x15xf32>
    %cst_147 = arith.constant dense<0xFF800000> : vector<2xf32>
    %596 = vector.multi_reduction <maximumf>, %595, %cst_147 [1] : vector<2x15xf32> to vector<2xf32>
    %597 = vector.shape_cast %596 : vector<2xf32> to vector<2x1xf32>
    %598 = vector.broadcast %597 : vector<2x1xf32> to vector<2x15xf32>
    %599 = arith.subf %595, %598 : vector<2x15xf32>
    %600 = math.exp %599 : vector<2x15xf32>
    %cst_148 = arith.constant dense<0.000000e+00> : vector<2xf32>
    %601 = vector.multi_reduction <add>, %600, %cst_148 [1] : vector<2x15xf32> to vector<2xf32>
    %602 = vector.shape_cast %601 : vector<2xf32> to vector<2x1xf32>
    %603 = tpu.reciprocal %602 {approx = true} : vector<2x1xf32> -> vector<2x1xf32>
    %604 = vector.broadcast %603 : vector<2x1xf32> to vector<2x15xf32>
    %605 = arith.mulf %600, %604 : vector<2x15xf32>
    %606 = vector.shape_cast %605 : vector<2x15xf32> to vector<2x1x15xf32>
    "tpu.trace_start"() <{level = 10 : i32, message = "bqn,bne->bqe"}> : () -> ()
    %cst_149 = arith.constant dense<0.000000e+00> : vector<2x1x32xf32>
    %607 = tpu.matmul %606, %1, %cst_149 {dimension_numbers = #tpu.dot_dimension_numbers<[2], [1], [1], [2], [0, 0, 0, 1, 1, 2], [0], [0]>} : vector<2x1x15xf32>, vector<2x15x32xf32>, vector<2x1x32xf32> -> vector<2x1x32xf32>
    "tpu.trace_stop"() : () -> ()
    %608 = vector.shape_cast %607 : vector<2x1x32xf32> to vector<2x32xf32>
    %cst_150 = arith.constant dense<0.000000e+00> : vector<2x128xf32>
    %609 = tpu.matmul %608, %32, %cst_150 {dimension_numbers = #tpu.dot_dimension_numbers<[1], [0], [0], [1], [0, 0, 1, 1], [], []>} : vector<2x32xf32>, vector<32x128xf32>, vector<2x128xf32> -> vector<2x128xf32>
    %cst_151 = arith.constant dense<0.000000e+00> : vector<2x128xf32>
    %610 = tpu.matmul %585, %33, %cst_151 {dimension_numbers = #tpu.dot_dimension_numbers<[1], [0], [0], [1], [0, 0, 1, 1], [], []>} : vector<2x32xf32>, vector<32x128xf32>, vector<2x128xf32> -> vector<2x128xf32>
    %611 = arith.addf %609, %610 : vector<2x128xf32>
    %cst_152 = arith.constant dense<0.000000e+00> : vector<2x128xf32>
    %612 = tpu.matmul %554, %34, %cst_152 {dimension_numbers = #tpu.dot_dimension_numbers<[1], [0], [0], [1], [0, 0, 1, 1], [], []>} : vector<2x32xf32>, vector<32x128xf32>, vector<2x128xf32> -> vector<2x128xf32>
    %613 = arith.addf %611, %612 : vector<2x128xf32>
    %614 = vector.broadcast %35 : vector<1x128xf32> to vector<2x128xf32>
    %615 = arith.addf %613, %614 : vector<2x128xf32>
    %616 = vector.extract_strided_slice %615 {offsets = [0, 0], sizes = [2, 32], strides = [1, 1]} : vector<2x128xf32> to vector<2x32xf32>
    %617 = arith.negf %616 : vector<2x32xf32>
    %618 = math.exp %617 : vector<2x32xf32>
    %cst_153 = arith.constant 1.000000e+00 : f32
    %619 = vector.broadcast %cst_153 : f32 to vector<2x32xf32>
    %620 = arith.addf %619, %618 : vector<2x32xf32>
    %621 = arith.divf %619, %620 : vector<2x32xf32>
    %622 = vector.extract_strided_slice %615 {offsets = [0, 32], sizes = [2, 32], strides = [1, 1]} : vector<2x128xf32> to vector<2x32xf32>
    %623 = arith.negf %622 : vector<2x32xf32>
    %624 = math.exp %623 : vector<2x32xf32>
    %cst_154 = arith.constant 1.000000e+00 : f32
    %625 = vector.broadcast %cst_154 : f32 to vector<2x32xf32>
    %626 = arith.addf %625, %624 : vector<2x32xf32>
    %627 = arith.divf %625, %626 : vector<2x32xf32>
    %628 = vector.extract_strided_slice %615 {offsets = [0, 64], sizes = [2, 32], strides = [1, 1]} : vector<2x128xf32> to vector<2x32xf32>
    %629 = math.tanh %628 : vector<2x32xf32>
    %630 = vector.extract_strided_slice %615 {offsets = [0, 96], sizes = [2, 32], strides = [1, 1]} : vector<2x128xf32> to vector<2x32xf32>
    %631 = arith.negf %630 : vector<2x32xf32>
    %632 = math.exp %631 : vector<2x32xf32>
    %cst_155 = arith.constant 1.000000e+00 : f32
    %633 = vector.broadcast %cst_155 : f32 to vector<2x32xf32>
    %634 = arith.addf %633, %632 : vector<2x32xf32>
    %635 = arith.divf %633, %634 : vector<2x32xf32>
    %636 = arith.mulf %627, %552 : vector<2x32xf32>
    %637 = arith.mulf %621, %629 : vector<2x32xf32>
    %638 = arith.addf %636, %637 : vector<2x32xf32>
    %639 = math.tanh %638 : vector<2x32xf32>
    %640 = arith.mulf %635, %639 : vector<2x32xf32>
    %641 = vector.extract_strided_slice %18 {offsets = [14, 0], sizes = [2, 128], strides = [1, 1]} : vector<18x128xf32> to vector<2x128xf32>
    %642 = arith.addf %641, %16 : vector<2x128xf32>
    %cst_156 = arith.constant dense<0.000000e+00> : vector<2x128xf32>
    %643 = tpu.matmul %640, %30, %cst_156 {dimension_numbers = #tpu.dot_dimension_numbers<[1], [0], [0], [1], [0, 0, 1, 1], [], []>} : vector<2x32xf32>, vector<32x128xf32>, vector<2x128xf32> -> vector<2x128xf32>
    %644 = arith.addf %642, %643 : vector<2x128xf32>
    %cst_157 = arith.constant dense<0.000000e+00> : vector<2x128xf32>
    %645 = tpu.matmul %585, %31, %cst_157 {dimension_numbers = #tpu.dot_dimension_numbers<[1], [0], [0], [1], [0, 0, 1, 1], [], []>} : vector<2x32xf32>, vector<32x128xf32>, vector<2x128xf32> -> vector<2x128xf32>
    %646 = arith.addf %644, %645 : vector<2x128xf32>
    %647 = vector.extract_strided_slice %646 {offsets = [0, 0], sizes = [2, 32], strides = [1, 1]} : vector<2x128xf32> to vector<2x32xf32>
    %648 = arith.negf %647 : vector<2x32xf32>
    %649 = math.exp %648 : vector<2x32xf32>
    %cst_158 = arith.constant 1.000000e+00 : f32
    %650 = vector.broadcast %cst_158 : f32 to vector<2x32xf32>
    %651 = arith.addf %650, %649 : vector<2x32xf32>
    %652 = arith.divf %650, %651 : vector<2x32xf32>
    %653 = vector.extract_strided_slice %646 {offsets = [0, 32], sizes = [2, 32], strides = [1, 1]} : vector<2x128xf32> to vector<2x32xf32>
    %654 = arith.negf %653 : vector<2x32xf32>
    %655 = math.exp %654 : vector<2x32xf32>
    %cst_159 = arith.constant 1.000000e+00 : f32
    %656 = vector.broadcast %cst_159 : f32 to vector<2x32xf32>
    %657 = arith.addf %656, %655 : vector<2x32xf32>
    %658 = arith.divf %656, %657 : vector<2x32xf32>
    %659 = vector.extract_strided_slice %646 {offsets = [0, 64], sizes = [2, 32], strides = [1, 1]} : vector<2x128xf32> to vector<2x32xf32>
    %660 = math.tanh %659 : vector<2x32xf32>
    %661 = vector.extract_strided_slice %646 {offsets = [0, 96], sizes = [2, 32], strides = [1, 1]} : vector<2x128xf32> to vector<2x32xf32>
    %662 = arith.negf %661 : vector<2x32xf32>
    %663 = math.exp %662 : vector<2x32xf32>
    %cst_160 = arith.constant 1.000000e+00 : f32
    %664 = vector.broadcast %cst_160 : f32 to vector<2x32xf32>
    %665 = arith.addf %664, %663 : vector<2x32xf32>
    %666 = arith.divf %664, %665 : vector<2x32xf32>
    %667 = arith.mulf %658, %583 : vector<2x32xf32>
    %668 = arith.mulf %652, %660 : vector<2x32xf32>
    %669 = arith.addf %667, %668 : vector<2x32xf32>
    %670 = math.tanh %669 : vector<2x32xf32>
    %671 = arith.mulf %666, %670 : vector<2x32xf32>
    %cst_161 = arith.constant dense<0.000000e+00> : vector<2x32xf32>
    %672 = tpu.matmul %671, %36, %cst_161 {dimension_numbers = #tpu.dot_dimension_numbers<[1], [0], [0], [1], [0, 0, 1, 1], [], []>} : vector<2x32xf32>, vector<32x32xf32>, vector<2x32xf32> -> vector<2x32xf32>
    %673 = vector.broadcast %37 : vector<1x32xf32> to vector<2x32xf32>
    %674 = arith.addf %672, %673 : vector<2x32xf32>
    %675 = vector.shape_cast %674 : vector<2x32xf32> to vector<2x1x32xf32>
    %676 = vector.broadcast %675 : vector<2x1x32xf32> to vector<2x15x32xf32>
    %677 = arith.addf %676, %11 : vector<2x15x32xf32>
    %678 = math.tanh %677 : vector<2x15x32xf32>
    %679 = arith.mulf %678, %22 : vector<2x15x32xf32>
    %cst_162 = arith.constant dense<0.000000e+00> : vector<2x15xf32>
    %680 = vector.multi_reduction <add>, %679, %cst_162 [2] : vector<2x15x32xf32> to vector<2x15xf32>
    %681 = arith.addf %680, %29 : vector<2x15xf32>
    %cst_163 = arith.constant dense<0xFF800000> : vector<2xf32>
    %682 = vector.multi_reduction <maximumf>, %681, %cst_163 [1] : vector<2x15xf32> to vector<2xf32>
    %683 = vector.shape_cast %682 : vector<2xf32> to vector<2x1xf32>
    %684 = vector.broadcast %683 : vector<2x1xf32> to vector<2x15xf32>
    %685 = arith.subf %681, %684 : vector<2x15xf32>
    %686 = math.exp %685 : vector<2x15xf32>
    %cst_164 = arith.constant dense<0.000000e+00> : vector<2xf32>
    %687 = vector.multi_reduction <add>, %686, %cst_164 [1] : vector<2x15xf32> to vector<2xf32>
    %688 = vector.shape_cast %687 : vector<2xf32> to vector<2x1xf32>
    %689 = tpu.reciprocal %688 {approx = true} : vector<2x1xf32> -> vector<2x1xf32>
    %690 = vector.broadcast %689 : vector<2x1xf32> to vector<2x15xf32>
    %691 = arith.mulf %686, %690 : vector<2x15xf32>
    %692 = vector.shape_cast %691 : vector<2x15xf32> to vector<2x1x15xf32>
    "tpu.trace_start"() <{level = 10 : i32, message = "bqn,bne->bqe"}> : () -> ()
    %cst_165 = arith.constant dense<0.000000e+00> : vector<2x1x32xf32>
    %693 = tpu.matmul %692, %1, %cst_165 {dimension_numbers = #tpu.dot_dimension_numbers<[2], [1], [1], [2], [0, 0, 0, 1, 1, 2], [0], [0]>} : vector<2x1x15xf32>, vector<2x15x32xf32>, vector<2x1x32xf32> -> vector<2x1x32xf32>
    "tpu.trace_stop"() : () -> ()
    %694 = vector.shape_cast %693 : vector<2x1x32xf32> to vector<2x32xf32>
    %cst_166 = arith.constant dense<0.000000e+00> : vector<2x128xf32>
    %695 = tpu.matmul %694, %32, %cst_166 {dimension_numbers = #tpu.dot_dimension_numbers<[1], [0], [0], [1], [0, 0, 1, 1], [], []>} : vector<2x32xf32>, vector<32x128xf32>, vector<2x128xf32> -> vector<2x128xf32>
    %cst_167 = arith.constant dense<0.000000e+00> : vector<2x128xf32>
    %696 = tpu.matmul %671, %33, %cst_167 {dimension_numbers = #tpu.dot_dimension_numbers<[1], [0], [0], [1], [0, 0, 1, 1], [], []>} : vector<2x32xf32>, vector<32x128xf32>, vector<2x128xf32> -> vector<2x128xf32>
    %697 = arith.addf %695, %696 : vector<2x128xf32>
    %cst_168 = arith.constant dense<0.000000e+00> : vector<2x128xf32>
    %698 = tpu.matmul %640, %34, %cst_168 {dimension_numbers = #tpu.dot_dimension_numbers<[1], [0], [0], [1], [0, 0, 1, 1], [], []>} : vector<2x32xf32>, vector<32x128xf32>, vector<2x128xf32> -> vector<2x128xf32>
    %699 = arith.addf %697, %698 : vector<2x128xf32>
    %700 = vector.broadcast %35 : vector<1x128xf32> to vector<2x128xf32>
    %701 = arith.addf %699, %700 : vector<2x128xf32>
    %702 = vector.extract_strided_slice %701 {offsets = [0, 0], sizes = [2, 32], strides = [1, 1]} : vector<2x128xf32> to vector<2x32xf32>
    %703 = arith.negf %702 : vector<2x32xf32>
    %704 = math.exp %703 : vector<2x32xf32>
    %cst_169 = arith.constant 1.000000e+00 : f32
    %705 = vector.broadcast %cst_169 : f32 to vector<2x32xf32>
    %706 = arith.addf %705, %704 : vector<2x32xf32>
    %707 = arith.divf %705, %706 : vector<2x32xf32>
    %708 = vector.extract_strided_slice %701 {offsets = [0, 32], sizes = [2, 32], strides = [1, 1]} : vector<2x128xf32> to vector<2x32xf32>
    %709 = arith.negf %708 : vector<2x32xf32>
    %710 = math.exp %709 : vector<2x32xf32>
    %cst_170 = arith.constant 1.000000e+00 : f32
    %711 = vector.broadcast %cst_170 : f32 to vector<2x32xf32>
    %712 = arith.addf %711, %710 : vector<2x32xf32>
    %713 = arith.divf %711, %712 : vector<2x32xf32>
    %714 = vector.extract_strided_slice %701 {offsets = [0, 64], sizes = [2, 32], strides = [1, 1]} : vector<2x128xf32> to vector<2x32xf32>
    %715 = math.tanh %714 : vector<2x32xf32>
    %716 = vector.extract_strided_slice %701 {offsets = [0, 96], sizes = [2, 32], strides = [1, 1]} : vector<2x128xf32> to vector<2x32xf32>
    %717 = arith.negf %716 : vector<2x32xf32>
    %718 = math.exp %717 : vector<2x32xf32>
    %cst_171 = arith.constant 1.000000e+00 : f32
    %719 = vector.broadcast %cst_171 : f32 to vector<2x32xf32>
    %720 = arith.addf %719, %718 : vector<2x32xf32>
    %721 = arith.divf %719, %720 : vector<2x32xf32>
    %722 = arith.mulf %713, %638 : vector<2x32xf32>
    %723 = arith.mulf %707, %715 : vector<2x32xf32>
    %724 = arith.addf %722, %723 : vector<2x32xf32>
    %725 = math.tanh %724 : vector<2x32xf32>
    %726 = arith.mulf %721, %725 : vector<2x32xf32>
    %727 = vector.extract_strided_slice %18 {offsets = [16, 0], sizes = [2, 128], strides = [1, 1]} : vector<18x128xf32> to vector<2x128xf32>
    %728 = arith.addf %727, %16 : vector<2x128xf32>
    %cst_172 = arith.constant dense<0.000000e+00> : vector<2x128xf32>
    %729 = tpu.matmul %726, %30, %cst_172 {dimension_numbers = #tpu.dot_dimension_numbers<[1], [0], [0], [1], [0, 0, 1, 1], [], []>} : vector<2x32xf32>, vector<32x128xf32>, vector<2x128xf32> -> vector<2x128xf32>
    %730 = arith.addf %728, %729 : vector<2x128xf32>
    %cst_173 = arith.constant dense<0.000000e+00> : vector<2x128xf32>
    %731 = tpu.matmul %671, %31, %cst_173 {dimension_numbers = #tpu.dot_dimension_numbers<[1], [0], [0], [1], [0, 0, 1, 1], [], []>} : vector<2x32xf32>, vector<32x128xf32>, vector<2x128xf32> -> vector<2x128xf32>
    %732 = arith.addf %730, %731 : vector<2x128xf32>
    %733 = vector.extract_strided_slice %732 {offsets = [0, 0], sizes = [2, 32], strides = [1, 1]} : vector<2x128xf32> to vector<2x32xf32>
    %734 = arith.negf %733 : vector<2x32xf32>
    %735 = math.exp %734 : vector<2x32xf32>
    %cst_174 = arith.constant 1.000000e+00 : f32
    %736 = vector.broadcast %cst_174 : f32 to vector<2x32xf32>
    %737 = arith.addf %736, %735 : vector<2x32xf32>
    %738 = arith.divf %736, %737 : vector<2x32xf32>
    %739 = vector.extract_strided_slice %732 {offsets = [0, 32], sizes = [2, 32], strides = [1, 1]} : vector<2x128xf32> to vector<2x32xf32>
    %740 = arith.negf %739 : vector<2x32xf32>
    %741 = math.exp %740 : vector<2x32xf32>
    %cst_175 = arith.constant 1.000000e+00 : f32
    %742 = vector.broadcast %cst_175 : f32 to vector<2x32xf32>
    %743 = arith.addf %742, %741 : vector<2x32xf32>
    %744 = arith.divf %742, %743 : vector<2x32xf32>
    %745 = vector.extract_strided_slice %732 {offsets = [0, 64], sizes = [2, 32], strides = [1, 1]} : vector<2x128xf32> to vector<2x32xf32>
    %746 = math.tanh %745 : vector<2x32xf32>
    %747 = vector.extract_strided_slice %732 {offsets = [0, 96], sizes = [2, 32], strides = [1, 1]} : vector<2x128xf32> to vector<2x32xf32>
    %748 = arith.negf %747 : vector<2x32xf32>
    %749 = math.exp %748 : vector<2x32xf32>
    %cst_176 = arith.constant 1.000000e+00 : f32
    %750 = vector.broadcast %cst_176 : f32 to vector<2x32xf32>
    %751 = arith.addf %750, %749 : vector<2x32xf32>
    %752 = arith.divf %750, %751 : vector<2x32xf32>
    %753 = arith.mulf %744, %669 : vector<2x32xf32>
    %754 = arith.mulf %738, %746 : vector<2x32xf32>
    %755 = arith.addf %753, %754 : vector<2x32xf32>
    %756 = math.tanh %755 : vector<2x32xf32>
    %757 = arith.mulf %752, %756 : vector<2x32xf32>
    %cst_177 = arith.constant dense<0.000000e+00> : vector<2x32xf32>
    %758 = tpu.matmul %757, %36, %cst_177 {dimension_numbers = #tpu.dot_dimension_numbers<[1], [0], [0], [1], [0, 0, 1, 1], [], []>} : vector<2x32xf32>, vector<32x32xf32>, vector<2x32xf32> -> vector<2x32xf32>
    %759 = vector.broadcast %37 : vector<1x32xf32> to vector<2x32xf32>
    %760 = arith.addf %758, %759 : vector<2x32xf32>
    %761 = vector.shape_cast %760 : vector<2x32xf32> to vector<2x1x32xf32>
    %762 = vector.broadcast %761 : vector<2x1x32xf32> to vector<2x15x32xf32>
    %763 = arith.addf %762, %11 : vector<2x15x32xf32>
    %764 = math.tanh %763 : vector<2x15x32xf32>
    %765 = arith.mulf %764, %22 : vector<2x15x32xf32>
    %cst_178 = arith.constant dense<0.000000e+00> : vector<2x15xf32>
    %766 = vector.multi_reduction <add>, %765, %cst_178 [2] : vector<2x15x32xf32> to vector<2x15xf32>
    %767 = arith.addf %766, %29 : vector<2x15xf32>
    %cst_179 = arith.constant dense<0xFF800000> : vector<2xf32>
    %768 = vector.multi_reduction <maximumf>, %767, %cst_179 [1] : vector<2x15xf32> to vector<2xf32>
    %769 = vector.shape_cast %768 : vector<2xf32> to vector<2x1xf32>
    %770 = vector.broadcast %769 : vector<2x1xf32> to vector<2x15xf32>
    %771 = arith.subf %767, %770 : vector<2x15xf32>
    %772 = math.exp %771 : vector<2x15xf32>
    %cst_180 = arith.constant dense<0.000000e+00> : vector<2xf32>
    %773 = vector.multi_reduction <add>, %772, %cst_180 [1] : vector<2x15xf32> to vector<2xf32>
    %774 = vector.shape_cast %773 : vector<2xf32> to vector<2x1xf32>
    %775 = tpu.reciprocal %774 {approx = true} : vector<2x1xf32> -> vector<2x1xf32>
    %776 = vector.broadcast %775 : vector<2x1xf32> to vector<2x15xf32>
    %777 = arith.mulf %772, %776 : vector<2x15xf32>
    %778 = vector.shape_cast %777 : vector<2x15xf32> to vector<2x1x15xf32>
    "tpu.trace_start"() <{level = 10 : i32, message = "bqn,bne->bqe"}> : () -> ()
    %cst_181 = arith.constant dense<0.000000e+00> : vector<2x1x32xf32>
    %779 = tpu.matmul %778, %1, %cst_181 {dimension_numbers = #tpu.dot_dimension_numbers<[2], [1], [1], [2], [0, 0, 0, 1, 1, 2], [0], [0]>} : vector<2x1x15xf32>, vector<2x15x32xf32>, vector<2x1x32xf32> -> vector<2x1x32xf32>
    "tpu.trace_stop"() : () -> ()
    %780 = vector.shape_cast %779 : vector<2x1x32xf32> to vector<2x32xf32>
    %cst_182 = arith.constant dense<0.000000e+00> : vector<2x128xf32>
    %781 = tpu.matmul %780, %32, %cst_182 {dimension_numbers = #tpu.dot_dimension_numbers<[1], [0], [0], [1], [0, 0, 1, 1], [], []>} : vector<2x32xf32>, vector<32x128xf32>, vector<2x128xf32> -> vector<2x128xf32>
    %cst_183 = arith.constant dense<0.000000e+00> : vector<2x128xf32>
    %782 = tpu.matmul %757, %33, %cst_183 {dimension_numbers = #tpu.dot_dimension_numbers<[1], [0], [0], [1], [0, 0, 1, 1], [], []>} : vector<2x32xf32>, vector<32x128xf32>, vector<2x128xf32> -> vector<2x128xf32>
    %783 = arith.addf %781, %782 : vector<2x128xf32>
    %cst_184 = arith.constant dense<0.000000e+00> : vector<2x128xf32>
    %784 = tpu.matmul %726, %34, %cst_184 {dimension_numbers = #tpu.dot_dimension_numbers<[1], [0], [0], [1], [0, 0, 1, 1], [], []>} : vector<2x32xf32>, vector<32x128xf32>, vector<2x128xf32> -> vector<2x128xf32>
    %785 = arith.addf %783, %784 : vector<2x128xf32>
    %786 = vector.broadcast %35 : vector<1x128xf32> to vector<2x128xf32>
    %787 = arith.addf %785, %786 : vector<2x128xf32>
    %788 = vector.extract_strided_slice %787 {offsets = [0, 0], sizes = [2, 32], strides = [1, 1]} : vector<2x128xf32> to vector<2x32xf32>
    %789 = arith.negf %788 : vector<2x32xf32>
    %790 = math.exp %789 : vector<2x32xf32>
    %cst_185 = arith.constant 1.000000e+00 : f32
    %791 = vector.broadcast %cst_185 : f32 to vector<2x32xf32>
    %792 = arith.addf %791, %790 : vector<2x32xf32>
    %793 = arith.divf %791, %792 : vector<2x32xf32>
    %794 = vector.extract_strided_slice %787 {offsets = [0, 32], sizes = [2, 32], strides = [1, 1]} : vector<2x128xf32> to vector<2x32xf32>
    %795 = arith.negf %794 : vector<2x32xf32>
    %796 = math.exp %795 : vector<2x32xf32>
    %cst_186 = arith.constant 1.000000e+00 : f32
    %797 = vector.broadcast %cst_186 : f32 to vector<2x32xf32>
    %798 = arith.addf %797, %796 : vector<2x32xf32>
    %799 = arith.divf %797, %798 : vector<2x32xf32>
    %800 = vector.extract_strided_slice %787 {offsets = [0, 64], sizes = [2, 32], strides = [1, 1]} : vector<2x128xf32> to vector<2x32xf32>
    %801 = math.tanh %800 : vector<2x32xf32>
    %802 = vector.extract_strided_slice %787 {offsets = [0, 96], sizes = [2, 32], strides = [1, 1]} : vector<2x128xf32> to vector<2x32xf32>
    %803 = arith.negf %802 : vector<2x32xf32>
    %804 = math.exp %803 : vector<2x32xf32>
    %cst_187 = arith.constant 1.000000e+00 : f32
    %805 = vector.broadcast %cst_187 : f32 to vector<2x32xf32>
    %806 = arith.addf %805, %804 : vector<2x32xf32>
    %807 = arith.divf %805, %806 : vector<2x32xf32>
    %808 = arith.mulf %799, %724 : vector<2x32xf32>
    %809 = arith.mulf %793, %801 : vector<2x32xf32>
    %810 = arith.addf %808, %809 : vector<2x32xf32>
    %811 = math.tanh %810 : vector<2x32xf32>
    %812 = arith.mulf %807, %811 : vector<2x32xf32>
    %813 = vector.shape_cast %124 : vector<2x32xf32> to vector<2x1x32xf32>
    %814 = vector.shape_cast %210 : vector<2x32xf32> to vector<2x1x32xf32>
    %815 = vector.shape_cast %296 : vector<2x32xf32> to vector<2x1x32xf32>
    %816 = vector.shape_cast %382 : vector<2x32xf32> to vector<2x1x32xf32>
    %817 = vector.shape_cast %468 : vector<2x32xf32> to vector<2x1x32xf32>
    %818 = vector.shape_cast %554 : vector<2x32xf32> to vector<2x1x32xf32>
    %819 = vector.shape_cast %640 : vector<2x32xf32> to vector<2x1x32xf32>
    %820 = vector.shape_cast %726 : vector<2x32xf32> to vector<2x1x32xf32>
    %821 = vector.shape_cast %812 : vector<2x32xf32> to vector<2x1x32xf32>
    %822 = tpu.concatenate %813, %814, %815, %816, %817, %818, %819, %820, %821 in 1 : vector<2x1x32xf32>, vector<2x1x32xf32>, vector<2x1x32xf32>, vector<2x1x32xf32>, vector<2x1x32xf32>, vector<2x1x32xf32>, vector<2x1x32xf32>, vector<2x1x32xf32>, vector<2x1x32xf32> -> vector<2x9x32xf32>
    %c0_188 = arith.constant 0 : index
    %c0_189 = arith.constant 0 : index
    %c0_190 = arith.constant 0 : index
    %823 = vector.load %arg24[%c0_188, %c0_189, %c0_190] : memref<2x9x32xf32, #tpu.memory_space<vmem>>, vector<2x9x32xf32>
    tpu.vector_store %arg24[%c0_188, %c0_189, %c0_190], %822 {strides = array<i32>} : memref<2x9x32xf32, #tpu.memory_space<vmem>>, vector<2x9x32xf32>,
    %c0_191 = arith.constant 0 : index
    %c0_192 = arith.constant 0 : index
    %824 = vector.load %arg19[%c0_191, %c0_192] : memref<32x32xf32, #tpu.memory_space<vmem>>, vector<32x32xf32>
    %cst_193 = arith.constant dense<0.000000e+00> : vector<30x32xf32>
    %825 = tpu.matmul %2, %824, %cst_193 {dimension_numbers = #tpu.dot_dimension_numbers<[1], [0], [0], [1], [0, 0, 1, 1], [], []>} : vector<30x32xf32>, vector<32x32xf32>, vector<30x32xf32> -> vector<30x32xf32>
    %c0_194 = arith.constant 0 : index
    %c0_195 = arith.constant 0 : index
    %826 = vector.load %arg20[%c0_194, %c0_195] : memref<1x32xf32, #tpu.memory_space<vmem>>, vector<1x32xf32>
    %827 = vector.broadcast %826 : vector<1x32xf32> to vector<30x32xf32>
    %828 = arith.addf %825, %827 : vector<30x32xf32>
    %829 = vector.shape_cast %828 : vector<30x32xf32> to vector<2x15x32xf32>
    %c0_196 = arith.constant 0 : index
    %c0_197 = arith.constant 0 : index
    %830 = vector.load %arg23[%c0_196, %c0_197] : memref<1x32xf32, #tpu.memory_space<vmem>>, vector<1x32xf32>
    %831 = vector.shape_cast %830 : vector<1x32xf32> to vector<1x1x32xf32>
    %832 = vector.shape_cast %831 : vector<1x1x32xf32> to vector<1x1x32xf32>
    %833 = vector.broadcast %832 : vector<1x1x32xf32> to vector<2x1x32xf32>
    %834 = tpu.concatenate %833, %829 in 1 : vector<2x1x32xf32>, vector<2x15x32xf32> -> vector<2x16x32xf32>
    %835 = vector.shape_cast %822 : vector<2x9x32xf32> to vector<18x32xf32>
    %c0_198 = arith.constant 0 : index
    %c0_199 = arith.constant 0 : index
    %836 = vector.load %arg21[%c0_198, %c0_199] : memref<32x32xf32, #tpu.memory_space<vmem>>, vector<32x32xf32>
    %cst_200 = arith.constant dense<0.000000e+00> : vector<18x32xf32>
    %837 = tpu.matmul %835, %836, %cst_200 {dimension_numbers = #tpu.dot_dimension_numbers<[1], [0], [0], [1], [0, 0, 1, 1], [], []>} : vector<18x32xf32>, vector<32x32xf32>, vector<18x32xf32> -> vector<18x32xf32>
    %c0_201 = arith.constant 0 : index
    %c0_202 = arith.constant 0 : index
    %838 = vector.load %arg22[%c0_201, %c0_202] : memref<1x32xf32, #tpu.memory_space<vmem>>, vector<1x32xf32>
    %839 = vector.broadcast %838 : vector<1x32xf32> to vector<18x32xf32>
    %840 = arith.addf %837, %839 : vector<18x32xf32>
    %841 = vector.shape_cast %840 : vector<18x32xf32> to vector<2x9x32xf32>
    "tpu.trace_start"() <{level = 10 : i32, message = "ble,bne->bln"}> : () -> ()
    %cst_203 = arith.constant dense<0.000000e+00> : vector<2x9x16xf32>
    %842 = tpu.matmul %841, %834, %cst_203 {dimension_numbers = #tpu.dot_dimension_numbers<[2], [2], [1], [1], [0, 0, 0, 1, 1, 1], [0], [0]>} : vector<2x9x32xf32>, vector<2x16x32xf32>, vector<2x9x16xf32> -> vector<2x9x16xf32>
    "tpu.trace_stop"() : () -> ()
    %c0_204 = arith.constant 0 : index
    %c0_205 = arith.constant 0 : index
    %c0_206 = arith.constant 0 : index
    %843 = vector.load %arg25[%c0_204, %c0_205, %c0_206] : memref<2x9x16xf32, #tpu.memory_space<vmem>>, vector<2x9x16xf32>
    tpu.vector_store %arg25[%c0_204, %c0_205, %c0_206], %842 {strides = array<i32>} : memref<2x9x16xf32, #tpu.memory_space<vmem>>, vector<2x9x16xf32>,
    return
  }
}

</mosaic_0001>

<llo_original>
// kernel: tpu_custom_call.1
$region0: #{tpu_custom_call.1}
  #allocation0 [shape = 'u32[]', space=smem, size = 0x4, offset = 0x4, fixed_abs, tag = 'smem constant byte address 0x4 - core index']
  #allocation1 [shape = 'u32[144,128]{1,0:T(1,128)}', space=vmem, size = 0x12000, scoped, tag = 'internal scratch']
  #allocation2 [shape = 'f32[1,1]{1,0:T(1,128)S(1)}', space=vmem, size = 0x200, scoped, tag = 'scoped memory for tpu_custom_call.1']
  %s0 = inlined_call_operand.hbm [shape: f32[2,32], index: 0, kind: input, shape index: {}]
  %s1 = inlined_call_operand.vmem [shape: f32[2,15,32], index: 1, kind: input, shape index: {}]
  %s2 = inlined_call_operand.hbm [shape: f32[9,2,32], index: 2, kind: input, shape index: {}]
  %s3 = inlined_call_operand.hbm [shape: f32[2,15], index: 3, kind: input, shape index: {}]
  %s4 = inlined_call_operand.vmem [shape: f32[32,32], index: 4, kind: input, shape index: {}]
  %s5 = inlined_call_operand.hbm [shape: f32[1,32], index: 5, kind: input, shape index: {}]
  %s6 = inlined_call_operand.vmem [shape: f32[32,128], index: 6, kind: input, shape index: {}]
  %s7 = inlined_call_operand.hbm [shape: f32[32,128], index: 7, kind: input, shape index: {}]
  %s8 = inlined_call_operand.vmem [shape: f32[32,128], index: 8, kind: input, shape index: {}]
  %s9 = inlined_call_operand.hbm [shape: f32[32,128], index: 9, kind: input, shape index: {}]
  %s10 = inlined_call_operand.vmem [shape: f32[1,128], index: 10, kind: input, shape index: {}]
  %s11 = inlined_call_operand.hbm [shape: f32[32,128], index: 11, kind: input, shape index: {}]
  %s12 = inlined_call_operand.hbm [shape: f32[32,128], index: 12, kind: input, shape index: {}]
  %s13 = inlined_call_operand.hbm [shape: f32[32,128], index: 13, kind: input, shape index: {}]
  %s14 = inlined_call_operand.vmem [shape: f32[1,128], index: 14, kind: input, shape index: {}]
  %s15 = inlined_call_operand.hbm [shape: f32[32,32], index: 15, kind: input, shape index: {}]
  %s16 = inlined_call_operand.hbm [shape: f32[1,32], index: 16, kind: input, shape index: {}]
  %s17 = inlined_call_operand.hbm [shape: f32[1,32], index: 17, kind: input, shape index: {}]
  %s18 = inlined_call_operand.<no memory space> [shape: f32[1,1], index: 18, kind: input, shape index: {}]
  %s19 = inlined_call_operand.vmem [shape: f32[32,32], index: 19, kind: input, shape index: {}]
  %s20 = inlined_call_operand.vmem [shape: f32[1,32], index: 20, kind: input, shape index: {}]
  %s21 = inlined_call_operand.hbm [shape: f32[32,32], index: 21, kind: input, shape index: {}]
  %s22 = inlined_call_operand.vmem [shape: f32[1,32], index: 22, kind: input, shape index: {}]
  %s23 = inlined_call_operand.vmem [shape: f32[1,32], index: 23, kind: input, shape index: {}]
  %s24 = inlined_call_operand.vmem [shape: f32[2,9,32], index: 24, kind: output, shape index: {0}]
  %s25 = inlined_call_operand.vmem [shape: f32[2,9,16], index: 25, kind: output, shape index: {1}]
  %26 = xla_tuple %s24, %s25
  %s27 = sld [smem:[#allocation0]]
  $region166: #{tpu_custom_call.1} parent=0
    _
  %s29 = ssub.s32 1, %s27
  %s30 = scalar_select 0, %s29, %s27
  %v31 = vstv %s18
  %32 = vst [vmem:[#allocation2] sm:$0x1] %v31
  $region1: #{tpu_custom_call.1} parent=0
    #allocation3 [shape = 'u8[1024]{0}', space=vmem, size = 0x400, scoped, tag = 'input window, operand 0, single buffered']
    #allocation4 [shape = 's32[1]{0}', space=sflag, size = 0x4, scoped, tag = 'scoped memory for tpu_custom_call.1']
    #allocation5 [shape = 'u8[9216]{0}', space=vmem, size = 0x2400, scoped, tag = 'input window, operand 2, single buffered']
    #allocation6 [shape = 's32[1]{0}', space=sflag, size = 0x4, scoped, tag = 'scoped memory for tpu_custom_call.1']
    #allocation7 [shape = 'u8[1024]{0}', space=vmem, size = 0x400, scoped, tag = 'input window, operand 3, single buffered']
    #allocation8 [shape = 'u8[512]{0}', space=vmem, size = 0x400, scoped, tag = 'input window, operand 5, single buffered']
    #allocation9 [shape = 's32[1]{0}', space=sflag, size = 0x4, scoped, tag = 'scoped memory for tpu_custom_call.1']
    #allocation10 [shape = 'u8[16384]{0}', space=vmem, size = 0x4000, scoped, tag = 'input window, operand 7, single buffered']
    #allocation11 [shape = 'u8[16384]{0}', space=vmem, size = 0x4000, scoped, tag = 'input window, operand 9, single buffered']
    #allocation12 [shape = 's32[1]{0}', space=sflag, size = 0x4, scoped, tag = 'scoped memory for tpu_custom_call.1']
    #allocation13 [shape = 'u8[16384]{0}', space=vmem, size = 0x4000, scoped, tag = 'input window, operand 11, single buffered']
    #allocation14 [shape = 'u8[16384]{0}', space=vmem, size = 0x4000, scoped, tag = 'input window, operand 12, single buffered']
    #allocation15 [shape = 's32[1]{0}', space=sflag, size = 0x4, scoped, tag = 'scoped memory for tpu_custom_call.1']
    #allocation16 [shape = 'u8[16384]{0}', space=vmem, size = 0x4000, scoped, tag = 'input window, operand 13, single buffered']
    #allocation17 [shape = 'u8[16384]{0}', space=vmem, size = 0x4000, scoped, tag = 'input window, operand 15, single buffered']
    #allocation18 [shape = 's32[1]{0}', space=sflag, size = 0x4, scoped, tag = 'scoped memory for tpu_custom_call.1']
    #allocation19 [shape = 'u8[512]{0}', space=vmem, size = 0x400, scoped, tag = 'input window, operand 16, single buffered']
    #allocation20 [shape = 'u8[512]{0}', space=vmem, size = 0x400, scoped, tag = 'input window, operand 17, single buffered']
    #allocation21 [shape = 's32[1]{0}', space=sflag, size = 0x4, scoped, tag = 'scoped memory for tpu_custom_call.1']
    #allocation22 [shape = 'u8[16384]{0}', space=vmem, size = 0x4000, scoped, tag = 'input window, operand 21, single buffered']
    %33 = vsyncpa [#allocation4], 0
    %34 = vsyncpa [#allocation6], 0
    %35 = vsyncpa [#allocation9], 0
    %36 = vsyncpa [#allocation12], 0
    %37 = vsyncpa [#allocation15], 0
    %38 = vsyncpa [#allocation18], 0
    %39 = vsyncpa [#allocation21], 0
    // Predicated region
    $region2: #{tpu_custom_call.1} parent=1 // pred_check
      _
    $region3: #{tpu_custom_call.1} parent=1 // pred_check_branch
      %41 = sbr.rel (0) target = $region5
    $region4: #{tpu_custom_call.1} parent=1 // pred_region
      %s43 = ssub.s32 32, 32
      %44 = vsyncadd [#allocation4], %s43
      %s46 = sshll.u32 [#allocation3], 4
      %s47 = int_to_ptr.vmem [resolvable:$true] %s46
      %49 = dma.hbm_to_vmem [thread:$0]  %s0, 32, %s47, [#allocation4]
    $region5: #{tpu_custom_call.1} parent=1 // pred_fallthru
      _
    // Predicated region
    $region6: #{tpu_custom_call.1} parent=1 // pred_check
      _
    $region7: #{tpu_custom_call.1} parent=1 // pred_check_branch
      %51 = sbr.rel (0) target = $region9
    $region8: #{tpu_custom_call.1} parent=1 // pred_region
      _
    $region9: #{tpu_custom_call.1} parent=1 // pred_fallthru
      _
    // Predicated region
    $region10: #{tpu_custom_call.1} parent=1 // pred_check
      _
    $region11: #{tpu_custom_call.1} parent=1 // pred_check_branch
      %53 = sbr.rel (0) target = $region13
    $region12: #{tpu_custom_call.1} parent=1 // pred_region
      %s55 = ssub.s32 288, 288
      %56 = vsyncadd [#allocation6], %s55
      %s57 = sshll.u32 [#allocation5], 4
      %s58 = int_to_ptr.vmem [resolvable:$true] %s57
      %63 = dma.hbm_to_vmem [thread:$0]  %s2, 288, %s58, [#allocation6], 32, 32, 2
    $region13: #{tpu_custom_call.1} parent=1 // pred_fallthru
      _
    // Predicated region
    $region14: #{tpu_custom_call.1} parent=1 // pred_check
      _
    $region15: #{tpu_custom_call.1} parent=1 // pred_check_branch
      %65 = sbr.rel (0) target = $region17
    $region16: #{tpu_custom_call.1} parent=1 // pred_region
      %s67 = ssub.s32 32, 32
      %68 = vsyncadd [#allocation6], %s67
      %s70 = sshll.u32 [#allocation7], 4
      %s71 = int_to_ptr.vmem [resolvable:$true] %s70
      %73 = dma.hbm_to_vmem [thread:$0]  %s3, 32, %s71, [#allocation6]
    $region17: #{tpu_custom_call.1} parent=1 // pred_fallthru
      _
    // Predicated region
    $region18: #{tpu_custom_call.1} parent=1 // pred_check
      _
    $region19: #{tpu_custom_call.1} parent=1 // pred_check_branch
      %75 = sbr.rel (0) target = $region21
    $region20: #{tpu_custom_call.1} parent=1 // pred_region
      _
    $region21: #{tpu_custom_call.1} parent=1 // pred_fallthru
      _
    // Predicated region
    $region22: #{tpu_custom_call.1} parent=1 // pred_check
      _
    $region23: #{tpu_custom_call.1} parent=1 // pred_check_branch
      %77 = sbr.rel (0) target = $region25
    $region24: #{tpu_custom_call.1} parent=1 // pred_region
      %s79 = ssub.s32 16, 16
      %80 = vsyncadd [#allocation9], %s79
      %s82 = sshll.u32 [#allocation8], 4
      %s83 = int_to_ptr.vmem [resolvable:$true] %s82
      %85 = dma.hbm_to_vmem [thread:$0]  %s5, 16, %s83, [#allocation9]
    $region25: #{tpu_custom_call.1} parent=1 // pred_fallthru
      _
    // Predicated region
    $region26: #{tpu_custom_call.1} parent=1 // pred_check
      _
    $region27: #{tpu_custom_call.1} parent=1 // pred_check_branch
      %87 = sbr.rel (0) target = $region29
    $region28: #{tpu_custom_call.1} parent=1 // pred_region
      _
    $region29: #{tpu_custom_call.1} parent=1 // pred_fallthru
      _
    // Predicated region
    $region30: #{tpu_custom_call.1} parent=1 // pred_check
      _
    $region31: #{tpu_custom_call.1} parent=1 // pred_check_branch
      %89 = sbr.rel (0) target = $region33
    $region32: #{tpu_custom_call.1} parent=1 // pred_region
      %s91 = ssub.s32 512, 512
      %92 = vsyncadd [#allocation9], %s91
      %s93 = sshll.u32 [#allocation10], 4
      %s94 = int_to_ptr.vmem [resolvable:$true] %s93
      %99 = dma.hbm_to_vmem [thread:$0]  %s7, 512, %s94, [#allocation9], 128, 128, 8
    $region33: #{tpu_custom_call.1} parent=1 // pred_fallthru
      _
    // Predicated region
    $region34: #{tpu_custom_call.1} parent=1 // pred_check
      _
    $region35: #{tpu_custom_call.1} parent=1 // pred_check_branch
      %101 = sbr.rel (0) target = $region37
    $region36: #{tpu_custom_call.1} parent=1 // pred_region
      _
    $region37: #{tpu_custom_call.1} parent=1 // pred_fallthru
      _
    // Predicated region
    $region38: #{tpu_custom_call.1} parent=1 // pred_check
      _
    $region39: #{tpu_custom_call.1} parent=1 // pred_check_branch
      %103 = sbr.rel (0) target = $region41
    $region40: #{tpu_custom_call.1} parent=1 // pred_region
      %s105 = ssub.s32 512, 512
      %106 = vsyncadd [#allocation12], %s105
      %s107 = sshll.u32 [#allocation11], 4
      %s108 = int_to_ptr.vmem [resolvable:$true] %s107
      %113 = dma.hbm_to_vmem [thread:$0]  %s9, 512, %s108, [#allocation12], 128, 128, 8
    $region41: #{tpu_custom_call.1} parent=1 // pred_fallthru
      _
    // Predicated region
    $region42: #{tpu_custom_call.1} parent=1 // pred_check
      _
    $region43: #{tpu_custom_call.1} parent=1 // pred_check_branch
      %115 = sbr.rel (0) target = $region45
    $region44: #{tpu_custom_call.1} parent=1 // pred_region
      _
    $region45: #{tpu_custom_call.1} parent=1 // pred_fallthru
      _
    // Predicated region
    $region46: #{tpu_custom_call.1} parent=1 // pred_check
      _
    $region47: #{tpu_custom_call.1} parent=1 // pred_check_branch
      %117 = sbr.rel (0) target = $region49
    $region48: #{tpu_custom_call.1} parent=1 // pred_region
      %s119 = ssub.s32 512, 512
      %120 = vsyncadd [#allocation12], %s119
      %s121 = sshll.u32 [#allocation13], 4
      %s122 = int_to_ptr.vmem [resolvable:$true] %s121
      %127 = dma.hbm_to_vmem [thread:$0]  %s11, 512, %s122, [#allocation12], 128, 128, 8
    $region49: #{tpu_custom_call.1} parent=1 // pred_fallthru
      _
    // Predicated region
    $region50: #{tpu_custom_call.1} parent=1 // pred_check
      _
    $region51: #{tpu_custom_call.1} parent=1 // pred_check_branch
      %129 = sbr.rel (0) target = $region53
    $region52: #{tpu_custom_call.1} parent=1 // pred_region
      %s131 = ssub.s32 512, 512
      %132 = vsyncadd [#allocation15], %s131
      %s133 = sshll.u32 [#allocation14], 4
      %s134 = int_to_ptr.vmem [resolvable:$true] %s133
      %139 = dma.hbm_to_vmem [thread:$0]  %s12, 512, %s134, [#allocation15], 128, 128, 8
    $region53: #{tpu_custom_call.1} parent=1 // pred_fallthru
      _
    // Predicated region
    $region54: #{tpu_custom_call.1} parent=1 // pred_check
      _
    $region55: #{tpu_custom_call.1} parent=1 // pred_check_branch
      %141 = sbr.rel (0) target = $region57
    $region56: #{tpu_custom_call.1} parent=1 // pred_region
      %s143 = ssub.s32 512, 512
      %144 = vsyncadd [#allocation15], %s143
      %s145 = sshll.u32 [#allocation16], 4
      %s146 = int_to_ptr.vmem [resolvable:$true] %s145
      %151 = dma.hbm_to_vmem [thread:$0]  %s13, 512, %s146, [#allocation15], 128, 128, 8
    $region57: #{tpu_custom_call.1} parent=1 // pred_fallthru
      _
    // Predicated region
    $region58: #{tpu_custom_call.1} parent=1 // pred_check
      _
    $region59: #{tpu_custom_call.1} parent=1 // pred_check_branch
      %153 = sbr.rel (0) target = $region61
    $region60: #{tpu_custom_call.1} parent=1 // pred_region
      _
    $region61: #{tpu_custom_call.1} parent=1 // pred_fallthru
      _
    // Predicated region
    $region62: #{tpu_custom_call.1} parent=1 // pred_check
      _
    $region63: #{tpu_custom_call.1} parent=1 // pred_check_branch
      %155 = sbr.rel (0) target = $region65
    $region64: #{tpu_custom_call.1} parent=1 // pred_region
      %s157 = ssub.s32 512, 512
      %158 = vsyncadd [#allocation18], %s157
      %s159 = sshll.u32 [#allocation17], 4
      %s160 = int_to_ptr.vmem [resolvable:$true] %s159
      %165 = dma.hbm_to_vmem [thread:$0]  %s15, 512, %s160, [#allocation18], 128, 128, 8
    $region65: #{tpu_custom_call.1} parent=1 // pred_fallthru
      _
    // Predicated region
    $region66: #{tpu_custom_call.1} parent=1 // pred_check
      _
    $region67: #{tpu_custom_call.1} parent=1 // pred_check_branch
      %167 = sbr.rel (0) target = $region69
    $region68: #{tpu_custom_call.1} parent=1 // pred_region
      %s169 = ssub.s32 16, 16
      %170 = vsyncadd [#allocation18], %s169
      %s172 = sshll.u32 [#allocation19], 4
      %s173 = int_to_ptr.vmem [resolvable:$true] %s172
      %175 = dma.hbm_to_vmem [thread:$0]  %s16, 16, %s173, [#allocation18]
    $region69: #{tpu_custom_call.1} parent=1 // pred_fallthru
      _
    // Predicated region
    $region70: #{tpu_custom_call.1} parent=1 // pred_check
      _
    $region71: #{tpu_custom_call.1} parent=1 // pred_check_branch
      %177 = sbr.rel (0) target = $region73
    $region72: #{tpu_custom_call.1} parent=1 // pred_region
      %s179 = ssub.s32 16, 16
      %180 = vsyncadd [#allocation21], %s179
      %s182 = sshll.u32 [#allocation20], 4
      %s183 = int_to_ptr.vmem [resolvable:$true] %s182
      %185 = dma.hbm_to_vmem [thread:$0]  %s17, 16, %s183, [#allocation21]
    $region73: #{tpu_custom_call.1} parent=1 // pred_fallthru
      _
    // Predicated region
    $region74: #{tpu_custom_call.1} parent=1 // pred_check
      _
    $region75: #{tpu_custom_call.1} parent=1 // pred_check_branch
      %187 = sbr.rel (0) target = $region77
    $region76: #{tpu_custom_call.1} parent=1 // pred_region
      _
    $region77: #{tpu_custom_call.1} parent=1 // pred_fallthru
      _
    // Predicated region
    $region78: #{tpu_custom_call.1} parent=1 // pred_check
      _
    $region79: #{tpu_custom_call.1} parent=1 // pred_check_branch
      %189 = sbr.rel (0) target = $region81
    $region80: #{tpu_custom_call.1} parent=1 // pred_region
      _
    $region81: #{tpu_custom_call.1} parent=1 // pred_fallthru
      _
    // Predicated region
    $region82: #{tpu_custom_call.1} parent=1 // pred_check
      _
    $region83: #{tpu_custom_call.1} parent=1 // pred_check_branch
      %191 = sbr.rel (0) target = $region85
    $region84: #{tpu_custom_call.1} parent=1 // pred_region
      _
    $region85: #{tpu_custom_call.1} parent=1 // pred_fallthru
      _
    // Predicated region
    $region86: #{tpu_custom_call.1} parent=1 // pred_check
      _
    $region87: #{tpu_custom_call.1} parent=1 // pred_check_branch
      %193 = sbr.rel (0) target = $region89
    $region88: #{tpu_custom_call.1} parent=1 // pred_region
      %s195 = ssub.s32 512, 512
      %196 = vsyncadd [#allocation21], %s195
      %s197 = sshll.u32 [#allocation22], 4
      %s198 = int_to_ptr.vmem [resolvable:$true] %s197
      %203 = dma.hbm_to_vmem [thread:$0]  %s21, 512, %s198, [#allocation21], 128, 128, 8
    $region89: #{tpu_custom_call.1} parent=1 // pred_fallthru
      _
    // Predicated region
    $region90: #{tpu_custom_call.1} parent=1 // pred_check
      _
    $region91: #{tpu_custom_call.1} parent=1 // pred_check_branch
      %205 = sbr.rel (0) target = $region93
    $region92: #{tpu_custom_call.1} parent=1 // pred_region
      _
    $region93: #{tpu_custom_call.1} parent=1 // pred_fallthru
      _
    // Predicated region
    $region94: #{tpu_custom_call.1} parent=1 // pred_check
      _
    $region95: #{tpu_custom_call.1} parent=1 // pred_check_branch
      %207 = sbr.rel (0) target = $region97
    $region96: #{tpu_custom_call.1} parent=1 // pred_region
      _
    $region97: #{tpu_custom_call.1} parent=1 // pred_fallthru
      _
    // Predicated region
    $region98: #{tpu_custom_call.1} parent=1 // pred_check
      _
    $region99: #{tpu_custom_call.1} parent=1 // pred_check_branch
      %209 = sbr.rel (0) target = $region101
    $region100: #{tpu_custom_call.1} parent=1 // pred_region
      %210 = dma.done [#allocation4], 32
    $region101: #{tpu_custom_call.1} parent=1 // pred_fallthru
      _
    // Predicated region
    $region102: #{tpu_custom_call.1} parent=1 // pred_check
      _
    $region103: #{tpu_custom_call.1} parent=1 // pred_check_branch
      %212 = sbr.rel (0) target = $region105
    $region104: #{tpu_custom_call.1} parent=1 // pred_region
      %213 = dma.done [#allocation6], 288
    $region105: #{tpu_custom_call.1} parent=1 // pred_fallthru
      _
    // Predicated region
    $region106: #{tpu_custom_call.1} parent=1 // pred_check
      _
    $region107: #{tpu_custom_call.1} parent=1 // pred_check_branch
      %215 = sbr.rel (0) target = $region109
    $region108: #{tpu_custom_call.1} parent=1 // pred_region
      %216 = dma.done [#allocation6], 32
    $region109: #{tpu_custom_call.1} parent=1 // pred_fallthru
      _
    // Predicated region
    $region110: #{tpu_custom_call.1} parent=1 // pred_check
      _
    $region111: #{tpu_custom_call.1} parent=1 // pred_check_branch
      %218 = sbr.rel (0) target = $region113
    $region112: #{tpu_custom_call.1} parent=1 // pred_region
      %219 = dma.done [#allocation9], 16
    $region113: #{tpu_custom_call.1} parent=1 // pred_fallthru
      _
    // Predicated region
    $region114: #{tpu_custom_call.1} parent=1 // pred_check
      _
    $region115: #{tpu_custom_call.1} parent=1 // pred_check_branch
      %221 = sbr.rel (0) target = $region117
    $region116: #{tpu_custom_call.1} parent=1 // pred_region
      %222 = dma.done [#allocation9], 512
    $region117: #{tpu_custom_call.1} parent=1 // pred_fallthru
      _
    // Predicated region
    $region118: #{tpu_custom_call.1} parent=1 // pred_check
      _
    $region119: #{tpu_custom_call.1} parent=1 // pred_check_branch
      %224 = sbr.rel (0) target = $region121
    $region120: #{tpu_custom_call.1} parent=1 // pred_region
      %225 = dma.done [#allocation12], 512
    $region121: #{tpu_custom_call.1} parent=1 // pred_fallthru
      _
    // Predicated region
    $region122: #{tpu_custom_call.1} parent=1 // pred_check
      _
    $region123: #{tpu_custom_call.1} parent=1 // pred_check_branch
      %227 = sbr.rel (0) target = $region125
    $region124: #{tpu_custom_call.1} parent=1 // pred_region
      %228 = dma.done [#allocation12], 512
    $region125: #{tpu_custom_call.1} parent=1 // pred_fallthru
      _
    // Predicated region
    $region126: #{tpu_custom_call.1} parent=1 // pred_check
      _
    $region127: #{tpu_custom_call.1} parent=1 // pred_check_branch
      %230 = sbr.rel (0) target = $region129
    $region128: #{tpu_custom_call.1} parent=1 // pred_region
      %231 = dma.done [#allocation15], 512
    $region129: #{tpu_custom_call.1} parent=1 // pred_fallthru
      _
    // Predicated region
    $region130: #{tpu_custom_call.1} parent=1 // pred_check
      _
    $region131: #{tpu_custom_call.1} parent=1 // pred_check_branch
      %233 = sbr.rel (0) target = $region133
    $region132: #{tpu_custom_call.1} parent=1 // pred_region
      %234 = dma.done [#allocation15], 512
    $region133: #{tpu_custom_call.1} parent=1 // pred_fallthru
      _
    // Predicated region
    $region134: #{tpu_custom_call.1} parent=1 // pred_check
      _
    $region135: #{tpu_custom_call.1} parent=1 // pred_check_branch
      %236 = sbr.rel (0) target = $region137
    $region136: #{tpu_custom_call.1} parent=1 // pred_region
      %237 = dma.done [#allocation18], 512
    $region137: #{tpu_custom_call.1} parent=1 // pred_fallthru
      _
    // Predicated region
    $region138: #{tpu_custom_call.1} parent=1 // pred_check
      _
    $region139: #{tpu_custom_call.1} parent=1 // pred_check_branch
      %239 = sbr.rel (0) target = $region141
    $region140: #{tpu_custom_call.1} parent=1 // pred_region
      %240 = dma.done [#allocation18], 16
    $region141: #{tpu_custom_call.1} parent=1 // pred_fallthru
      _
    // Predicated region
    $region142: #{tpu_custom_call.1} parent=1 // pred_check
      _
    $region143: #{tpu_custom_call.1} parent=1 // pred_check_branch
      %242 = sbr.rel (0) target = $region145
    $region144: #{tpu_custom_call.1} parent=1 // pred_region
      %243 = dma.done [#allocation21], 16
    $region145: #{tpu_custom_call.1} parent=1 // pred_fallthru
      _
    // Predicated region
    $region146: #{tpu_custom_call.1} parent=1 // pred_check
      _
    $region147: #{tpu_custom_call.1} parent=1 // pred_check_branch
      %245 = sbr.rel (0) target = $region149
    $region148: #{tpu_custom_call.1} parent=1 // pred_region
      %246 = dma.done [#allocation21], 512
    $region149: #{tpu_custom_call.1} parent=1 // pred_fallthru
      _
    %v247 = vld [vmem:[#allocation3] sm:$0x3]
    %v248 = vld [vmem:[%s1] sm:$0xff]
    %v249 = vld [vmem:[%s1 + $0x8] sm:$0x7f]
    %v250 = vld [vmem:[%s1 + $0x10] sm:$0xff]
    %v251 = vld [vmem:[%s1 + $0x18] sm:$0x7f]
    %v256 = vcombine.high %v248, %v248
    %v258 = vunpack.c.l.s4 1966171168
    %v259 = vunpack.c.0.s8 %v258
    %v260 = vlaneseq
    %v261 = vshrl.u32 %v260, 7
    %v262 = vsub.s32 %v259, %v261
    %v263 = vrot.slane %v248, %v262
    %v265 = vunpack.c.l.s4 1966171168
    %v266 = vunpack.c.0.s8 %v265
    %v267 = vlaneseq
    %v268 = vshrl.u32 %v267, 7
    %v269 = vsub.s32 %v266, %v268
    %v270 = vrot.slane %v256, %v269
    %v271 = vcombine.high %v263, %v263
    %v272 = vcombine.high %v270, %v270
    %v274 = vunpack.c.l.s4 1966171168
    %v275 = vunpack.c.0.s8 %v274
    %v276 = vlaneseq
    %v277 = vshrl.u32 %v276, 7
    %v278 = vsub.s32 %v275, %v277
    %v279 = vrot.slane %v263, %v278
    %v281 = vunpack.c.l.s4 1966171168
    %v282 = vunpack.c.0.s8 %v281
    %v283 = vlaneseq
    %v284 = vshrl.u32 %v283, 7
    %v285 = vsub.s32 %v282, %v284
    %v286 = vrot.slane %v270, %v285
    %v288 = vunpack.c.l.s4 1966171168
    %v289 = vunpack.c.0.s8 %v288
    %v290 = vlaneseq
    %v291 = vshrl.u32 %v290, 7
    %v292 = vsub.s32 %v289, %v291
    %v293 = vrot.slane %v271, %v292
    %v295 = vunpack.c.l.s4 1966171168
    %v296 = vunpack.c.0.s8 %v295
    %v297 = vlaneseq
    %v298 = vshrl.u32 %v297, 7
    %v299 = vsub.s32 %v296, %v298
    %v300 = vrot.slane %v272, %v299
    %v301 = vcombine.high %v279, %v279
    %v302 = vcombine.high %v286, %v286
    %v303 = vcombine.high %v293, %v293
    %v304 = vcombine.high %v300, %v300
    %v305 = vcombine.high %v249, %v249
    %v307 = vunpack.c.l.s4 1966171168
    %v308 = vunpack.c.0.s8 %v307
    %v309 = vlaneseq
    %v310 = vshrl.u32 %v309, 7
    %v311 = vsub.s32 %v308, %v310
    %v312 = vrot.slane %v249, %v311
    %v314 = vunpack.c.l.s4 1966171168
    %v315 = vunpack.c.0.s8 %v314
    %v316 = vlaneseq
    %v317 = vshrl.u32 %v316, 7
    %v318 = vsub.s32 %v315, %v317
    %v319 = vrot.slane %v305, %v318
    %v320 = vcombine.high %v312, %v312
    %v321 = vcombine.high %v319, %v319
    %v323 = vunpack.c.l.s4 1966171168
    %v324 = vunpack.c.0.s8 %v323
    %v325 = vlaneseq
    %v326 = vshrl.u32 %v325, 7
    %v327 = vsub.s32 %v324, %v326
    %v328 = vrot.slane %v312, %v327
    %v330 = vunpack.c.l.s4 1966171168
    %v331 = vunpack.c.0.s8 %v330
    %v332 = vlaneseq
    %v333 = vshrl.u32 %v332, 7
    %v334 = vsub.s32 %v331, %v333
    %v335 = vrot.slane %v319, %v334
    %v337 = vunpack.c.l.s4 1966171168
    %v338 = vunpack.c.0.s8 %v337
    %v339 = vlaneseq
    %v340 = vshrl.u32 %v339, 7
    %v341 = vsub.s32 %v338, %v340
    %v342 = vrot.slane %v320, %v341
    %v344 = vunpack.c.l.s4 1966171168
    %v345 = vunpack.c.0.s8 %v344
    %v346 = vlaneseq
    %v347 = vshrl.u32 %v346, 7
    %v348 = vsub.s32 %v345, %v347
    %v349 = vrot.slane %v321, %v348
    %v350 = vcombine.high %v328, %v328
    %v351 = vcombine.high %v335, %v335
    %v352 = vcombine.high %v342, %v342
    %v353 = vcombine.high %v250, %v250
    %v355 = vunpack.c.l.s4 1966171168
    %v356 = vunpack.c.0.s8 %v355
    %v357 = vlaneseq
    %v358 = vshrl.u32 %v357, 7
    %v359 = vsub.s32 %v356, %v358
    %v360 = vrot.slane %v250, %v359
    %v362 = vunpack.c.l.s4 1966171168
    %v363 = vunpack.c.0.s8 %v362
    %v364 = vlaneseq
    %v365 = vshrl.u32 %v364, 7
    %v366 = vsub.s32 %v363, %v365
    %v367 = vrot.slane %v353, %v366
    %v368 = vcombine.high %v360, %v360
    %v369 = vcombine.high %v367, %v367
    %v371 = vunpack.c.l.s4 1966171168
    %v372 = vunpack.c.0.s8 %v371
    %v373 = vlaneseq
    %v374 = vshrl.u32 %v373, 7
    %v375 = vsub.s32 %v372, %v374
    %v376 = vrot.slane %v360, %v375
    %v378 = vunpack.c.l.s4 1966171168
    %v379 = vunpack.c.0.s8 %v378
    %v380 = vlaneseq
    %v381 = vshrl.u32 %v380, 7
    %v382 = vsub.s32 %v379, %v381
    %v383 = vrot.slane %v367, %v382
    %v385 = vunpack.c.l.s4 1966171168
    %v386 = vunpack.c.0.s8 %v385
    %v387 = vlaneseq
    %v388 = vshrl.u32 %v387, 7
    %v389 = vsub.s32 %v386, %v388
    %v390 = vrot.slane %v368, %v389
    %v392 = vunpack.c.l.s4 1966171168
    %v393 = vunpack.c.0.s8 %v392
    %v394 = vlaneseq
    %v395 = vshrl.u32 %v394, 7
    %v396 = vsub.s32 %v393, %v395
    %v397 = vrot.slane %v369, %v396
    %v398 = vcombine.high %v376, %v376
    %v399 = vcombine.high %v383, %v383
    %v400 = vcombine.high %v390, %v390
    %v401 = vcombine.high %v397, %v397
    %v402 = vcombine.high %v251, %v251
    %v404 = vunpack.c.l.s4 1966171168
    %v405 = vunpack.c.0.s8 %v404
    %v406 = vlaneseq
    %v407 = vshrl.u32 %v406, 7
    %v408 = vsub.s32 %v405, %v407
    %v409 = vrot.slane %v251, %v408
    %v411 = vunpack.c.l.s4 1966171168
    %v412 = vunpack.c.0.s8 %v411
    %v413 = vlaneseq
    %v414 = vshrl.u32 %v413, 7
    %v415 = vsub.s32 %v412, %v414
    %v416 = vrot.slane %v402, %v415
    %v417 = vcombine.high %v409, %v409
    %v418 = vcombine.high %v416, %v416
    %v420 = vunpack.c.l.s4 1966171168
    %v421 = vunpack.c.0.s8 %v420
    %v422 = vlaneseq
    %v423 = vshrl.u32 %v422, 7
    %v424 = vsub.s32 %v421, %v423
    %v425 = vrot.slane %v409, %v424
    %v427 = vunpack.c.l.s4 1966171168
    %v428 = vunpack.c.0.s8 %v427
    %v429 = vlaneseq
    %v430 = vshrl.u32 %v429, 7
    %v431 = vsub.s32 %v428, %v430
    %v432 = vrot.slane %v416, %v431
    %v434 = vunpack.c.l.s4 1966171168
    %v435 = vunpack.c.0.s8 %v434
    %v436 = vlaneseq
    %v437 = vshrl.u32 %v436, 7
    %v438 = vsub.s32 %v435, %v437
    %v439 = vrot.slane %v417, %v438
    %v441 = vunpack.c.l.s4 1966171168
    %v442 = vunpack.c.0.s8 %v441
    %v443 = vlaneseq
    %v444 = vshrl.u32 %v443, 7
    %v445 = vsub.s32 %v442, %v444
    %v446 = vrot.slane %v418, %v445
    %v447 = vcombine.high %v425, %v425
    %v448 = vcombine.high %v432, %v432
    %v449 = vcombine.high %v439, %v439
    %v450 = vld [vmem:[#allocation5] sm:$0x3]
    %v451 = vld [vmem:[#allocation5 + $0x2] sm:$0x3]
    %v452 = vld [vmem:[#allocation5 + $0x4] sm:$0x3]
    %v453 = vld [vmem:[#allocation5 + $0x6] sm:$0x3]
    %v454 = vld [vmem:[#allocation5 + $0x8] sm:$0x3]
    %v455 = vld [vmem:[#allocation5 + $0xa] sm:$0x3]
    %v456 = vld [vmem:[#allocation5 + $0xc] sm:$0x3]
    %v457 = vld [vmem:[#allocation5 + $0xe] sm:$0x3]
    %v458 = vld [vmem:[#allocation5 + $0x10] sm:$0x3]
    %v459 = vld [vmem:[#allocation7] sm:$0x3]
    %v460 = vld [vmem:[%s4] sm:$0xff]
    %v461 = vld [vmem:[%s4 + $0x8] sm:$0xff]
    %v462 = vld [vmem:[%s4 + $0x10] sm:$0xff]
    %v463 = vld [vmem:[%s4 + $0x18] sm:$0xff]
    %v464 = vld [vmem:[#allocation8] sm:$0x1]
    %v466 = vlaneseq
    %v467 = vshrl.u32 %v466, 7
    %v468 = vsub.s32 0, %v467
    %v469 = vrot.slane %v464, %v468
    %v471 = vcombine.low %v279, %v293
    %v472 = vcombine.low %v301, %v303
    %v473 = vcombine.low %v286, %v300
    %v474 = vcombine.low %v302, %v304
    %v476 = vunpack.c.l.s4 1966171168
    %v477 = vunpack.c.0.s8 %v476
    %v478 = vlaneseq
    %v479 = vshrl.u32 %v478, 7
    %v480 = vsub.s32 %v477, %v479
    %v481 = vrot.slane %v471, %v480
    %v483 = vunpack.c.l.s4 1966171168
    %v484 = vunpack.c.0.s8 %v483
    %v485 = vlaneseq
    %v486 = vshrl.u32 %v485, 7
    %v487 = vsub.s32 %v484, %v486
    %v488 = vrot.slane %v472, %v487
    %v490 = vunpack.c.l.s4 1966171168
    %v491 = vunpack.c.0.s8 %v490
    %v492 = vlaneseq
    %v493 = vshrl.u32 %v492, 7
    %v494 = vsub.s32 %v491, %v493
    %v495 = vrot.slane %v473, %v494
    %v497 = vunpack.c.l.s4 1966171168
    %v498 = vunpack.c.0.s8 %v497
    %v499 = vlaneseq
    %v500 = vshrl.u32 %v499, 7
    %v501 = vsub.s32 %v498, %v500
    %v502 = vrot.slane %v474, %v501
    %v503 = vcombine.low %v481, %v488
    %v504 = vcombine.low %v495, %v502
    %v506 = vunpack.c.l.s4 1966171168
    %v507 = vunpack.c.0.s8 %v506
    %v508 = vlaneseq
    %v509 = vshrl.u32 %v508, 7
    %v510 = vsub.s32 %v507, %v509
    %v511 = vrot.slane %v503, %v510
    %v513 = vunpack.c.l.s4 1966171168
    %v514 = vunpack.c.0.s8 %v513
    %v515 = vlaneseq
    %v516 = vshrl.u32 %v515, 7
    %v517 = vsub.s32 %v514, %v516
    %v518 = vrot.slane %v504, %v517
    %v519 = vcombine.low %v511, %v518
    %v520 = vcombine.low %v328, %v342
    %v521 = vcombine.low %v350, %v352
    %v522 = vcombine.low %v335, %v349
    %v523 = vcombine.low %v351, %v376
    %v525 = vunpack.c.l.s4 1966171168
    %v526 = vunpack.c.0.s8 %v525
    %v527 = vlaneseq
    %v528 = vshrl.u32 %v527, 7
    %v529 = vsub.s32 %v526, %v528
    %v530 = vrot.slane %v520, %v529
    %v532 = vunpack.c.l.s4 1966171168
    %v533 = vunpack.c.0.s8 %v532
    %v534 = vlaneseq
    %v535 = vshrl.u32 %v534, 7
    %v536 = vsub.s32 %v533, %v535
    %v537 = vrot.slane %v521, %v536
    %v539 = vunpack.c.l.s4 1966171168
    %v540 = vunpack.c.0.s8 %v539
    %v541 = vlaneseq
    %v542 = vshrl.u32 %v541, 7
    %v543 = vsub.s32 %v540, %v542
    %v544 = vrot.slane %v522, %v543
    %v546 = vunpack.c.l.s4 1966171168
    %v547 = vunpack.c.0.s8 %v546
    %v548 = vlaneseq
    %v549 = vshrl.u32 %v548, 7
    %v550 = vsub.s32 %v547, %v549
    %v551 = vrot.slane %v523, %v550
    %v552 = vcombine.low %v530, %v537
    %v553 = vcombine.low %v544, %v551
    %v555 = vunpack.c.l.s4 1966171168
    %v556 = vunpack.c.0.s8 %v555
    %v557 = vlaneseq
    %v558 = vshrl.u32 %v557, 7
    %v559 = vsub.s32 %v556, %v558
    %v560 = vrot.slane %v552, %v559
    %v562 = vunpack.c.l.s4 1966171168
    %v563 = vunpack.c.0.s8 %v562
    %v564 = vlaneseq
    %v565 = vshrl.u32 %v564, 7
    %v566 = vsub.s32 %v563, %v565
    %v567 = vrot.slane %v553, %v566
    %v568 = vcombine.low %v560, %v567
    %v569 = vcombine.low %v390, %v398
    %v570 = vcombine.low %v400, %v383
    %v571 = vcombine.low %v397, %v399
    %v572 = vcombine.low %v401, %v425
    %v574 = vunpack.c.l.s4 1966171168
    %v575 = vunpack.c.0.s8 %v574
    %v576 = vlaneseq
    %v577 = vshrl.u32 %v576, 7
    %v578 = vsub.s32 %v575, %v577
    %v579 = vrot.slane %v569, %v578
    %v581 = vunpack.c.l.s4 1966171168
    %v582 = vunpack.c.0.s8 %v581
    %v583 = vlaneseq
    %v584 = vshrl.u32 %v583, 7
    %v585 = vsub.s32 %v582, %v584
    %v586 = vrot.slane %v570, %v585
    %v588 = vunpack.c.l.s4 1966171168
    %v589 = vunpack.c.0.s8 %v588
    %v590 = vlaneseq
    %v591 = vshrl.u32 %v590, 7
    %v592 = vsub.s32 %v589, %v591
    %v593 = vrot.slane %v571, %v592
    %v595 = vunpack.c.l.s4 1966171168
    %v596 = vunpack.c.0.s8 %v595
    %v597 = vlaneseq
    %v598 = vshrl.u32 %v597, 7
    %v599 = vsub.s32 %v596, %v598
    %v600 = vrot.slane %v572, %v599
    %v601 = vcombine.low %v579, %v586
    %v602 = vcombine.low %v593, %v600
    %v604 = vunpack.c.l.s4 1966171168
    %v605 = vunpack.c.0.s8 %v604
    %v606 = vlaneseq
    %v607 = vshrl.u32 %v606, 7
    %v608 = vsub.s32 %v605, %v607
    %v609 = vrot.slane %v601, %v608
    %v611 = vunpack.c.l.s4 1966171168
    %v612 = vunpack.c.0.s8 %v611
    %v613 = vlaneseq
    %v614 = vshrl.u32 %v613, 7
    %v615 = vsub.s32 %v612, %v614
    %v616 = vrot.slane %v602, %v615
    %v617 = vcombine.low %v609, %v616
    %v618 = vcombine.low %v439, %v447
    %v619 = vcombine.low %v449, %v432
    %v620 = vcombine.low %v446, %v448
    %v622 = vunpack.c.l.s4 1966171168
    %v623 = vunpack.c.0.s8 %v622
    %v624 = vlaneseq
    %v625 = vshrl.u32 %v624, 7
    %v626 = vsub.s32 %v623, %v625
    %v627 = vrot.slane %v618, %v626
    %v629 = vunpack.c.l.s4 1966171168
    %v630 = vunpack.c.0.s8 %v629
    %v631 = vlaneseq
    %v632 = vshrl.u32 %v631, 7
    %v633 = vsub.s32 %v630, %v632
    %v634 = vrot.slane %v619, %v633
    %v636 = vunpack.c.l.s4 1966171168
    %v637 = vunpack.c.0.s8 %v636
    %v638 = vlaneseq
    %v639 = vshrl.u32 %v638, 7
    %v640 = vsub.s32 %v637, %v639
    %v641 = vrot.slane %v620, %v640
    %v642 = vcombine.low %v627, %v634
    %v644 = vunpack.c.l.s4 1966171168
    %v645 = vunpack.c.0.s8 %v644
    %v646 = vlaneseq
    %v647 = vshrl.u32 %v646, 7
    %v648 = vsub.s32 %v645, %v647
    %v649 = vrot.slane %v642, %v648
    %v651 = vunpack.c.l.s4 1966171168
    %v652 = vunpack.c.0.s8 %v651
    %v653 = vlaneseq
    %v654 = vshrl.u32 %v653, 7
    %v655 = vsub.s32 %v652, %v654
    %v656 = vrot.slane %v641, %v655
    %v657 = vcombine.low %v649, %v656
    %vm658 = vcmask 261120
    %v659 = vsel %vm658, %v519, 0
    %v661 = vsel %vm658, %v568, 0
    %v663 = vsel %vm658, %v617, 0
    %v665 = vsel %vm658, %v657, 0
    %667 = vmatprep.subr.mxu0 0.0
    %668 = vmatpush1.msra.mxu0 %v460
    %669 = vmatprep.subr.mxu0 0.0
    %670 = vmatpush1.msra.mxu0 %v461
    %671 = vmatprep.subr.mxu0 0.0
    %672 = vmatpush1.msra.mxu0 %v462
    %673 = vmatprep.subr.mxu0 0.0
    %674 = vmatpush1.msra.mxu0 %v463
    %675 = vmatprep.subr.mxu0 0.0
    %676 = vmatpush1.msra.mxu0 0.0
    %677 = vmatprep.subr.mxu0 0.0
    %678 = vmatpush1.msra.mxu0 0.0
    %679 = vmatprep.subr.mxu0 0.0
    %680 = vmatpush1.msra.mxu0 0.0
    %681 = vmatprep.subr.mxu0 0.0
    %682 = vmatpush1.msra.mxu0 0.0
    %683 = vmatprep.subr.mxu0 0.0
    %684 = vmatpush1.msra.mxu0 0.0
    %685 = vmatprep.subr.mxu0 0.0
    %686 = vmatpush1.msra.mxu0 0.0
    %687 = vmatprep.subr.mxu0 0.0
    %688 = vmatpush1.msra.mxu0 0.0
    %689 = vmatprep.subr.mxu0 0.0
    %690 = vmatpush1.msra.mxu0 0.0
    %691 = vmatprep.subr.mxu0 0.0
    %692 = vmatpush1.msra.mxu0 0.0
    %693 = vmatprep.subr.mxu0 0.0
    %694 = vmatpush1.msra.mxu0 0.0
    %695 = vmatprep.subr.mxu0 0.0
    %696 = vmatpush1.msra.mxu0 0.0
    %697 = vmatprep.subr.mxu0 0.0
    %698 = vmatpush1.msra.mxu0 0.0
    %699 = vmatprep.subr.mxu0 0.0
    %700 = vmatpush1.msra.mxu0 0.0
    %701 = vmatprep.subr.mxu0 0.0
    %702 = vmatpush1.msra.mxu0 0.0
    %703 = vmatprep.subr.mxu0 0.0
    %704 = vmatpush1.msra.mxu0 0.0
    %705 = vmatprep.subr.mxu0 0.0
    %706 = vmatpush1.msra.mxu0 0.0
    %707 = vmatprep.subr.mxu0 0.0
    %708 = vmatpush1.msra.mxu0 0.0
    %709 = vmatprep.subr.mxu0 0.0
    %710 = vmatpush1.msra.mxu0 0.0
    %711 = vmatprep.subr.mxu0 0.0
    %712 = vmatpush1.msra.mxu0 0.0
    %713 = vmatprep.subr.mxu0 0.0
    %714 = vmatpush1.msra.mxu0 0.0
    %715 = vmatprep.subr.mxu0 0.0
    %716 = vmatpush1.msra.mxu0 0.0
    %717 = vmatprep.subr.mxu0 0.0
    %718 = vmatpush1.msra.mxu0 0.0
    %719 = vmatprep.subr.mxu0 0.0
    %720 = vmatpush1.msra.mxu0 0.0
    %721 = vmatprep.subr.mxu0 0.0
    %722 = vmatpush1.msra.mxu0 0.0
    %723 = vmatprep.subr.mxu0 0.0
    %724 = vmatpush1.msra.mxu0 0.0
    %725 = vmatprep.subr.mxu0 0.0
    %726 = vmatpush1.msra.mxu0 0.0
    %727 = vmatprep.subr.mxu0 0.0
    %728 = vmatpush1.msra.mxu0 0.0
    %729 = vmatprep.subr.mxu0 0.0
    %730 = vmatpush1.msra.mxu0 0.0
    %731 = vmatprep.mubr.f32.mxu0 0.0
    %732 = vmatmul.mubr.f32.gmra.mrb[0].mxu0 %v659
    %v733 = vpop.f32.mrb[0].mxu0
    %v734 = vadd.f32 %v469, %v733
    %v735 = vpop.f32.mrb[0].mxu0
    %736 = vmatprep.mubr.f32.mxu0 0.0
    %737 = vmatmul.mubr.f32.gmra.mrb[0].mxu0 %v661
    %v738 = vpop.f32.mrb[0].mxu0
    %v739 = vadd.f32 %v469, %v738
    %v740 = vpop.f32.mrb[0].mxu0
    %741 = vmatprep.mubr.f32.mxu0 0.0
    %742 = vmatmul.mubr.f32.gmra.mrb[0].mxu0 %v663
    %v743 = vpop.f32.mrb[0].mxu0
    %v744 = vadd.f32 %v469, %v743
    %v745 = vpop.f32.mrb[0].mxu0
    %746 = vmatprep.mubr.f32.mxu0 0.0
    %747 = vmatmul.mubr.f32.gmra.mrb[0].mxu0 %v665
    %v748 = vpop.f32.mrb[0].mxu0
    %v749 = vadd.f32 %v469, %v748
    %v750 = vpop.f32.mrb[0].mxu0
    %751 = vdwg.mxu0
    %v756 = vcombine.high %v734, %v734
    %v758 = vunpack.c.l.s4 1966171168
    %v759 = vunpack.c.0.s8 %v758
    %v760 = vlaneseq
    %v761 = vshrl.u32 %v760, 7
    %v762 = vsub.s32 %v759, %v761
    %v763 = vrot.slane %v734, %v762
    %v765 = vunpack.c.l.s4 1966171168
    %v766 = vunpack.c.0.s8 %v765
    %v767 = vlaneseq
    %v768 = vshrl.u32 %v767, 7
    %v769 = vsub.s32 %v766, %v768
    %v770 = vrot.slane %v756, %v769
    %v771 = vcombine.high %v763, %v763
    %v772 = vcombine.high %v770, %v770
    %v774 = vunpack.c.l.s4 1966171168
    %v775 = vunpack.c.0.s8 %v774
    %v776 = vlaneseq
    %v777 = vshrl.u32 %v776, 7
    %v778 = vsub.s32 %v775, %v777
    %v779 = vrot.slane %v763, %v778
    %v781 = vunpack.c.l.s4 1966171168
    %v782 = vunpack.c.0.s8 %v781
    %v783 = vlaneseq
    %v784 = vshrl.u32 %v783, 7
    %v785 = vsub.s32 %v782, %v784
    %v786 = vrot.slane %v770, %v785
    %v788 = vunpack.c.l.s4 1966171168
    %v789 = vunpack.c.0.s8 %v788
    %v790 = vlaneseq
    %v791 = vshrl.u32 %v790, 7
    %v792 = vsub.s32 %v789, %v791
    %v793 = vrot.slane %v771, %v792
    %v795 = vunpack.c.l.s4 1966171168
    %v796 = vunpack.c.0.s8 %v795
    %v797 = vlaneseq
    %v798 = vshrl.u32 %v797, 7
    %v799 = vsub.s32 %v796, %v798
    %v800 = vrot.slane %v772, %v799
    %v801 = vcombine.high %v779, %v779
    %v802 = vcombine.high %v786, %v786
    %v803 = vcombine.high %v793, %v793
    %v804 = vcombine.high %v800, %v800
    %v805 = vcombine.high %v739, %v739
    %v807 = vunpack.c.l.s4 1966171168
    %v808 = vunpack.c.0.s8 %v807
    %v809 = vlaneseq
    %v810 = vshrl.u32 %v809, 7
    %v811 = vsub.s32 %v808, %v810
    %v812 = vrot.slane %v739, %v811
    %v814 = vunpack.c.l.s4 1966171168
    %v815 = vunpack.c.0.s8 %v814
    %v816 = vlaneseq
    %v817 = vshrl.u32 %v816, 7
    %v818 = vsub.s32 %v815, %v817
    %v819 = vrot.slane %v805, %v818
    %v820 = vcombine.high %v812, %v812
    %v821 = vcombine.high %v819, %v819
    %v823 = vunpack.c.l.s4 1966171168
    %v824 = vunpack.c.0.s8 %v823
    %v825 = vlaneseq
    %v826 = vshrl.u32 %v825, 7
    %v827 = vsub.s32 %v824, %v826
    %v828 = vrot.slane %v812, %v827
    %v830 = vunpack.c.l.s4 1966171168
    %v831 = vunpack.c.0.s8 %v830
    %v832 = vlaneseq
    %v833 = vshrl.u32 %v832, 7
    %v834 = vsub.s32 %v831, %v833
    %v835 = vrot.slane %v819, %v834
    %v837 = vunpack.c.l.s4 1966171168
    %v838 = vunpack.c.0.s8 %v837
    %v839 = vlaneseq
    %v840 = vshrl.u32 %v839, 7
    %v841 = vsub.s32 %v838, %v840
    %v842 = vrot.slane %v820, %v841
    %v844 = vunpack.c.l.s4 1966171168
    %v845 = vunpack.c.0.s8 %v844
    %v846 = vlaneseq
    %v847 = vshrl.u32 %v846, 7
    %v848 = vsub.s32 %v845, %v847
    %v849 = vrot.slane %v821, %v848
    %v850 = vcombine.high %v828, %v828
    %v851 = vcombine.high %v835, %v835
    %v852 = vcombine.high %v842, %v842
    %v853 = vcombine.high %v849, %v849
    %v854 = vcombine.high %v744, %v744
    %v856 = vunpack.c.l.s4 1966171168
    %v857 = vunpack.c.0.s8 %v856
    %v858 = vlaneseq
    %v859 = vshrl.u32 %v858, 7
    %v860 = vsub.s32 %v857, %v859
    %v861 = vrot.slane %v744, %v860
    %v863 = vunpack.c.l.s4 1966171168
    %v864 = vunpack.c.0.s8 %v863
    %v865 = vlaneseq
    %v866 = vshrl.u32 %v865, 7
    %v867 = vsub.s32 %v864, %v866
    %v868 = vrot.slane %v854, %v867
    %v869 = vcombine.high %v861, %v861
    %v870 = vcombine.high %v868, %v868
    %v872 = vunpack.c.l.s4 1966171168
    %v873 = vunpack.c.0.s8 %v872
    %v874 = vlaneseq
    %v875 = vshrl.u32 %v874, 7
    %v876 = vsub.s32 %v873, %v875
    %v877 = vrot.slane %v861, %v876
    %v879 = vunpack.c.l.s4 1966171168
    %v880 = vunpack.c.0.s8 %v879
    %v881 = vlaneseq
    %v882 = vshrl.u32 %v881, 7
    %v883 = vsub.s32 %v880, %v882
    %v884 = vrot.slane %v868, %v883
    %v886 = vunpack.c.l.s4 1966171168
    %v887 = vunpack.c.0.s8 %v886
    %v888 = vlaneseq
    %v889 = vshrl.u32 %v888, 7
    %v890 = vsub.s32 %v887, %v889
    %v891 = vrot.slane %v869, %v890
    %v893 = vunpack.c.l.s4 1966171168
    %v894 = vunpack.c.0.s8 %v893
    %v895 = vlaneseq
    %v896 = vshrl.u32 %v895, 7
    %v897 = vsub.s32 %v894, %v896
    %v898 = vrot.slane %v870, %v897
    %v899 = vcombine.high %v877, %v877
    %v900 = vcombine.high %v884, %v884
    %v901 = vcombine.high %v891, %v891
    %v902 = vcombine.high %v898, %v898
    %v903 = vcombine.high %v749, %v749
    %v905 = vunpack.c.l.s4 1966171168
    %v906 = vunpack.c.0.s8 %v905
    %v907 = vlaneseq
    %v908 = vshrl.u32 %v907, 7
    %v909 = vsub.s32 %v906, %v908
    %v910 = vrot.slane %v749, %v909
    %v912 = vunpack.c.l.s4 1966171168
    %v913 = vunpack.c.0.s8 %v912
    %v914 = vlaneseq
    %v915 = vshrl.u32 %v914, 7
    %v916 = vsub.s32 %v913, %v915
    %v917 = vrot.slane %v903, %v916
    %v918 = vcombine.high %v910, %v910
    %v919 = vcombine.high %v917, %v917
    %v921 = vunpack.c.l.s4 1966171168
    %v922 = vunpack.c.0.s8 %v921
    %v923 = vlaneseq
    %v924 = vshrl.u32 %v923, 7
    %v925 = vsub.s32 %v922, %v924
    %v926 = vrot.slane %v910, %v925
    %v928 = vunpack.c.l.s4 1966171168
    %v929 = vunpack.c.0.s8 %v928
    %v930 = vlaneseq
    %v931 = vshrl.u32 %v930, 7
    %v932 = vsub.s32 %v929, %v931
    %v933 = vrot.slane %v917, %v932
    %v935 = vunpack.c.l.s4 1966171168
    %v936 = vunpack.c.0.s8 %v935
    %v937 = vlaneseq
    %v938 = vshrl.u32 %v937, 7
    %v939 = vsub.s32 %v936, %v938
    %v940 = vrot.slane %v918, %v939
    %v942 = vunpack.c.l.s4 1966171168
    %v943 = vunpack.c.0.s8 %v942
    %v944 = vlaneseq
    %v945 = vshrl.u32 %v944, 7
    %v946 = vsub.s32 %v943, %v945
    %v947 = vrot.slane %v919, %v946
    %v948 = vcombine.high %v926, %v926
    %v949 = vcombine.high %v940, %v940
    %v950 = vld [vmem:[#allocation10] sm:$0xff]
    %v951 = vld [vmem:[#allocation10 + $0x8] sm:$0xff]
    %v952 = vld [vmem:[#allocation10 + $0x10] sm:$0xff]
    %v953 = vld [vmem:[#allocation10 + $0x18] sm:$0xff]
    %v954 = vld [vmem:[%s10] sm:$0x1]
    %v956 = vlaneseq
    %v957 = vshrl.u32 %v956, 7
    %v958 = vsub.s32 0, %v957
    %v959 = vrot.slane %v954, %v958
    %v962 = vsel %vm658, %v247, 0
    %964 = vmatprep.subr.mxu0 0.0
    %965 = vmatpush1.msra.mxu0 %v950
    %966 = vmatprep.subr.mxu0 0.0
    %967 = vmatpush1.msra.mxu0 %v951
    %968 = vmatprep.subr.mxu0 0.0
    %969 = vmatpush1.msra.mxu0 %v952
    %970 = vmatprep.subr.mxu0 0.0
    %971 = vmatpush1.msra.mxu0 %v953
    %972 = vmatprep.subr.mxu0 0.0
    %973 = vmatpush1.msra.mxu0 0.0
    %974 = vmatprep.subr.mxu0 0.0
    %975 = vmatpush1.msra.mxu0 0.0
    %976 = vmatprep.subr.mxu0 0.0
    %977 = vmatpush1.msra.mxu0 0.0
    %978 = vmatprep.subr.mxu0 0.0
    %979 = vmatpush1.msra.mxu0 0.0
    %980 = vmatprep.subr.mxu0 0.0
    %981 = vmatpush1.msra.mxu0 0.0
    %982 = vmatprep.subr.mxu0 0.0
    %983 = vmatpush1.msra.mxu0 0.0
    %984 = vmatprep.subr.mxu0 0.0
    %985 = vmatpush1.msra.mxu0 0.0
    %986 = vmatprep.subr.mxu0 0.0
    %987 = vmatpush1.msra.mxu0 0.0
    %988 = vmatprep.subr.mxu0 0.0
    %989 = vmatpush1.msra.mxu0 0.0
    %990 = vmatprep.subr.mxu0 0.0
    %991 = vmatpush1.msra.mxu0 0.0
    %992 = vmatprep.subr.mxu0 0.0
    %993 = vmatpush1.msra.mxu0 0.0
    %994 = vmatprep.subr.mxu0 0.0
    %995 = vmatpush1.msra.mxu0 0.0
    %996 = vmatprep.subr.mxu0 0.0
    %997 = vmatpush1.msra.mxu0 0.0
    %998 = vmatprep.subr.mxu0 0.0
    %999 = vmatpush1.msra.mxu0 0.0
    %1000 = vmatprep.subr.mxu0 0.0
    %1001 = vmatpush1.msra.mxu0 0.0
    %1002 = vmatprep.subr.mxu0 0.0
    %1003 = vmatpush1.msra.mxu0 0.0
    %1004 = vmatprep.subr.mxu0 0.0
    %1005 = vmatpush1.msra.mxu0 0.0
    %1006 = vmatprep.subr.mxu0 0.0
    %1007 = vmatpush1.msra.mxu0 0.0
    %1008 = vmatprep.subr.mxu0 0.0
    %1009 = vmatpush1.msra.mxu0 0.0
    %1010 = vmatprep.subr.mxu0 0.0
    %1011 = vmatpush1.msra.mxu0 0.0
    %1012 = vmatprep.subr.mxu0 0.0
    %1013 = vmatpush1.msra.mxu0 0.0
    %1014 = vmatprep.subr.mxu0 0.0
    %1015 = vmatpush1.msra.mxu0 0.0
    %1016 = vmatprep.subr.mxu0 0.0
    %1017 = vmatpush1.msra.mxu0 0.0
    %1018 = vmatprep.subr.mxu0 0.0
    %1019 = vmatpush1.msra.mxu0 0.0
    %1020 = vmatprep.subr.mxu0 0.0
    %1021 = vmatpush1.msra.mxu0 0.0
    %1022 = vmatprep.subr.mxu0 0.0
    %1023 = vmatpush1.msra.mxu0 0.0
    %1024 = vmatprep.subr.mxu0 0.0
    %1025 = vmatpush1.msra.mxu0 0.0
    %1026 = vmatprep.subr.mxu0 0.0
    %1027 = vmatpush1.msra.mxu0 0.0
    %1028 = vmatprep.mubr.f32.mxu0 0.0
    %1029 = vmatmul.mubr.f32.gmra.mrb[0].mxu0 %v962
    %v1030 = vpop.f32.mrb[0].mxu0
    %v1031 = vadd.f32 %v959, %v1030
    %v1032 = vpop.f32.mrb[0].mxu0
    %1033 = vdwg.mxu0
    %v1034 = vld [vmem:[%s8] sm:$0xff]
    %v1035 = vld [vmem:[%s8 + $0x8] sm:$0xff]
    %v1036 = vld [vmem:[%s8 + $0x10] sm:$0xff]
    %v1037 = vld [vmem:[%s8 + $0x18] sm:$0xff]
    %v1047 = vcombine.low %v450, %v451
    %v1048 = vcombine.low %v452, %v453
    %v1050 = vunpack.c.l.s4 1983009808
    %v1051 = vunpack.c.0.s8 %v1050
    %v1052 = vlaneseq
    %v1053 = vshrl.u32 %v1052, 7
    %v1054 = vsub.s32 %v1051, %v1053
    %v1055 = vrot.slane %v1047, %v1054
    %v1057 = vunpack.c.l.s4 1983009808
    %v1058 = vunpack.c.0.s8 %v1057
    %v1059 = vlaneseq
    %v1060 = vshrl.u32 %v1059, 7
    %v1061 = vsub.s32 %v1058, %v1060
    %v1062 = vrot.slane %v1048, %v1061
    %v1063 = vcombine.low %v1055, %v1062
    %v1064 = vcombine.low %v454, %v455
    %v1065 = vcombine.low %v456, %v457
    %v1067 = vunpack.c.l.s4 1983009808
    %v1068 = vunpack.c.0.s8 %v1067
    %v1069 = vlaneseq
    %v1070 = vshrl.u32 %v1069, 7
    %v1071 = vsub.s32 %v1068, %v1070
    %v1072 = vrot.slane %v1064, %v1071
    %v1074 = vunpack.c.l.s4 1983009808
    %v1075 = vunpack.c.0.s8 %v1074
    %v1076 = vlaneseq
    %v1077 = vshrl.u32 %v1076, 7
    %v1078 = vsub.s32 %v1075, %v1077
    %v1079 = vrot.slane %v1065, %v1078
    %v1080 = vcombine.low %v1072, %v1079
    %v1082 = vunpack.c.l.s4 1983009808
    %v1083 = vunpack.c.0.s8 %v1082
    %v1084 = vlaneseq
    %v1085 = vshrl.u32 %v1084, 7
    %v1086 = vsub.s32 %v1083, %v1085
    %v1087 = vrot.slane %v458, %v1086
    %v1088 = vsel %vm658, %v1063, 0
    %v1090 = vsel %vm658, %v1080, 0
    %v1092 = vsel %vm658, %v1087, 0
    %1094 = vmatprep.subr.mxu0 0.0
    %1095 = vmatpush1.msra.mxu0 %v1034
    %1096 = vmatprep.subr.mxu0 0.0
    %1097 = vmatpush1.msra.mxu0 %v1035
    %1098 = vmatprep.subr.mxu0 0.0
    %1099 = vmatpush1.msra.mxu0 %v1036
    %1100 = vmatprep.subr.mxu0 0.0
    %1101 = vmatpush1.msra.mxu0 %v1037
    %1102 = vmatprep.subr.mxu0 0.0
    %1103 = vmatpush1.msra.mxu0 0.0
    %1104 = vmatprep.subr.mxu0 0.0
    %1105 = vmatpush1.msra.mxu0 0.0
    %1106 = vmatprep.subr.mxu0 0.0
    %1107 = vmatpush1.msra.mxu0 0.0
    %1108 = vmatprep.subr.mxu0 0.0
    %1109 = vmatpush1.msra.mxu0 0.0
    %1110 = vmatprep.subr.mxu0 0.0
    %1111 = vmatpush1.msra.mxu0 0.0
    %1112 = vmatprep.subr.mxu0 0.0
    %1113 = vmatpush1.msra.mxu0 0.0
    %1114 = vmatprep.subr.mxu0 0.0
    %1115 = vmatpush1.msra.mxu0 0.0
    %1116 = vmatprep.subr.mxu0 0.0
    %1117 = vmatpush1.msra.mxu0 0.0
    %1118 = vmatprep.subr.mxu0 0.0
    %1119 = vmatpush1.msra.mxu0 0.0
    %1120 = vmatprep.subr.mxu0 0.0
    %1121 = vmatpush1.msra.mxu0 0.0
    %1122 = vmatprep.subr.mxu0 0.0
    %1123 = vmatpush1.msra.mxu0 0.0
    %1124 = vmatprep.subr.mxu0 0.0
    %1125 = vmatpush1.msra.mxu0 0.0
    %1126 = vmatprep.subr.mxu0 0.0
    %1127 = vmatpush1.msra.mxu0 0.0
    %1128 = vmatprep.subr.mxu0 0.0
    %1129 = vmatpush1.msra.mxu0 0.0
    %1130 = vmatprep.subr.mxu0 0.0
    %1131 = vmatpush1.msra.mxu0 0.0
    %1132 = vmatprep.subr.mxu0 0.0
    %1133 = vmatpush1.msra.mxu0 0.0
    %1134 = vmatprep.subr.mxu0 0.0
    %1135 = vmatpush1.msra.mxu0 0.0
    %1136 = vmatprep.subr.mxu0 0.0
    %1137 = vmatpush1.msra.mxu0 0.0
    %1138 = vmatprep.subr.mxu0 0.0
    %1139 = vmatpush1.msra.mxu0 0.0
    %1140 = vmatprep.subr.mxu0 0.0
    %1141 = vmatpush1.msra.mxu0 0.0
    %1142 = vmatprep.subr.mxu0 0.0
    %1143 = vmatpush1.msra.mxu0 0.0
    %1144 = vmatprep.subr.mxu0 0.0
    %1145 = vmatpush1.msra.mxu0 0.0
    %1146 = vmatprep.subr.mxu0 0.0
    %1147 = vmatpush1.msra.mxu0 0.0
    %1148 = vmatprep.subr.mxu0 0.0
    %1149 = vmatpush1.msra.mxu0 0.0
    %1150 = vmatprep.subr.mxu0 0.0
    %1151 = vmatpush1.msra.mxu0 0.0
    %1152 = vmatprep.subr.mxu0 0.0
    %1153 = vmatpush1.msra.mxu0 0.0
    %1154 = vmatprep.subr.mxu0 0.0
    %1155 = vmatpush1.msra.mxu0 0.0
    %1156 = vmatprep.subr.mxu0 0.0
    %1157 = vmatpush1.msra.mxu0 0.0
    %1158 = vmatprep.mubr.f32.mxu0 0.0
    %1159 = vmatmul.mubr.f32.gmra.mrb[0].mxu0 %v1088
    %v1160 = vpop.f32.mrb[0].mxu0
    %v1161 = vadd.f32 0.0, %v1160
    %v1162 = vpop.f32.mrb[0].mxu0
    %1163 = vmatprep.mubr.f32.mxu0 0.0
    %1164 = vmatmul.mubr.f32.gmra.mrb[0].mxu0 %v1090
    %v1165 = vpop.f32.mrb[0].mxu0
    %v1166 = vadd.f32 0.0, %v1165
    %v1167 = vpop.f32.mrb[0].mxu0
    %1168 = vmatprep.mubr.f32.mxu0 0.0
    %1169 = vmatmul.mubr.f32.gmra.mrb[0].mxu0 %v1092
    %v1170 = vpop.f32.mrb[0].mxu0
    %v1171 = vadd.f32 0.0, %v1170
    %v1172 = vpop.f32.mrb[0].mxu0
    %1173 = vdwg.mxu0
    %v1174 = vld [vmem:[#allocation20] sm:$0x1]
    %v1176 = vlaneseq
    %v1177 = vshrl.u32 %v1176, 7
    %v1178 = vsub.s32 0, %v1177
    %v1179 = vrot.slane %v1174, %v1178
    %v1181 = vld [vmem:[#allocation2] sm:$0x1]
    %s1182 = vtos %v1181
    %vm1183 = vcmp.gt.f32.partialorder %v459, 0.0
    %v1184 = vstv %s1182
    %v1185 = vsel %vm1183, %v1184, -1e+30
    %v1186 = vld [vmem:[%s6] sm:$0xff]
    %v1187 = vld [vmem:[%s6 + $0x8] sm:$0xff]
    %v1188 = vld [vmem:[%s6 + $0x10] sm:$0xff]
    %v1189 = vld [vmem:[%s6 + $0x18] sm:$0xff]
    %v1190 = vld [vmem:[#allocation11] sm:$0xff]
    %v1191 = vld [vmem:[#allocation11 + $0x8] sm:$0xff]
    %v1192 = vld [vmem:[#allocation11 + $0x10] sm:$0xff]
    %v1193 = vld [vmem:[#allocation11 + $0x18] sm:$0xff]
    %v1194 = vld [vmem:[#allocation13] sm:$0xff]
    %v1195 = vld [vmem:[#allocation13 + $0x8] sm:$0xff]
    %v1196 = vld [vmem:[#allocation13 + $0x10] sm:$0xff]
    %v1197 = vld [vmem:[#allocation13 + $0x18] sm:$0xff]
    %v1198 = vld [vmem:[#allocation14] sm:$0xff]
    %v1199 = vld [vmem:[#allocation14 + $0x8] sm:$0xff]
    %v1200 = vld [vmem:[#allocation14 + $0x10] sm:$0xff]
    %v1201 = vld [vmem:[#allocation14 + $0x18] sm:$0xff]
    %v1202 = vld [vmem:[#allocation16] sm:$0xff]
    %v1203 = vld [vmem:[#allocation16 + $0x8] sm:$0xff]
    %v1204 = vld [vmem:[#allocation16 + $0x10] sm:$0xff]
    %v1205 = vld [vmem:[#allocation16 + $0x18] sm:$0xff]
    %v1206 = vld [vmem:[%s14] sm:$0x1]
    %v1207 = vld [vmem:[#allocation17] sm:$0xff]
    %v1208 = vld [vmem:[#allocation17 + $0x8] sm:$0xff]
    %v1209 = vld [vmem:[#allocation17 + $0x10] sm:$0xff]
    %v1210 = vld [vmem:[#allocation17 + $0x18] sm:$0xff]
    %v1211 = vld [vmem:[#allocation19] sm:$0x1]
    %v1212 = vadd.f32 %v1161, %v1031
    %v1214 = vsel %vm658, 0.0, 0
    %1216 = vmatprep.subr.mxu0 0.0
    %1217 = vmatpush1.msra.mxu0 %v1186
    %1218 = vmatprep.subr.mxu0 0.0
    %1219 = vmatpush1.msra.mxu0 %v1187
    %1220 = vmatprep.subr.mxu0 0.0
    %1221 = vmatpush1.msra.mxu0 %v1188
    %1222 = vmatprep.subr.mxu0 0.0
    %1223 = vmatpush1.msra.mxu0 %v1189
    %1224 = vmatprep.subr.mxu0 0.0
    %1225 = vmatpush1.msra.mxu0 0.0
    %1226 = vmatprep.subr.mxu0 0.0
    %1227 = vmatpush1.msra.mxu0 0.0
    %1228 = vmatprep.subr.mxu0 0.0
    %1229 = vmatpush1.msra.mxu0 0.0
    %1230 = vmatprep.subr.mxu0 0.0
    %1231 = vmatpush1.msra.mxu0 0.0
    %1232 = vmatprep.subr.mxu0 0.0
    %1233 = vmatpush1.msra.mxu0 0.0
    %1234 = vmatprep.subr.mxu0 0.0
    %1235 = vmatpush1.msra.mxu0 0.0
    %1236 = vmatprep.subr.mxu0 0.0
    %1237 = vmatpush1.msra.mxu0 0.0
    %1238 = vmatprep.subr.mxu0 0.0
    %1239 = vmatpush1.msra.mxu0 0.0
    %1240 = vmatprep.subr.mxu0 0.0
    %1241 = vmatpush1.msra.mxu0 0.0
    %1242 = vmatprep.subr.mxu0 0.0
    %1243 = vmatpush1.msra.mxu0 0.0
    %1244 = vmatprep.subr.mxu0 0.0
    %1245 = vmatpush1.msra.mxu0 0.0
    %1246 = vmatprep.subr.mxu0 0.0
    %1247 = vmatpush1.msra.mxu0 0.0
    %1248 = vmatprep.subr.mxu0 0.0
    %1249 = vmatpush1.msra.mxu0 0.0
    %1250 = vmatprep.subr.mxu0 0.0
    %1251 = vmatpush1.msra.mxu0 0.0
    %1252 = vmatprep.subr.mxu0 0.0
    %1253 = vmatpush1.msra.mxu0 0.0
    %1254 = vmatprep.subr.mxu0 0.0
    %1255 = vmatpush1.msra.mxu0 0.0
    %1256 = vmatprep.subr.mxu0 0.0
    %1257 = vmatpush1.msra.mxu0 0.0
    %1258 = vmatprep.subr.mxu0 0.0
    %1259 = vmatpush1.msra.mxu0 0.0
    %1260 = vmatprep.subr.mxu0 0.0
    %1261 = vmatpush1.msra.mxu0 0.0
    %1262 = vmatprep.subr.mxu0 0.0
    %1263 = vmatpush1.msra.mxu0 0.0
    %1264 = vmatprep.subr.mxu0 0.0
    %1265 = vmatpush1.msra.mxu0 0.0
    %1266 = vmatprep.subr.mxu0 0.0
    %1267 = vmatpush1.msra.mxu0 0.0
    %1268 = vmatprep.subr.mxu0 0.0
    %1269 = vmatpush1.msra.mxu0 0.0
    %1270 = vmatprep.subr.mxu0 0.0
    %1271 = vmatpush1.msra.mxu0 0.0
    %1272 = vmatprep.subr.mxu0 0.0
    %1273 = vmatpush1.msra.mxu0 0.0
    %1274 = vmatprep.subr.mxu0 0.0
    %1275 = vmatpush1.msra.mxu0 0.0
    %1276 = vmatprep.subr.mxu0 0.0
    %1277 = vmatpush1.msra.mxu0 0.0
    %1278 = vmatprep.subr.mxu0 0.0
    %1279 = vmatpush1.msra.mxu0 0.0
    %1280 = vmatprep.mubr.f32.mxu0 0.0
    %1281 = vmatmul.mubr.f32.gmra.mrb[0].mxu0 %v1214
    %v1282 = vpop.f32.mrb[0].mxu0
    %v1283 = vadd.f32 0.0, %v1282
    %v1284 = vpop.f32.mrb[0].mxu0
    %1285 = vdwg.mxu0
    %v1286 = vadd.f32 %v1212, %v1283
    %1287 = vmatprep.subr.mxu0 0.0
    %1288 = vmatpush1.msra.mxu0 %v1190
    %1289 = vmatprep.subr.mxu0 0.0
    %1290 = vmatpush1.msra.mxu0 %v1191
    %1291 = vmatprep.subr.mxu0 0.0
    %1292 = vmatpush1.msra.mxu0 %v1192
    %1293 = vmatprep.subr.mxu0 0.0
    %1294 = vmatpush1.msra.mxu0 %v1193
    %1295 = vmatprep.subr.mxu0 0.0
    %1296 = vmatpush1.msra.mxu0 0.0
    %1297 = vmatprep.subr.mxu0 0.0
    %1298 = vmatpush1.msra.mxu0 0.0
    %1299 = vmatprep.subr.mxu0 0.0
    %1300 = vmatpush1.msra.mxu0 0.0
    %1301 = vmatprep.subr.mxu0 0.0
    %1302 = vmatpush1.msra.mxu0 0.0
    %1303 = vmatprep.subr.mxu0 0.0
    %1304 = vmatpush1.msra.mxu0 0.0
    %1305 = vmatprep.subr.mxu0 0.0
    %1306 = vmatpush1.msra.mxu0 0.0
    %1307 = vmatprep.subr.mxu0 0.0
    %1308 = vmatpush1.msra.mxu0 0.0
    %1309 = vmatprep.subr.mxu0 0.0
    %1310 = vmatpush1.msra.mxu0 0.0
    %1311 = vmatprep.subr.mxu0 0.0
    %1312 = vmatpush1.msra.mxu0 0.0
    %1313 = vmatprep.subr.mxu0 0.0
    %1314 = vmatpush1.msra.mxu0 0.0
    %1315 = vmatprep.subr.mxu0 0.0
    %1316 = vmatpush1.msra.mxu0 0.0
    %1317 = vmatprep.subr.mxu0 0.0
    %1318 = vmatpush1.msra.mxu0 0.0
    %1319 = vmatprep.subr.mxu0 0.0
    %1320 = vmatpush1.msra.mxu0 0.0
    %1321 = vmatprep.subr.mxu0 0.0
    %1322 = vmatpush1.msra.mxu0 0.0
    %1323 = vmatprep.subr.mxu0 0.0
    %1324 = vmatpush1.msra.mxu0 0.0
    %1325 = vmatprep.subr.mxu0 0.0
    %1326 = vmatpush1.msra.mxu0 0.0
    %1327 = vmatprep.subr.mxu0 0.0
    %1328 = vmatpush1.msra.mxu0 0.0
    %1329 = vmatprep.subr.mxu0 0.0
    %1330 = vmatpush1.msra.mxu0 0.0
    %1331 = vmatprep.subr.mxu0 0.0
    %1332 = vmatpush1.msra.mxu0 0.0
    %1333 = vmatprep.subr.mxu0 0.0
    %1334 = vmatpush1.msra.mxu0 0.0
    %1335 = vmatprep.subr.mxu0 0.0
    %1336 = vmatpush1.msra.mxu0 0.0
    %1337 = vmatprep.subr.mxu0 0.0
    %1338 = vmatpush1.msra.mxu0 0.0
    %1339 = vmatprep.subr.mxu0 0.0
    %1340 = vmatpush1.msra.mxu0 0.0
    %1341 = vmatprep.subr.mxu0 0.0
    %1342 = vmatpush1.msra.mxu0 0.0
    %1343 = vmatprep.subr.mxu0 0.0
    %1344 = vmatpush1.msra.mxu0 0.0
    %1345 = vmatprep.subr.mxu0 0.0
    %1346 = vmatpush1.msra.mxu0 0.0
    %1347 = vmatprep.subr.mxu0 0.0
    %1348 = vmatpush1.msra.mxu0 0.0
    %1349 = vmatprep.subr.mxu0 0.0
    %1350 = vmatpush1.msra.mxu0 0.0
    %1351 = vmatprep.mubr.f32.mxu0 0.0
    %1352 = vmatmul.mubr.f32.gmra.mrb[0].mxu0 %v1214
    %v1353 = vpop.f32.mrb[0].mxu0
    %v1354 = vadd.f32 0.0, %v1353
    %v1355 = vpop.f32.mrb[0].mxu0
    %1356 = vdwg.mxu0
    %v1357 = vadd.f32 %v1286, %v1354
    %v1358 = vxor.u32 %v1357, 2147483648
    %v1359 = vmul.f32 %v1358, 1.442695
    %v1360 = vpow.pop %v1359
    %v1361 = vadd.f32 %v1360, 1.0
    %v1362 = vrcp.pop %v1361
    %v1363 = vmul.f32 1.0, %v1362
    %v1364 = vtanh.pop %v1357
    %v1365 = vmul.f32 %v1363, 0.0
    %1367 = vrot.lane.b32.xlu0 %v1364, 64
    %v1368 = vpop.permute.xlu0 %1367
    %v1370 = vmul.f32 %v1363, %v1368
    %1372 = vrot.lane.b32.xlu0 %v1370, 32
    %v1373 = vpop.permute.xlu0 %1372
    %v1375 = vadd.f32 %v1365, %v1373
    %v1376 = vtanh.pop %v1375
    %1378 = vrot.lane.b32.xlu0 %v1376, 64
    %v1379 = vpop.permute.xlu0 %1378
    %v1381 = vmul.f32 %v1363, %v1379
    %v1383 = vlaneseq
    %v1384 = vshrl.u32 %v1383, 7
    %v1385 = vsub.s32 0, %v1384
    %v1386 = vrot.slane %v1211, %v1385
    %1389 = vrot.lane.b32.xlu0 %v1381, 32
    %v1390 = vpop.permute.xlu0 %1389
    %v1391 = vsel %vm658, %v1390, 0
    %1393 = vmatprep.subr.mxu0 0.0
    %1394 = vmatpush1.msra.mxu0 %v1207
    %1395 = vmatprep.subr.mxu0 0.0
    %1396 = vmatpush1.msra.mxu0 %v1208
    %1397 = vmatprep.subr.mxu0 0.0
    %1398 = vmatpush1.msra.mxu0 %v1209
    %1399 = vmatprep.subr.mxu0 0.0
    %1400 = vmatpush1.msra.mxu0 %v1210
    %1401 = vmatprep.subr.mxu0 0.0
    %1402 = vmatpush1.msra.mxu0 0.0
    %1403 = vmatprep.subr.mxu0 0.0
    %1404 = vmatpush1.msra.mxu0 0.0
    %1405 = vmatprep.subr.mxu0 0.0
    %1406 = vmatpush1.msra.mxu0 0.0
    %1407 = vmatprep.subr.mxu0 0.0
    %1408 = vmatpush1.msra.mxu0 0.0
    %1409 = vmatprep.subr.mxu0 0.0
    %1410 = vmatpush1.msra.mxu0 0.0
    %1411 = vmatprep.subr.mxu0 0.0
    %1412 = vmatpush1.msra.mxu0 0.0
    %1413 = vmatprep.subr.mxu0 0.0
    %1414 = vmatpush1.msra.mxu0 0.0
    %1415 = vmatprep.subr.mxu0 0.0
    %1416 = vmatpush1.msra.mxu0 0.0
    %1417 = vmatprep.subr.mxu0 0.0
    %1418 = vmatpush1.msra.mxu0 0.0
    %1419 = vmatprep.subr.mxu0 0.0
    %1420 = vmatpush1.msra.mxu0 0.0
    %1421 = vmatprep.subr.mxu0 0.0
    %1422 = vmatpush1.msra.mxu0 0.0
    %1423 = vmatprep.subr.mxu0 0.0
    %1424 = vmatpush1.msra.mxu0 0.0
    %1425 = vmatprep.subr.mxu0 0.0
    %1426 = vmatpush1.msra.mxu0 0.0
    %1427 = vmatprep.subr.mxu0 0.0
    %1428 = vmatpush1.msra.mxu0 0.0
    %1429 = vmatprep.subr.mxu0 0.0
    %1430 = vmatpush1.msra.mxu0 0.0
    %1431 = vmatprep.subr.mxu0 0.0
    %1432 = vmatpush1.msra.mxu0 0.0
    %1433 = vmatprep.subr.mxu0 0.0
    %1434 = vmatpush1.msra.mxu0 0.0
    %1435 = vmatprep.subr.mxu0 0.0
    %1436 = vmatpush1.msra.mxu0 0.0
    %1437 = vmatprep.subr.mxu0 0.0
    %1438 = vmatpush1.msra.mxu0 0.0
    %1439 = vmatprep.subr.mxu0 0.0
    %1440 = vmatpush1.msra.mxu0 0.0
    %1441 = vmatprep.subr.mxu0 0.0
    %1442 = vmatpush1.msra.mxu0 0.0
    %1443 = vmatprep.subr.mxu0 0.0
    %1444 = vmatpush1.msra.mxu0 0.0
    %1445 = vmatprep.subr.mxu0 0.0
    %1446 = vmatpush1.msra.mxu0 0.0
    %1447 = vmatprep.subr.mxu0 0.0
    %1448 = vmatpush1.msra.mxu0 0.0
    %1449 = vmatprep.subr.mxu0 0.0
    %1450 = vmatpush1.msra.mxu0 0.0
    %1451 = vmatprep.subr.mxu0 0.0
    %1452 = vmatpush1.msra.mxu0 0.0
    %1453 = vmatprep.subr.mxu0 0.0
    %1454 = vmatpush1.msra.mxu0 0.0
    %1455 = vmatprep.subr.mxu0 0.0
    %1456 = vmatpush1.msra.mxu0 0.0
    %1457 = vmatprep.mubr.f32.mxu0 0.0
    %1458 = vmatmul.mubr.f32.gmra.mrb[0].mxu0 %v1391
    %v1459 = vpop.f32.mrb[0].mxu0
    %v1460 = vadd.f32 %v1386, %v1459
    %v1461 = vpop.f32.mrb[0].mxu0
    %1462 = vdwg.mxu0
    %v1465 = vunpack.c.l.s4 1966171168
    %v1466 = vunpack.c.0.s8 %v1465
    %v1467 = vlaneseq
    %v1468 = vshrl.u32 %v1467, 7
    %v1469 = vsub.s32 %v1466, %v1468
    %v1470 = vrot.slane %v1460, %v1469
    %v1471 = vcombine.high %v1470, %v1470
    %v1473 = vunpack.c.l.s4 1966171168
    %v1474 = vunpack.c.0.s8 %v1473
    %v1475 = vlaneseq
    %v1476 = vshrl.u32 %v1475, 7
    %v1477 = vsub.s32 %v1474, %v1476
    %v1478 = vrot.slane %v1470, %v1477
    %v1480 = vunpack.c.l.s4 1966171168
    %v1481 = vunpack.c.0.s8 %v1480
    %v1482 = vlaneseq
    %v1483 = vshrl.u32 %v1482, 7
    %v1484 = vsub.s32 %v1481, %v1483
    %v1485 = vrot.slane %v1471, %v1484
    %v1486 = vlaneseq
    %v1487 = vshrl.u32 %v1486, 7
    %v1488 = vsub.s32 0, %v1487
    %v1489 = vrot.slane %v1478, %v1488
    %v1490 = vlaneseq
    %v1491 = vshrl.u32 %v1490, 7
    %v1492 = vsub.s32 0, %v1491
    %v1493 = vrot.slane %v1485, %v1492
    %v1496 = vcombine.low %v779, %v793
    %v1497 = vcombine.low %v801, %v803
    %v1498 = vcombine.low %v786, %v800
    %v1499 = vcombine.low %v802, %v804
    %v1501 = vunpack.c.l.s4 1966171168
    %v1502 = vunpack.c.0.s8 %v1501
    %v1503 = vlaneseq
    %v1504 = vshrl.u32 %v1503, 7
    %v1505 = vsub.s32 %v1502, %v1504
    %v1506 = vrot.slane %v1496, %v1505
    %v1508 = vunpack.c.l.s4 1966171168
    %v1509 = vunpack.c.0.s8 %v1508
    %v1510 = vlaneseq
    %v1511 = vshrl.u32 %v1510, 7
    %v1512 = vsub.s32 %v1509, %v1511
    %v1513 = vrot.slane %v1497, %v1512
    %v1515 = vunpack.c.l.s4 1966171168
    %v1516 = vunpack.c.0.s8 %v1515
    %v1517 = vlaneseq
    %v1518 = vshrl.u32 %v1517, 7
    %v1519 = vsub.s32 %v1516, %v1518
    %v1520 = vrot.slane %v1498, %v1519
    %v1522 = vunpack.c.l.s4 1966171168
    %v1523 = vunpack.c.0.s8 %v1522
    %v1524 = vlaneseq
    %v1525 = vshrl.u32 %v1524, 7
    %v1526 = vsub.s32 %v1523, %v1525
    %v1527 = vrot.slane %v1499, %v1526
    %v1528 = vcombine.low %v1506, %v1513
    %v1529 = vcombine.low %v1520, %v1527
    %v1531 = vunpack.c.l.s4 1966171168
    %v1532 = vunpack.c.0.s8 %v1531
    %v1533 = vlaneseq
    %v1534 = vshrl.u32 %v1533, 7
    %v1535 = vsub.s32 %v1532, %v1534
    %v1536 = vrot.slane %v1528, %v1535
    %v1538 = vunpack.c.l.s4 1966171168
    %v1539 = vunpack.c.0.s8 %v1538
    %v1540 = vlaneseq
    %v1541 = vshrl.u32 %v1540, 7
    %v1542 = vsub.s32 %v1539, %v1541
    %v1543 = vrot.slane %v1529, %v1542
    %v1544 = vcombine.low %v1536, %v1543
    %v1545 = vcombine.low %v828, %v842
    %v1546 = vcombine.low %v850, %v852
    %v1547 = vcombine.low %v835, %v849
    %v1549 = vunpack.c.l.s4 1966171168
    %v1550 = vunpack.c.0.s8 %v1549
    %v1551 = vlaneseq
    %v1552 = vshrl.u32 %v1551, 7
    %v1553 = vsub.s32 %v1550, %v1552
    %v1554 = vrot.slane %v1545, %v1553
    %v1556 = vunpack.c.l.s4 1966171168
    %v1557 = vunpack.c.0.s8 %v1556
    %v1558 = vlaneseq
    %v1559 = vshrl.u32 %v1558, 7
    %v1560 = vsub.s32 %v1557, %v1559
    %v1561 = vrot.slane %v1546, %v1560
    %v1563 = vunpack.c.l.s4 1966171168
    %v1564 = vunpack.c.0.s8 %v1563
    %v1565 = vlaneseq
    %v1566 = vshrl.u32 %v1565, 7
    %v1567 = vsub.s32 %v1564, %v1566
    %v1568 = vrot.slane %v1547, %v1567
    %v1570 = vunpack.c.l.s4 1966171168
    %v1571 = vunpack.c.0.s8 %v1570
    %v1572 = vlaneseq
    %v1573 = vshrl.u32 %v1572, 7
    %v1574 = vsub.s32 %v1571, %v1573
    %v1575 = vrot.slane %v851, %v1574
    %v1576 = vcombine.low %v1554, %v1561
    %v1577 = vcombine.low %v1568, %v1575
    %v1579 = vunpack.c.l.s4 1966171168
    %v1580 = vunpack.c.0.s8 %v1579
    %v1581 = vlaneseq
    %v1582 = vshrl.u32 %v1581, 7
    %v1583 = vsub.s32 %v1580, %v1582
    %v1584 = vrot.slane %v1576, %v1583
    %v1586 = vunpack.c.l.s4 1966171168
    %v1587 = vunpack.c.0.s8 %v1586
    %v1588 = vlaneseq
    %v1589 = vshrl.u32 %v1588, 7
    %v1590 = vsub.s32 %v1587, %v1589
    %v1591 = vrot.slane %v1577, %v1590
    %v1592 = vcombine.low %v1584, %v1591
    %v1593 = vcombine.low %v853, %v877
    %v1594 = vcombine.low %v891, %v899
    %v1595 = vcombine.low %v901, %v884
    %v1596 = vcombine.low %v898, %v900
    %v1598 = vunpack.c.l.s4 1966171168
    %v1599 = vunpack.c.0.s8 %v1598
    %v1600 = vlaneseq
    %v1601 = vshrl.u32 %v1600, 7
    %v1602 = vsub.s32 %v1599, %v1601
    %v1603 = vrot.slane %v1593, %v1602
    %v1605 = vunpack.c.l.s4 1966171168
    %v1606 = vunpack.c.0.s8 %v1605
    %v1607 = vlaneseq
    %v1608 = vshrl.u32 %v1607, 7
    %v1609 = vsub.s32 %v1606, %v1608
    %v1610 = vrot.slane %v1594, %v1609
    %v1612 = vunpack.c.l.s4 1966171168
    %v1613 = vunpack.c.0.s8 %v1612
    %v1614 = vlaneseq
    %v1615 = vshrl.u32 %v1614, 7
    %v1616 = vsub.s32 %v1613, %v1615
    %v1617 = vrot.slane %v1595, %v1616
    %v1619 = vunpack.c.l.s4 1966171168
    %v1620 = vunpack.c.0.s8 %v1619
    %v1621 = vlaneseq
    %v1622 = vshrl.u32 %v1621, 7
    %v1623 = vsub.s32 %v1620, %v1622
    %v1624 = vrot.slane %v1596, %v1623
    %v1625 = vcombine.low %v1603, %v1610
    %v1626 = vcombine.low %v1617, %v1624
    %v1628 = vunpack.c.l.s4 1966171168
    %v1629 = vunpack.c.0.s8 %v1628
    %v1630 = vlaneseq
    %v1631 = vshrl.u32 %v1630, 7
    %v1632 = vsub.s32 %v1629, %v1631
    %v1633 = vrot.slane %v1625, %v1632
    %v1635 = vunpack.c.l.s4 1966171168
    %v1636 = vunpack.c.0.s8 %v1635
    %v1637 = vlaneseq
    %v1638 = vshrl.u32 %v1637, 7
    %v1639 = vsub.s32 %v1636, %v1638
    %v1640 = vrot.slane %v1626, %v1639
    %v1641 = vcombine.low %v1633, %v1640
    %v1642 = vcombine.low %v902, %v926
    %v1643 = vcombine.low %v940, %v948
    %v1644 = vcombine.low %v949, %v933
    %v1646 = vunpack.c.l.s4 1966171168
    %v1647 = vunpack.c.0.s8 %v1646
    %v1648 = vlaneseq
    %v1649 = vshrl.u32 %v1648, 7
    %v1650 = vsub.s32 %v1647, %v1649
    %v1651 = vrot.slane %v1642, %v1650
    %v1653 = vunpack.c.l.s4 1966171168
    %v1654 = vunpack.c.0.s8 %v1653
    %v1655 = vlaneseq
    %v1656 = vshrl.u32 %v1655, 7
    %v1657 = vsub.s32 %v1654, %v1656
    %v1658 = vrot.slane %v1643, %v1657
    %v1660 = vunpack.c.l.s4 1966171168
    %v1661 = vunpack.c.0.s8 %v1660
    %v1662 = vlaneseq
    %v1663 = vshrl.u32 %v1662, 7
    %v1664 = vsub.s32 %v1661, %v1663
    %v1665 = vrot.slane %v1644, %v1664
    %v1667 = vunpack.c.l.s4 1966171168
    %v1668 = vunpack.c.0.s8 %v1667
    %v1669 = vlaneseq
    %v1670 = vshrl.u32 %v1669, 7
    %v1671 = vsub.s32 %v1668, %v1670
    %v1672 = vrot.slane %v947, %v1671
    %v1673 = vcombine.low %v1651, %v1658
    %v1674 = vcombine.low %v1665, %v1672
    %v1676 = vunpack.c.l.s4 1966171168
    %v1677 = vunpack.c.0.s8 %v1676
    %v1678 = vlaneseq
    %v1679 = vshrl.u32 %v1678, 7
    %v1680 = vsub.s32 %v1677, %v1679
    %v1681 = vrot.slane %v1673, %v1680
    %v1683 = vunpack.c.l.s4 1966171168
    %v1684 = vunpack.c.0.s8 %v1683
    %v1685 = vlaneseq
    %v1686 = vshrl.u32 %v1685, 7
    %v1687 = vsub.s32 %v1684, %v1686
    %v1688 = vrot.slane %v1674, %v1687
    %v1689 = vcombine.low %v1681, %v1688
    %v1694 = vadd.f32 %v1489, %v1544
    %v1695 = vadd.f32 %v1489, %v1592
    %v1696 = vadd.f32 %v1493, %v1641
    %v1697 = vadd.f32 %v1493, %v1689
    %v1698 = vtanh.pop %v1694
    %v1699 = vtanh.pop %v1695
    %v1700 = vtanh.pop %v1696
    %v1701 = vtanh.pop %v1697
    %v1702 = vmul.f32 %v1698, %v1179
    %v1703 = vmul.f32 %v1699, %v1179
    %v1704 = vmul.f32 %v1700, %v1179
    %v1705 = vmul.f32 %v1701, %v1179
    %v1706 = vsel %vm658, %v1702, 0.0
    %1707 = vadd.xlane.f32.xlu0 %v1706
    %v1708 = vpop.xlane.xlu0 %1707
    %vm1709 = vcmask 260096
    %v1710 = vsel %vm1709, %v1703, 0.0
    %1711 = vadd.xlane.f32.xlu0 %v1710
    %v1712 = vpop.xlane.xlu0 %1711
    %v1713 = vsel %vm658, %v1704, 0.0
    %1714 = vadd.xlane.f32.xlu0 %v1713
    %v1715 = vpop.xlane.xlu0 %1714
    %v1716 = vsel %vm1709, %v1705, 0.0
    %1717 = vadd.xlane.f32.xlu0 %v1716
    %v1718 = vpop.xlane.xlu0 %1717
    %v1720 = vlaneseq
    %v1721 = vshrl.u32 %v1720, 7
    %v1722 = vsub.s32 0, %v1721
    %v1723 = vrot.slane %v1185, %v1722
    %1725 = vbcast.lane.b32.xlu0 %v1723, 256
    %v1726 = vpop.permute.xlu0 %1725
    %s1728 = sor.u32 256, 8
    %1729 = vbcast.lane.b32.xlu0 %v1723, %s1728
    %v1730 = vpop.permute.xlu0 %1729
    %v1731 = vlaneseq
    %v1732 = vshrl.u32 %v1731, 7
    %v1733 = vsub.s32 1, %v1732
    %v1734 = vrot.slane %v1185, %v1733
    %1736 = vbcast.lane.b32.xlu0 %v1734, 256
    %v1737 = vpop.permute.xlu0 %1736
    %s1739 = sor.u32 256, 8
    %1740 = vbcast.lane.b32.xlu0 %v1734, %s1739
    %v1741 = vpop.permute.xlu0 %1740
    %v1746 = vadd.f32 %v1708, %v1726
    %v1747 = vadd.f32 %v1712, %v1730
    %v1748 = vadd.f32 %v1715, %v1737
    %v1749 = vadd.f32 %v1718, %v1741
    %1754 = vset.pattern.permute.xlu0 0
    %1755 = vperm.xlu0 %1754, %v1746
    %v1756 = vpop.permute.xlu0 %1755
    %1757 = vset.pattern.permute.xlu0 0
    %1758 = vperm.xlu0 %1757, %v1747
    %v1759 = vpop.permute.xlu0 %1758
    %1760 = vset.pattern.permute.xlu0 0
    %1761 = vperm.xlu0 %1760, %v1748
    %v1762 = vpop.permute.xlu0 %1761
    %1763 = vset.pattern.permute.xlu0 0
    %1764 = vperm.xlu0 %1763, %v1749
    %v1765 = vpop.permute.xlu0 %1764
    %v1766 = vlaneseq
    %v1767 = vand.u32 %v1766, 127
    %v1768 = vlaneseq
    %v1769 = vshrl.u32 %v1768, 7
    %v1770 = vsub.s32 %v1767, %v1769
    %v1771 = vrot.slane %v1756, %v1770
    %v1772 = vadd.s32 %v1767, 4294967288
    %v1773 = vlaneseq
    %v1774 = vshrl.u32 %v1773, 7
    %v1775 = vsub.s32 %v1772, %v1774
    %v1776 = vrot.slane %v1759, %v1775
    %vm1777 = vcmask 130112
    %v1778 = vsel %vm1777, %v1776, %v1771
    %v1779 = vlaneseq
    %v1780 = vshrl.u32 %v1779, 7
    %v1781 = vsub.s32 %v1767, %v1780
    %v1782 = vrot.slane %v1762, %v1781
    %v1783 = vlaneseq
    %v1784 = vshrl.u32 %v1783, 7
    %v1785 = vsub.s32 %v1772, %v1784
    %v1786 = vrot.slane %v1765, %v1785
    %v1787 = vsel %vm1777, %v1786, %v1782
    %vm1788 = vcmask 1041409
    %v1789 = vsel %vm1788, %v1787, %v1778
    %vm1791 = vcmask 115712
    %v1792 = vsel %vm1791, %v1789, -inf
    %1793 = vmax.xlane.f32.xlu0 %v1792
    %v1794 = vpop.xlane.xlu0 %1793
    %v1796 = vlaneseq
    %v1797 = vshrl.u32 %v1796, 7
    %v1798 = vsub.s32 0, %v1797
    %v1799 = vrot.slane %v1794, %v1798
    %v1800 = vlaneseq
    %v1801 = vshrl.u32 %v1800, 7
    %v1802 = vsub.s32 1, %v1801
    %v1803 = vrot.slane %v1794, %v1802
    %v1806 = vsub.f32 %v1746, %v1799
    %v1807 = vsub.f32 %v1747, %v1799
    %v1808 = vsub.f32 %v1748, %v1803
    %v1809 = vsub.f32 %v1749, %v1803
    %v1810 = vmul.f32 %v1806, 1.442695
    %v1811 = vpow.pop %v1810
    %v1812 = vmul.f32 %v1807, 1.442695
    %v1813 = vpow.pop %v1812
    %v1814 = vmul.f32 %v1808, 1.442695
    %v1815 = vpow.pop %v1814
    %v1816 = vmul.f32 %v1809, 1.442695
    %v1817 = vpow.pop %v1816
    %1822 = vset.pattern.permute.xlu0 0
    %1823 = vperm.xlu0 %1822, %v1811
    %v1824 = vpop.permute.xlu0 %1823
    %1825 = vset.pattern.permute.xlu0 0
    %1826 = vperm.xlu0 %1825, %v1813
    %v1827 = vpop.permute.xlu0 %1826
    %1828 = vset.pattern.permute.xlu0 0
    %1829 = vperm.xlu0 %1828, %v1815
    %v1830 = vpop.permute.xlu0 %1829
    %1831 = vset.pattern.permute.xlu0 0
    %1832 = vperm.xlu0 %1831, %v1817
    %v1833 = vpop.permute.xlu0 %1832
    %v1834 = vlaneseq
    %v1835 = vshrl.u32 %v1834, 7
    %v1836 = vsub.s32 %v1767, %v1835
    %v1837 = vrot.slane %v1824, %v1836
    %v1838 = vlaneseq
    %v1839 = vshrl.u32 %v1838, 7
    %v1840 = vsub.s32 %v1772, %v1839
    %v1841 = vrot.slane %v1827, %v1840
    %v1842 = vsel %vm1777, %v1841, %v1837
    %v1843 = vlaneseq
    %v1844 = vshrl.u32 %v1843, 7
    %v1845 = vsub.s32 %v1767, %v1844
    %v1846 = vrot.slane %v1830, %v1845
    %v1847 = vlaneseq
    %v1848 = vshrl.u32 %v1847, 7
    %v1849 = vsub.s32 %v1772, %v1848
    %v1850 = vrot.slane %v1833, %v1849
    %v1851 = vsel %vm1777, %v1850, %v1846
    %v1852 = vsel %vm1788, %v1851, %v1842
    %v1854 = vsel %vm1791, %v1852, 0.0
    %1855 = vadd.xlane.f32.xlu0 %v1854
    %v1856 = vpop.xlane.xlu0 %1855
    %v1857 = vrcp.pop %v1856
    %v1859 = vlaneseq
    %v1860 = vshrl.u32 %v1859, 7
    %v1861 = vsub.s32 0, %v1860
    %v1862 = vrot.slane %v1857, %v1861
    %v1863 = vlaneseq
    %v1864 = vshrl.u32 %v1863, 7
    %v1865 = vsub.s32 1, %v1864
    %v1866 = vrot.slane %v1857, %v1865
    %v1869 = vmul.f32 %v1811, %v1862
    %v1870 = vmul.f32 %v1813, %v1862
    %v1871 = vmul.f32 %v1815, %v1866
    %v1872 = vmul.f32 %v1817, %v1866
    %1875 = vset.pattern.permute.xlu0 0
    %1876 = vperm.xlu0 %1875, %v1869
    %v1877 = vpop.permute.xlu0 %1876
    %1878 = vset.pattern.permute.xlu0 0
    %1879 = vperm.xlu0 %1878, %v1870
    %v1880 = vpop.permute.xlu0 %1879
    %v1881 = vlaneseq
    %v1882 = vshrl.u32 %v1881, 7
    %v1883 = vsub.s32 %v1767, %v1882
    %v1884 = vrot.slane %v1877, %v1883
    %v1885 = vlaneseq
    %v1886 = vshrl.u32 %v1885, 7
    %v1887 = vsub.s32 %v1772, %v1886
    %v1888 = vrot.slane %v1880, %v1887
    %v1889 = vsel %vm1777, %v1888, %v1884
    %vm1890 = vcmask 121856
    %v1891 = vsel %vm1890, %v1889, 0
    %vm1893 = vcmask 1046528
    %v1894 = vsel %vm1893, %v249, 0
    %1896 = vmatprep.subr.mxu0 0.0
    %1897 = vmatpush1.msra.mxu0 %v248
    %1898 = vmatprep.subr.mxu0 0.0
    %1899 = vmatpush1.msra.mxu0 %v1894
    %1900 = vmatprep.subr.mxu0 0.0
    %1901 = vmatpush1.msra.mxu0 0.0
    %1902 = vmatprep.subr.mxu0 0.0
    %1903 = vmatpush1.msra.mxu0 0.0
    %1904 = vmatprep.subr.mxu0 0.0
    %1905 = vmatpush1.msra.mxu0 0.0
    %1906 = vmatprep.subr.mxu0 0.0
    %1907 = vmatpush1.msra.mxu0 0.0
    %1908 = vmatprep.subr.mxu0 0.0
    %1909 = vmatpush1.msra.mxu0 0.0
    %1910 = vmatprep.subr.mxu0 0.0
    %1911 = vmatpush1.msra.mxu0 0.0
    %1912 = vmatprep.subr.mxu0 0.0
    %1913 = vmatpush1.msra.mxu0 0.0
    %1914 = vmatprep.subr.mxu0 0.0
    %1915 = vmatpush1.msra.mxu0 0.0
    %1916 = vmatprep.subr.mxu0 0.0
    %1917 = vmatpush1.msra.mxu0 0.0
    %1918 = vmatprep.subr.mxu0 0.0
    %1919 = vmatpush1.msra.mxu0 0.0
    %1920 = vmatprep.subr.mxu0 0.0
    %1921 = vmatpush1.msra.mxu0 0.0
    %1922 = vmatprep.subr.mxu0 0.0
    %1923 = vmatpush1.msra.mxu0 0.0
    %1924 = vmatprep.subr.mxu0 0.0
    %1925 = vmatpush1.msra.mxu0 0.0
    %1926 = vmatprep.subr.mxu0 0.0
    %1927 = vmatpush1.msra.mxu0 0.0
    %1928 = vmatprep.subr.mxu0 0.0
    %1929 = vmatpush1.msra.mxu0 0.0
    %1930 = vmatprep.subr.mxu0 0.0
    %1931 = vmatpush1.msra.mxu0 0.0
    %1932 = vmatprep.subr.mxu0 0.0
    %1933 = vmatpush1.msra.mxu0 0.0
    %1934 = vmatprep.subr.mxu0 0.0
    %1935 = vmatpush1.msra.mxu0 0.0
    %1936 = vmatprep.subr.mxu0 0.0
    %1937 = vmatpush1.msra.mxu0 0.0
    %1938 = vmatprep.subr.mxu0 0.0
    %1939 = vmatpush1.msra.mxu0 0.0
    %1940 = vmatprep.subr.mxu0 0.0
    %1941 = vmatpush1.msra.mxu0 0.0
    %1942 = vmatprep.subr.mxu0 0.0
    %1943 = vmatpush1.msra.mxu0 0.0
    %1944 = vmatprep.subr.mxu0 0.0
    %1945 = vmatpush1.msra.mxu0 0.0
    %1946 = vmatprep.subr.mxu0 0.0
    %1947 = vmatpush1.msra.mxu0 0.0
    %1948 = vmatprep.subr.mxu0 0.0
    %1949 = vmatpush1.msra.mxu0 0.0
    %1950 = vmatprep.subr.mxu0 0.0
    %1951 = vmatpush1.msra.mxu0 0.0
    %1952 = vmatprep.subr.mxu0 0.0
    %1953 = vmatpush1.msra.mxu0 0.0
    %1954 = vmatprep.subr.mxu0 0.0
    %1955 = vmatpush1.msra.mxu0 0.0
    %1956 = vmatprep.subr.mxu0 0.0
    %1957 = vmatpush1.msra.mxu0 0.0
    %1958 = vmatprep.subr.mxu0 0.0
    %1959 = vmatpush1.msra.mxu0 0.0
    %1960 = vmatprep.mubr.f32.mxu0 0.0
    %1961 = vmatmul.mubr.f32.gmra.mrb[0].mxu0 %v1891
    %v1962 = vpop.f32.mrb[0].mxu0
    %v1963 = vadd.f32 0.0, %v1962
    %v1964 = vpop.f32.mrb[0].mxu0
    %1965 = vdwg.mxu0
    %1968 = vset.pattern.permute.xlu0 0
    %1969 = vperm.xlu0 %1968, %v1871
    %v1970 = vpop.permute.xlu0 %1969
    %1971 = vset.pattern.permute.xlu0 0
    %1972 = vperm.xlu0 %1971, %v1872
    %v1973 = vpop.permute.xlu0 %1972
    %v1974 = vlaneseq
    %v1975 = vshrl.u32 %v1974, 7
    %v1976 = vsub.s32 %v1767, %v1975
    %v1977 = vrot.slane %v1970, %v1976
    %v1978 = vlaneseq
    %v1979 = vshrl.u32 %v1978, 7
    %v1980 = vsub.s32 %v1772, %v1979
    %v1981 = vrot.slane %v1973, %v1980
    %v1982 = vsel %vm1777, %v1981, %v1977
    %v1983 = vsel %vm1890, %v1982, 0
    %v1985 = vsel %vm1893, %v251, 0
    %1987 = vmatprep.subr.mxu0 0.0
    %1988 = vmatpush1.msra.mxu0 %v250
    %1989 = vmatprep.subr.mxu0 0.0
    %1990 = vmatpush1.msra.mxu0 %v1985
    %1991 = vmatprep.subr.mxu0 0.0
    %1992 = vmatpush1.msra.mxu0 0.0
    %1993 = vmatprep.subr.mxu0 0.0
    %1994 = vmatpush1.msra.mxu0 0.0
    %1995 = vmatprep.subr.mxu0 0.0
    %1996 = vmatpush1.msra.mxu0 0.0
    %1997 = vmatprep.subr.mxu0 0.0
    %1998 = vmatpush1.msra.mxu0 0.0
    %1999 = vmatprep.subr.mxu0 0.0
    %2000 = vmatpush1.msra.mxu0 0.0
    %2001 = vmatprep.subr.mxu0 0.0
    %2002 = vmatpush1.msra.mxu0 0.0
    %2003 = vmatprep.subr.mxu0 0.0
    %2004 = vmatpush1.msra.mxu0 0.0
    %2005 = vmatprep.subr.mxu0 0.0
    %2006 = vmatpush1.msra.mxu0 0.0
    %2007 = vmatprep.subr.mxu0 0.0
    %2008 = vmatpush1.msra.mxu0 0.0
    %2009 = vmatprep.subr.mxu0 0.0
    %2010 = vmatpush1.msra.mxu0 0.0
    %2011 = vmatprep.subr.mxu0 0.0
    %2012 = vmatpush1.msra.mxu0 0.0
    %2013 = vmatprep.subr.mxu0 0.0
    %2014 = vmatpush1.msra.mxu0 0.0
    %2015 = vmatprep.subr.mxu0 0.0
    %2016 = vmatpush1.msra.mxu0 0.0
    %2017 = vmatprep.subr.mxu0 0.0
    %2018 = vmatpush1.msra.mxu0 0.0
    %2019 = vmatprep.subr.mxu0 0.0
    %2020 = vmatpush1.msra.mxu0 0.0
    %2021 = vmatprep.subr.mxu0 0.0
    %2022 = vmatpush1.msra.mxu0 0.0
    %2023 = vmatprep.subr.mxu0 0.0
    %2024 = vmatpush1.msra.mxu0 0.0
    %2025 = vmatprep.subr.mxu0 0.0
    %2026 = vmatpush1.msra.mxu0 0.0
    %2027 = vmatprep.subr.mxu0 0.0
    %2028 = vmatpush1.msra.mxu0 0.0
    %2029 = vmatprep.subr.mxu0 0.0
    %2030 = vmatpush1.msra.mxu0 0.0
    %2031 = vmatprep.subr.mxu0 0.0
    %2032 = vmatpush1.msra.mxu0 0.0
    %2033 = vmatprep.subr.mxu0 0.0
    %2034 = vmatpush1.msra.mxu0 0.0
    %2035 = vmatprep.subr.mxu0 0.0
    %2036 = vmatpush1.msra.mxu0 0.0
    %2037 = vmatprep.subr.mxu0 0.0
    %2038 = vmatpush1.msra.mxu0 0.0
    %2039 = vmatprep.subr.mxu0 0.0
    %2040 = vmatpush1.msra.mxu0 0.0
    %2041 = vmatprep.subr.mxu0 0.0
    %2042 = vmatpush1.msra.mxu0 0.0
    %2043 = vmatprep.subr.mxu0 0.0
    %2044 = vmatpush1.msra.mxu0 0.0
    %2045 = vmatprep.subr.mxu0 0.0
    %2046 = vmatpush1.msra.mxu0 0.0
    %2047 = vmatprep.subr.mxu0 0.0
    %2048 = vmatpush1.msra.mxu0 0.0
    %2049 = vmatprep.subr.mxu0 0.0
    %2050 = vmatpush1.msra.mxu0 0.0
    %2051 = vmatprep.mubr.f32.mxu0 0.0
    %2052 = vmatmul.mubr.f32.gmra.mrb[0].mxu0 %v1983
    %v2053 = vpop.f32.mrb[0].mxu0
    %v2054 = vadd.f32 0.0, %v2053
    %v2055 = vpop.f32.mrb[0].mxu0
    %2056 = vdwg.mxu0
    %2057 = vmatprep.subr.mxu0 0.0
    %2058 = vmatpush1.msra.mxu0 %v1198
    %2059 = vmatprep.subr.mxu0 0.0
    %2060 = vmatpush1.msra.mxu0 %v1199
    %2061 = vmatprep.subr.mxu0 0.0
    %2062 = vmatpush1.msra.mxu0 %v1200
    %2063 = vmatprep.subr.mxu0 0.0
    %2064 = vmatpush1.msra.mxu0 %v1201
    %2065 = vmatprep.subr.mxu0 0.0
    %2066 = vmatpush1.msra.mxu0 0.0
    %2067 = vmatprep.subr.mxu0 0.0
    %2068 = vmatpush1.msra.mxu0 0.0
    %2069 = vmatprep.subr.mxu0 0.0
    %2070 = vmatpush1.msra.mxu0 0.0
    %2071 = vmatprep.subr.mxu0 0.0
    %2072 = vmatpush1.msra.mxu0 0.0
    %2073 = vmatprep.subr.mxu0 0.0
    %2074 = vmatpush1.msra.mxu0 0.0
    %2075 = vmatprep.subr.mxu0 0.0
    %2076 = vmatpush1.msra.mxu0 0.0
    %2077 = vmatprep.subr.mxu0 0.0
    %2078 = vmatpush1.msra.mxu0 0.0
    %2079 = vmatprep.subr.mxu0 0.0
    %2080 = vmatpush1.msra.mxu0 0.0
    %2081 = vmatprep.subr.mxu0 0.0
    %2082 = vmatpush1.msra.mxu0 0.0
    %2083 = vmatprep.subr.mxu0 0.0
    %2084 = vmatpush1.msra.mxu0 0.0
    %2085 = vmatprep.subr.mxu0 0.0
    %2086 = vmatpush1.msra.mxu0 0.0
    %2087 = vmatprep.subr.mxu0 0.0
    %2088 = vmatpush1.msra.mxu0 0.0
    %2089 = vmatprep.subr.mxu0 0.0
    %2090 = vmatpush1.msra.mxu0 0.0
    %2091 = vmatprep.subr.mxu0 0.0
    %2092 = vmatpush1.msra.mxu0 0.0
    %2093 = vmatprep.subr.mxu0 0.0
    %2094 = vmatpush1.msra.mxu0 0.0
    %2095 = vmatprep.subr.mxu0 0.0
    %2096 = vmatpush1.msra.mxu0 0.0
    %2097 = vmatprep.subr.mxu0 0.0
    %2098 = vmatpush1.msra.mxu0 0.0
    %2099 = vmatprep.subr.mxu0 0.0
    %2100 = vmatpush1.msra.mxu0 0.0
    %2101 = vmatprep.subr.mxu0 0.0
    %2102 = vmatpush1.msra.mxu0 0.0
    %2103 = vmatprep.subr.mxu0 0.0
    %2104 = vmatpush1.msra.mxu0 0.0
    %2105 = vmatprep.subr.mxu0 0.0
    %2106 = vmatpush1.msra.mxu0 0.0
    %2107 = vmatprep.subr.mxu0 0.0
    %2108 = vmatpush1.msra.mxu0 0.0
    %2109 = vmatprep.subr.mxu0 0.0
    %2110 = vmatpush1.msra.mxu0 0.0
    %2111 = vmatprep.subr.mxu0 0.0
    %2112 = vmatpush1.msra.mxu0 0.0
    %2113 = vmatprep.subr.mxu0 0.0
    %2114 = vmatpush1.msra.mxu0 0.0
    %2115 = vmatprep.subr.mxu0 0.0
    %2116 = vmatpush1.msra.mxu0 0.0
    %2117 = vmatprep.subr.mxu0 0.0
    %2118 = vmatpush1.msra.mxu0 0.0
    %2119 = vmatprep.subr.mxu0 0.0
    %2120 = vmatpush1.msra.mxu0 0.0
    %2121 = vmatprep.mubr.f32.mxu0 0.0
    %2122 = vmatmul.mubr.f32.gmra.mrb[0].mxu0 %v1391
    %v2123 = vpop.f32.mrb[0].mxu0
    %v2124 = vadd.f32 0.0, %v2123
    %v2125 = vpop.f32.mrb[0].mxu0
    %2126 = vdwg.mxu0
    %v2129 = vrot.slane %v2054, 7
    %v2130 = vsel %vm1788, %v2129, %v1963
    %v2131 = vsel %vm658, %v2130, 0
    %2133 = vmatprep.subr.mxu0 0.0
    %2134 = vmatpush1.msra.mxu0 %v1194
    %2135 = vmatprep.subr.mxu0 0.0
    %2136 = vmatpush1.msra.mxu0 %v1195
    %2137 = vmatprep.subr.mxu0 0.0
    %2138 = vmatpush1.msra.mxu0 %v1196
    %2139 = vmatprep.subr.mxu0 0.0
    %2140 = vmatpush1.msra.mxu0 %v1197
    %2141 = vmatprep.subr.mxu0 0.0
    %2142 = vmatpush1.msra.mxu0 0.0
    %2143 = vmatprep.subr.mxu0 0.0
    %2144 = vmatpush1.msra.mxu0 0.0
    %2145 = vmatprep.subr.mxu0 0.0
    %2146 = vmatpush1.msra.mxu0 0.0
    %2147 = vmatprep.subr.mxu0 0.0
    %2148 = vmatpush1.msra.mxu0 0.0
    %2149 = vmatprep.subr.mxu0 0.0
    %2150 = vmatpush1.msra.mxu0 0.0
    %2151 = vmatprep.subr.mxu0 0.0
    %2152 = vmatpush1.msra.mxu0 0.0
    %2153 = vmatprep.subr.mxu0 0.0
    %2154 = vmatpush1.msra.mxu0 0.0
    %2155 = vmatprep.subr.mxu0 0.0
    %2156 = vmatpush1.msra.mxu0 0.0
    %2157 = vmatprep.subr.mxu0 0.0
    %2158 = vmatpush1.msra.mxu0 0.0
    %2159 = vmatprep.subr.mxu0 0.0
    %2160 = vmatpush1.msra.mxu0 0.0
    %2161 = vmatprep.subr.mxu0 0.0
    %2162 = vmatpush1.msra.mxu0 0.0
    %2163 = vmatprep.subr.mxu0 0.0
    %2164 = vmatpush1.msra.mxu0 0.0
    %2165 = vmatprep.subr.mxu0 0.0
    %2166 = vmatpush1.msra.mxu0 0.0
    %2167 = vmatprep.subr.mxu0 0.0
    %2168 = vmatpush1.msra.mxu0 0.0
    %2169 = vmatprep.subr.mxu0 0.0
    %2170 = vmatpush1.msra.mxu0 0.0
    %2171 = vmatprep.subr.mxu0 0.0
    %2172 = vmatpush1.msra.mxu0 0.0
    %2173 = vmatprep.subr.mxu0 0.0
    %2174 = vmatpush1.msra.mxu0 0.0
    %2175 = vmatprep.subr.mxu0 0.0
    %2176 = vmatpush1.msra.mxu0 0.0
    %2177 = vmatprep.subr.mxu0 0.0
    %2178 = vmatpush1.msra.mxu0 0.0
    %2179 = vmatprep.subr.mxu0 0.0
    %2180 = vmatpush1.msra.mxu0 0.0
    %2181 = vmatprep.subr.mxu0 0.0
    %2182 = vmatpush1.msra.mxu0 0.0
    %2183 = vmatprep.subr.mxu0 0.0
    %2184 = vmatpush1.msra.mxu0 0.0
    %2185 = vmatprep.subr.mxu0 0.0
    %2186 = vmatpush1.msra.mxu0 0.0
    %2187 = vmatprep.subr.mxu0 0.0
    %2188 = vmatpush1.msra.mxu0 0.0
    %2189 = vmatprep.subr.mxu0 0.0
    %2190 = vmatpush1.msra.mxu0 0.0
    %2191 = vmatprep.subr.mxu0 0.0
    %2192 = vmatpush1.msra.mxu0 0.0
    %2193 = vmatprep.subr.mxu0 0.0
    %2194 = vmatpush1.msra.mxu0 0.0
    %2195 = vmatprep.subr.mxu0 0.0
    %2196 = vmatpush1.msra.mxu0 0.0
    %2197 = vmatprep.mubr.f32.mxu0 0.0
    %2198 = vmatmul.mubr.f32.gmra.mrb[0].mxu0 %v2131
    %v2199 = vpop.f32.mrb[0].mxu0
    %v2200 = vadd.f32 %v2124, %v2199
    %v2201 = vpop.f32.mrb[0].mxu0
    %2202 = vdwg.mxu0
    %2203 = vmatprep.subr.mxu0 0.0
    %2204 = vmatpush1.msra.mxu0 %v1202
    %2205 = vmatprep.subr.mxu0 0.0
    %2206 = vmatpush1.msra.mxu0 %v1203
    %2207 = vmatprep.subr.mxu0 0.0
    %2208 = vmatpush1.msra.mxu0 %v1204
    %2209 = vmatprep.subr.mxu0 0.0
    %2210 = vmatpush1.msra.mxu0 %v1205
    %2211 = vmatprep.subr.mxu0 0.0
    %2212 = vmatpush1.msra.mxu0 0.0
    %2213 = vmatprep.subr.mxu0 0.0
    %2214 = vmatpush1.msra.mxu0 0.0
    %2215 = vmatprep.subr.mxu0 0.0
    %2216 = vmatpush1.msra.mxu0 0.0
    %2217 = vmatprep.subr.mxu0 0.0
    %2218 = vmatpush1.msra.mxu0 0.0
    %2219 = vmatprep.subr.mxu0 0.0
    %2220 = vmatpush1.msra.mxu0 0.0
    %2221 = vmatprep.subr.mxu0 0.0
    %2222 = vmatpush1.msra.mxu0 0.0
    %2223 = vmatprep.subr.mxu0 0.0
    %2224 = vmatpush1.msra.mxu0 0.0
    %2225 = vmatprep.subr.mxu0 0.0
    %2226 = vmatpush1.msra.mxu0 0.0
    %2227 = vmatprep.subr.mxu0 0.0
    %2228 = vmatpush1.msra.mxu0 0.0
    %2229 = vmatprep.subr.mxu0 0.0
    %2230 = vmatpush1.msra.mxu0 0.0
    %2231 = vmatprep.subr.mxu0 0.0
    %2232 = vmatpush1.msra.mxu0 0.0
    %2233 = vmatprep.subr.mxu0 0.0
    %2234 = vmatpush1.msra.mxu0 0.0
    %2235 = vmatprep.subr.mxu0 0.0
    %2236 = vmatpush1.msra.mxu0 0.0
    %2237 = vmatprep.subr.mxu0 0.0
    %2238 = vmatpush1.msra.mxu0 0.0
    %2239 = vmatprep.subr.mxu0 0.0
    %2240 = vmatpush1.msra.mxu0 0.0
    %2241 = vmatprep.subr.mxu0 0.0
    %2242 = vmatpush1.msra.mxu0 0.0
    %2243 = vmatprep.subr.mxu0 0.0
    %2244 = vmatpush1.msra.mxu0 0.0
    %2245 = vmatprep.subr.mxu0 0.0
    %2246 = vmatpush1.msra.mxu0 0.0
    %2247 = vmatprep.subr.mxu0 0.0
    %2248 = vmatpush1.msra.mxu0 0.0
    %2249 = vmatprep.subr.mxu0 0.0
    %2250 = vmatpush1.msra.mxu0 0.0
    %2251 = vmatprep.subr.mxu0 0.0
    %2252 = vmatpush1.msra.mxu0 0.0
    %2253 = vmatprep.subr.mxu0 0.0
    %2254 = vmatpush1.msra.mxu0 0.0
    %2255 = vmatprep.subr.mxu0 0.0
    %2256 = vmatpush1.msra.mxu0 0.0
    %2257 = vmatprep.subr.mxu0 0.0
    %2258 = vmatpush1.msra.mxu0 0.0
    %2259 = vmatprep.subr.mxu0 0.0
    %2260 = vmatpush1.msra.mxu0 0.0
    %2261 = vmatprep.subr.mxu0 0.0
    %2262 = vmatpush1.msra.mxu0 0.0
    %2263 = vmatprep.subr.mxu0 0.0
    %2264 = vmatpush1.msra.mxu0 0.0
    %2265 = vmatprep.subr.mxu0 0.0
    %2266 = vmatpush1.msra.mxu0 0.0
    %2267 = vmatprep.mubr.f32.mxu0 0.0
    %2268 = vmatmul.mubr.f32.gmra.mrb[0].mxu0 %v1214
    %v2269 = vpop.f32.mrb[0].mxu0
    %v2270 = vadd.f32 0.0, %v2269
    %v2271 = vpop.f32.mrb[0].mxu0
    %2272 = vdwg.mxu0
    %v2273 = vadd.f32 %v2200, %v2270
    %v2275 = vlaneseq
    %v2276 = vshrl.u32 %v2275, 7
    %v2277 = vsub.s32 0, %v2276
    %v2278 = vrot.slane %v1206, %v2277
    %v2280 = vadd.f32 %v2273, %v2278
    %v2281 = vxor.u32 %v2280, 2147483648
    %v2282 = vmul.f32 %v2281, 1.442695
    %v2283 = vpow.pop %v2282
    %v2284 = vadd.f32 %v2283, 1.0
    %v2285 = vrcp.pop %v2284
    %v2286 = vmul.f32 1.0, %v2285
    %v2287 = vtanh.pop %v2280
    %v2288 = vmul.f32 %v2286, 0.0
    %2290 = vrot.lane.b32.xlu0 %v2287, 64
    %v2291 = vpop.permute.xlu0 %2290
    %v2293 = vmul.f32 %v2286, %v2291
    %2295 = vrot.lane.b32.xlu0 %v2293, 32
    %v2296 = vpop.permute.xlu0 %2295
    %v2298 = vadd.f32 %v2288, %v2296
    %v2299 = vtanh.pop %v2298
    %2301 = vrot.lane.b32.xlu0 %v2299, 64
    %v2302 = vpop.permute.xlu0 %2301
    %v2304 = vmul.f32 %v2286, %v2302
    %v2306 = vrot.slane %v1031, 6
    %v2308 = vadd.f32 %v1161, %v2306
    %2310 = vrot.lane.b32.xlu0 %v2304, 32
    %v2311 = vpop.permute.xlu0 %2310
    %v2312 = vsel %vm658, %v2311, 0
    %2314 = vmatprep.subr.mxu0 0.0
    %2315 = vmatpush1.msra.mxu0 %v1186
    %2316 = vmatprep.subr.mxu0 0.0
    %2317 = vmatpush1.msra.mxu0 %v1187
    %2318 = vmatprep.subr.mxu0 0.0
    %2319 = vmatpush1.msra.mxu0 %v1188
    %2320 = vmatprep.subr.mxu0 0.0
    %2321 = vmatpush1.msra.mxu0 %v1189
    %2322 = vmatprep.subr.mxu0 0.0
    %2323 = vmatpush1.msra.mxu0 0.0
    %2324 = vmatprep.subr.mxu0 0.0
    %2325 = vmatpush1.msra.mxu0 0.0
    %2326 = vmatprep.subr.mxu0 0.0
    %2327 = vmatpush1.msra.mxu0 0.0
    %2328 = vmatprep.subr.mxu0 0.0
    %2329 = vmatpush1.msra.mxu0 0.0
    %2330 = vmatprep.subr.mxu0 0.0
    %2331 = vmatpush1.msra.mxu0 0.0
    %2332 = vmatprep.subr.mxu0 0.0
    %2333 = vmatpush1.msra.mxu0 0.0
    %2334 = vmatprep.subr.mxu0 0.0
    %2335 = vmatpush1.msra.mxu0 0.0
    %2336 = vmatprep.subr.mxu0 0.0
    %2337 = vmatpush1.msra.mxu0 0.0
    %2338 = vmatprep.subr.mxu0 0.0
    %2339 = vmatpush1.msra.mxu0 0.0
    %2340 = vmatprep.subr.mxu0 0.0
    %2341 = vmatpush1.msra.mxu0 0.0
    %2342 = vmatprep.subr.mxu0 0.0
    %2343 = vmatpush1.msra.mxu0 0.0
    %2344 = vmatprep.subr.mxu0 0.0
    %2345 = vmatpush1.msra.mxu0 0.0
    %2346 = vmatprep.subr.mxu0 0.0
    %2347 = vmatpush1.msra.mxu0 0.0
    %2348 = vmatprep.subr.mxu0 0.0
    %2349 = vmatpush1.msra.mxu0 0.0
    %2350 = vmatprep.subr.mxu0 0.0
    %2351 = vmatpush1.msra.mxu0 0.0
    %2352 = vmatprep.subr.mxu0 0.0
    %2353 = vmatpush1.msra.mxu0 0.0
    %2354 = vmatprep.subr.mxu0 0.0
    %2355 = vmatpush1.msra.mxu0 0.0
    %2356 = vmatprep.subr.mxu0 0.0
    %2357 = vmatpush1.msra.mxu0 0.0
    %2358 = vmatprep.subr.mxu0 0.0
    %2359 = vmatpush1.msra.mxu0 0.0
    %2360 = vmatprep.subr.mxu0 0.0
    %2361 = vmatpush1.msra.mxu0 0.0
    %2362 = vmatprep.subr.mxu0 0.0
    %2363 = vmatpush1.msra.mxu0 0.0
    %2364 = vmatprep.subr.mxu0 0.0
    %2365 = vmatpush1.msra.mxu0 0.0
    %2366 = vmatprep.subr.mxu0 0.0
    %2367 = vmatpush1.msra.mxu0 0.0
    %2368 = vmatprep.subr.mxu0 0.0
    %2369 = vmatpush1.msra.mxu0 0.0
    %2370 = vmatprep.subr.mxu0 0.0
    %2371 = vmatpush1.msra.mxu0 0.0
    %2372 = vmatprep.subr.mxu0 0.0
    %2373 = vmatpush1.msra.mxu0 0.0
    %2374 = vmatprep.subr.mxu0 0.0
    %2375 = vmatpush1.msra.mxu0 0.0
    %2376 = vmatprep.subr.mxu0 0.0
    %2377 = vmatpush1.msra.mxu0 0.0
    %2378 = vmatprep.mubr.f32.mxu0 0.0
    %2379 = vmatmul.mubr.f32.gmra.mrb[0].mxu0 %v2312
    %v2380 = vpop.f32.mrb[0].mxu0
    %v2381 = vadd.f32 0.0, %v2380
    %v2382 = vpop.f32.mrb[0].mxu0
    %2383 = vdwg.mxu0
    %v2385 = vrot.slane %v2381, 6
    %v2387 = vadd.f32 %v2308, %v2385
    %2388 = vmatprep.subr.mxu0 0.0
    %2389 = vmatpush1.msra.mxu0 %v1190
    %2390 = vmatprep.subr.mxu0 0.0
    %2391 = vmatpush1.msra.mxu0 %v1191
    %2392 = vmatprep.subr.mxu0 0.0
    %2393 = vmatpush1.msra.mxu0 %v1192
    %2394 = vmatprep.subr.mxu0 0.0
    %2395 = vmatpush1.msra.mxu0 %v1193
    %2396 = vmatprep.subr.mxu0 0.0
    %2397 = vmatpush1.msra.mxu0 0.0
    %2398 = vmatprep.subr.mxu0 0.0
    %2399 = vmatpush1.msra.mxu0 0.0
    %2400 = vmatprep.subr.mxu0 0.0
    %2401 = vmatpush1.msra.mxu0 0.0
    %2402 = vmatprep.subr.mxu0 0.0
    %2403 = vmatpush1.msra.mxu0 0.0
    %2404 = vmatprep.subr.mxu0 0.0
    %2405 = vmatpush1.msra.mxu0 0.0
    %2406 = vmatprep.subr.mxu0 0.0
    %2407 = vmatpush1.msra.mxu0 0.0
    %2408 = vmatprep.subr.mxu0 0.0
    %2409 = vmatpush1.msra.mxu0 0.0
    %2410 = vmatprep.subr.mxu0 0.0
    %2411 = vmatpush1.msra.mxu0 0.0
    %2412 = vmatprep.subr.mxu0 0.0
    %2413 = vmatpush1.msra.mxu0 0.0
    %2414 = vmatprep.subr.mxu0 0.0
    %2415 = vmatpush1.msra.mxu0 0.0
    %2416 = vmatprep.subr.mxu0 0.0
    %2417 = vmatpush1.msra.mxu0 0.0
    %2418 = vmatprep.subr.mxu0 0.0
    %2419 = vmatpush1.msra.mxu0 0.0
    %2420 = vmatprep.subr.mxu0 0.0
    %2421 = vmatpush1.msra.mxu0 0.0
    %2422 = vmatprep.subr.mxu0 0.0
    %2423 = vmatpush1.msra.mxu0 0.0
    %2424 = vmatprep.subr.mxu0 0.0
    %2425 = vmatpush1.msra.mxu0 0.0
    %2426 = vmatprep.subr.mxu0 0.0
    %2427 = vmatpush1.msra.mxu0 0.0
    %2428 = vmatprep.subr.mxu0 0.0
    %2429 = vmatpush1.msra.mxu0 0.0
    %2430 = vmatprep.subr.mxu0 0.0
    %2431 = vmatpush1.msra.mxu0 0.0
    %2432 = vmatprep.subr.mxu0 0.0
    %2433 = vmatpush1.msra.mxu0 0.0
    %2434 = vmatprep.subr.mxu0 0.0
    %2435 = vmatpush1.msra.mxu0 0.0
    %2436 = vmatprep.subr.mxu0 0.0
    %2437 = vmatpush1.msra.mxu0 0.0
    %2438 = vmatprep.subr.mxu0 0.0
    %2439 = vmatpush1.msra.mxu0 0.0
    %2440 = vmatprep.subr.mxu0 0.0
    %2441 = vmatpush1.msra.mxu0 0.0
    %2442 = vmatprep.subr.mxu0 0.0
    %2443 = vmatpush1.msra.mxu0 0.0
    %2444 = vmatprep.subr.mxu0 0.0
    %2445 = vmatpush1.msra.mxu0 0.0
    %2446 = vmatprep.subr.mxu0 0.0
    %2447 = vmatpush1.msra.mxu0 0.0
    %2448 = vmatprep.subr.mxu0 0.0
    %2449 = vmatpush1.msra.mxu0 0.0
    %2450 = vmatprep.subr.mxu0 0.0
    %2451 = vmatpush1.msra.mxu0 0.0
    %2452 = vmatprep.mubr.f32.mxu0 0.0
    %2453 = vmatmul.mubr.f32.gmra.mrb[0].mxu0 %v1391
    %v2454 = vpop.f32.mrb[0].mxu0
    %v2455 = vadd.f32 0.0, %v2454
    %v2456 = vpop.f32.mrb[0].mxu0
    %2457 = vdwg.mxu0
    %v2459 = vrot.slane %v2455, 6
    %v2461 = vadd.f32 %v2387, %v2459
    %v2462 = vxor.u32 %v2461, 2147483648
    %v2463 = vmul.f32 %v2462, 1.442695
    %v2464 = vpow.pop %v2463
    %v2465 = vadd.f32 %v2464, 1.0
    %v2466 = vrcp.pop %v2465
    %v2467 = vmul.f32 1.0, %v2466
    %v2468 = vtanh.pop %v2461
    %v2470 = vrot.slane %v1375, 6
    %v2472 = vmul.f32 %v2467, %v2470
    %2474 = vrot.lane.b32.xlu0 %v2468, 64
    %v2475 = vpop.permute.xlu0 %2474
    %v2477 = vmul.f32 %v2467, %v2475
    %2479 = vrot.lane.b32.xlu0 %v2477, 32
    %v2480 = vpop.permute.xlu0 %2479
    %v2482 = vadd.f32 %v2472, %v2480
    %v2483 = vtanh.pop %v2482
    %2485 = vrot.lane.b32.xlu0 %v2483, 64
    %v2486 = vpop.permute.xlu0 %2485
    %v2488 = vmul.f32 %v2467, %v2486
    %v2490 = vrot.slane %v2488, 2
    %2491 = vrot.lane.b32.xlu0 %v2490, 32
    %v2492 = vpop.permute.xlu0 %2491
    %v2493 = vsel %vm658, %v2492, 0
    %2495 = vmatprep.subr.mxu0 0.0
    %2496 = vmatpush1.msra.mxu0 %v1207
    %2497 = vmatprep.subr.mxu0 0.0
    %2498 = vmatpush1.msra.mxu0 %v1208
    %2499 = vmatprep.subr.mxu0 0.0
    %2500 = vmatpush1.msra.mxu0 %v1209
    %2501 = vmatprep.subr.mxu0 0.0
    %2502 = vmatpush1.msra.mxu0 %v1210
    %2503 = vmatprep.subr.mxu0 0.0
    %2504 = vmatpush1.msra.mxu0 0.0
    %2505 = vmatprep.subr.mxu0 0.0
    %2506 = vmatpush1.msra.mxu0 0.0
    %2507 = vmatprep.subr.mxu0 0.0
    %2508 = vmatpush1.msra.mxu0 0.0
    %2509 = vmatprep.subr.mxu0 0.0
    %2510 = vmatpush1.msra.mxu0 0.0
    %2511 = vmatprep.subr.mxu0 0.0
    %2512 = vmatpush1.msra.mxu0 0.0
    %2513 = vmatprep.subr.mxu0 0.0
    %2514 = vmatpush1.msra.mxu0 0.0
    %2515 = vmatprep.subr.mxu0 0.0
    %2516 = vmatpush1.msra.mxu0 0.0
    %2517 = vmatprep.subr.mxu0 0.0
    %2518 = vmatpush1.msra.mxu0 0.0
    %2519 = vmatprep.subr.mxu0 0.0
    %2520 = vmatpush1.msra.mxu0 0.0
    %2521 = vmatprep.subr.mxu0 0.0
    %2522 = vmatpush1.msra.mxu0 0.0
    %2523 = vmatprep.subr.mxu0 0.0
    %2524 = vmatpush1.msra.mxu0 0.0
    %2525 = vmatprep.subr.mxu0 0.0
    %2526 = vmatpush1.msra.mxu0 0.0
    %2527 = vmatprep.subr.mxu0 0.0
    %2528 = vmatpush1.msra.mxu0 0.0
    %2529 = vmatprep.subr.mxu0 0.0
    %2530 = vmatpush1.msra.mxu0 0.0
    %2531 = vmatprep.subr.mxu0 0.0
    %2532 = vmatpush1.msra.mxu0 0.0
    %2533 = vmatprep.subr.mxu0 0.0
    %2534 = vmatpush1.msra.mxu0 0.0
    %2535 = vmatprep.subr.mxu0 0.0
    %2536 = vmatpush1.msra.mxu0 0.0
    %2537 = vmatprep.subr.mxu0 0.0
    %2538 = vmatpush1.msra.mxu0 0.0
    %2539 = vmatprep.subr.mxu0 0.0
    %2540 = vmatpush1.msra.mxu0 0.0
    %2541 = vmatprep.subr.mxu0 0.0
    %2542 = vmatpush1.msra.mxu0 0.0
    %2543 = vmatprep.subr.mxu0 0.0
    %2544 = vmatpush1.msra.mxu0 0.0
    %2545 = vmatprep.subr.mxu0 0.0
    %2546 = vmatpush1.msra.mxu0 0.0
    %2547 = vmatprep.subr.mxu0 0.0
    %2548 = vmatpush1.msra.mxu0 0.0
    %2549 = vmatprep.subr.mxu0 0.0
    %2550 = vmatpush1.msra.mxu0 0.0
    %2551 = vmatprep.subr.mxu0 0.0
    %2552 = vmatpush1.msra.mxu0 0.0
    %2553 = vmatprep.subr.mxu0 0.0
    %2554 = vmatpush1.msra.mxu0 0.0
    %2555 = vmatprep.subr.mxu0 0.0
    %2556 = vmatpush1.msra.mxu0 0.0
    %2557 = vmatprep.subr.mxu0 0.0
    %2558 = vmatpush1.msra.mxu0 0.0
    %2559 = vmatprep.mubr.f32.mxu0 0.0
    %2560 = vmatmul.mubr.f32.gmra.mrb[0].mxu0 %v2493
    %v2561 = vpop.f32.mrb[0].mxu0
    %v2562 = vadd.f32 %v1386, %v2561
    %v2563 = vpop.f32.mrb[0].mxu0
    %2564 = vdwg.mxu0
    %v2567 = vunpack.c.l.s4 1966171168
    %v2568 = vunpack.c.0.s8 %v2567
    %v2569 = vlaneseq
    %v2570 = vshrl.u32 %v2569, 7
    %v2571 = vsub.s32 %v2568, %v2570
    %v2572 = vrot.slane %v2562, %v2571
    %v2573 = vcombine.high %v2572, %v2572
    %v2575 = vunpack.c.l.s4 1966171168
    %v2576 = vunpack.c.0.s8 %v2575
    %v2577 = vlaneseq
    %v2578 = vshrl.u32 %v2577, 7
    %v2579 = vsub.s32 %v2576, %v2578
    %v2580 = vrot.slane %v2572, %v2579
    %v2582 = vunpack.c.l.s4 1966171168
    %v2583 = vunpack.c.0.s8 %v2582
    %v2584 = vlaneseq
    %v2585 = vshrl.u32 %v2584, 7
    %v2586 = vsub.s32 %v2583, %v2585
    %v2587 = vrot.slane %v2573, %v2586
    %v2588 = vlaneseq
    %v2589 = vshrl.u32 %v2588, 7
    %v2590 = vsub.s32 0, %v2589
    %v2591 = vrot.slane %v2580, %v2590
    %v2592 = vlaneseq
    %v2593 = vshrl.u32 %v2592, 7
    %v2594 = vsub.s32 0, %v2593
    %v2595 = vrot.slane %v2587, %v2594
    %v2598 = vadd.f32 %v2591, %v1544
    %v2599 = vadd.f32 %v2591, %v1592
    %v2600 = vadd.f32 %v2595, %v1641
    %v2601 = vadd.f32 %v2595, %v1689
    %v2602 = vtanh.pop %v2598
    %v2603 = vtanh.pop %v2599
    %v2604 = vtanh.pop %v2600
    %v2605 = vtanh.pop %v2601
    %v2606 = vmul.f32 %v2602, %v1179
    %v2607 = vmul.f32 %v2603, %v1179
    %v2608 = vmul.f32 %v2604, %v1179
    %v2609 = vmul.f32 %v2605, %v1179
    %v2610 = vsel %vm658, %v2606, 0.0
    %2611 = vadd.xlane.f32.xlu0 %v2610
    %v2612 = vpop.xlane.xlu0 %2611
    %v2613 = vsel %vm1709, %v2607, 0.0
    %2614 = vadd.xlane.f32.xlu0 %v2613
    %v2615 = vpop.xlane.xlu0 %2614
    %v2616 = vsel %vm658, %v2608, 0.0
    %2617 = vadd.xlane.f32.xlu0 %v2616
    %v2618 = vpop.xlane.xlu0 %2617
    %v2619 = vsel %vm1709, %v2609, 0.0
    %2620 = vadd.xlane.f32.xlu0 %v2619
    %v2621 = vpop.xlane.xlu0 %2620
    %v2622 = vadd.f32 %v2612, %v1726
    %v2623 = vadd.f32 %v2615, %v1730
    %v2624 = vadd.f32 %v2618, %v1737
    %v2625 = vadd.f32 %v2621, %v1741
    %2630 = vset.pattern.permute.xlu0 0
    %2631 = vperm.xlu0 %2630, %v2622
    %v2632 = vpop.permute.xlu0 %2631
    %2633 = vset.pattern.permute.xlu0 0
    %2634 = vperm.xlu0 %2633, %v2623
    %v2635 = vpop.permute.xlu0 %2634
    %2636 = vset.pattern.permute.xlu0 0
    %2637 = vperm.xlu0 %2636, %v2624
    %v2638 = vpop.permute.xlu0 %2637
    %2639 = vset.pattern.permute.xlu0 0
    %2640 = vperm.xlu0 %2639, %v2625
    %v2641 = vpop.permute.xlu0 %2640
    %v2642 = vlaneseq
    %v2643 = vshrl.u32 %v2642, 7
    %v2644 = vsub.s32 %v1767, %v2643
    %v2645 = vrot.slane %v2632, %v2644
    %v2646 = vlaneseq
    %v2647 = vshrl.u32 %v2646, 7
    %v2648 = vsub.s32 %v1772, %v2647
    %v2649 = vrot.slane %v2635, %v2648
    %v2650 = vsel %vm1777, %v2649, %v2645
    %v2651 = vlaneseq
    %v2652 = vshrl.u32 %v2651, 7
    %v2653 = vsub.s32 %v1767, %v2652
    %v2654 = vrot.slane %v2638, %v2653
    %v2655 = vlaneseq
    %v2656 = vshrl.u32 %v2655, 7
    %v2657 = vsub.s32 %v1772, %v2656
    %v2658 = vrot.slane %v2641, %v2657
    %v2659 = vsel %vm1777, %v2658, %v2654
    %v2660 = vsel %vm1788, %v2659, %v2650
    %v2662 = vsel %vm1791, %v2660, -inf
    %2663 = vmax.xlane.f32.xlu0 %v2662
    %v2664 = vpop.xlane.xlu0 %2663
    %v2666 = vlaneseq
    %v2667 = vshrl.u32 %v2666, 7
    %v2668 = vsub.s32 0, %v2667
    %v2669 = vrot.slane %v2664, %v2668
    %v2670 = vlaneseq
    %v2671 = vshrl.u32 %v2670, 7
    %v2672 = vsub.s32 1, %v2671
    %v2673 = vrot.slane %v2664, %v2672
    %v2676 = vsub.f32 %v2622, %v2669
    %v2677 = vsub.f32 %v2623, %v2669
    %v2678 = vsub.f32 %v2624, %v2673
    %v2679 = vsub.f32 %v2625, %v2673
    %v2680 = vmul.f32 %v2676, 1.442695
    %v2681 = vpow.pop %v2680
    %v2682 = vmul.f32 %v2677, 1.442695
    %v2683 = vpow.pop %v2682
    %v2684 = vmul.f32 %v2678, 1.442695
    %v2685 = vpow.pop %v2684
    %v2686 = vmul.f32 %v2679, 1.442695
    %v2687 = vpow.pop %v2686
    %2692 = vset.pattern.permute.xlu0 0
    %2693 = vperm.xlu0 %2692, %v2681
    %v2694 = vpop.permute.xlu0 %2693
    %2695 = vset.pattern.permute.xlu0 0
    %2696 = vperm.xlu0 %2695, %v2683
    %v2697 = vpop.permute.xlu0 %2696
    %2698 = vset.pattern.permute.xlu0 0
    %2699 = vperm.xlu0 %2698, %v2685
    %v2700 = vpop.permute.xlu0 %2699
    %2701 = vset.pattern.permute.xlu0 0
    %2702 = vperm.xlu0 %2701, %v2687
    %v2703 = vpop.permute.xlu0 %2702
    %v2704 = vlaneseq
    %v2705 = vshrl.u32 %v2704, 7
    %v2706 = vsub.s32 %v1767, %v2705
    %v2707 = vrot.slane %v2694, %v2706
    %v2708 = vlaneseq
    %v2709 = vshrl.u32 %v2708, 7
    %v2710 = vsub.s32 %v1772, %v2709
    %v2711 = vrot.slane %v2697, %v2710
    %v2712 = vsel %vm1777, %v2711, %v2707
    %v2713 = vlaneseq
    %v2714 = vshrl.u32 %v2713, 7
    %v2715 = vsub.s32 %v1767, %v2714
    %v2716 = vrot.slane %v2700, %v2715
    %v2717 = vlaneseq
    %v2718 = vshrl.u32 %v2717, 7
    %v2719 = vsub.s32 %v1772, %v2718
    %v2720 = vrot.slane %v2703, %v2719
    %v2721 = vsel %vm1777, %v2720, %v2716
    %v2722 = vsel %vm1788, %v2721, %v2712
    %v2724 = vsel %vm1791, %v2722, 0.0
    %2725 = vadd.xlane.f32.xlu0 %v2724
    %v2726 = vpop.xlane.xlu0 %2725
    %v2727 = vrcp.pop %v2726
    %v2729 = vlaneseq
    %v2730 = vshrl.u32 %v2729, 7
    %v2731 = vsub.s32 0, %v2730
    %v2732 = vrot.slane %v2727, %v2731
    %v2733 = vlaneseq
    %v2734 = vshrl.u32 %v2733, 7
    %v2735 = vsub.s32 1, %v2734
    %v2736 = vrot.slane %v2727, %v2735
    %v2739 = vmul.f32 %v2681, %v2732
    %v2740 = vmul.f32 %v2683, %v2732
    %v2741 = vmul.f32 %v2685, %v2736
    %v2742 = vmul.f32 %v2687, %v2736
    %2745 = vset.pattern.permute.xlu0 0
    %2746 = vperm.xlu0 %2745, %v2739
    %v2747 = vpop.permute.xlu0 %2746
    %2748 = vset.pattern.permute.xlu0 0
    %2749 = vperm.xlu0 %2748, %v2740
    %v2750 = vpop.permute.xlu0 %2749
    %v2751 = vlaneseq
    %v2752 = vshrl.u32 %v2751, 7
    %v2753 = vsub.s32 %v1767, %v2752
    %v2754 = vrot.slane %v2747, %v2753
    %v2755 = vlaneseq
    %v2756 = vshrl.u32 %v2755, 7
    %v2757 = vsub.s32 %v1772, %v2756
    %v2758 = vrot.slane %v2750, %v2757
    %v2759 = vsel %vm1777, %v2758, %v2754
    %v2760 = vsel %vm1890, %v2759, 0
    %2762 = vmatprep.subr.mxu0 0.0
    %2763 = vmatpush1.msra.mxu0 %v248
    %2764 = vmatprep.subr.mxu0 0.0
    %2765 = vmatpush1.msra.mxu0 %v1894
    %2766 = vmatprep.subr.mxu0 0.0
    %2767 = vmatpush1.msra.mxu0 0.0
    %2768 = vmatprep.subr.mxu0 0.0
    %2769 = vmatpush1.msra.mxu0 0.0
    %2770 = vmatprep.subr.mxu0 0.0
    %2771 = vmatpush1.msra.mxu0 0.0
    %2772 = vmatprep.subr.mxu0 0.0
    %2773 = vmatpush1.msra.mxu0 0.0
    %2774 = vmatprep.subr.mxu0 0.0
    %2775 = vmatpush1.msra.mxu0 0.0
    %2776 = vmatprep.subr.mxu0 0.0
    %2777 = vmatpush1.msra.mxu0 0.0
    %2778 = vmatprep.subr.mxu0 0.0
    %2779 = vmatpush1.msra.mxu0 0.0
    %2780 = vmatprep.subr.mxu0 0.0
    %2781 = vmatpush1.msra.mxu0 0.0
    %2782 = vmatprep.subr.mxu0 0.0
    %2783 = vmatpush1.msra.mxu0 0.0
    %2784 = vmatprep.subr.mxu0 0.0
    %2785 = vmatpush1.msra.mxu0 0.0
    %2786 = vmatprep.subr.mxu0 0.0
    %2787 = vmatpush1.msra.mxu0 0.0
    %2788 = vmatprep.subr.mxu0 0.0
    %2789 = vmatpush1.msra.mxu0 0.0
    %2790 = vmatprep.subr.mxu0 0.0
    %2791 = vmatpush1.msra.mxu0 0.0
    %2792 = vmatprep.subr.mxu0 0.0
    %2793 = vmatpush1.msra.mxu0 0.0
    %2794 = vmatprep.subr.mxu0 0.0
    %2795 = vmatpush1.msra.mxu0 0.0
    %2796 = vmatprep.subr.mxu0 0.0
    %2797 = vmatpush1.msra.mxu0 0.0
    %2798 = vmatprep.subr.mxu0 0.0
    %2799 = vmatpush1.msra.mxu0 0.0
    %2800 = vmatprep.subr.mxu0 0.0
    %2801 = vmatpush1.msra.mxu0 0.0
    %2802 = vmatprep.subr.mxu0 0.0
    %2803 = vmatpush1.msra.mxu0 0.0
    %2804 = vmatprep.subr.mxu0 0.0
    %2805 = vmatpush1.msra.mxu0 0.0
    %2806 = vmatprep.subr.mxu0 0.0
    %2807 = vmatpush1.msra.mxu0 0.0
    %2808 = vmatprep.subr.mxu0 0.0
    %2809 = vmatpush1.msra.mxu0 0.0
    %2810 = vmatprep.subr.mxu0 0.0
    %2811 = vmatpush1.msra.mxu0 0.0
    %2812 = vmatprep.subr.mxu0 0.0
    %2813 = vmatpush1.msra.mxu0 0.0
    %2814 = vmatprep.subr.mxu0 0.0
    %2815 = vmatpush1.msra.mxu0 0.0
    %2816 = vmatprep.subr.mxu0 0.0
    %2817 = vmatpush1.msra.mxu0 0.0
    %2818 = vmatprep.subr.mxu0 0.0
    %2819 = vmatpush1.msra.mxu0 0.0
    %2820 = vmatprep.subr.mxu0 0.0
    %2821 = vmatpush1.msra.mxu0 0.0
    %2822 = vmatprep.subr.mxu0 0.0
    %2823 = vmatpush1.msra.mxu0 0.0
    %2824 = vmatprep.subr.mxu0 0.0
    %2825 = vmatpush1.msra.mxu0 0.0
    %2826 = vmatprep.mubr.f32.mxu0 0.0
    %2827 = vmatmul.mubr.f32.gmra.mrb[0].mxu0 %v2760
    %v2828 = vpop.f32.mrb[0].mxu0
    %v2829 = vadd.f32 0.0, %v2828
    %v2830 = vpop.f32.mrb[0].mxu0
    %2831 = vdwg.mxu0
    %2834 = vset.pattern.permute.xlu0 0
    %2835 = vperm.xlu0 %2834, %v2741
    %v2836 = vpop.permute.xlu0 %2835
    %2837 = vset.pattern.permute.xlu0 0
    %2838 = vperm.xlu0 %2837, %v2742
    %v2839 = vpop.permute.xlu0 %2838
    %v2840 = vlaneseq
    %v2841 = vshrl.u32 %v2840, 7
    %v2842 = vsub.s32 %v1767, %v2841
    %v2843 = vrot.slane %v2836, %v2842
    %v2844 = vlaneseq
    %v2845 = vshrl.u32 %v2844, 7
    %v2846 = vsub.s32 %v1772, %v2845
    %v2847 = vrot.slane %v2839, %v2846
    %v2848 = vsel %vm1777, %v2847, %v2843
    %v2849 = vsel %vm1890, %v2848, 0
    %2851 = vmatprep.subr.mxu0 0.0
    %2852 = vmatpush1.msra.mxu0 %v250
    %2853 = vmatprep.subr.mxu0 0.0
    %2854 = vmatpush1.msra.mxu0 %v1985
    %2855 = vmatprep.subr.mxu0 0.0
    %2856 = vmatpush1.msra.mxu0 0.0
    %2857 = vmatprep.subr.mxu0 0.0
    %2858 = vmatpush1.msra.mxu0 0.0
    %2859 = vmatprep.subr.mxu0 0.0
    %2860 = vmatpush1.msra.mxu0 0.0
    %2861 = vmatprep.subr.mxu0 0.0
    %2862 = vmatpush1.msra.mxu0 0.0
    %2863 = vmatprep.subr.mxu0 0.0
    %2864 = vmatpush1.msra.mxu0 0.0
    %2865 = vmatprep.subr.mxu0 0.0
    %2866 = vmatpush1.msra.mxu0 0.0
    %2867 = vmatprep.subr.mxu0 0.0
    %2868 = vmatpush1.msra.mxu0 0.0
    %2869 = vmatprep.subr.mxu0 0.0
    %2870 = vmatpush1.msra.mxu0 0.0
    %2871 = vmatprep.subr.mxu0 0.0
    %2872 = vmatpush1.msra.mxu0 0.0
    %2873 = vmatprep.subr.mxu0 0.0
    %2874 = vmatpush1.msra.mxu0 0.0
    %2875 = vmatprep.subr.mxu0 0.0
    %2876 = vmatpush1.msra.mxu0 0.0
    %2877 = vmatprep.subr.mxu0 0.0
    %2878 = vmatpush1.msra.mxu0 0.0
    %2879 = vmatprep.subr.mxu0 0.0
    %2880 = vmatpush1.msra.mxu0 0.0
    %2881 = vmatprep.subr.mxu0 0.0
    %2882 = vmatpush1.msra.mxu0 0.0
    %2883 = vmatprep.subr.mxu0 0.0
    %2884 = vmatpush1.msra.mxu0 0.0
    %2885 = vmatprep.subr.mxu0 0.0
    %2886 = vmatpush1.msra.mxu0 0.0
    %2887 = vmatprep.subr.mxu0 0.0
    %2888 = vmatpush1.msra.mxu0 0.0
    %2889 = vmatprep.subr.mxu0 0.0
    %2890 = vmatpush1.msra.mxu0 0.0
    %2891 = vmatprep.subr.mxu0 0.0
    %2892 = vmatpush1.msra.mxu0 0.0
    %2893 = vmatprep.subr.mxu0 0.0
    %2894 = vmatpush1.msra.mxu0 0.0
    %2895 = vmatprep.subr.mxu0 0.0
    %2896 = vmatpush1.msra.mxu0 0.0
    %2897 = vmatprep.subr.mxu0 0.0
    %2898 = vmatpush1.msra.mxu0 0.0
    %2899 = vmatprep.subr.mxu0 0.0
    %2900 = vmatpush1.msra.mxu0 0.0
    %2901 = vmatprep.subr.mxu0 0.0
    %2902 = vmatpush1.msra.mxu0 0.0
    %2903 = vmatprep.subr.mxu0 0.0
    %2904 = vmatpush1.msra.mxu0 0.0
    %2905 = vmatprep.subr.mxu0 0.0
    %2906 = vmatpush1.msra.mxu0 0.0
    %2907 = vmatprep.subr.mxu0 0.0
    %2908 = vmatpush1.msra.mxu0 0.0
    %2909 = vmatprep.subr.mxu0 0.0
    %2910 = vmatpush1.msra.mxu0 0.0
    %2911 = vmatprep.subr.mxu0 0.0
    %2912 = vmatpush1.msra.mxu0 0.0
    %2913 = vmatprep.subr.mxu0 0.0
    %2914 = vmatpush1.msra.mxu0 0.0
    %2915 = vmatprep.mubr.f32.mxu0 0.0
    %2916 = vmatmul.mubr.f32.gmra.mrb[0].mxu0 %v2849
    %v2917 = vpop.f32.mrb[0].mxu0
    %v2918 = vadd.f32 0.0, %v2917
    %v2919 = vpop.f32.mrb[0].mxu0
    %2920 = vdwg.mxu0
    %2921 = vmatprep.subr.mxu0 0.0
    %2922 = vmatpush1.msra.mxu0 %v1198
    %2923 = vmatprep.subr.mxu0 0.0
    %2924 = vmatpush1.msra.mxu0 %v1199
    %2925 = vmatprep.subr.mxu0 0.0
    %2926 = vmatpush1.msra.mxu0 %v1200
    %2927 = vmatprep.subr.mxu0 0.0
    %2928 = vmatpush1.msra.mxu0 %v1201
    %2929 = vmatprep.subr.mxu0 0.0
    %2930 = vmatpush1.msra.mxu0 0.0
    %2931 = vmatprep.subr.mxu0 0.0
    %2932 = vmatpush1.msra.mxu0 0.0
    %2933 = vmatprep.subr.mxu0 0.0
    %2934 = vmatpush1.msra.mxu0 0.0
    %2935 = vmatprep.subr.mxu0 0.0
    %2936 = vmatpush1.msra.mxu0 0.0
    %2937 = vmatprep.subr.mxu0 0.0
    %2938 = vmatpush1.msra.mxu0 0.0
    %2939 = vmatprep.subr.mxu0 0.0
    %2940 = vmatpush1.msra.mxu0 0.0
    %2941 = vmatprep.subr.mxu0 0.0
    %2942 = vmatpush1.msra.mxu0 0.0
    %2943 = vmatprep.subr.mxu0 0.0
    %2944 = vmatpush1.msra.mxu0 0.0
    %2945 = vmatprep.subr.mxu0 0.0
    %2946 = vmatpush1.msra.mxu0 0.0
    %2947 = vmatprep.subr.mxu0 0.0
    %2948 = vmatpush1.msra.mxu0 0.0
    %2949 = vmatprep.subr.mxu0 0.0
    %2950 = vmatpush1.msra.mxu0 0.0
    %2951 = vmatprep.subr.mxu0 0.0
    %2952 = vmatpush1.msra.mxu0 0.0
    %2953 = vmatprep.subr.mxu0 0.0
    %2954 = vmatpush1.msra.mxu0 0.0
    %2955 = vmatprep.subr.mxu0 0.0
    %2956 = vmatpush1.msra.mxu0 0.0
    %2957 = vmatprep.subr.mxu0 0.0
    %2958 = vmatpush1.msra.mxu0 0.0
    %2959 = vmatprep.subr.mxu0 0.0
    %2960 = vmatpush1.msra.mxu0 0.0
    %2961 = vmatprep.subr.mxu0 0.0
    %2962 = vmatpush1.msra.mxu0 0.0
    %2963 = vmatprep.subr.mxu0 0.0
    %2964 = vmatpush1.msra.mxu0 0.0
    %2965 = vmatprep.subr.mxu0 0.0
    %2966 = vmatpush1.msra.mxu0 0.0
    %2967 = vmatprep.subr.mxu0 0.0
    %2968 = vmatpush1.msra.mxu0 0.0
    %2969 = vmatprep.subr.mxu0 0.0
    %2970 = vmatpush1.msra.mxu0 0.0
    %2971 = vmatprep.subr.mxu0 0.0
    %2972 = vmatpush1.msra.mxu0 0.0
    %2973 = vmatprep.subr.mxu0 0.0
    %2974 = vmatpush1.msra.mxu0 0.0
    %2975 = vmatprep.subr.mxu0 0.0
    %2976 = vmatpush1.msra.mxu0 0.0
    %2977 = vmatprep.subr.mxu0 0.0
    %2978 = vmatpush1.msra.mxu0 0.0
    %2979 = vmatprep.subr.mxu0 0.0
    %2980 = vmatpush1.msra.mxu0 0.0
    %2981 = vmatprep.subr.mxu0 0.0
    %2982 = vmatpush1.msra.mxu0 0.0
    %2983 = vmatprep.subr.mxu0 0.0
    %2984 = vmatpush1.msra.mxu0 0.0
    %2985 = vmatprep.mubr.f32.mxu0 0.0
    %2986 = vmatmul.mubr.f32.gmra.mrb[0].mxu0 %v2493
    %v2987 = vpop.f32.mrb[0].mxu0
    %v2988 = vadd.f32 0.0, %v2987
    %v2989 = vpop.f32.mrb[0].mxu0
    %2990 = vdwg.mxu0
    %v2993 = vrot.slane %v2918, 7
    %v2994 = vsel %vm1788, %v2993, %v2829
    %v2995 = vsel %vm658, %v2994, 0
    %2997 = vmatprep.subr.mxu0 0.0
    %2998 = vmatpush1.msra.mxu0 %v1194
    %2999 = vmatprep.subr.mxu0 0.0
    %3000 = vmatpush1.msra.mxu0 %v1195
    %3001 = vmatprep.subr.mxu0 0.0
    %3002 = vmatpush1.msra.mxu0 %v1196
    %3003 = vmatprep.subr.mxu0 0.0
    %3004 = vmatpush1.msra.mxu0 %v1197
    %3005 = vmatprep.subr.mxu0 0.0
    %3006 = vmatpush1.msra.mxu0 0.0
    %3007 = vmatprep.subr.mxu0 0.0
    %3008 = vmatpush1.msra.mxu0 0.0
    %3009 = vmatprep.subr.mxu0 0.0
    %3010 = vmatpush1.msra.mxu0 0.0
    %3011 = vmatprep.subr.mxu0 0.0
    %3012 = vmatpush1.msra.mxu0 0.0
    %3013 = vmatprep.subr.mxu0 0.0
    %3014 = vmatpush1.msra.mxu0 0.0
    %3015 = vmatprep.subr.mxu0 0.0
    %3016 = vmatpush1.msra.mxu0 0.0
    %3017 = vmatprep.subr.mxu0 0.0
    %3018 = vmatpush1.msra.mxu0 0.0
    %3019 = vmatprep.subr.mxu0 0.0
    %3020 = vmatpush1.msra.mxu0 0.0
    %3021 = vmatprep.subr.mxu0 0.0
    %3022 = vmatpush1.msra.mxu0 0.0
    %3023 = vmatprep.subr.mxu0 0.0
    %3024 = vmatpush1.msra.mxu0 0.0
    %3025 = vmatprep.subr.mxu0 0.0
    %3026 = vmatpush1.msra.mxu0 0.0
    %3027 = vmatprep.subr.mxu0 0.0
    %3028 = vmatpush1.msra.mxu0 0.0
    %3029 = vmatprep.subr.mxu0 0.0
    %3030 = vmatpush1.msra.mxu0 0.0
    %3031 = vmatprep.subr.mxu0 0.0
    %3032 = vmatpush1.msra.mxu0 0.0
    %3033 = vmatprep.subr.mxu0 0.0
    %3034 = vmatpush1.msra.mxu0 0.0
    %3035 = vmatprep.subr.mxu0 0.0
    %3036 = vmatpush1.msra.mxu0 0.0
    %3037 = vmatprep.subr.mxu0 0.0
    %3038 = vmatpush1.msra.mxu0 0.0
    %3039 = vmatprep.subr.mxu0 0.0
    %3040 = vmatpush1.msra.mxu0 0.0
    %3041 = vmatprep.subr.mxu0 0.0
    %3042 = vmatpush1.msra.mxu0 0.0
    %3043 = vmatprep.subr.mxu0 0.0
    %3044 = vmatpush1.msra.mxu0 0.0
    %3045 = vmatprep.subr.mxu0 0.0
    %3046 = vmatpush1.msra.mxu0 0.0
    %3047 = vmatprep.subr.mxu0 0.0
    %3048 = vmatpush1.msra.mxu0 0.0
    %3049 = vmatprep.subr.mxu0 0.0
    %3050 = vmatpush1.msra.mxu0 0.0
    %3051 = vmatprep.subr.mxu0 0.0
    %3052 = vmatpush1.msra.mxu0 0.0
    %3053 = vmatprep.subr.mxu0 0.0
    %3054 = vmatpush1.msra.mxu0 0.0
    %3055 = vmatprep.subr.mxu0 0.0
    %3056 = vmatpush1.msra.mxu0 0.0
    %3057 = vmatprep.subr.mxu0 0.0
    %3058 = vmatpush1.msra.mxu0 0.0
    %3059 = vmatprep.subr.mxu0 0.0
    %3060 = vmatpush1.msra.mxu0 0.0
    %3061 = vmatprep.mubr.f32.mxu0 0.0
    %3062 = vmatmul.mubr.f32.gmra.mrb[0].mxu0 %v2995
    %v3063 = vpop.f32.mrb[0].mxu0
    %v3064 = vadd.f32 %v2988, %v3063
    %v3065 = vpop.f32.mrb[0].mxu0
    %3066 = vdwg.mxu0
    %3067 = vmatprep.subr.mxu0 0.0
    %3068 = vmatpush1.msra.mxu0 %v1202
    %3069 = vmatprep.subr.mxu0 0.0
    %3070 = vmatpush1.msra.mxu0 %v1203
    %3071 = vmatprep.subr.mxu0 0.0
    %3072 = vmatpush1.msra.mxu0 %v1204
    %3073 = vmatprep.subr.mxu0 0.0
    %3074 = vmatpush1.msra.mxu0 %v1205
    %3075 = vmatprep.subr.mxu0 0.0
    %3076 = vmatpush1.msra.mxu0 0.0
    %3077 = vmatprep.subr.mxu0 0.0
    %3078 = vmatpush1.msra.mxu0 0.0
    %3079 = vmatprep.subr.mxu0 0.0
    %3080 = vmatpush1.msra.mxu0 0.0
    %3081 = vmatprep.subr.mxu0 0.0
    %3082 = vmatpush1.msra.mxu0 0.0
    %3083 = vmatprep.subr.mxu0 0.0
    %3084 = vmatpush1.msra.mxu0 0.0
    %3085 = vmatprep.subr.mxu0 0.0
    %3086 = vmatpush1.msra.mxu0 0.0
    %3087 = vmatprep.subr.mxu0 0.0
    %3088 = vmatpush1.msra.mxu0 0.0
    %3089 = vmatprep.subr.mxu0 0.0
    %3090 = vmatpush1.msra.mxu0 0.0
    %3091 = vmatprep.subr.mxu0 0.0
    %3092 = vmatpush1.msra.mxu0 0.0
    %3093 = vmatprep.subr.mxu0 0.0
    %3094 = vmatpush1.msra.mxu0 0.0
    %3095 = vmatprep.subr.mxu0 0.0
    %3096 = vmatpush1.msra.mxu0 0.0
    %3097 = vmatprep.subr.mxu0 0.0
    %3098 = vmatpush1.msra.mxu0 0.0
    %3099 = vmatprep.subr.mxu0 0.0
    %3100 = vmatpush1.msra.mxu0 0.0
    %3101 = vmatprep.subr.mxu0 0.0
    %3102 = vmatpush1.msra.mxu0 0.0
    %3103 = vmatprep.subr.mxu0 0.0
    %3104 = vmatpush1.msra.mxu0 0.0
    %3105 = vmatprep.subr.mxu0 0.0
    %3106 = vmatpush1.msra.mxu0 0.0
    %3107 = vmatprep.subr.mxu0 0.0
    %3108 = vmatpush1.msra.mxu0 0.0
    %3109 = vmatprep.subr.mxu0 0.0
    %3110 = vmatpush1.msra.mxu0 0.0
    %3111 = vmatprep.subr.mxu0 0.0
    %3112 = vmatpush1.msra.mxu0 0.0
    %3113 = vmatprep.subr.mxu0 0.0
    %3114 = vmatpush1.msra.mxu0 0.0
    %3115 = vmatprep.subr.mxu0 0.0
    %3116 = vmatpush1.msra.mxu0 0.0
    %3117 = vmatprep.subr.mxu0 0.0
    %3118 = vmatpush1.msra.mxu0 0.0
    %3119 = vmatprep.subr.mxu0 0.0
    %3120 = vmatpush1.msra.mxu0 0.0
    %3121 = vmatprep.subr.mxu0 0.0
    %3122 = vmatpush1.msra.mxu0 0.0
    %3123 = vmatprep.subr.mxu0 0.0
    %3124 = vmatpush1.msra.mxu0 0.0
    %3125 = vmatprep.subr.mxu0 0.0
    %3126 = vmatpush1.msra.mxu0 0.0
    %3127 = vmatprep.subr.mxu0 0.0
    %3128 = vmatpush1.msra.mxu0 0.0
    %3129 = vmatprep.subr.mxu0 0.0
    %3130 = vmatpush1.msra.mxu0 0.0
    %3131 = vmatprep.mubr.f32.mxu0 0.0
    %3132 = vmatmul.mubr.f32.gmra.mrb[0].mxu0 %v2312
    %v3133 = vpop.f32.mrb[0].mxu0
    %v3134 = vadd.f32 0.0, %v3133
    %v3135 = vpop.f32.mrb[0].mxu0
    %3136 = vdwg.mxu0
    %v3137 = vadd.f32 %v3064, %v3134
    %v3138 = vadd.f32 %v3137, %v2278
    %v3139 = vxor.u32 %v3138, 2147483648
    %v3140 = vmul.f32 %v3139, 1.442695
    %v3141 = vpow.pop %v3140
    %v3142 = vadd.f32 %v3141, 1.0
    %v3143 = vrcp.pop %v3142
    %v3144 = vmul.f32 1.0, %v3143
    %v3145 = vtanh.pop %v3138
    %v3146 = vmul.f32 %v3144, %v2298
    %3148 = vrot.lane.b32.xlu0 %v3145, 64
    %v3149 = vpop.permute.xlu0 %3148
    %v3151 = vmul.f32 %v3144, %v3149
    %3153 = vrot.lane.b32.xlu0 %v3151, 32
    %v3154 = vpop.permute.xlu0 %3153
    %v3156 = vadd.f32 %v3146, %v3154
    %v3157 = vtanh.pop %v3156
    %3159 = vrot.lane.b32.xlu0 %v3157, 64
    %v3160 = vpop.permute.xlu0 %3159
    %v3162 = vmul.f32 %v3144, %v3160
    %v3163 = vrot.slane %v1031, 4
    %v3165 = vadd.f32 %v1161, %v3163
    %3167 = vrot.lane.b32.xlu0 %v3162, 32
    %v3168 = vpop.permute.xlu0 %3167
    %v3169 = vsel %vm658, %v3168, 0
    %3171 = vmatprep.subr.mxu0 0.0
    %3172 = vmatpush1.msra.mxu0 %v1186
    %3173 = vmatprep.subr.mxu0 0.0
    %3174 = vmatpush1.msra.mxu0 %v1187
    %3175 = vmatprep.subr.mxu0 0.0
    %3176 = vmatpush1.msra.mxu0 %v1188
    %3177 = vmatprep.subr.mxu0 0.0
    %3178 = vmatpush1.msra.mxu0 %v1189
    %3179 = vmatprep.subr.mxu0 0.0
    %3180 = vmatpush1.msra.mxu0 0.0
    %3181 = vmatprep.subr.mxu0 0.0
    %3182 = vmatpush1.msra.mxu0 0.0
    %3183 = vmatprep.subr.mxu0 0.0
    %3184 = vmatpush1.msra.mxu0 0.0
    %3185 = vmatprep.subr.mxu0 0.0
    %3186 = vmatpush1.msra.mxu0 0.0
    %3187 = vmatprep.subr.mxu0 0.0
    %3188 = vmatpush1.msra.mxu0 0.0
    %3189 = vmatprep.subr.mxu0 0.0
    %3190 = vmatpush1.msra.mxu0 0.0
    %3191 = vmatprep.subr.mxu0 0.0
    %3192 = vmatpush1.msra.mxu0 0.0
    %3193 = vmatprep.subr.mxu0 0.0
    %3194 = vmatpush1.msra.mxu0 0.0
    %3195 = vmatprep.subr.mxu0 0.0
    %3196 = vmatpush1.msra.mxu0 0.0
    %3197 = vmatprep.subr.mxu0 0.0
    %3198 = vmatpush1.msra.mxu0 0.0
    %3199 = vmatprep.subr.mxu0 0.0
    %3200 = vmatpush1.msra.mxu0 0.0
    %3201 = vmatprep.subr.mxu0 0.0
    %3202 = vmatpush1.msra.mxu0 0.0
    %3203 = vmatprep.subr.mxu0 0.0
    %3204 = vmatpush1.msra.mxu0 0.0
    %3205 = vmatprep.subr.mxu0 0.0
    %3206 = vmatpush1.msra.mxu0 0.0
    %3207 = vmatprep.subr.mxu0 0.0
    %3208 = vmatpush1.msra.mxu0 0.0
    %3209 = vmatprep.subr.mxu0 0.0
    %3210 = vmatpush1.msra.mxu0 0.0
    %3211 = vmatprep.subr.mxu0 0.0
    %3212 = vmatpush1.msra.mxu0 0.0
    %3213 = vmatprep.subr.mxu0 0.0
    %3214 = vmatpush1.msra.mxu0 0.0
    %3215 = vmatprep.subr.mxu0 0.0
    %3216 = vmatpush1.msra.mxu0 0.0
    %3217 = vmatprep.subr.mxu0 0.0
    %3218 = vmatpush1.msra.mxu0 0.0
    %3219 = vmatprep.subr.mxu0 0.0
    %3220 = vmatpush1.msra.mxu0 0.0
    %3221 = vmatprep.subr.mxu0 0.0
    %3222 = vmatpush1.msra.mxu0 0.0
    %3223 = vmatprep.subr.mxu0 0.0
    %3224 = vmatpush1.msra.mxu0 0.0
    %3225 = vmatprep.subr.mxu0 0.0
    %3226 = vmatpush1.msra.mxu0 0.0
    %3227 = vmatprep.subr.mxu0 0.0
    %3228 = vmatpush1.msra.mxu0 0.0
    %3229 = vmatprep.subr.mxu0 0.0
    %3230 = vmatpush1.msra.mxu0 0.0
    %3231 = vmatprep.subr.mxu0 0.0
    %3232 = vmatpush1.msra.mxu0 0.0
    %3233 = vmatprep.subr.mxu0 0.0
    %3234 = vmatpush1.msra.mxu0 0.0
    %3235 = vmatprep.mubr.f32.mxu0 0.0
    %3236 = vmatmul.mubr.f32.gmra.mrb[0].mxu0 %v3169
    %v3237 = vpop.f32.mrb[0].mxu0
    %v3238 = vadd.f32 0.0, %v3237
    %v3239 = vpop.f32.mrb[0].mxu0
    %3240 = vdwg.mxu0
    %v3242 = vrot.slane %v3238, 4
    %v3244 = vadd.f32 %v3165, %v3242
    %3245 = vmatprep.subr.mxu0 0.0
    %3246 = vmatpush1.msra.mxu0 %v1190
    %3247 = vmatprep.subr.mxu0 0.0
    %3248 = vmatpush1.msra.mxu0 %v1191
    %3249 = vmatprep.subr.mxu0 0.0
    %3250 = vmatpush1.msra.mxu0 %v1192
    %3251 = vmatprep.subr.mxu0 0.0
    %3252 = vmatpush1.msra.mxu0 %v1193
    %3253 = vmatprep.subr.mxu0 0.0
    %3254 = vmatpush1.msra.mxu0 0.0
    %3255 = vmatprep.subr.mxu0 0.0
    %3256 = vmatpush1.msra.mxu0 0.0
    %3257 = vmatprep.subr.mxu0 0.0
    %3258 = vmatpush1.msra.mxu0 0.0
    %3259 = vmatprep.subr.mxu0 0.0
    %3260 = vmatpush1.msra.mxu0 0.0
    %3261 = vmatprep.subr.mxu0 0.0
    %3262 = vmatpush1.msra.mxu0 0.0
    %3263 = vmatprep.subr.mxu0 0.0
    %3264 = vmatpush1.msra.mxu0 0.0
    %3265 = vmatprep.subr.mxu0 0.0
    %3266 = vmatpush1.msra.mxu0 0.0
    %3267 = vmatprep.subr.mxu0 0.0
    %3268 = vmatpush1.msra.mxu0 0.0
    %3269 = vmatprep.subr.mxu0 0.0
    %3270 = vmatpush1.msra.mxu0 0.0
    %3271 = vmatprep.subr.mxu0 0.0
    %3272 = vmatpush1.msra.mxu0 0.0
    %3273 = vmatprep.subr.mxu0 0.0
    %3274 = vmatpush1.msra.mxu0 0.0
    %3275 = vmatprep.subr.mxu0 0.0
    %3276 = vmatpush1.msra.mxu0 0.0
    %3277 = vmatprep.subr.mxu0 0.0
    %3278 = vmatpush1.msra.mxu0 0.0
    %3279 = vmatprep.subr.mxu0 0.0
    %3280 = vmatpush1.msra.mxu0 0.0
    %3281 = vmatprep.subr.mxu0 0.0
    %3282 = vmatpush1.msra.mxu0 0.0
    %3283 = vmatprep.subr.mxu0 0.0
    %3284 = vmatpush1.msra.mxu0 0.0
    %3285 = vmatprep.subr.mxu0 0.0
    %3286 = vmatpush1.msra.mxu0 0.0
    %3287 = vmatprep.subr.mxu0 0.0
    %3288 = vmatpush1.msra.mxu0 0.0
    %3289 = vmatprep.subr.mxu0 0.0
    %3290 = vmatpush1.msra.mxu0 0.0
    %3291 = vmatprep.subr.mxu0 0.0
    %3292 = vmatpush1.msra.mxu0 0.0
    %3293 = vmatprep.subr.mxu0 0.0
    %3294 = vmatpush1.msra.mxu0 0.0
    %3295 = vmatprep.subr.mxu0 0.0
    %3296 = vmatpush1.msra.mxu0 0.0
    %3297 = vmatprep.subr.mxu0 0.0
    %3298 = vmatpush1.msra.mxu0 0.0
    %3299 = vmatprep.subr.mxu0 0.0
    %3300 = vmatpush1.msra.mxu0 0.0
    %3301 = vmatprep.subr.mxu0 0.0
    %3302 = vmatpush1.msra.mxu0 0.0
    %3303 = vmatprep.subr.mxu0 0.0
    %3304 = vmatpush1.msra.mxu0 0.0
    %3305 = vmatprep.subr.mxu0 0.0
    %3306 = vmatpush1.msra.mxu0 0.0
    %3307 = vmatprep.subr.mxu0 0.0
    %3308 = vmatpush1.msra.mxu0 0.0
    %3309 = vmatprep.mubr.f32.mxu0 0.0
    %3310 = vmatmul.mubr.f32.gmra.mrb[0].mxu0 %v2493
    %v3311 = vpop.f32.mrb[0].mxu0
    %v3312 = vadd.f32 0.0, %v3311
    %v3313 = vpop.f32.mrb[0].mxu0
    %3314 = vdwg.mxu0
    %v3316 = vrot.slane %v3312, 4
    %v3318 = vadd.f32 %v3244, %v3316
    %v3319 = vxor.u32 %v3318, 2147483648
    %v3320 = vmul.f32 %v3319, 1.442695
    %v3321 = vpow.pop %v3320
    %v3322 = vadd.f32 %v3321, 1.0
    %v3323 = vrcp.pop %v3322
    %v3324 = vmul.f32 1.0, %v3323
    %v3325 = vtanh.pop %v3318
    %v3327 = vrot.slane %v2482, 6
    %v3329 = vmul.f32 %v3324, %v3327
    %3331 = vrot.lane.b32.xlu0 %v3325, 64
    %v3332 = vpop.permute.xlu0 %3331
    %v3334 = vmul.f32 %v3324, %v3332
    %3336 = vrot.lane.b32.xlu0 %v3334, 32
    %v3337 = vpop.permute.xlu0 %3336
    %v3339 = vadd.f32 %v3329, %v3337
    %v3340 = vtanh.pop %v3339
    %3342 = vrot.lane.b32.xlu0 %v3340, 64
    %v3343 = vpop.permute.xlu0 %3342
    %v3345 = vmul.f32 %v3324, %v3343
    %v3347 = vrot.slane %v3345, 4
    %3348 = vrot.lane.b32.xlu0 %v3347, 32
    %v3349 = vpop.permute.xlu0 %3348
    %v3350 = vsel %vm658, %v3349, 0
    %3352 = vmatprep.subr.mxu0 0.0
    %3353 = vmatpush1.msra.mxu0 %v1207
    %3354 = vmatprep.subr.mxu0 0.0
    %3355 = vmatpush1.msra.mxu0 %v1208
    %3356 = vmatprep.subr.mxu0 0.0
    %3357 = vmatpush1.msra.mxu0 %v1209
    %3358 = vmatprep.subr.mxu0 0.0
    %3359 = vmatpush1.msra.mxu0 %v1210
    %3360 = vmatprep.subr.mxu0 0.0
    %3361 = vmatpush1.msra.mxu0 0.0
    %3362 = vmatprep.subr.mxu0 0.0
    %3363 = vmatpush1.msra.mxu0 0.0
    %3364 = vmatprep.subr.mxu0 0.0
    %3365 = vmatpush1.msra.mxu0 0.0
    %3366 = vmatprep.subr.mxu0 0.0
    %3367 = vmatpush1.msra.mxu0 0.0
    %3368 = vmatprep.subr.mxu0 0.0
    %3369 = vmatpush1.msra.mxu0 0.0
    %3370 = vmatprep.subr.mxu0 0.0
    %3371 = vmatpush1.msra.mxu0 0.0
    %3372 = vmatprep.subr.mxu0 0.0
    %3373 = vmatpush1.msra.mxu0 0.0
    %3374 = vmatprep.subr.mxu0 0.0
    %3375 = vmatpush1.msra.mxu0 0.0
    %3376 = vmatprep.subr.mxu0 0.0
    %3377 = vmatpush1.msra.mxu0 0.0
    %3378 = vmatprep.subr.mxu0 0.0
    %3379 = vmatpush1.msra.mxu0 0.0
    %3380 = vmatprep.subr.mxu0 0.0
    %3381 = vmatpush1.msra.mxu0 0.0
    %3382 = vmatprep.subr.mxu0 0.0
    %3383 = vmatpush1.msra.mxu0 0.0
    %3384 = vmatprep.subr.mxu0 0.0
    %3385 = vmatpush1.msra.mxu0 0.0
    %3386 = vmatprep.subr.mxu0 0.0
    %3387 = vmatpush1.msra.mxu0 0.0
    %3388 = vmatprep.subr.mxu0 0.0
    %3389 = vmatpush1.msra.mxu0 0.0
    %3390 = vmatprep.subr.mxu0 0.0
    %3391 = vmatpush1.msra.mxu0 0.0
    %3392 = vmatprep.subr.mxu0 0.0
    %3393 = vmatpush1.msra.mxu0 0.0
    %3394 = vmatprep.subr.mxu0 0.0
    %3395 = vmatpush1.msra.mxu0 0.0
    %3396 = vmatprep.subr.mxu0 0.0
    %3397 = vmatpush1.msra.mxu0 0.0
    %3398 = vmatprep.subr.mxu0 0.0
    %3399 = vmatpush1.msra.mxu0 0.0
    %3400 = vmatprep.subr.mxu0 0.0
    %3401 = vmatpush1.msra.mxu0 0.0
    %3402 = vmatprep.subr.mxu0 0.0
    %3403 = vmatpush1.msra.mxu0 0.0
    %3404 = vmatprep.subr.mxu0 0.0
    %3405 = vmatpush1.msra.mxu0 0.0
    %3406 = vmatprep.subr.mxu0 0.0
    %3407 = vmatpush1.msra.mxu0 0.0
    %3408 = vmatprep.subr.mxu0 0.0
    %3409 = vmatpush1.msra.mxu0 0.0
    %3410 = vmatprep.subr.mxu0 0.0
    %3411 = vmatpush1.msra.mxu0 0.0
    %3412 = vmatprep.subr.mxu0 0.0
    %3413 = vmatpush1.msra.mxu0 0.0
    %3414 = vmatprep.subr.mxu0 0.0
    %3415 = vmatpush1.msra.mxu0 0.0
    %3416 = vmatprep.mubr.f32.mxu0 0.0
    %3417 = vmatmul.mubr.f32.gmra.mrb[0].mxu0 %v3350
    %v3418 = vpop.f32.mrb[0].mxu0
    %v3419 = vadd.f32 %v1386, %v3418
    %v3420 = vpop.f32.mrb[0].mxu0
    %3421 = vdwg.mxu0
    %v3424 = vunpack.c.l.s4 1966171168
    %v3425 = vunpack.c.0.s8 %v3424
    %v3426 = vlaneseq
    %v3427 = vshrl.u32 %v3426, 7
    %v3428 = vsub.s32 %v3425, %v3427
    %v3429 = vrot.slane %v3419, %v3428
    %v3430 = vcombine.high %v3429, %v3429
    %v3432 = vunpack.c.l.s4 1966171168
    %v3433 = vunpack.c.0.s8 %v3432
    %v3434 = vlaneseq
    %v3435 = vshrl.u32 %v3434, 7
    %v3436 = vsub.s32 %v3433, %v3435
    %v3437 = vrot.slane %v3429, %v3436
    %v3439 = vunpack.c.l.s4 1966171168
    %v3440 = vunpack.c.0.s8 %v3439
    %v3441 = vlaneseq
    %v3442 = vshrl.u32 %v3441, 7
    %v3443 = vsub.s32 %v3440, %v3442
    %v3444 = vrot.slane %v3430, %v3443
    %v3445 = vlaneseq
    %v3446 = vshrl.u32 %v3445, 7
    %v3447 = vsub.s32 0, %v3446
    %v3448 = vrot.slane %v3437, %v3447
    %v3449 = vlaneseq
    %v3450 = vshrl.u32 %v3449, 7
    %v3451 = vsub.s32 0, %v3450
    %v3452 = vrot.slane %v3444, %v3451
    %v3455 = vadd.f32 %v3448, %v1544
    %v3456 = vadd.f32 %v3448, %v1592
    %v3457 = vadd.f32 %v3452, %v1641
    %v3458 = vadd.f32 %v3452, %v1689
    %v3459 = vtanh.pop %v3455
    %v3460 = vtanh.pop %v3456
    %v3461 = vtanh.pop %v3457
    %v3462 = vtanh.pop %v3458
    %v3463 = vmul.f32 %v3459, %v1179
    %v3464 = vmul.f32 %v3460, %v1179
    %v3465 = vmul.f32 %v3461, %v1179
    %v3466 = vmul.f32 %v3462, %v1179
    %v3467 = vsel %vm658, %v3463, 0.0
    %3468 = vadd.xlane.f32.xlu0 %v3467
    %v3469 = vpop.xlane.xlu0 %3468
    %v3470 = vsel %vm1709, %v3464, 0.0
    %3471 = vadd.xlane.f32.xlu0 %v3470
    %v3472 = vpop.xlane.xlu0 %3471
    %v3473 = vsel %vm658, %v3465, 0.0
    %3474 = vadd.xlane.f32.xlu0 %v3473
    %v3475 = vpop.xlane.xlu0 %3474
    %v3476 = vsel %vm1709, %v3466, 0.0
    %3477 = vadd.xlane.f32.xlu0 %v3476
    %v3478 = vpop.xlane.xlu0 %3477
    %v3479 = vadd.f32 %v3469, %v1726
    %v3480 = vadd.f32 %v3472, %v1730
    %v3481 = vadd.f32 %v3475, %v1737
    %v3482 = vadd.f32 %v3478, %v1741
    %3487 = vset.pattern.permute.xlu0 0
    %3488 = vperm.xlu0 %3487, %v3479
    %v3489 = vpop.permute.xlu0 %3488
    %3490 = vset.pattern.permute.xlu0 0
    %3491 = vperm.xlu0 %3490, %v3480
    %v3492 = vpop.permute.xlu0 %3491
    %3493 = vset.pattern.permute.xlu0 0
    %3494 = vperm.xlu0 %3493, %v3481
    %v3495 = vpop.permute.xlu0 %3494
    %3496 = vset.pattern.permute.xlu0 0
    %3497 = vperm.xlu0 %3496, %v3482
    %v3498 = vpop.permute.xlu0 %3497
    %v3499 = vlaneseq
    %v3500 = vshrl.u32 %v3499, 7
    %v3501 = vsub.s32 %v1767, %v3500
    %v3502 = vrot.slane %v3489, %v3501
    %v3503 = vlaneseq
    %v3504 = vshrl.u32 %v3503, 7
    %v3505 = vsub.s32 %v1772, %v3504
    %v3506 = vrot.slane %v3492, %v3505
    %v3507 = vsel %vm1777, %v3506, %v3502
    %v3508 = vlaneseq
    %v3509 = vshrl.u32 %v3508, 7
    %v3510 = vsub.s32 %v1767, %v3509
    %v3511 = vrot.slane %v3495, %v3510
    %v3512 = vlaneseq
    %v3513 = vshrl.u32 %v3512, 7
    %v3514 = vsub.s32 %v1772, %v3513
    %v3515 = vrot.slane %v3498, %v3514
    %v3516 = vsel %vm1777, %v3515, %v3511
    %v3517 = vsel %vm1788, %v3516, %v3507
    %v3519 = vsel %vm1791, %v3517, -inf
    %3520 = vmax.xlane.f32.xlu0 %v3519
    %v3521 = vpop.xlane.xlu0 %3520
    %v3523 = vlaneseq
    %v3524 = vshrl.u32 %v3523, 7
    %v3525 = vsub.s32 0, %v3524
    %v3526 = vrot.slane %v3521, %v3525
    %v3527 = vlaneseq
    %v3528 = vshrl.u32 %v3527, 7
    %v3529 = vsub.s32 1, %v3528
    %v3530 = vrot.slane %v3521, %v3529
    %v3533 = vsub.f32 %v3479, %v3526
    %v3534 = vsub.f32 %v3480, %v3526
    %v3535 = vsub.f32 %v3481, %v3530
    %v3536 = vsub.f32 %v3482, %v3530
    %v3537 = vmul.f32 %v3533, 1.442695
    %v3538 = vpow.pop %v3537
    %v3539 = vmul.f32 %v3534, 1.442695
    %v3540 = vpow.pop %v3539
    %v3541 = vmul.f32 %v3535, 1.442695
    %v3542 = vpow.pop %v3541
    %v3543 = vmul.f32 %v3536, 1.442695
    %v3544 = vpow.pop %v3543
    %3549 = vset.pattern.permute.xlu0 0
    %3550 = vperm.xlu0 %3549, %v3538
    %v3551 = vpop.permute.xlu0 %3550
    %3552 = vset.pattern.permute.xlu0 0
    %3553 = vperm.xlu0 %3552, %v3540
    %v3554 = vpop.permute.xlu0 %3553
    %3555 = vset.pattern.permute.xlu0 0
    %3556 = vperm.xlu0 %3555, %v3542
    %v3557 = vpop.permute.xlu0 %3556
    %3558 = vset.pattern.permute.xlu0 0
    %3559 = vperm.xlu0 %3558, %v3544
    %v3560 = vpop.permute.xlu0 %3559
    %v3561 = vlaneseq
    %v3562 = vshrl.u32 %v3561, 7
    %v3563 = vsub.s32 %v1767, %v3562
    %v3564 = vrot.slane %v3551, %v3563
    %v3565 = vlaneseq
    %v3566 = vshrl.u32 %v3565, 7
    %v3567 = vsub.s32 %v1772, %v3566
    %v3568 = vrot.slane %v3554, %v3567
    %v3569 = vsel %vm1777, %v3568, %v3564
    %v3570 = vlaneseq
    %v3571 = vshrl.u32 %v3570, 7
    %v3572 = vsub.s32 %v1767, %v3571
    %v3573 = vrot.slane %v3557, %v3572
    %v3574 = vlaneseq
    %v3575 = vshrl.u32 %v3574, 7
    %v3576 = vsub.s32 %v1772, %v3575
    %v3577 = vrot.slane %v3560, %v3576
    %v3578 = vsel %vm1777, %v3577, %v3573
    %v3579 = vsel %vm1788, %v3578, %v3569
    %v3581 = vsel %vm1791, %v3579, 0.0
    %3582 = vadd.xlane.f32.xlu0 %v3581
    %v3583 = vpop.xlane.xlu0 %3582
    %v3584 = vrcp.pop %v3583
    %v3586 = vlaneseq
    %v3587 = vshrl.u32 %v3586, 7
    %v3588 = vsub.s32 0, %v3587
    %v3589 = vrot.slane %v3584, %v3588
    %v3590 = vlaneseq
    %v3591 = vshrl.u32 %v3590, 7
    %v3592 = vsub.s32 1, %v3591
    %v3593 = vrot.slane %v3584, %v3592
    %v3596 = vmul.f32 %v3538, %v3589
    %v3597 = vmul.f32 %v3540, %v3589
    %v3598 = vmul.f32 %v3542, %v3593
    %v3599 = vmul.f32 %v3544, %v3593
    %3602 = vset.pattern.permute.xlu0 0
    %3603 = vperm.xlu0 %3602, %v3596
    %v3604 = vpop.permute.xlu0 %3603
    %3605 = vset.pattern.permute.xlu0 0
    %3606 = vperm.xlu0 %3605, %v3597
    %v3607 = vpop.permute.xlu0 %3606
    %v3608 = vlaneseq
    %v3609 = vshrl.u32 %v3608, 7
    %v3610 = vsub.s32 %v1767, %v3609
    %v3611 = vrot.slane %v3604, %v3610
    %v3612 = vlaneseq
    %v3613 = vshrl.u32 %v3612, 7
    %v3614 = vsub.s32 %v1772, %v3613
    %v3615 = vrot.slane %v3607, %v3614
    %v3616 = vsel %vm1777, %v3615, %v3611
    %v3617 = vsel %vm1890, %v3616, 0
    %3619 = vmatprep.subr.mxu0 0.0
    %3620 = vmatpush1.msra.mxu0 %v248
    %3621 = vmatprep.subr.mxu0 0.0
    %3622 = vmatpush1.msra.mxu0 %v1894
    %3623 = vmatprep.subr.mxu0 0.0
    %3624 = vmatpush1.msra.mxu0 0.0
    %3625 = vmatprep.subr.mxu0 0.0
    %3626 = vmatpush1.msra.mxu0 0.0
    %3627 = vmatprep.subr.mxu0 0.0
    %3628 = vmatpush1.msra.mxu0 0.0
    %3629 = vmatprep.subr.mxu0 0.0
    %3630 = vmatpush1.msra.mxu0 0.0
    %3631 = vmatprep.subr.mxu0 0.0
    %3632 = vmatpush1.msra.mxu0 0.0
    %3633 = vmatprep.subr.mxu0 0.0
    %3634 = vmatpush1.msra.mxu0 0.0
    %3635 = vmatprep.subr.mxu0 0.0
    %3636 = vmatpush1.msra.mxu0 0.0
    %3637 = vmatprep.subr.mxu0 0.0
    %3638 = vmatpush1.msra.mxu0 0.0
    %3639 = vmatprep.subr.mxu0 0.0
    %3640 = vmatpush1.msra.mxu0 0.0
    %3641 = vmatprep.subr.mxu0 0.0
    %3642 = vmatpush1.msra.mxu0 0.0
    %3643 = vmatprep.subr.mxu0 0.0
    %3644 = vmatpush1.msra.mxu0 0.0
    %3645 = vmatprep.subr.mxu0 0.0
    %3646 = vmatpush1.msra.mxu0 0.0
    %3647 = vmatprep.subr.mxu0 0.0
    %3648 = vmatpush1.msra.mxu0 0.0
    %3649 = vmatprep.subr.mxu0 0.0
    %3650 = vmatpush1.msra.mxu0 0.0
    %3651 = vmatprep.subr.mxu0 0.0
    %3652 = vmatpush1.msra.mxu0 0.0
    %3653 = vmatprep.subr.mxu0 0.0
    %3654 = vmatpush1.msra.mxu0 0.0
    %3655 = vmatprep.subr.mxu0 0.0
    %3656 = vmatpush1.msra.mxu0 0.0
    %3657 = vmatprep.subr.mxu0 0.0
    %3658 = vmatpush1.msra.mxu0 0.0
    %3659 = vmatprep.subr.mxu0 0.0
    %3660 = vmatpush1.msra.mxu0 0.0
    %3661 = vmatprep.subr.mxu0 0.0
    %3662 = vmatpush1.msra.mxu0 0.0
    %3663 = vmatprep.subr.mxu0 0.0
    %3664 = vmatpush1.msra.mxu0 0.0
    %3665 = vmatprep.subr.mxu0 0.0
    %3666 = vmatpush1.msra.mxu0 0.0
    %3667 = vmatprep.subr.mxu0 0.0
    %3668 = vmatpush1.msra.mxu0 0.0
    %3669 = vmatprep.subr.mxu0 0.0
    %3670 = vmatpush1.msra.mxu0 0.0
    %3671 = vmatprep.subr.mxu0 0.0
    %3672 = vmatpush1.msra.mxu0 0.0
    %3673 = vmatprep.subr.mxu0 0.0
    %3674 = vmatpush1.msra.mxu0 0.0
    %3675 = vmatprep.subr.mxu0 0.0
    %3676 = vmatpush1.msra.mxu0 0.0
    %3677 = vmatprep.subr.mxu0 0.0
    %3678 = vmatpush1.msra.mxu0 0.0
    %3679 = vmatprep.subr.mxu0 0.0
    %3680 = vmatpush1.msra.mxu0 0.0
    %3681 = vmatprep.subr.mxu0 0.0
    %3682 = vmatpush1.msra.mxu0 0.0
    %3683 = vmatprep.mubr.f32.mxu0 0.0
    %3684 = vmatmul.mubr.f32.gmra.mrb[0].mxu0 %v3617
    %v3685 = vpop.f32.mrb[0].mxu0
    %v3686 = vadd.f32 0.0, %v3685
    %v3687 = vpop.f32.mrb[0].mxu0
    %3688 = vdwg.mxu0
    %3691 = vset.pattern.permute.xlu0 0
    %3692 = vperm.xlu0 %3691, %v3598
    %v3693 = vpop.permute.xlu0 %3692
    %3694 = vset.pattern.permute.xlu0 0
    %3695 = vperm.xlu0 %3694, %v3599
    %v3696 = vpop.permute.xlu0 %3695
    %v3697 = vlaneseq
    %v3698 = vshrl.u32 %v3697, 7
    %v3699 = vsub.s32 %v1767, %v3698
    %v3700 = vrot.slane %v3693, %v3699
    %v3701 = vlaneseq
    %v3702 = vshrl.u32 %v3701, 7
    %v3703 = vsub.s32 %v1772, %v3702
    %v3704 = vrot.slane %v3696, %v3703
    %v3705 = vsel %vm1777, %v3704, %v3700
    %v3706 = vsel %vm1890, %v3705, 0
    %3708 = vmatprep.subr.mxu0 0.0
    %3709 = vmatpush1.msra.mxu0 %v250
    %3710 = vmatprep.subr.mxu0 0.0
    %3711 = vmatpush1.msra.mxu0 %v1985
    %3712 = vmatprep.subr.mxu0 0.0
    %3713 = vmatpush1.msra.mxu0 0.0
    %3714 = vmatprep.subr.mxu0 0.0
    %3715 = vmatpush1.msra.mxu0 0.0
    %3716 = vmatprep.subr.mxu0 0.0
    %3717 = vmatpush1.msra.mxu0 0.0
    %3718 = vmatprep.subr.mxu0 0.0
    %3719 = vmatpush1.msra.mxu0 0.0
    %3720 = vmatprep.subr.mxu0 0.0
    %3721 = vmatpush1.msra.mxu0 0.0
    %3722 = vmatprep.subr.mxu0 0.0
    %3723 = vmatpush1.msra.mxu0 0.0
    %3724 = vmatprep.subr.mxu0 0.0
    %3725 = vmatpush1.msra.mxu0 0.0
    %3726 = vmatprep.subr.mxu0 0.0
    %3727 = vmatpush1.msra.mxu0 0.0
    %3728 = vmatprep.subr.mxu0 0.0
    %3729 = vmatpush1.msra.mxu0 0.0
    %3730 = vmatprep.subr.mxu0 0.0
    %3731 = vmatpush1.msra.mxu0 0.0
    %3732 = vmatprep.subr.mxu0 0.0
    %3733 = vmatpush1.msra.mxu0 0.0
    %3734 = vmatprep.subr.mxu0 0.0
    %3735 = vmatpush1.msra.mxu0 0.0
    %3736 = vmatprep.subr.mxu0 0.0
    %3737 = vmatpush1.msra.mxu0 0.0
    %3738 = vmatprep.subr.mxu0 0.0
    %3739 = vmatpush1.msra.mxu0 0.0
    %3740 = vmatprep.subr.mxu0 0.0
    %3741 = vmatpush1.msra.mxu0 0.0
    %3742 = vmatprep.subr.mxu0 0.0
    %3743 = vmatpush1.msra.mxu0 0.0
    %3744 = vmatprep.subr.mxu0 0.0
    %3745 = vmatpush1.msra.mxu0 0.0
    %3746 = vmatprep.subr.mxu0 0.0
    %3747 = vmatpush1.msra.mxu0 0.0
    %3748 = vmatprep.subr.mxu0 0.0
    %3749 = vmatpush1.msra.mxu0 0.0
    %3750 = vmatprep.subr.mxu0 0.0
    %3751 = vmatpush1.msra.mxu0 0.0
    %3752 = vmatprep.subr.mxu0 0.0
    %3753 = vmatpush1.msra.mxu0 0.0
    %3754 = vmatprep.subr.mxu0 0.0
    %3755 = vmatpush1.msra.mxu0 0.0
    %3756 = vmatprep.subr.mxu0 0.0
    %3757 = vmatpush1.msra.mxu0 0.0
    %3758 = vmatprep.subr.mxu0 0.0
    %3759 = vmatpush1.msra.mxu0 0.0
    %3760 = vmatprep.subr.mxu0 0.0
    %3761 = vmatpush1.msra.mxu0 0.0
    %3762 = vmatprep.subr.mxu0 0.0
    %3763 = vmatpush1.msra.mxu0 0.0
    %3764 = vmatprep.subr.mxu0 0.0
    %3765 = vmatpush1.msra.mxu0 0.0
    %3766 = vmatprep.subr.mxu0 0.0
    %3767 = vmatpush1.msra.mxu0 0.0
    %3768 = vmatprep.subr.mxu0 0.0
    %3769 = vmatpush1.msra.mxu0 0.0
    %3770 = vmatprep.subr.mxu0 0.0
    %3771 = vmatpush1.msra.mxu0 0.0
    %3772 = vmatprep.mubr.f32.mxu0 0.0
    %3773 = vmatmul.mubr.f32.gmra.mrb[0].mxu0 %v3706
    %v3774 = vpop.f32.mrb[0].mxu0
    %v3775 = vadd.f32 0.0, %v3774
    %v3776 = vpop.f32.mrb[0].mxu0
    %3777 = vdwg.mxu0
    %3778 = vmatprep.subr.mxu0 0.0
    %3779 = vmatpush1.msra.mxu0 %v1198
    %3780 = vmatprep.subr.mxu0 0.0
    %3781 = vmatpush1.msra.mxu0 %v1199
    %3782 = vmatprep.subr.mxu0 0.0
    %3783 = vmatpush1.msra.mxu0 %v1200
    %3784 = vmatprep.subr.mxu0 0.0
    %3785 = vmatpush1.msra.mxu0 %v1201
    %3786 = vmatprep.subr.mxu0 0.0
    %3787 = vmatpush1.msra.mxu0 0.0
    %3788 = vmatprep.subr.mxu0 0.0
    %3789 = vmatpush1.msra.mxu0 0.0
    %3790 = vmatprep.subr.mxu0 0.0
    %3791 = vmatpush1.msra.mxu0 0.0
    %3792 = vmatprep.subr.mxu0 0.0
    %3793 = vmatpush1.msra.mxu0 0.0
    %3794 = vmatprep.subr.mxu0 0.0
    %3795 = vmatpush1.msra.mxu0 0.0
    %3796 = vmatprep.subr.mxu0 0.0
    %3797 = vmatpush1.msra.mxu0 0.0
    %3798 = vmatprep.subr.mxu0 0.0
    %3799 = vmatpush1.msra.mxu0 0.0
    %3800 = vmatprep.subr.mxu0 0.0
    %3801 = vmatpush1.msra.mxu0 0.0
    %3802 = vmatprep.subr.mxu0 0.0
    %3803 = vmatpush1.msra.mxu0 0.0
    %3804 = vmatprep.subr.mxu0 0.0
    %3805 = vmatpush1.msra.mxu0 0.0
    %3806 = vmatprep.subr.mxu0 0.0
    %3807 = vmatpush1.msra.mxu0 0.0
    %3808 = vmatprep.subr.mxu0 0.0
    %3809 = vmatpush1.msra.mxu0 0.0
    %3810 = vmatprep.subr.mxu0 0.0
    %3811 = vmatpush1.msra.mxu0 0.0
    %3812 = vmatprep.subr.mxu0 0.0
    %3813 = vmatpush1.msra.mxu0 0.0
    %3814 = vmatprep.subr.mxu0 0.0
    %3815 = vmatpush1.msra.mxu0 0.0
    %3816 = vmatprep.subr.mxu0 0.0
    %3817 = vmatpush1.msra.mxu0 0.0
    %3818 = vmatprep.subr.mxu0 0.0
    %3819 = vmatpush1.msra.mxu0 0.0
    %3820 = vmatprep.subr.mxu0 0.0
    %3821 = vmatpush1.msra.mxu0 0.0
    %3822 = vmatprep.subr.mxu0 0.0
    %3823 = vmatpush1.msra.mxu0 0.0
    %3824 = vmatprep.subr.mxu0 0.0
    %3825 = vmatpush1.msra.mxu0 0.0
    %3826 = vmatprep.subr.mxu0 0.0
    %3827 = vmatpush1.msra.mxu0 0.0
    %3828 = vmatprep.subr.mxu0 0.0
    %3829 = vmatpush1.msra.mxu0 0.0
    %3830 = vmatprep.subr.mxu0 0.0
    %3831 = vmatpush1.msra.mxu0 0.0
    %3832 = vmatprep.subr.mxu0 0.0
    %3833 = vmatpush1.msra.mxu0 0.0
    %3834 = vmatprep.subr.mxu0 0.0
    %3835 = vmatpush1.msra.mxu0 0.0
    %3836 = vmatprep.subr.mxu0 0.0
    %3837 = vmatpush1.msra.mxu0 0.0
    %3838 = vmatprep.subr.mxu0 0.0
    %3839 = vmatpush1.msra.mxu0 0.0
    %3840 = vmatprep.subr.mxu0 0.0
    %3841 = vmatpush1.msra.mxu0 0.0
    %3842 = vmatprep.mubr.f32.mxu0 0.0
    %3843 = vmatmul.mubr.f32.gmra.mrb[0].mxu0 %v3350
    %v3844 = vpop.f32.mrb[0].mxu0
    %v3845 = vadd.f32 0.0, %v3844
    %v3846 = vpop.f32.mrb[0].mxu0
    %3847 = vdwg.mxu0
    %v3850 = vrot.slane %v3775, 7
    %v3851 = vsel %vm1788, %v3850, %v3686
    %v3852 = vsel %vm658, %v3851, 0
    %3854 = vmatprep.subr.mxu0 0.0
    %3855 = vmatpush1.msra.mxu0 %v1194
    %3856 = vmatprep.subr.mxu0 0.0
    %3857 = vmatpush1.msra.mxu0 %v1195
    %3858 = vmatprep.subr.mxu0 0.0
    %3859 = vmatpush1.msra.mxu0 %v1196
    %3860 = vmatprep.subr.mxu0 0.0
    %3861 = vmatpush1.msra.mxu0 %v1197
    %3862 = vmatprep.subr.mxu0 0.0
    %3863 = vmatpush1.msra.mxu0 0.0
    %3864 = vmatprep.subr.mxu0 0.0
    %3865 = vmatpush1.msra.mxu0 0.0
    %3866 = vmatprep.subr.mxu0 0.0
    %3867 = vmatpush1.msra.mxu0 0.0
    %3868 = vmatprep.subr.mxu0 0.0
    %3869 = vmatpush1.msra.mxu0 0.0
    %3870 = vmatprep.subr.mxu0 0.0
    %3871 = vmatpush1.msra.mxu0 0.0
    %3872 = vmatprep.subr.mxu0 0.0
    %3873 = vmatpush1.msra.mxu0 0.0
    %3874 = vmatprep.subr.mxu0 0.0
    %3875 = vmatpush1.msra.mxu0 0.0
    %3876 = vmatprep.subr.mxu0 0.0
    %3877 = vmatpush1.msra.mxu0 0.0
    %3878 = vmatprep.subr.mxu0 0.0
    %3879 = vmatpush1.msra.mxu0 0.0
    %3880 = vmatprep.subr.mxu0 0.0
    %3881 = vmatpush1.msra.mxu0 0.0
    %3882 = vmatprep.subr.mxu0 0.0
    %3883 = vmatpush1.msra.mxu0 0.0
    %3884 = vmatprep.subr.mxu0 0.0
    %3885 = vmatpush1.msra.mxu0 0.0
    %3886 = vmatprep.subr.mxu0 0.0
    %3887 = vmatpush1.msra.mxu0 0.0
    %3888 = vmatprep.subr.mxu0 0.0
    %3889 = vmatpush1.msra.mxu0 0.0
    %3890 = vmatprep.subr.mxu0 0.0
    %3891 = vmatpush1.msra.mxu0 0.0
    %3892 = vmatprep.subr.mxu0 0.0
    %3893 = vmatpush1.msra.mxu0 0.0
    %3894 = vmatprep.subr.mxu0 0.0
    %3895 = vmatpush1.msra.mxu0 0.0
    %3896 = vmatprep.subr.mxu0 0.0
    %3897 = vmatpush1.msra.mxu0 0.0
    %3898 = vmatprep.subr.mxu0 0.0
    %3899 = vmatpush1.msra.mxu0 0.0
    %3900 = vmatprep.subr.mxu0 0.0
    %3901 = vmatpush1.msra.mxu0 0.0
    %3902 = vmatprep.subr.mxu0 0.0
    %3903 = vmatpush1.msra.mxu0 0.0
    %3904 = vmatprep.subr.mxu0 0.0
    %3905 = vmatpush1.msra.mxu0 0.0
    %3906 = vmatprep.subr.mxu0 0.0
    %3907 = vmatpush1.msra.mxu0 0.0
    %3908 = vmatprep.subr.mxu0 0.0
    %3909 = vmatpush1.msra.mxu0 0.0
    %3910 = vmatprep.subr.mxu0 0.0
    %3911 = vmatpush1.msra.mxu0 0.0
    %3912 = vmatprep.subr.mxu0 0.0
    %3913 = vmatpush1.msra.mxu0 0.0
    %3914 = vmatprep.subr.mxu0 0.0
    %3915 = vmatpush1.msra.mxu0 0.0
    %3916 = vmatprep.subr.mxu0 0.0
    %3917 = vmatpush1.msra.mxu0 0.0
    %3918 = vmatprep.mubr.f32.mxu0 0.0
    %3919 = vmatmul.mubr.f32.gmra.mrb[0].mxu0 %v3852
    %v3920 = vpop.f32.mrb[0].mxu0
    %v3921 = vadd.f32 %v3845, %v3920
    %v3922 = vpop.f32.mrb[0].mxu0
    %3923 = vdwg.mxu0
    %3924 = vmatprep.subr.mxu0 0.0
    %3925 = vmatpush1.msra.mxu0 %v1202
    %3926 = vmatprep.subr.mxu0 0.0
    %3927 = vmatpush1.msra.mxu0 %v1203
    %3928 = vmatprep.subr.mxu0 0.0
    %3929 = vmatpush1.msra.mxu0 %v1204
    %3930 = vmatprep.subr.mxu0 0.0
    %3931 = vmatpush1.msra.mxu0 %v1205
    %3932 = vmatprep.subr.mxu0 0.0
    %3933 = vmatpush1.msra.mxu0 0.0
    %3934 = vmatprep.subr.mxu0 0.0
    %3935 = vmatpush1.msra.mxu0 0.0
    %3936 = vmatprep.subr.mxu0 0.0
    %3937 = vmatpush1.msra.mxu0 0.0
    %3938 = vmatprep.subr.mxu0 0.0
    %3939 = vmatpush1.msra.mxu0 0.0
    %3940 = vmatprep.subr.mxu0 0.0
    %3941 = vmatpush1.msra.mxu0 0.0
    %3942 = vmatprep.subr.mxu0 0.0
    %3943 = vmatpush1.msra.mxu0 0.0
    %3944 = vmatprep.subr.mxu0 0.0
    %3945 = vmatpush1.msra.mxu0 0.0
    %3946 = vmatprep.subr.mxu0 0.0
    %3947 = vmatpush1.msra.mxu0 0.0
    %3948 = vmatprep.subr.mxu0 0.0
    %3949 = vmatpush1.msra.mxu0 0.0
    %3950 = vmatprep.subr.mxu0 0.0
    %3951 = vmatpush1.msra.mxu0 0.0
    %3952 = vmatprep.subr.mxu0 0.0
    %3953 = vmatpush1.msra.mxu0 0.0
    %3954 = vmatprep.subr.mxu0 0.0
    %3955 = vmatpush1.msra.mxu0 0.0
    %3956 = vmatprep.subr.mxu0 0.0
    %3957 = vmatpush1.msra.mxu0 0.0
    %3958 = vmatprep.subr.mxu0 0.0
    %3959 = vmatpush1.msra.mxu0 0.0
    %3960 = vmatprep.subr.mxu0 0.0
    %3961 = vmatpush1.msra.mxu0 0.0
    %3962 = vmatprep.subr.mxu0 0.0
    %3963 = vmatpush1.msra.mxu0 0.0
    %3964 = vmatprep.subr.mxu0 0.0
    %3965 = vmatpush1.msra.mxu0 0.0
    %3966 = vmatprep.subr.mxu0 0.0
    %3967 = vmatpush1.msra.mxu0 0.0
    %3968 = vmatprep.subr.mxu0 0.0
    %3969 = vmatpush1.msra.mxu0 0.0
    %3970 = vmatprep.subr.mxu0 0.0
    %3971 = vmatpush1.msra.mxu0 0.0
    %3972 = vmatprep.subr.mxu0 0.0
    %3973 = vmatpush1.msra.mxu0 0.0
    %3974 = vmatprep.subr.mxu0 0.0
    %3975 = vmatpush1.msra.mxu0 0.0
    %3976 = vmatprep.subr.mxu0 0.0
    %3977 = vmatpush1.msra.mxu0 0.0
    %3978 = vmatprep.subr.mxu0 0.0
    %3979 = vmatpush1.msra.mxu0 0.0
    %3980 = vmatprep.subr.mxu0 0.0
    %3981 = vmatpush1.msra.mxu0 0.0
    %3982 = vmatprep.subr.mxu0 0.0
    %3983 = vmatpush1.msra.mxu0 0.0
    %3984 = vmatprep.subr.mxu0 0.0
    %3985 = vmatpush1.msra.mxu0 0.0
    %3986 = vmatprep.subr.mxu0 0.0
    %3987 = vmatpush1.msra.mxu0 0.0
    %3988 = vmatprep.mubr.f32.mxu0 0.0
    %3989 = vmatmul.mubr.f32.gmra.mrb[0].mxu0 %v3169
    %v3990 = vpop.f32.mrb[0].mxu0
    %v3991 = vadd.f32 0.0, %v3990
    %v3992 = vpop.f32.mrb[0].mxu0
    %3993 = vdwg.mxu0
    %v3994 = vadd.f32 %v3921, %v3991
    %v3995 = vadd.f32 %v3994, %v2278
    %v3996 = vxor.u32 %v3995, 2147483648
    %v3997 = vmul.f32 %v3996, 1.442695
    %v3998 = vpow.pop %v3997
    %v3999 = vadd.f32 %v3998, 1.0
    %v4000 = vrcp.pop %v3999
    %v4001 = vmul.f32 1.0, %v4000
    %v4002 = vtanh.pop %v3995
    %v4003 = vmul.f32 %v4001, %v3156
    %4005 = vrot.lane.b32.xlu0 %v4002, 64
    %v4006 = vpop.permute.xlu0 %4005
    %v4008 = vmul.f32 %v4001, %v4006
    %4010 = vrot.lane.b32.xlu0 %v4008, 32
    %v4011 = vpop.permute.xlu0 %4010
    %v4013 = vadd.f32 %v4003, %v4011
    %v4014 = vtanh.pop %v4013
    %4016 = vrot.lane.b32.xlu0 %v4014, 64
    %v4017 = vpop.permute.xlu0 %4016
    %v4019 = vmul.f32 %v4001, %v4017
    %v4020 = vrot.slane %v1031, 2
    %v4022 = vadd.f32 %v1161, %v4020
    %4024 = vrot.lane.b32.xlu0 %v4019, 32
    %v4025 = vpop.permute.xlu0 %4024
    %v4026 = vsel %vm658, %v4025, 0
    %4028 = vmatprep.subr.mxu0 0.0
    %4029 = vmatpush1.msra.mxu0 %v1186
    %4030 = vmatprep.subr.mxu0 0.0
    %4031 = vmatpush1.msra.mxu0 %v1187
    %4032 = vmatprep.subr.mxu0 0.0
    %4033 = vmatpush1.msra.mxu0 %v1188
    %4034 = vmatprep.subr.mxu0 0.0
    %4035 = vmatpush1.msra.mxu0 %v1189
    %4036 = vmatprep.subr.mxu0 0.0
    %4037 = vmatpush1.msra.mxu0 0.0
    %4038 = vmatprep.subr.mxu0 0.0
    %4039 = vmatpush1.msra.mxu0 0.0
    %4040 = vmatprep.subr.mxu0 0.0
    %4041 = vmatpush1.msra.mxu0 0.0
    %4042 = vmatprep.subr.mxu0 0.0
    %4043 = vmatpush1.msra.mxu0 0.0
    %4044 = vmatprep.subr.mxu0 0.0
    %4045 = vmatpush1.msra.mxu0 0.0
    %4046 = vmatprep.subr.mxu0 0.0
    %4047 = vmatpush1.msra.mxu0 0.0
    %4048 = vmatprep.subr.mxu0 0.0
    %4049 = vmatpush1.msra.mxu0 0.0
    %4050 = vmatprep.subr.mxu0 0.0
    %4051 = vmatpush1.msra.mxu0 0.0
    %4052 = vmatprep.subr.mxu0 0.0
    %4053 = vmatpush1.msra.mxu0 0.0
    %4054 = vmatprep.subr.mxu0 0.0
    %4055 = vmatpush1.msra.mxu0 0.0
    %4056 = vmatprep.subr.mxu0 0.0
    %4057 = vmatpush1.msra.mxu0 0.0
    %4058 = vmatprep.subr.mxu0 0.0
    %4059 = vmatpush1.msra.mxu0 0.0
    %4060 = vmatprep.subr.mxu0 0.0
    %4061 = vmatpush1.msra.mxu0 0.0
    %4062 = vmatprep.subr.mxu0 0.0
    %4063 = vmatpush1.msra.mxu0 0.0
    %4064 = vmatprep.subr.mxu0 0.0
    %4065 = vmatpush1.msra.mxu0 0.0
    %4066 = vmatprep.subr.mxu0 0.0
    %4067 = vmatpush1.msra.mxu0 0.0
    %4068 = vmatprep.subr.mxu0 0.0
    %4069 = vmatpush1.msra.mxu0 0.0
    %4070 = vmatprep.subr.mxu0 0.0
    %4071 = vmatpush1.msra.mxu0 0.0
    %4072 = vmatprep.subr.mxu0 0.0
    %4073 = vmatpush1.msra.mxu0 0.0
    %4074 = vmatprep.subr.mxu0 0.0
    %4075 = vmatpush1.msra.mxu0 0.0
    %4076 = vmatprep.subr.mxu0 0.0
    %4077 = vmatpush1.msra.mxu0 0.0
    %4078 = vmatprep.subr.mxu0 0.0
    %4079 = vmatpush1.msra.mxu0 0.0
    %4080 = vmatprep.subr.mxu0 0.0
    %4081 = vmatpush1.msra.mxu0 0.0
    %4082 = vmatprep.subr.mxu0 0.0
    %4083 = vmatpush1.msra.mxu0 0.0
    %4084 = vmatprep.subr.mxu0 0.0
    %4085 = vmatpush1.msra.mxu0 0.0
    %4086 = vmatprep.subr.mxu0 0.0
    %4087 = vmatpush1.msra.mxu0 0.0
    %4088 = vmatprep.subr.mxu0 0.0
    %4089 = vmatpush1.msra.mxu0 0.0
    %4090 = vmatprep.subr.mxu0 0.0
    %4091 = vmatpush1.msra.mxu0 0.0
    %4092 = vmatprep.mubr.f32.mxu0 0.0
    %4093 = vmatmul.mubr.f32.gmra.mrb[0].mxu0 %v4026
    %v4094 = vpop.f32.mrb[0].mxu0
    %v4095 = vadd.f32 0.0, %v4094
    %v4096 = vpop.f32.mrb[0].mxu0
    %4097 = vdwg.mxu0
    %v4099 = vrot.slane %v4095, 2
    %v4101 = vadd.f32 %v4022, %v4099
    %4102 = vmatprep.subr.mxu0 0.0
    %4103 = vmatpush1.msra.mxu0 %v1190
    %4104 = vmatprep.subr.mxu0 0.0
    %4105 = vmatpush1.msra.mxu0 %v1191
    %4106 = vmatprep.subr.mxu0 0.0
    %4107 = vmatpush1.msra.mxu0 %v1192
    %4108 = vmatprep.subr.mxu0 0.0
    %4109 = vmatpush1.msra.mxu0 %v1193
    %4110 = vmatprep.subr.mxu0 0.0
    %4111 = vmatpush1.msra.mxu0 0.0
    %4112 = vmatprep.subr.mxu0 0.0
    %4113 = vmatpush1.msra.mxu0 0.0
    %4114 = vmatprep.subr.mxu0 0.0
    %4115 = vmatpush1.msra.mxu0 0.0
    %4116 = vmatprep.subr.mxu0 0.0
    %4117 = vmatpush1.msra.mxu0 0.0
    %4118 = vmatprep.subr.mxu0 0.0
    %4119 = vmatpush1.msra.mxu0 0.0
    %4120 = vmatprep.subr.mxu0 0.0
    %4121 = vmatpush1.msra.mxu0 0.0
    %4122 = vmatprep.subr.mxu0 0.0
    %4123 = vmatpush1.msra.mxu0 0.0
    %4124 = vmatprep.subr.mxu0 0.0
    %4125 = vmatpush1.msra.mxu0 0.0
    %4126 = vmatprep.subr.mxu0 0.0
    %4127 = vmatpush1.msra.mxu0 0.0
    %4128 = vmatprep.subr.mxu0 0.0
    %4129 = vmatpush1.msra.mxu0 0.0
    %4130 = vmatprep.subr.mxu0 0.0
    %4131 = vmatpush1.msra.mxu0 0.0
    %4132 = vmatprep.subr.mxu0 0.0
    %4133 = vmatpush1.msra.mxu0 0.0
    %4134 = vmatprep.subr.mxu0 0.0
    %4135 = vmatpush1.msra.mxu0 0.0
    %4136 = vmatprep.subr.mxu0 0.0
    %4137 = vmatpush1.msra.mxu0 0.0
    %4138 = vmatprep.subr.mxu0 0.0
    %4139 = vmatpush1.msra.mxu0 0.0
    %4140 = vmatprep.subr.mxu0 0.0
    %4141 = vmatpush1.msra.mxu0 0.0
    %4142 = vmatprep.subr.mxu0 0.0
    %4143 = vmatpush1.msra.mxu0 0.0
    %4144 = vmatprep.subr.mxu0 0.0
    %4145 = vmatpush1.msra.mxu0 0.0
    %4146 = vmatprep.subr.mxu0 0.0
    %4147 = vmatpush1.msra.mxu0 0.0
    %4148 = vmatprep.subr.mxu0 0.0
    %4149 = vmatpush1.msra.mxu0 0.0
    %4150 = vmatprep.subr.mxu0 0.0
    %4151 = vmatpush1.msra.mxu0 0.0
    %4152 = vmatprep.subr.mxu0 0.0
    %4153 = vmatpush1.msra.mxu0 0.0
    %4154 = vmatprep.subr.mxu0 0.0
    %4155 = vmatpush1.msra.mxu0 0.0
    %4156 = vmatprep.subr.mxu0 0.0
    %4157 = vmatpush1.msra.mxu0 0.0
    %4158 = vmatprep.subr.mxu0 0.0
    %4159 = vmatpush1.msra.mxu0 0.0
    %4160 = vmatprep.subr.mxu0 0.0
    %4161 = vmatpush1.msra.mxu0 0.0
    %4162 = vmatprep.subr.mxu0 0.0
    %4163 = vmatpush1.msra.mxu0 0.0
    %4164 = vmatprep.subr.mxu0 0.0
    %4165 = vmatpush1.msra.mxu0 0.0
    %4166 = vmatprep.mubr.f32.mxu0 0.0
    %4167 = vmatmul.mubr.f32.gmra.mrb[0].mxu0 %v3350
    %v4168 = vpop.f32.mrb[0].mxu0
    %v4169 = vadd.f32 0.0, %v4168
    %v4170 = vpop.f32.mrb[0].mxu0
    %4171 = vdwg.mxu0
    %v4173 = vrot.slane %v4169, 2
    %v4175 = vadd.f32 %v4101, %v4173
    %v4176 = vxor.u32 %v4175, 2147483648
    %v4177 = vmul.f32 %v4176, 1.442695
    %v4178 = vpow.pop %v4177
    %v4179 = vadd.f32 %v4178, 1.0
    %v4180 = vrcp.pop %v4179
    %v4181 = vmul.f32 1.0, %v4180
    %v4182 = vtanh.pop %v4175
    %v4184 = vrot.slane %v3339, 6
    %v4186 = vmul.f32 %v4181, %v4184
    %4188 = vrot.lane.b32.xlu0 %v4182, 64
    %v4189 = vpop.permute.xlu0 %4188
    %v4191 = vmul.f32 %v4181, %v4189
    %4193 = vrot.lane.b32.xlu0 %v4191, 32
    %v4194 = vpop.permute.xlu0 %4193
    %v4196 = vadd.f32 %v4186, %v4194
    %v4197 = vtanh.pop %v4196
    %4199 = vrot.lane.b32.xlu0 %v4197, 64
    %v4200 = vpop.permute.xlu0 %4199
    %v4202 = vmul.f32 %v4181, %v4200
    %v4204 = vrot.slane %v4202, 6
    %4205 = vrot.lane.b32.xlu0 %v4204, 32
    %v4206 = vpop.permute.xlu0 %4205
    %v4207 = vsel %vm658, %v4206, 0
    %4209 = vmatprep.subr.mxu0 0.0
    %4210 = vmatpush1.msra.mxu0 %v1207
    %4211 = vmatprep.subr.mxu0 0.0
    %4212 = vmatpush1.msra.mxu0 %v1208
    %4213 = vmatprep.subr.mxu0 0.0
    %4214 = vmatpush1.msra.mxu0 %v1209
    %4215 = vmatprep.subr.mxu0 0.0
    %4216 = vmatpush1.msra.mxu0 %v1210
    %4217 = vmatprep.subr.mxu0 0.0
    %4218 = vmatpush1.msra.mxu0 0.0
    %4219 = vmatprep.subr.mxu0 0.0
    %4220 = vmatpush1.msra.mxu0 0.0
    %4221 = vmatprep.subr.mxu0 0.0
    %4222 = vmatpush1.msra.mxu0 0.0
    %4223 = vmatprep.subr.mxu0 0.0
    %4224 = vmatpush1.msra.mxu0 0.0
    %4225 = vmatprep.subr.mxu0 0.0
    %4226 = vmatpush1.msra.mxu0 0.0
    %4227 = vmatprep.subr.mxu0 0.0
    %4228 = vmatpush1.msra.mxu0 0.0
    %4229 = vmatprep.subr.mxu0 0.0
    %4230 = vmatpush1.msra.mxu0 0.0
    %4231 = vmatprep.subr.mxu0 0.0
    %4232 = vmatpush1.msra.mxu0 0.0
    %4233 = vmatprep.subr.mxu0 0.0
    %4234 = vmatpush1.msra.mxu0 0.0
    %4235 = vmatprep.subr.mxu0 0.0
    %4236 = vmatpush1.msra.mxu0 0.0
    %4237 = vmatprep.subr.mxu0 0.0
    %4238 = vmatpush1.msra.mxu0 0.0
    %4239 = vmatprep.subr.mxu0 0.0
    %4240 = vmatpush1.msra.mxu0 0.0
    %4241 = vmatprep.subr.mxu0 0.0
    %4242 = vmatpush1.msra.mxu0 0.0
    %4243 = vmatprep.subr.mxu0 0.0
    %4244 = vmatpush1.msra.mxu0 0.0
    %4245 = vmatprep.subr.mxu0 0.0
    %4246 = vmatpush1.msra.mxu0 0.0
    %4247 = vmatprep.subr.mxu0 0.0
    %4248 = vmatpush1.msra.mxu0 0.0
    %4249 = vmatprep.subr.mxu0 0.0
    %4250 = vmatpush1.msra.mxu0 0.0
    %4251 = vmatprep.subr.mxu0 0.0
    %4252 = vmatpush1.msra.mxu0 0.0
    %4253 = vmatprep.subr.mxu0 0.0
    %4254 = vmatpush1.msra.mxu0 0.0
    %4255 = vmatprep.subr.mxu0 0.0
    %4256 = vmatpush1.msra.mxu0 0.0
    %4257 = vmatprep.subr.mxu0 0.0
    %4258 = vmatpush1.msra.mxu0 0.0
    %4259 = vmatprep.subr.mxu0 0.0
    %4260 = vmatpush1.msra.mxu0 0.0
    %4261 = vmatprep.subr.mxu0 0.0
    %4262 = vmatpush1.msra.mxu0 0.0
    %4263 = vmatprep.subr.mxu0 0.0
    %4264 = vmatpush1.msra.mxu0 0.0
    %4265 = vmatprep.subr.mxu0 0.0
    %4266 = vmatpush1.msra.mxu0 0.0
    %4267 = vmatprep.subr.mxu0 0.0
    %4268 = vmatpush1.msra.mxu0 0.0
    %4269 = vmatprep.subr.mxu0 0.0
    %4270 = vmatpush1.msra.mxu0 0.0
    %4271 = vmatprep.subr.mxu0 0.0
    %4272 = vmatpush1.msra.mxu0 0.0
    %4273 = vmatprep.mubr.f32.mxu0 0.0
    %4274 = vmatmul.mubr.f32.gmra.mrb[0].mxu0 %v4207
    %v4275 = vpop.f32.mrb[0].mxu0
    %v4276 = vadd.f32 %v1386, %v4275
    %v4277 = vpop.f32.mrb[0].mxu0
    %4278 = vdwg.mxu0
    %v4281 = vunpack.c.l.s4 1966171168
    %v4282 = vunpack.c.0.s8 %v4281
    %v4283 = vlaneseq
    %v4284 = vshrl.u32 %v4283, 7
    %v4285 = vsub.s32 %v4282, %v4284
    %v4286 = vrot.slane %v4276, %v4285
    %v4287 = vcombine.high %v4286, %v4286
    %v4289 = vunpack.c.l.s4 1966171168
    %v4290 = vunpack.c.0.s8 %v4289
    %v4291 = vlaneseq
    %v4292 = vshrl.u32 %v4291, 7
    %v4293 = vsub.s32 %v4290, %v4292
    %v4294 = vrot.slane %v4286, %v4293
    %v4296 = vunpack.c.l.s4 1966171168
    %v4297 = vunpack.c.0.s8 %v4296
    %v4298 = vlaneseq
    %v4299 = vshrl.u32 %v4298, 7
    %v4300 = vsub.s32 %v4297, %v4299
    %v4301 = vrot.slane %v4287, %v4300
    %v4302 = vlaneseq
    %v4303 = vshrl.u32 %v4302, 7
    %v4304 = vsub.s32 0, %v4303
    %v4305 = vrot.slane %v4294, %v4304
    %v4306 = vlaneseq
    %v4307 = vshrl.u32 %v4306, 7
    %v4308 = vsub.s32 0, %v4307
    %v4309 = vrot.slane %v4301, %v4308
    %v4312 = vadd.f32 %v4305, %v1544
    %v4313 = vadd.f32 %v4305, %v1592
    %v4314 = vadd.f32 %v4309, %v1641
    %v4315 = vadd.f32 %v4309, %v1689
    %v4316 = vtanh.pop %v4312
    %v4317 = vtanh.pop %v4313
    %v4318 = vtanh.pop %v4314
    %v4319 = vtanh.pop %v4315
    %v4320 = vmul.f32 %v4316, %v1179
    %v4321 = vmul.f32 %v4317, %v1179
    %v4322 = vmul.f32 %v4318, %v1179
    %v4323 = vmul.f32 %v4319, %v1179
    %v4324 = vsel %vm658, %v4320, 0.0
    %4325 = vadd.xlane.f32.xlu0 %v4324
    %v4326 = vpop.xlane.xlu0 %4325
    %v4327 = vsel %vm1709, %v4321, 0.0
    %4328 = vadd.xlane.f32.xlu0 %v4327
    %v4329 = vpop.xlane.xlu0 %4328
    %v4330 = vsel %vm658, %v4322, 0.0
    %4331 = vadd.xlane.f32.xlu0 %v4330
    %v4332 = vpop.xlane.xlu0 %4331
    %v4333 = vsel %vm1709, %v4323, 0.0
    %4334 = vadd.xlane.f32.xlu0 %v4333
    %v4335 = vpop.xlane.xlu0 %4334
    %v4336 = vadd.f32 %v4326, %v1726
    %v4337 = vadd.f32 %v4329, %v1730
    %v4338 = vadd.f32 %v4332, %v1737
    %v4339 = vadd.f32 %v4335, %v1741
    %4344 = vset.pattern.permute.xlu0 0
    %4345 = vperm.xlu0 %4344, %v4336
    %v4346 = vpop.permute.xlu0 %4345
    %4347 = vset.pattern.permute.xlu0 0
    %4348 = vperm.xlu0 %4347, %v4337
    %v4349 = vpop.permute.xlu0 %4348
    %4350 = vset.pattern.permute.xlu0 0
    %4351 = vperm.xlu0 %4350, %v4338
    %v4352 = vpop.permute.xlu0 %4351
    %4353 = vset.pattern.permute.xlu0 0
    %4354 = vperm.xlu0 %4353, %v4339
    %v4355 = vpop.permute.xlu0 %4354
    %v4356 = vlaneseq
    %v4357 = vshrl.u32 %v4356, 7
    %v4358 = vsub.s32 %v1767, %v4357
    %v4359 = vrot.slane %v4346, %v4358
    %v4360 = vlaneseq
    %v4361 = vshrl.u32 %v4360, 7
    %v4362 = vsub.s32 %v1772, %v4361
    %v4363 = vrot.slane %v4349, %v4362
    %v4364 = vsel %vm1777, %v4363, %v4359
    %v4365 = vlaneseq
    %v4366 = vshrl.u32 %v4365, 7
    %v4367 = vsub.s32 %v1767, %v4366
    %v4368 = vrot.slane %v4352, %v4367
    %v4369 = vlaneseq
    %v4370 = vshrl.u32 %v4369, 7
    %v4371 = vsub.s32 %v1772, %v4370
    %v4372 = vrot.slane %v4355, %v4371
    %v4373 = vsel %vm1777, %v4372, %v4368
    %v4374 = vsel %vm1788, %v4373, %v4364
    %v4376 = vsel %vm1791, %v4374, -inf
    %4377 = vmax.xlane.f32.xlu0 %v4376
    %v4378 = vpop.xlane.xlu0 %4377
    %v4380 = vlaneseq
    %v4381 = vshrl.u32 %v4380, 7
    %v4382 = vsub.s32 0, %v4381
    %v4383 = vrot.slane %v4378, %v4382
    %v4384 = vlaneseq
    %v4385 = vshrl.u32 %v4384, 7
    %v4386 = vsub.s32 1, %v4385
    %v4387 = vrot.slane %v4378, %v4386
    %v4390 = vsub.f32 %v4336, %v4383
    %v4391 = vsub.f32 %v4337, %v4383
    %v4392 = vsub.f32 %v4338, %v4387
    %v4393 = vsub.f32 %v4339, %v4387
    %v4394 = vmul.f32 %v4390, 1.442695
    %v4395 = vpow.pop %v4394
    %v4396 = vmul.f32 %v4391, 1.442695
    %v4397 = vpow.pop %v4396
    %v4398 = vmul.f32 %v4392, 1.442695
    %v4399 = vpow.pop %v4398
    %v4400 = vmul.f32 %v4393, 1.442695
    %v4401 = vpow.pop %v4400
    %4406 = vset.pattern.permute.xlu0 0
    %4407 = vperm.xlu0 %4406, %v4395
    %v4408 = vpop.permute.xlu0 %4407
    %4409 = vset.pattern.permute.xlu0 0
    %4410 = vperm.xlu0 %4409, %v4397
    %v4411 = vpop.permute.xlu0 %4410
    %4412 = vset.pattern.permute.xlu0 0
    %4413 = vperm.xlu0 %4412, %v4399
    %v4414 = vpop.permute.xlu0 %4413
    %4415 = vset.pattern.permute.xlu0 0
    %4416 = vperm.xlu0 %4415, %v4401
    %v4417 = vpop.permute.xlu0 %4416
    %v4418 = vlaneseq
    %v4419 = vshrl.u32 %v4418, 7
    %v4420 = vsub.s32 %v1767, %v4419
    %v4421 = vrot.slane %v4408, %v4420
    %v4422 = vlaneseq
    %v4423 = vshrl.u32 %v4422, 7
    %v4424 = vsub.s32 %v1772, %v4423
    %v4425 = vrot.slane %v4411, %v4424
    %v4426 = vsel %vm1777, %v4425, %v4421
    %v4427 = vlaneseq
    %v4428 = vshrl.u32 %v4427, 7
    %v4429 = vsub.s32 %v1767, %v4428
    %v4430 = vrot.slane %v4414, %v4429
    %v4431 = vlaneseq
    %v4432 = vshrl.u32 %v4431, 7
    %v4433 = vsub.s32 %v1772, %v4432
    %v4434 = vrot.slane %v4417, %v4433
    %v4435 = vsel %vm1777, %v4434, %v4430
    %v4436 = vsel %vm1788, %v4435, %v4426
    %v4438 = vsel %vm1791, %v4436, 0.0
    %4439 = vadd.xlane.f32.xlu0 %v4438
    %v4440 = vpop.xlane.xlu0 %4439
    %v4441 = vrcp.pop %v4440
    %v4443 = vlaneseq
    %v4444 = vshrl.u32 %v4443, 7
    %v4445 = vsub.s32 0, %v4444
    %v4446 = vrot.slane %v4441, %v4445
    %v4447 = vlaneseq
    %v4448 = vshrl.u32 %v4447, 7
    %v4449 = vsub.s32 1, %v4448
    %v4450 = vrot.slane %v4441, %v4449
    %v4453 = vmul.f32 %v4395, %v4446
    %v4454 = vmul.f32 %v4397, %v4446
    %v4455 = vmul.f32 %v4399, %v4450
    %v4456 = vmul.f32 %v4401, %v4450
    %4459 = vset.pattern.permute.xlu0 0
    %4460 = vperm.xlu0 %4459, %v4453
    %v4461 = vpop.permute.xlu0 %4460
    %4462 = vset.pattern.permute.xlu0 0
    %4463 = vperm.xlu0 %4462, %v4454
    %v4464 = vpop.permute.xlu0 %4463
    %v4465 = vlaneseq
    %v4466 = vshrl.u32 %v4465, 7
    %v4467 = vsub.s32 %v1767, %v4466
    %v4468 = vrot.slane %v4461, %v4467
    %v4469 = vlaneseq
    %v4470 = vshrl.u32 %v4469, 7
    %v4471 = vsub.s32 %v1772, %v4470
    %v4472 = vrot.slane %v4464, %v4471
    %v4473 = vsel %vm1777, %v4472, %v4468
    %v4474 = vsel %vm1890, %v4473, 0
    %4476 = vmatprep.subr.mxu0 0.0
    %4477 = vmatpush1.msra.mxu0 %v248
    %4478 = vmatprep.subr.mxu0 0.0
    %4479 = vmatpush1.msra.mxu0 %v1894
    %4480 = vmatprep.subr.mxu0 0.0
    %4481 = vmatpush1.msra.mxu0 0.0
    %4482 = vmatprep.subr.mxu0 0.0
    %4483 = vmatpush1.msra.mxu0 0.0
    %4484 = vmatprep.subr.mxu0 0.0
    %4485 = vmatpush1.msra.mxu0 0.0
    %4486 = vmatprep.subr.mxu0 0.0
    %4487 = vmatpush1.msra.mxu0 0.0
    %4488 = vmatprep.subr.mxu0 0.0
    %4489 = vmatpush1.msra.mxu0 0.0
    %4490 = vmatprep.subr.mxu0 0.0
    %4491 = vmatpush1.msra.mxu0 0.0
    %4492 = vmatprep.subr.mxu0 0.0
    %4493 = vmatpush1.msra.mxu0 0.0
    %4494 = vmatprep.subr.mxu0 0.0
    %4495 = vmatpush1.msra.mxu0 0.0
    %4496 = vmatprep.subr.mxu0 0.0
    %4497 = vmatpush1.msra.mxu0 0.0
    %4498 = vmatprep.subr.mxu0 0.0
    %4499 = vmatpush1.msra.mxu0 0.0
    %4500 = vmatprep.subr.mxu0 0.0
    %4501 = vmatpush1.msra.mxu0 0.0
    %4502 = vmatprep.subr.mxu0 0.0
    %4503 = vmatpush1.msra.mxu0 0.0
    %4504 = vmatprep.subr.mxu0 0.0
    %4505 = vmatpush1.msra.mxu0 0.0
    %4506 = vmatprep.subr.mxu0 0.0
    %4507 = vmatpush1.msra.mxu0 0.0
    %4508 = vmatprep.subr.mxu0 0.0
    %4509 = vmatpush1.msra.mxu0 0.0
    %4510 = vmatprep.subr.mxu0 0.0
    %4511 = vmatpush1.msra.mxu0 0.0
    %4512 = vmatprep.subr.mxu0 0.0
    %4513 = vmatpush1.msra.mxu0 0.0
    %4514 = vmatprep.subr.mxu0 0.0
    %4515 = vmatpush1.msra.mxu0 0.0
    %4516 = vmatprep.subr.mxu0 0.0
    %4517 = vmatpush1.msra.mxu0 0.0
    %4518 = vmatprep.subr.mxu0 0.0
    %4519 = vmatpush1.msra.mxu0 0.0
    %4520 = vmatprep.subr.mxu0 0.0
    %4521 = vmatpush1.msra.mxu0 0.0
    %4522 = vmatprep.subr.mxu0 0.0
    %4523 = vmatpush1.msra.mxu0 0.0
    %4524 = vmatprep.subr.mxu0 0.0
    %4525 = vmatpush1.msra.mxu0 0.0
    %4526 = vmatprep.subr.mxu0 0.0
    %4527 = vmatpush1.msra.mxu0 0.0
    %4528 = vmatprep.subr.mxu0 0.0
    %4529 = vmatpush1.msra.mxu0 0.0
    %4530 = vmatprep.subr.mxu0 0.0
    %4531 = vmatpush1.msra.mxu0 0.0
    %4532 = vmatprep.subr.mxu0 0.0
    %4533 = vmatpush1.msra.mxu0 0.0
    %4534 = vmatprep.subr.mxu0 0.0
    %4535 = vmatpush1.msra.mxu0 0.0
    %4536 = vmatprep.subr.mxu0 0.0
    %4537 = vmatpush1.msra.mxu0 0.0
    %4538 = vmatprep.subr.mxu0 0.0
    %4539 = vmatpush1.msra.mxu0 0.0
    %4540 = vmatprep.mubr.f32.mxu0 0.0
    %4541 = vmatmul.mubr.f32.gmra.mrb[0].mxu0 %v4474
    %v4542 = vpop.f32.mrb[0].mxu0
    %v4543 = vadd.f32 0.0, %v4542
    %v4544 = vpop.f32.mrb[0].mxu0
    %4545 = vdwg.mxu0
    %4548 = vset.pattern.permute.xlu0 0
    %4549 = vperm.xlu0 %4548, %v4455
    %v4550 = vpop.permute.xlu0 %4549
    %4551 = vset.pattern.permute.xlu0 0
    %4552 = vperm.xlu0 %4551, %v4456
    %v4553 = vpop.permute.xlu0 %4552
    %v4554 = vlaneseq
    %v4555 = vshrl.u32 %v4554, 7
    %v4556 = vsub.s32 %v1767, %v4555
    %v4557 = vrot.slane %v4550, %v4556
    %v4558 = vlaneseq
    %v4559 = vshrl.u32 %v4558, 7
    %v4560 = vsub.s32 %v1772, %v4559
    %v4561 = vrot.slane %v4553, %v4560
    %v4562 = vsel %vm1777, %v4561, %v4557
    %v4563 = vsel %vm1890, %v4562, 0
    %4565 = vmatprep.subr.mxu0 0.0
    %4566 = vmatpush1.msra.mxu0 %v250
    %4567 = vmatprep.subr.mxu0 0.0
    %4568 = vmatpush1.msra.mxu0 %v1985
    %4569 = vmatprep.subr.mxu0 0.0
    %4570 = vmatpush1.msra.mxu0 0.0
    %4571 = vmatprep.subr.mxu0 0.0
    %4572 = vmatpush1.msra.mxu0 0.0
    %4573 = vmatprep.subr.mxu0 0.0
    %4574 = vmatpush1.msra.mxu0 0.0
    %4575 = vmatprep.subr.mxu0 0.0
    %4576 = vmatpush1.msra.mxu0 0.0
    %4577 = vmatprep.subr.mxu0 0.0
    %4578 = vmatpush1.msra.mxu0 0.0
    %4579 = vmatprep.subr.mxu0 0.0
    %4580 = vmatpush1.msra.mxu0 0.0
    %4581 = vmatprep.subr.mxu0 0.0
    %4582 = vmatpush1.msra.mxu0 0.0
    %4583 = vmatprep.subr.mxu0 0.0
    %4584 = vmatpush1.msra.mxu0 0.0
    %4585 = vmatprep.subr.mxu0 0.0
    %4586 = vmatpush1.msra.mxu0 0.0
    %4587 = vmatprep.subr.mxu0 0.0
    %4588 = vmatpush1.msra.mxu0 0.0
    %4589 = vmatprep.subr.mxu0 0.0
    %4590 = vmatpush1.msra.mxu0 0.0
    %4591 = vmatprep.subr.mxu0 0.0
    %4592 = vmatpush1.msra.mxu0 0.0
    %4593 = vmatprep.subr.mxu0 0.0
    %4594 = vmatpush1.msra.mxu0 0.0
    %4595 = vmatprep.subr.mxu0 0.0
    %4596 = vmatpush1.msra.mxu0 0.0
    %4597 = vmatprep.subr.mxu0 0.0
    %4598 = vmatpush1.msra.mxu0 0.0
    %4599 = vmatprep.subr.mxu0 0.0
    %4600 = vmatpush1.msra.mxu0 0.0
    %4601 = vmatprep.subr.mxu0 0.0
    %4602 = vmatpush1.msra.mxu0 0.0
    %4603 = vmatprep.subr.mxu0 0.0
    %4604 = vmatpush1.msra.mxu0 0.0
    %4605 = vmatprep.subr.mxu0 0.0
    %4606 = vmatpush1.msra.mxu0 0.0
    %4607 = vmatprep.subr.mxu0 0.0
    %4608 = vmatpush1.msra.mxu0 0.0
    %4609 = vmatprep.subr.mxu0 0.0
    %4610 = vmatpush1.msra.mxu0 0.0
    %4611 = vmatprep.subr.mxu0 0.0
    %4612 = vmatpush1.msra.mxu0 0.0
    %4613 = vmatprep.subr.mxu0 0.0
    %4614 = vmatpush1.msra.mxu0 0.0
    %4615 = vmatprep.subr.mxu0 0.0
    %4616 = vmatpush1.msra.mxu0 0.0
    %4617 = vmatprep.subr.mxu0 0.0
    %4618 = vmatpush1.msra.mxu0 0.0
    %4619 = vmatprep.subr.mxu0 0.0
    %4620 = vmatpush1.msra.mxu0 0.0
    %4621 = vmatprep.subr.mxu0 0.0
    %4622 = vmatpush1.msra.mxu0 0.0
    %4623 = vmatprep.subr.mxu0 0.0
    %4624 = vmatpush1.msra.mxu0 0.0
    %4625 = vmatprep.subr.mxu0 0.0
    %4626 = vmatpush1.msra.mxu0 0.0
    %4627 = vmatprep.subr.mxu0 0.0
    %4628 = vmatpush1.msra.mxu0 0.0
    %4629 = vmatprep.mubr.f32.mxu0 0.0
    %4630 = vmatmul.mubr.f32.gmra.mrb[0].mxu0 %v4563
    %v4631 = vpop.f32.mrb[0].mxu0
    %v4632 = vadd.f32 0.0, %v4631
    %v4633 = vpop.f32.mrb[0].mxu0
    %4634 = vdwg.mxu0
    %4635 = vmatprep.subr.mxu0 0.0
    %4636 = vmatpush1.msra.mxu0 %v1198
    %4637 = vmatprep.subr.mxu0 0.0
    %4638 = vmatpush1.msra.mxu0 %v1199
    %4639 = vmatprep.subr.mxu0 0.0
    %4640 = vmatpush1.msra.mxu0 %v1200
    %4641 = vmatprep.subr.mxu0 0.0
    %4642 = vmatpush1.msra.mxu0 %v1201
    %4643 = vmatprep.subr.mxu0 0.0
    %4644 = vmatpush1.msra.mxu0 0.0
    %4645 = vmatprep.subr.mxu0 0.0
    %4646 = vmatpush1.msra.mxu0 0.0
    %4647 = vmatprep.subr.mxu0 0.0
    %4648 = vmatpush1.msra.mxu0 0.0
    %4649 = vmatprep.subr.mxu0 0.0
    %4650 = vmatpush1.msra.mxu0 0.0
    %4651 = vmatprep.subr.mxu0 0.0
    %4652 = vmatpush1.msra.mxu0 0.0
    %4653 = vmatprep.subr.mxu0 0.0
    %4654 = vmatpush1.msra.mxu0 0.0
    %4655 = vmatprep.subr.mxu0 0.0
    %4656 = vmatpush1.msra.mxu0 0.0
    %4657 = vmatprep.subr.mxu0 0.0
    %4658 = vmatpush1.msra.mxu0 0.0
    %4659 = vmatprep.subr.mxu0 0.0
    %4660 = vmatpush1.msra.mxu0 0.0
    %4661 = vmatprep.subr.mxu0 0.0
    %4662 = vmatpush1.msra.mxu0 0.0
    %4663 = vmatprep.subr.mxu0 0.0
    %4664 = vmatpush1.msra.mxu0 0.0
    %4665 = vmatprep.subr.mxu0 0.0
    %4666 = vmatpush1.msra.mxu0 0.0
    %4667 = vmatprep.subr.mxu0 0.0
    %4668 = vmatpush1.msra.mxu0 0.0
    %4669 = vmatprep.subr.mxu0 0.0
    %4670 = vmatpush1.msra.mxu0 0.0
    %4671 = vmatprep.subr.mxu0 0.0
    %4672 = vmatpush1.msra.mxu0 0.0
    %4673 = vmatprep.subr.mxu0 0.0
    %4674 = vmatpush1.msra.mxu0 0.0
    %4675 = vmatprep.subr.mxu0 0.0
    %4676 = vmatpush1.msra.mxu0 0.0
    %4677 = vmatprep.subr.mxu0 0.0
    %4678 = vmatpush1.msra.mxu0 0.0
    %4679 = vmatprep.subr.mxu0 0.0
    %4680 = vmatpush1.msra.mxu0 0.0
    %4681 = vmatprep.subr.mxu0 0.0
    %4682 = vmatpush1.msra.mxu0 0.0
    %4683 = vmatprep.subr.mxu0 0.0
    %4684 = vmatpush1.msra.mxu0 0.0
    %4685 = vmatprep.subr.mxu0 0.0
    %4686 = vmatpush1.msra.mxu0 0.0
    %4687 = vmatprep.subr.mxu0 0.0
    %4688 = vmatpush1.msra.mxu0 0.0
    %4689 = vmatprep.subr.mxu0 0.0
    %4690 = vmatpush1.msra.mxu0 0.0
    %4691 = vmatprep.subr.mxu0 0.0
    %4692 = vmatpush1.msra.mxu0 0.0
    %4693 = vmatprep.subr.mxu0 0.0
    %4694 = vmatpush1.msra.mxu0 0.0
    %4695 = vmatprep.subr.mxu0 0.0
    %4696 = vmatpush1.msra.mxu0 0.0
    %4697 = vmatprep.subr.mxu0 0.0
    %4698 = vmatpush1.msra.mxu0 0.0
    %4699 = vmatprep.mubr.f32.mxu0 0.0
    %4700 = vmatmul.mubr.f32.gmra.mrb[0].mxu0 %v4207
    %v4701 = vpop.f32.mrb[0].mxu0
    %v4702 = vadd.f32 0.0, %v4701
    %v4703 = vpop.f32.mrb[0].mxu0
    %4704 = vdwg.mxu0
    %v4707 = vrot.slane %v4632, 7
    %v4708 = vsel %vm1788, %v4707, %v4543
    %v4709 = vsel %vm658, %v4708, 0
    %4711 = vmatprep.subr.mxu0 0.0
    %4712 = vmatpush1.msra.mxu0 %v1194
    %4713 = vmatprep.subr.mxu0 0.0
    %4714 = vmatpush1.msra.mxu0 %v1195
    %4715 = vmatprep.subr.mxu0 0.0
    %4716 = vmatpush1.msra.mxu0 %v1196
    %4717 = vmatprep.subr.mxu0 0.0
    %4718 = vmatpush1.msra.mxu0 %v1197
    %4719 = vmatprep.subr.mxu0 0.0
    %4720 = vmatpush1.msra.mxu0 0.0
    %4721 = vmatprep.subr.mxu0 0.0
    %4722 = vmatpush1.msra.mxu0 0.0
    %4723 = vmatprep.subr.mxu0 0.0
    %4724 = vmatpush1.msra.mxu0 0.0
    %4725 = vmatprep.subr.mxu0 0.0
    %4726 = vmatpush1.msra.mxu0 0.0
    %4727 = vmatprep.subr.mxu0 0.0
    %4728 = vmatpush1.msra.mxu0 0.0
    %4729 = vmatprep.subr.mxu0 0.0
    %4730 = vmatpush1.msra.mxu0 0.0
    %4731 = vmatprep.subr.mxu0 0.0
    %4732 = vmatpush1.msra.mxu0 0.0
    %4733 = vmatprep.subr.mxu0 0.0
    %4734 = vmatpush1.msra.mxu0 0.0
    %4735 = vmatprep.subr.mxu0 0.0
    %4736 = vmatpush1.msra.mxu0 0.0
    %4737 = vmatprep.subr.mxu0 0.0
    %4738 = vmatpush1.msra.mxu0 0.0
    %4739 = vmatprep.subr.mxu0 0.0
    %4740 = vmatpush1.msra.mxu0 0.0
    %4741 = vmatprep.subr.mxu0 0.0
    %4742 = vmatpush1.msra.mxu0 0.0
    %4743 = vmatprep.subr.mxu0 0.0
    %4744 = vmatpush1.msra.mxu0 0.0
    %4745 = vmatprep.subr.mxu0 0.0
    %4746 = vmatpush1.msra.mxu0 0.0
    %4747 = vmatprep.subr.mxu0 0.0
    %4748 = vmatpush1.msra.mxu0 0.0
    %4749 = vmatprep.subr.mxu0 0.0
    %4750 = vmatpush1.msra.mxu0 0.0
    %4751 = vmatprep.subr.mxu0 0.0
    %4752 = vmatpush1.msra.mxu0 0.0
    %4753 = vmatprep.subr.mxu0 0.0
    %4754 = vmatpush1.msra.mxu0 0.0
    %4755 = vmatprep.subr.mxu0 0.0
    %4756 = vmatpush1.msra.mxu0 0.0
    %4757 = vmatprep.subr.mxu0 0.0
    %4758 = vmatpush1.msra.mxu0 0.0
    %4759 = vmatprep.subr.mxu0 0.0
    %4760 = vmatpush1.msra.mxu0 0.0
    %4761 = vmatprep.subr.mxu0 0.0
    %4762 = vmatpush1.msra.mxu0 0.0
    %4763 = vmatprep.subr.mxu0 0.0
    %4764 = vmatpush1.msra.mxu0 0.0
    %4765 = vmatprep.subr.mxu0 0.0
    %4766 = vmatpush1.msra.mxu0 0.0
    %4767 = vmatprep.subr.mxu0 0.0
    %4768 = vmatpush1.msra.mxu0 0.0
    %4769 = vmatprep.subr.mxu0 0.0
    %4770 = vmatpush1.msra.mxu0 0.0
    %4771 = vmatprep.subr.mxu0 0.0
    %4772 = vmatpush1.msra.mxu0 0.0
    %4773 = vmatprep.subr.mxu0 0.0
    %4774 = vmatpush1.msra.mxu0 0.0
    %4775 = vmatprep.mubr.f32.mxu0 0.0
    %4776 = vmatmul.mubr.f32.gmra.mrb[0].mxu0 %v4709
    %v4777 = vpop.f32.mrb[0].mxu0
    %v4778 = vadd.f32 %v4702, %v4777
    %v4779 = vpop.f32.mrb[0].mxu0
    %4780 = vdwg.mxu0
    %4781 = vmatprep.subr.mxu0 0.0
    %4782 = vmatpush1.msra.mxu0 %v1202
    %4783 = vmatprep.subr.mxu0 0.0
    %4784 = vmatpush1.msra.mxu0 %v1203
    %4785 = vmatprep.subr.mxu0 0.0
    %4786 = vmatpush1.msra.mxu0 %v1204
    %4787 = vmatprep.subr.mxu0 0.0
    %4788 = vmatpush1.msra.mxu0 %v1205
    %4789 = vmatprep.subr.mxu0 0.0
    %4790 = vmatpush1.msra.mxu0 0.0
    %4791 = vmatprep.subr.mxu0 0.0
    %4792 = vmatpush1.msra.mxu0 0.0
    %4793 = vmatprep.subr.mxu0 0.0
    %4794 = vmatpush1.msra.mxu0 0.0
    %4795 = vmatprep.subr.mxu0 0.0
    %4796 = vmatpush1.msra.mxu0 0.0
    %4797 = vmatprep.subr.mxu0 0.0
    %4798 = vmatpush1.msra.mxu0 0.0
    %4799 = vmatprep.subr.mxu0 0.0
    %4800 = vmatpush1.msra.mxu0 0.0
    %4801 = vmatprep.subr.mxu0 0.0
    %4802 = vmatpush1.msra.mxu0 0.0
    %4803 = vmatprep.subr.mxu0 0.0
    %4804 = vmatpush1.msra.mxu0 0.0
    %4805 = vmatprep.subr.mxu0 0.0
    %4806 = vmatpush1.msra.mxu0 0.0
    %4807 = vmatprep.subr.mxu0 0.0
    %4808 = vmatpush1.msra.mxu0 0.0
    %4809 = vmatprep.subr.mxu0 0.0
    %4810 = vmatpush1.msra.mxu0 0.0
    %4811 = vmatprep.subr.mxu0 0.0
    %4812 = vmatpush1.msra.mxu0 0.0
    %4813 = vmatprep.subr.mxu0 0.0
    %4814 = vmatpush1.msra.mxu0 0.0
    %4815 = vmatprep.subr.mxu0 0.0
    %4816 = vmatpush1.msra.mxu0 0.0
    %4817 = vmatprep.subr.mxu0 0.0
    %4818 = vmatpush1.msra.mxu0 0.0
    %4819 = vmatprep.subr.mxu0 0.0
    %4820 = vmatpush1.msra.mxu0 0.0
    %4821 = vmatprep.subr.mxu0 0.0
    %4822 = vmatpush1.msra.mxu0 0.0
    %4823 = vmatprep.subr.mxu0 0.0
    %4824 = vmatpush1.msra.mxu0 0.0
    %4825 = vmatprep.subr.mxu0 0.0
    %4826 = vmatpush1.msra.mxu0 0.0
    %4827 = vmatprep.subr.mxu0 0.0
    %4828 = vmatpush1.msra.mxu0 0.0
    %4829 = vmatprep.subr.mxu0 0.0
    %4830 = vmatpush1.msra.mxu0 0.0
    %4831 = vmatprep.subr.mxu0 0.0
    %4832 = vmatpush1.msra.mxu0 0.0
    %4833 = vmatprep.subr.mxu0 0.0
    %4834 = vmatpush1.msra.mxu0 0.0
    %4835 = vmatprep.subr.mxu0 0.0
    %4836 = vmatpush1.msra.mxu0 0.0
    %4837 = vmatprep.subr.mxu0 0.0
    %4838 = vmatpush1.msra.mxu0 0.0
    %4839 = vmatprep.subr.mxu0 0.0
    %4840 = vmatpush1.msra.mxu0 0.0
    %4841 = vmatprep.subr.mxu0 0.0
    %4842 = vmatpush1.msra.mxu0 0.0
    %4843 = vmatprep.subr.mxu0 0.0
    %4844 = vmatpush1.msra.mxu0 0.0
    %4845 = vmatprep.mubr.f32.mxu0 0.0
    %4846 = vmatmul.mubr.f32.gmra.mrb[0].mxu0 %v4026
    %v4847 = vpop.f32.mrb[0].mxu0
    %v4848 = vadd.f32 0.0, %v4847
    %v4849 = vpop.f32.mrb[0].mxu0
    %4850 = vdwg.mxu0
    %v4851 = vadd.f32 %v4778, %v4848
    %v4852 = vadd.f32 %v4851, %v2278
    %v4853 = vxor.u32 %v4852, 2147483648
    %v4854 = vmul.f32 %v4853, 1.442695
    %v4855 = vpow.pop %v4854
    %v4856 = vadd.f32 %v4855, 1.0
    %v4857 = vrcp.pop %v4856
    %v4858 = vmul.f32 1.0, %v4857
    %v4859 = vtanh.pop %v4852
    %v4860 = vmul.f32 %v4858, %v4013
    %4862 = vrot.lane.b32.xlu0 %v4859, 64
    %v4863 = vpop.permute.xlu0 %4862
    %v4865 = vmul.f32 %v4858, %v4863
    %4867 = vrot.lane.b32.xlu0 %v4865, 32
    %v4868 = vpop.permute.xlu0 %4867
    %v4870 = vadd.f32 %v4860, %v4868
    %v4871 = vtanh.pop %v4870
    %4873 = vrot.lane.b32.xlu0 %v4871, 64
    %v4874 = vpop.permute.xlu0 %4873
    %v4876 = vmul.f32 %v4858, %v4874
    %v4877 = vadd.f32 %v1166, %v1031
    %4879 = vrot.lane.b32.xlu0 %v4876, 32
    %v4880 = vpop.permute.xlu0 %4879
    %v4881 = vsel %vm658, %v4880, 0
    %4883 = vmatprep.subr.mxu0 0.0
    %4884 = vmatpush1.msra.mxu0 %v1186
    %4885 = vmatprep.subr.mxu0 0.0
    %4886 = vmatpush1.msra.mxu0 %v1187
    %4887 = vmatprep.subr.mxu0 0.0
    %4888 = vmatpush1.msra.mxu0 %v1188
    %4889 = vmatprep.subr.mxu0 0.0
    %4890 = vmatpush1.msra.mxu0 %v1189
    %4891 = vmatprep.subr.mxu0 0.0
    %4892 = vmatpush1.msra.mxu0 0.0
    %4893 = vmatprep.subr.mxu0 0.0
    %4894 = vmatpush1.msra.mxu0 0.0
    %4895 = vmatprep.subr.mxu0 0.0
    %4896 = vmatpush1.msra.mxu0 0.0
    %4897 = vmatprep.subr.mxu0 0.0
    %4898 = vmatpush1.msra.mxu0 0.0
    %4899 = vmatprep.subr.mxu0 0.0
    %4900 = vmatpush1.msra.mxu0 0.0
    %4901 = vmatprep.subr.mxu0 0.0
    %4902 = vmatpush1.msra.mxu0 0.0
    %4903 = vmatprep.subr.mxu0 0.0
    %4904 = vmatpush1.msra.mxu0 0.0
    %4905 = vmatprep.subr.mxu0 0.0
    %4906 = vmatpush1.msra.mxu0 0.0
    %4907 = vmatprep.subr.mxu0 0.0
    %4908 = vmatpush1.msra.mxu0 0.0
    %4909 = vmatprep.subr.mxu0 0.0
    %4910 = vmatpush1.msra.mxu0 0.0
    %4911 = vmatprep.subr.mxu0 0.0
    %4912 = vmatpush1.msra.mxu0 0.0
    %4913 = vmatprep.subr.mxu0 0.0
    %4914 = vmatpush1.msra.mxu0 0.0
    %4915 = vmatprep.subr.mxu0 0.0
    %4916 = vmatpush1.msra.mxu0 0.0
    %4917 = vmatprep.subr.mxu0 0.0
    %4918 = vmatpush1.msra.mxu0 0.0
    %4919 = vmatprep.subr.mxu0 0.0
    %4920 = vmatpush1.msra.mxu0 0.0
    %4921 = vmatprep.subr.mxu0 0.0
    %4922 = vmatpush1.msra.mxu0 0.0
    %4923 = vmatprep.subr.mxu0 0.0
    %4924 = vmatpush1.msra.mxu0 0.0
    %4925 = vmatprep.subr.mxu0 0.0
    %4926 = vmatpush1.msra.mxu0 0.0
    %4927 = vmatprep.subr.mxu0 0.0
    %4928 = vmatpush1.msra.mxu0 0.0
    %4929 = vmatprep.subr.mxu0 0.0
    %4930 = vmatpush1.msra.mxu0 0.0
    %4931 = vmatprep.subr.mxu0 0.0
    %4932 = vmatpush1.msra.mxu0 0.0
    %4933 = vmatprep.subr.mxu0 0.0
    %4934 = vmatpush1.msra.mxu0 0.0
    %4935 = vmatprep.subr.mxu0 0.0
    %4936 = vmatpush1.msra.mxu0 0.0
    %4937 = vmatprep.subr.mxu0 0.0
    %4938 = vmatpush1.msra.mxu0 0.0
    %4939 = vmatprep.subr.mxu0 0.0
    %4940 = vmatpush1.msra.mxu0 0.0
    %4941 = vmatprep.subr.mxu0 0.0
    %4942 = vmatpush1.msra.mxu0 0.0
    %4943 = vmatprep.subr.mxu0 0.0
    %4944 = vmatpush1.msra.mxu0 0.0
    %4945 = vmatprep.subr.mxu0 0.0
    %4946 = vmatpush1.msra.mxu0 0.0
    %4947 = vmatprep.mubr.f32.mxu0 0.0
    %4948 = vmatmul.mubr.f32.gmra.mrb[0].mxu0 %v4881
    %v4949 = vpop.f32.mrb[0].mxu0
    %v4950 = vadd.f32 0.0, %v4949
    %v4951 = vpop.f32.mrb[0].mxu0
    %4952 = vdwg.mxu0
    %v4953 = vadd.f32 %v4877, %v4950
    %4954 = vmatprep.subr.mxu0 0.0
    %4955 = vmatpush1.msra.mxu0 %v1190
    %4956 = vmatprep.subr.mxu0 0.0
    %4957 = vmatpush1.msra.mxu0 %v1191
    %4958 = vmatprep.subr.mxu0 0.0
    %4959 = vmatpush1.msra.mxu0 %v1192
    %4960 = vmatprep.subr.mxu0 0.0
    %4961 = vmatpush1.msra.mxu0 %v1193
    %4962 = vmatprep.subr.mxu0 0.0
    %4963 = vmatpush1.msra.mxu0 0.0
    %4964 = vmatprep.subr.mxu0 0.0
    %4965 = vmatpush1.msra.mxu0 0.0
    %4966 = vmatprep.subr.mxu0 0.0
    %4967 = vmatpush1.msra.mxu0 0.0
    %4968 = vmatprep.subr.mxu0 0.0
    %4969 = vmatpush1.msra.mxu0 0.0
    %4970 = vmatprep.subr.mxu0 0.0
    %4971 = vmatpush1.msra.mxu0 0.0
    %4972 = vmatprep.subr.mxu0 0.0
    %4973 = vmatpush1.msra.mxu0 0.0
    %4974 = vmatprep.subr.mxu0 0.0
    %4975 = vmatpush1.msra.mxu0 0.0
    %4976 = vmatprep.subr.mxu0 0.0
    %4977 = vmatpush1.msra.mxu0 0.0
    %4978 = vmatprep.subr.mxu0 0.0
    %4979 = vmatpush1.msra.mxu0 0.0
    %4980 = vmatprep.subr.mxu0 0.0
    %4981 = vmatpush1.msra.mxu0 0.0
    %4982 = vmatprep.subr.mxu0 0.0
    %4983 = vmatpush1.msra.mxu0 0.0
    %4984 = vmatprep.subr.mxu0 0.0
    %4985 = vmatpush1.msra.mxu0 0.0
    %4986 = vmatprep.subr.mxu0 0.0
    %4987 = vmatpush1.msra.mxu0 0.0
    %4988 = vmatprep.subr.mxu0 0.0
    %4989 = vmatpush1.msra.mxu0 0.0
    %4990 = vmatprep.subr.mxu0 0.0
    %4991 = vmatpush1.msra.mxu0 0.0
    %4992 = vmatprep.subr.mxu0 0.0
    %4993 = vmatpush1.msra.mxu0 0.0
    %4994 = vmatprep.subr.mxu0 0.0
    %4995 = vmatpush1.msra.mxu0 0.0
    %4996 = vmatprep.subr.mxu0 0.0
    %4997 = vmatpush1.msra.mxu0 0.0
    %4998 = vmatprep.subr.mxu0 0.0
    %4999 = vmatpush1.msra.mxu0 0.0
    %5000 = vmatprep.subr.mxu0 0.0
    %5001 = vmatpush1.msra.mxu0 0.0
    %5002 = vmatprep.subr.mxu0 0.0
    %5003 = vmatpush1.msra.mxu0 0.0
    %5004 = vmatprep.subr.mxu0 0.0
    %5005 = vmatpush1.msra.mxu0 0.0
    %5006 = vmatprep.subr.mxu0 0.0
    %5007 = vmatpush1.msra.mxu0 0.0
    %5008 = vmatprep.subr.mxu0 0.0
    %5009 = vmatpush1.msra.mxu0 0.0
    %5010 = vmatprep.subr.mxu0 0.0
    %5011 = vmatpush1.msra.mxu0 0.0
    %5012 = vmatprep.subr.mxu0 0.0
    %5013 = vmatpush1.msra.mxu0 0.0
    %5014 = vmatprep.subr.mxu0 0.0
    %5015 = vmatpush1.msra.mxu0 0.0
    %5016 = vmatprep.subr.mxu0 0.0
    %5017 = vmatpush1.msra.mxu0 0.0
    %5018 = vmatprep.mubr.f32.mxu0 0.0
    %5019 = vmatmul.mubr.f32.gmra.mrb[0].mxu0 %v4207
    %v5020 = vpop.f32.mrb[0].mxu0
    %v5021 = vadd.f32 0.0, %v5020
    %v5022 = vpop.f32.mrb[0].mxu0
    %5023 = vdwg.mxu0
    %v5024 = vadd.f32 %v4953, %v5021
    %v5025 = vxor.u32 %v5024, 2147483648
    %v5026 = vmul.f32 %v5025, 1.442695
    %v5027 = vpow.pop %v5026
    %v5028 = vadd.f32 %v5027, 1.0
    %v5029 = vrcp.pop %v5028
    %v5030 = vmul.f32 1.0, %v5029
    %v5031 = vtanh.pop %v5024
    %v5033 = vrot.slane %v4196, 6
    %v5035 = vmul.f32 %v5030, %v5033
    %5037 = vrot.lane.b32.xlu0 %v5031, 64
    %v5038 = vpop.permute.xlu0 %5037
    %v5040 = vmul.f32 %v5030, %v5038
    %5042 = vrot.lane.b32.xlu0 %v5040, 32
    %v5043 = vpop.permute.xlu0 %5042
    %v5045 = vadd.f32 %v5035, %v5043
    %v5046 = vtanh.pop %v5045
    %5048 = vrot.lane.b32.xlu0 %v5046, 64
    %v5049 = vpop.permute.xlu0 %5048
    %v5051 = vmul.f32 %v5030, %v5049
    %5053 = vrot.lane.b32.xlu0 %v5051, 32
    %v5054 = vpop.permute.xlu0 %5053
    %v5055 = vsel %vm658, %v5054, 0
    %5057 = vmatprep.subr.mxu0 0.0
    %5058 = vmatpush1.msra.mxu0 %v1207
    %5059 = vmatprep.subr.mxu0 0.0
    %5060 = vmatpush1.msra.mxu0 %v1208
    %5061 = vmatprep.subr.mxu0 0.0
    %5062 = vmatpush1.msra.mxu0 %v1209
    %5063 = vmatprep.subr.mxu0 0.0
    %5064 = vmatpush1.msra.mxu0 %v1210
    %5065 = vmatprep.subr.mxu0 0.0
    %5066 = vmatpush1.msra.mxu0 0.0
    %5067 = vmatprep.subr.mxu0 0.0
    %5068 = vmatpush1.msra.mxu0 0.0
    %5069 = vmatprep.subr.mxu0 0.0
    %5070 = vmatpush1.msra.mxu0 0.0
    %5071 = vmatprep.subr.mxu0 0.0
    %5072 = vmatpush1.msra.mxu0 0.0
    %5073 = vmatprep.subr.mxu0 0.0
    %5074 = vmatpush1.msra.mxu0 0.0
    %5075 = vmatprep.subr.mxu0 0.0
    %5076 = vmatpush1.msra.mxu0 0.0
    %5077 = vmatprep.subr.mxu0 0.0
    %5078 = vmatpush1.msra.mxu0 0.0
    %5079 = vmatprep.subr.mxu0 0.0
    %5080 = vmatpush1.msra.mxu0 0.0
    %5081 = vmatprep.subr.mxu0 0.0
    %5082 = vmatpush1.msra.mxu0 0.0
    %5083 = vmatprep.subr.mxu0 0.0
    %5084 = vmatpush1.msra.mxu0 0.0
    %5085 = vmatprep.subr.mxu0 0.0
    %5086 = vmatpush1.msra.mxu0 0.0
    %5087 = vmatprep.subr.mxu0 0.0
    %5088 = vmatpush1.msra.mxu0 0.0
    %5089 = vmatprep.subr.mxu0 0.0
    %5090 = vmatpush1.msra.mxu0 0.0
    %5091 = vmatprep.subr.mxu0 0.0
    %5092 = vmatpush1.msra.mxu0 0.0
    %5093 = vmatprep.subr.mxu0 0.0
    %5094 = vmatpush1.msra.mxu0 0.0
    %5095 = vmatprep.subr.mxu0 0.0
    %5096 = vmatpush1.msra.mxu0 0.0
    %5097 = vmatprep.subr.mxu0 0.0
    %5098 = vmatpush1.msra.mxu0 0.0
    %5099 = vmatprep.subr.mxu0 0.0
    %5100 = vmatpush1.msra.mxu0 0.0
    %5101 = vmatprep.subr.mxu0 0.0
    %5102 = vmatpush1.msra.mxu0 0.0
    %5103 = vmatprep.subr.mxu0 0.0
    %5104 = vmatpush1.msra.mxu0 0.0
    %5105 = vmatprep.subr.mxu0 0.0
    %5106 = vmatpush1.msra.mxu0 0.0
    %5107 = vmatprep.subr.mxu0 0.0
    %5108 = vmatpush1.msra.mxu0 0.0
    %5109 = vmatprep.subr.mxu0 0.0
    %5110 = vmatpush1.msra.mxu0 0.0
    %5111 = vmatprep.subr.mxu0 0.0
    %5112 = vmatpush1.msra.mxu0 0.0
    %5113 = vmatprep.subr.mxu0 0.0
    %5114 = vmatpush1.msra.mxu0 0.0
    %5115 = vmatprep.subr.mxu0 0.0
    %5116 = vmatpush1.msra.mxu0 0.0
    %5117 = vmatprep.subr.mxu0 0.0
    %5118 = vmatpush1.msra.mxu0 0.0
    %5119 = vmatprep.subr.mxu0 0.0
    %5120 = vmatpush1.msra.mxu0 0.0
    %5121 = vmatprep.mubr.f32.mxu0 0.0
    %5122 = vmatmul.mubr.f32.gmra.mrb[0].mxu0 %v5055
    %v5123 = vpop.f32.mrb[0].mxu0
    %v5124 = vadd.f32 %v1386, %v5123
    %v5125 = vpop.f32.mrb[0].mxu0
    %5126 = vdwg.mxu0
    %v5129 = vunpack.c.l.s4 1966171168
    %v5130 = vunpack.c.0.s8 %v5129
    %v5131 = vlaneseq
    %v5132 = vshrl.u32 %v5131, 7
    %v5133 = vsub.s32 %v5130, %v5132
    %v5134 = vrot.slane %v5124, %v5133
    %v5135 = vcombine.high %v5134, %v5134
    %v5137 = vunpack.c.l.s4 1966171168
    %v5138 = vunpack.c.0.s8 %v5137
    %v5139 = vlaneseq
    %v5140 = vshrl.u32 %v5139, 7
    %v5141 = vsub.s32 %v5138, %v5140
    %v5142 = vrot.slane %v5134, %v5141
    %v5144 = vunpack.c.l.s4 1966171168
    %v5145 = vunpack.c.0.s8 %v5144
    %v5146 = vlaneseq
    %v5147 = vshrl.u32 %v5146, 7
    %v5148 = vsub.s32 %v5145, %v5147
    %v5149 = vrot.slane %v5135, %v5148
    %v5150 = vlaneseq
    %v5151 = vshrl.u32 %v5150, 7
    %v5152 = vsub.s32 0, %v5151
    %v5153 = vrot.slane %v5142, %v5152
    %v5154 = vlaneseq
    %v5155 = vshrl.u32 %v5154, 7
    %v5156 = vsub.s32 0, %v5155
    %v5157 = vrot.slane %v5149, %v5156
    %v5160 = vadd.f32 %v5153, %v1544
    %v5161 = vadd.f32 %v5153, %v1592
    %v5162 = vadd.f32 %v5157, %v1641
    %v5163 = vadd.f32 %v5157, %v1689
    %v5164 = vtanh.pop %v5160
    %v5165 = vtanh.pop %v5161
    %v5166 = vtanh.pop %v5162
    %v5167 = vtanh.pop %v5163
    %v5168 = vmul.f32 %v5164, %v1179
    %v5169 = vmul.f32 %v5165, %v1179
    %v5170 = vmul.f32 %v5166, %v1179
    %v5171 = vmul.f32 %v5167, %v1179
    %v5172 = vsel %vm658, %v5168, 0.0
    %5173 = vadd.xlane.f32.xlu0 %v5172
    %v5174 = vpop.xlane.xlu0 %5173
    %v5175 = vsel %vm1709, %v5169, 0.0
    %5176 = vadd.xlane.f32.xlu0 %v5175
    %v5177 = vpop.xlane.xlu0 %5176
    %v5178 = vsel %vm658, %v5170, 0.0
    %5179 = vadd.xlane.f32.xlu0 %v5178
    %v5180 = vpop.xlane.xlu0 %5179
    %v5181 = vsel %vm1709, %v5171, 0.0
    %5182 = vadd.xlane.f32.xlu0 %v5181
    %v5183 = vpop.xlane.xlu0 %5182
    %v5184 = vadd.f32 %v5174, %v1726
    %v5185 = vadd.f32 %v5177, %v1730
    %v5186 = vadd.f32 %v5180, %v1737
    %v5187 = vadd.f32 %v5183, %v1741
    %5192 = vset.pattern.permute.xlu0 0
    %5193 = vperm.xlu0 %5192, %v5184
    %v5194 = vpop.permute.xlu0 %5193
    %5195 = vset.pattern.permute.xlu0 0
    %5196 = vperm.xlu0 %5195, %v5185
    %v5197 = vpop.permute.xlu0 %5196
    %5198 = vset.pattern.permute.xlu0 0
    %5199 = vperm.xlu0 %5198, %v5186
    %v5200 = vpop.permute.xlu0 %5199
    %5201 = vset.pattern.permute.xlu0 0
    %5202 = vperm.xlu0 %5201, %v5187
    %v5203 = vpop.permute.xlu0 %5202
    %v5204 = vlaneseq
    %v5205 = vshrl.u32 %v5204, 7
    %v5206 = vsub.s32 %v1767, %v5205
    %v5207 = vrot.slane %v5194, %v5206
    %v5208 = vlaneseq
    %v5209 = vshrl.u32 %v5208, 7
    %v5210 = vsub.s32 %v1772, %v5209
    %v5211 = vrot.slane %v5197, %v5210
    %v5212 = vsel %vm1777, %v5211, %v5207
    %v5213 = vlaneseq
    %v5214 = vshrl.u32 %v5213, 7
    %v5215 = vsub.s32 %v1767, %v5214
    %v5216 = vrot.slane %v5200, %v5215
    %v5217 = vlaneseq
    %v5218 = vshrl.u32 %v5217, 7
    %v5219 = vsub.s32 %v1772, %v5218
    %v5220 = vrot.slane %v5203, %v5219
    %v5221 = vsel %vm1777, %v5220, %v5216
    %v5222 = vsel %vm1788, %v5221, %v5212
    %v5224 = vsel %vm1791, %v5222, -inf
    %5225 = vmax.xlane.f32.xlu0 %v5224
    %v5226 = vpop.xlane.xlu0 %5225
    %v5228 = vlaneseq
    %v5229 = vshrl.u32 %v5228, 7
    %v5230 = vsub.s32 0, %v5229
    %v5231 = vrot.slane %v5226, %v5230
    %v5232 = vlaneseq
    %v5233 = vshrl.u32 %v5232, 7
    %v5234 = vsub.s32 1, %v5233
    %v5235 = vrot.slane %v5226, %v5234
    %v5238 = vsub.f32 %v5184, %v5231
    %v5239 = vsub.f32 %v5185, %v5231
    %v5240 = vsub.f32 %v5186, %v5235
    %v5241 = vsub.f32 %v5187, %v5235
    %v5242 = vmul.f32 %v5238, 1.442695
    %v5243 = vpow.pop %v5242
    %v5244 = vmul.f32 %v5239, 1.442695
    %v5245 = vpow.pop %v5244
    %v5246 = vmul.f32 %v5240, 1.442695
    %v5247 = vpow.pop %v5246
    %v5248 = vmul.f32 %v5241, 1.442695
    %v5249 = vpow.pop %v5248
    %5254 = vset.pattern.permute.xlu0 0
    %5255 = vperm.xlu0 %5254, %v5243
    %v5256 = vpop.permute.xlu0 %5255
    %5257 = vset.pattern.permute.xlu0 0
    %5258 = vperm.xlu0 %5257, %v5245
    %v5259 = vpop.permute.xlu0 %5258
    %5260 = vset.pattern.permute.xlu0 0
    %5261 = vperm.xlu0 %5260, %v5247
    %v5262 = vpop.permute.xlu0 %5261
    %5263 = vset.pattern.permute.xlu0 0
    %5264 = vperm.xlu0 %5263, %v5249
    %v5265 = vpop.permute.xlu0 %5264
    %v5266 = vlaneseq
    %v5267 = vshrl.u32 %v5266, 7
    %v5268 = vsub.s32 %v1767, %v5267
    %v5269 = vrot.slane %v5256, %v5268
    %v5270 = vlaneseq
    %v5271 = vshrl.u32 %v5270, 7
    %v5272 = vsub.s32 %v1772, %v5271
    %v5273 = vrot.slane %v5259, %v5272
    %v5274 = vsel %vm1777, %v5273, %v5269
    %v5275 = vlaneseq
    %v5276 = vshrl.u32 %v5275, 7
    %v5277 = vsub.s32 %v1767, %v5276
    %v5278 = vrot.slane %v5262, %v5277
    %v5279 = vlaneseq
    %v5280 = vshrl.u32 %v5279, 7
    %v5281 = vsub.s32 %v1772, %v5280
    %v5282 = vrot.slane %v5265, %v5281
    %v5283 = vsel %vm1777, %v5282, %v5278
    %v5284 = vsel %vm1788, %v5283, %v5274
    %v5286 = vsel %vm1791, %v5284, 0.0
    %5287 = vadd.xlane.f32.xlu0 %v5286
    %v5288 = vpop.xlane.xlu0 %5287
    %v5289 = vrcp.pop %v5288
    %v5291 = vlaneseq
    %v5292 = vshrl.u32 %v5291, 7
    %v5293 = vsub.s32 0, %v5292
    %v5294 = vrot.slane %v5289, %v5293
    %v5295 = vlaneseq
    %v5296 = vshrl.u32 %v5295, 7
    %v5297 = vsub.s32 1, %v5296
    %v5298 = vrot.slane %v5289, %v5297
    %v5301 = vmul.f32 %v5243, %v5294
    %v5302 = vmul.f32 %v5245, %v5294
    %v5303 = vmul.f32 %v5247, %v5298
    %v5304 = vmul.f32 %v5249, %v5298
    %5307 = vset.pattern.permute.xlu0 0
    %5308 = vperm.xlu0 %5307, %v5301
    %v5309 = vpop.permute.xlu0 %5308
    %5310 = vset.pattern.permute.xlu0 0
    %5311 = vperm.xlu0 %5310, %v5302
    %v5312 = vpop.permute.xlu0 %5311
    %v5313 = vlaneseq
    %v5314 = vshrl.u32 %v5313, 7
    %v5315 = vsub.s32 %v1767, %v5314
    %v5316 = vrot.slane %v5309, %v5315
    %v5317 = vlaneseq
    %v5318 = vshrl.u32 %v5317, 7
    %v5319 = vsub.s32 %v1772, %v5318
    %v5320 = vrot.slane %v5312, %v5319
    %v5321 = vsel %vm1777, %v5320, %v5316
    %v5322 = vsel %vm1890, %v5321, 0
    %5324 = vmatprep.subr.mxu0 0.0
    %5325 = vmatpush1.msra.mxu0 %v248
    %5326 = vmatprep.subr.mxu0 0.0
    %5327 = vmatpush1.msra.mxu0 %v1894
    %5328 = vmatprep.subr.mxu0 0.0
    %5329 = vmatpush1.msra.mxu0 0.0
    %5330 = vmatprep.subr.mxu0 0.0
    %5331 = vmatpush1.msra.mxu0 0.0
    %5332 = vmatprep.subr.mxu0 0.0
    %5333 = vmatpush1.msra.mxu0 0.0
    %5334 = vmatprep.subr.mxu0 0.0
    %5335 = vmatpush1.msra.mxu0 0.0
    %5336 = vmatprep.subr.mxu0 0.0
    %5337 = vmatpush1.msra.mxu0 0.0
    %5338 = vmatprep.subr.mxu0 0.0
    %5339 = vmatpush1.msra.mxu0 0.0
    %5340 = vmatprep.subr.mxu0 0.0
    %5341 = vmatpush1.msra.mxu0 0.0
    %5342 = vmatprep.subr.mxu0 0.0
    %5343 = vmatpush1.msra.mxu0 0.0
    %5344 = vmatprep.subr.mxu0 0.0
    %5345 = vmatpush1.msra.mxu0 0.0
    %5346 = vmatprep.subr.mxu0 0.0
    %5347 = vmatpush1.msra.mxu0 0.0
    %5348 = vmatprep.subr.mxu0 0.0
    %5349 = vmatpush1.msra.mxu0 0.0
    %5350 = vmatprep.subr.mxu0 0.0
    %5351 = vmatpush1.msra.mxu0 0.0
    %5352 = vmatprep.subr.mxu0 0.0
    %5353 = vmatpush1.msra.mxu0 0.0
    %5354 = vmatprep.subr.mxu0 0.0
    %5355 = vmatpush1.msra.mxu0 0.0
    %5356 = vmatprep.subr.mxu0 0.0
    %5357 = vmatpush1.msra.mxu0 0.0
    %5358 = vmatprep.subr.mxu0 0.0
    %5359 = vmatpush1.msra.mxu0 0.0
    %5360 = vmatprep.subr.mxu0 0.0
    %5361 = vmatpush1.msra.mxu0 0.0
    %5362 = vmatprep.subr.mxu0 0.0
    %5363 = vmatpush1.msra.mxu0 0.0
    %5364 = vmatprep.subr.mxu0 0.0
    %5365 = vmatpush1.msra.mxu0 0.0
    %5366 = vmatprep.subr.mxu0 0.0
    %5367 = vmatpush1.msra.mxu0 0.0
    %5368 = vmatprep.subr.mxu0 0.0
    %5369 = vmatpush1.msra.mxu0 0.0
    %5370 = vmatprep.subr.mxu0 0.0
    %5371 = vmatpush1.msra.mxu0 0.0
    %5372 = vmatprep.subr.mxu0 0.0
    %5373 = vmatpush1.msra.mxu0 0.0
    %5374 = vmatprep.subr.mxu0 0.0
    %5375 = vmatpush1.msra.mxu0 0.0
    %5376 = vmatprep.subr.mxu0 0.0
    %5377 = vmatpush1.msra.mxu0 0.0
    %5378 = vmatprep.subr.mxu0 0.0
    %5379 = vmatpush1.msra.mxu0 0.0
    %5380 = vmatprep.subr.mxu0 0.0
    %5381 = vmatpush1.msra.mxu0 0.0
    %5382 = vmatprep.subr.mxu0 0.0
    %5383 = vmatpush1.msra.mxu0 0.0
    %5384 = vmatprep.subr.mxu0 0.0
    %5385 = vmatpush1.msra.mxu0 0.0
    %5386 = vmatprep.subr.mxu0 0.0
    %5387 = vmatpush1.msra.mxu0 0.0
    %5388 = vmatprep.mubr.f32.mxu0 0.0
    %5389 = vmatmul.mubr.f32.gmra.mrb[0].mxu0 %v5322
    %v5390 = vpop.f32.mrb[0].mxu0
    %v5391 = vadd.f32 0.0, %v5390
    %v5392 = vpop.f32.mrb[0].mxu0
    %5393 = vdwg.mxu0
    %5396 = vset.pattern.permute.xlu0 0
    %5397 = vperm.xlu0 %5396, %v5303
    %v5398 = vpop.permute.xlu0 %5397
    %5399 = vset.pattern.permute.xlu0 0
    %5400 = vperm.xlu0 %5399, %v5304
    %v5401 = vpop.permute.xlu0 %5400
    %v5402 = vlaneseq
    %v5403 = vshrl.u32 %v5402, 7
    %v5404 = vsub.s32 %v1767, %v5403
    %v5405 = vrot.slane %v5398, %v5404
    %v5406 = vlaneseq
    %v5407 = vshrl.u32 %v5406, 7
    %v5408 = vsub.s32 %v1772, %v5407
    %v5409 = vrot.slane %v5401, %v5408
    %v5410 = vsel %vm1777, %v5409, %v5405
    %v5411 = vsel %vm1890, %v5410, 0
    %5413 = vmatprep.subr.mxu0 0.0
    %5414 = vmatpush1.msra.mxu0 %v250
    %5415 = vmatprep.subr.mxu0 0.0
    %5416 = vmatpush1.msra.mxu0 %v1985
    %5417 = vmatprep.subr.mxu0 0.0
    %5418 = vmatpush1.msra.mxu0 0.0
    %5419 = vmatprep.subr.mxu0 0.0
    %5420 = vmatpush1.msra.mxu0 0.0
    %5421 = vmatprep.subr.mxu0 0.0
    %5422 = vmatpush1.msra.mxu0 0.0
    %5423 = vmatprep.subr.mxu0 0.0
    %5424 = vmatpush1.msra.mxu0 0.0
    %5425 = vmatprep.subr.mxu0 0.0
    %5426 = vmatpush1.msra.mxu0 0.0
    %5427 = vmatprep.subr.mxu0 0.0
    %5428 = vmatpush1.msra.mxu0 0.0
    %5429 = vmatprep.subr.mxu0 0.0
    %5430 = vmatpush1.msra.mxu0 0.0
    %5431 = vmatprep.subr.mxu0 0.0
    %5432 = vmatpush1.msra.mxu0 0.0
    %5433 = vmatprep.subr.mxu0 0.0
    %5434 = vmatpush1.msra.mxu0 0.0
    %5435 = vmatprep.subr.mxu0 0.0
    %5436 = vmatpush1.msra.mxu0 0.0
    %5437 = vmatprep.subr.mxu0 0.0
    %5438 = vmatpush1.msra.mxu0 0.0
    %5439 = vmatprep.subr.mxu0 0.0
    %5440 = vmatpush1.msra.mxu0 0.0
    %5441 = vmatprep.subr.mxu0 0.0
    %5442 = vmatpush1.msra.mxu0 0.0
    %5443 = vmatprep.subr.mxu0 0.0
    %5444 = vmatpush1.msra.mxu0 0.0
    %5445 = vmatprep.subr.mxu0 0.0
    %5446 = vmatpush1.msra.mxu0 0.0
    %5447 = vmatprep.subr.mxu0 0.0
    %5448 = vmatpush1.msra.mxu0 0.0
    %5449 = vmatprep.subr.mxu0 0.0
    %5450 = vmatpush1.msra.mxu0 0.0
    %5451 = vmatprep.subr.mxu0 0.0
    %5452 = vmatpush1.msra.mxu0 0.0
    %5453 = vmatprep.subr.mxu0 0.0
    %5454 = vmatpush1.msra.mxu0 0.0
    %5455 = vmatprep.subr.mxu0 0.0
    %5456 = vmatpush1.msra.mxu0 0.0
    %5457 = vmatprep.subr.mxu0 0.0
    %5458 = vmatpush1.msra.mxu0 0.0
    %5459 = vmatprep.subr.mxu0 0.0
    %5460 = vmatpush1.msra.mxu0 0.0
    %5461 = vmatprep.subr.mxu0 0.0
    %5462 = vmatpush1.msra.mxu0 0.0
    %5463 = vmatprep.subr.mxu0 0.0
    %5464 = vmatpush1.msra.mxu0 0.0
    %5465 = vmatprep.subr.mxu0 0.0
    %5466 = vmatpush1.msra.mxu0 0.0
    %5467 = vmatprep.subr.mxu0 0.0
    %5468 = vmatpush1.msra.mxu0 0.0
    %5469 = vmatprep.subr.mxu0 0.0
    %5470 = vmatpush1.msra.mxu0 0.0
    %5471 = vmatprep.subr.mxu0 0.0
    %5472 = vmatpush1.msra.mxu0 0.0
    %5473 = vmatprep.subr.mxu0 0.0
    %5474 = vmatpush1.msra.mxu0 0.0
    %5475 = vmatprep.subr.mxu0 0.0
    %5476 = vmatpush1.msra.mxu0 0.0
    %5477 = vmatprep.mubr.f32.mxu0 0.0
    %5478 = vmatmul.mubr.f32.gmra.mrb[0].mxu0 %v5411
    %v5479 = vpop.f32.mrb[0].mxu0
    %v5480 = vadd.f32 0.0, %v5479
    %v5481 = vpop.f32.mrb[0].mxu0
    %5482 = vdwg.mxu0
    %5483 = vmatprep.subr.mxu0 0.0
    %5484 = vmatpush1.msra.mxu0 %v1198
    %5485 = vmatprep.subr.mxu0 0.0
    %5486 = vmatpush1.msra.mxu0 %v1199
    %5487 = vmatprep.subr.mxu0 0.0
    %5488 = vmatpush1.msra.mxu0 %v1200
    %5489 = vmatprep.subr.mxu0 0.0
    %5490 = vmatpush1.msra.mxu0 %v1201
    %5491 = vmatprep.subr.mxu0 0.0
    %5492 = vmatpush1.msra.mxu0 0.0
    %5493 = vmatprep.subr.mxu0 0.0
    %5494 = vmatpush1.msra.mxu0 0.0
    %5495 = vmatprep.subr.mxu0 0.0
    %5496 = vmatpush1.msra.mxu0 0.0
    %5497 = vmatprep.subr.mxu0 0.0
    %5498 = vmatpush1.msra.mxu0 0.0
    %5499 = vmatprep.subr.mxu0 0.0
    %5500 = vmatpush1.msra.mxu0 0.0
    %5501 = vmatprep.subr.mxu0 0.0
    %5502 = vmatpush1.msra.mxu0 0.0
    %5503 = vmatprep.subr.mxu0 0.0
    %5504 = vmatpush1.msra.mxu0 0.0
    %5505 = vmatprep.subr.mxu0 0.0
    %5506 = vmatpush1.msra.mxu0 0.0
    %5507 = vmatprep.subr.mxu0 0.0
    %5508 = vmatpush1.msra.mxu0 0.0
    %5509 = vmatprep.subr.mxu0 0.0
    %5510 = vmatpush1.msra.mxu0 0.0
    %5511 = vmatprep.subr.mxu0 0.0
    %5512 = vmatpush1.msra.mxu0 0.0
    %5513 = vmatprep.subr.mxu0 0.0
    %5514 = vmatpush1.msra.mxu0 0.0
    %5515 = vmatprep.subr.mxu0 0.0
    %5516 = vmatpush1.msra.mxu0 0.0
    %5517 = vmatprep.subr.mxu0 0.0
    %5518 = vmatpush1.msra.mxu0 0.0
    %5519 = vmatprep.subr.mxu0 0.0
    %5520 = vmatpush1.msra.mxu0 0.0
    %5521 = vmatprep.subr.mxu0 0.0
    %5522 = vmatpush1.msra.mxu0 0.0
    %5523 = vmatprep.subr.mxu0 0.0
    %5524 = vmatpush1.msra.mxu0 0.0
    %5525 = vmatprep.subr.mxu0 0.0
    %5526 = vmatpush1.msra.mxu0 0.0
    %5527 = vmatprep.subr.mxu0 0.0
    %5528 = vmatpush1.msra.mxu0 0.0
    %5529 = vmatprep.subr.mxu0 0.0
    %5530 = vmatpush1.msra.mxu0 0.0
    %5531 = vmatprep.subr.mxu0 0.0
    %5532 = vmatpush1.msra.mxu0 0.0
    %5533 = vmatprep.subr.mxu0 0.0
    %5534 = vmatpush1.msra.mxu0 0.0
    %5535 = vmatprep.subr.mxu0 0.0
    %5536 = vmatpush1.msra.mxu0 0.0
    %5537 = vmatprep.subr.mxu0 0.0
    %5538 = vmatpush1.msra.mxu0 0.0
    %5539 = vmatprep.subr.mxu0 0.0
    %5540 = vmatpush1.msra.mxu0 0.0
    %5541 = vmatprep.subr.mxu0 0.0
    %5542 = vmatpush1.msra.mxu0 0.0
    %5543 = vmatprep.subr.mxu0 0.0
    %5544 = vmatpush1.msra.mxu0 0.0
    %5545 = vmatprep.subr.mxu0 0.0
    %5546 = vmatpush1.msra.mxu0 0.0
    %5547 = vmatprep.mubr.f32.mxu0 0.0
    %5548 = vmatmul.mubr.f32.gmra.mrb[0].mxu0 %v5055
    %v5549 = vpop.f32.mrb[0].mxu0
    %v5550 = vadd.f32 0.0, %v5549
    %v5551 = vpop.f32.mrb[0].mxu0
    %5552 = vdwg.mxu0
    %v5555 = vrot.slane %v5480, 7
    %v5556 = vsel %vm1788, %v5555, %v5391
    %v5557 = vsel %vm658, %v5556, 0
    %5559 = vmatprep.subr.mxu0 0.0
    %5560 = vmatpush1.msra.mxu0 %v1194
    %5561 = vmatprep.subr.mxu0 0.0
    %5562 = vmatpush1.msra.mxu0 %v1195
    %5563 = vmatprep.subr.mxu0 0.0
    %5564 = vmatpush1.msra.mxu0 %v1196
    %5565 = vmatprep.subr.mxu0 0.0
    %5566 = vmatpush1.msra.mxu0 %v1197
    %5567 = vmatprep.subr.mxu0 0.0
    %5568 = vmatpush1.msra.mxu0 0.0
    %5569 = vmatprep.subr.mxu0 0.0
    %5570 = vmatpush1.msra.mxu0 0.0
    %5571 = vmatprep.subr.mxu0 0.0
    %5572 = vmatpush1.msra.mxu0 0.0
    %5573 = vmatprep.subr.mxu0 0.0
    %5574 = vmatpush1.msra.mxu0 0.0
    %5575 = vmatprep.subr.mxu0 0.0
    %5576 = vmatpush1.msra.mxu0 0.0
    %5577 = vmatprep.subr.mxu0 0.0
    %5578 = vmatpush1.msra.mxu0 0.0
    %5579 = vmatprep.subr.mxu0 0.0
    %5580 = vmatpush1.msra.mxu0 0.0
    %5581 = vmatprep.subr.mxu0 0.0
    %5582 = vmatpush1.msra.mxu0 0.0
    %5583 = vmatprep.subr.mxu0 0.0
    %5584 = vmatpush1.msra.mxu0 0.0
    %5585 = vmatprep.subr.mxu0 0.0
    %5586 = vmatpush1.msra.mxu0 0.0
    %5587 = vmatprep.subr.mxu0 0.0
    %5588 = vmatpush1.msra.mxu0 0.0
    %5589 = vmatprep.subr.mxu0 0.0
    %5590 = vmatpush1.msra.mxu0 0.0
    %5591 = vmatprep.subr.mxu0 0.0
    %5592 = vmatpush1.msra.mxu0 0.0
    %5593 = vmatprep.subr.mxu0 0.0
    %5594 = vmatpush1.msra.mxu0 0.0
    %5595 = vmatprep.subr.mxu0 0.0
    %5596 = vmatpush1.msra.mxu0 0.0
    %5597 = vmatprep.subr.mxu0 0.0
    %5598 = vmatpush1.msra.mxu0 0.0
    %5599 = vmatprep.subr.mxu0 0.0
    %5600 = vmatpush1.msra.mxu0 0.0
    %5601 = vmatprep.subr.mxu0 0.0
    %5602 = vmatpush1.msra.mxu0 0.0
    %5603 = vmatprep.subr.mxu0 0.0
    %5604 = vmatpush1.msra.mxu0 0.0
    %5605 = vmatprep.subr.mxu0 0.0
    %5606 = vmatpush1.msra.mxu0 0.0
    %5607 = vmatprep.subr.mxu0 0.0
    %5608 = vmatpush1.msra.mxu0 0.0
    %5609 = vmatprep.subr.mxu0 0.0
    %5610 = vmatpush1.msra.mxu0 0.0
    %5611 = vmatprep.subr.mxu0 0.0
    %5612 = vmatpush1.msra.mxu0 0.0
    %5613 = vmatprep.subr.mxu0 0.0
    %5614 = vmatpush1.msra.mxu0 0.0
    %5615 = vmatprep.subr.mxu0 0.0
    %5616 = vmatpush1.msra.mxu0 0.0
    %5617 = vmatprep.subr.mxu0 0.0
    %5618 = vmatpush1.msra.mxu0 0.0
    %5619 = vmatprep.subr.mxu0 0.0
    %5620 = vmatpush1.msra.mxu0 0.0
    %5621 = vmatprep.subr.mxu0 0.0
    %5622 = vmatpush1.msra.mxu0 0.0
    %5623 = vmatprep.mubr.f32.mxu0 0.0
    %5624 = vmatmul.mubr.f32.gmra.mrb[0].mxu0 %v5557
    %v5625 = vpop.f32.mrb[0].mxu0
    %v5626 = vadd.f32 %v5550, %v5625
    %v5627 = vpop.f32.mrb[0].mxu0
    %5628 = vdwg.mxu0
    %5629 = vmatprep.subr.mxu0 0.0
    %5630 = vmatpush1.msra.mxu0 %v1202
    %5631 = vmatprep.subr.mxu0 0.0
    %5632 = vmatpush1.msra.mxu0 %v1203
    %5633 = vmatprep.subr.mxu0 0.0
    %5634 = vmatpush1.msra.mxu0 %v1204
    %5635 = vmatprep.subr.mxu0 0.0
    %5636 = vmatpush1.msra.mxu0 %v1205
    %5637 = vmatprep.subr.mxu0 0.0
    %5638 = vmatpush1.msra.mxu0 0.0
    %5639 = vmatprep.subr.mxu0 0.0
    %5640 = vmatpush1.msra.mxu0 0.0
    %5641 = vmatprep.subr.mxu0 0.0
    %5642 = vmatpush1.msra.mxu0 0.0
    %5643 = vmatprep.subr.mxu0 0.0
    %5644 = vmatpush1.msra.mxu0 0.0
    %5645 = vmatprep.subr.mxu0 0.0
    %5646 = vmatpush1.msra.mxu0 0.0
    %5647 = vmatprep.subr.mxu0 0.0
    %5648 = vmatpush1.msra.mxu0 0.0
    %5649 = vmatprep.subr.mxu0 0.0
    %5650 = vmatpush1.msra.mxu0 0.0
    %5651 = vmatprep.subr.mxu0 0.0
    %5652 = vmatpush1.msra.mxu0 0.0
    %5653 = vmatprep.subr.mxu0 0.0
    %5654 = vmatpush1.msra.mxu0 0.0
    %5655 = vmatprep.subr.mxu0 0.0
    %5656 = vmatpush1.msra.mxu0 0.0
    %5657 = vmatprep.subr.mxu0 0.0
    %5658 = vmatpush1.msra.mxu0 0.0
    %5659 = vmatprep.subr.mxu0 0.0
    %5660 = vmatpush1.msra.mxu0 0.0
    %5661 = vmatprep.subr.mxu0 0.0
    %5662 = vmatpush1.msra.mxu0 0.0
    %5663 = vmatprep.subr.mxu0 0.0
    %5664 = vmatpush1.msra.mxu0 0.0
    %5665 = vmatprep.subr.mxu0 0.0
    %5666 = vmatpush1.msra.mxu0 0.0
    %5667 = vmatprep.subr.mxu0 0.0
    %5668 = vmatpush1.msra.mxu0 0.0
    %5669 = vmatprep.subr.mxu0 0.0
    %5670 = vmatpush1.msra.mxu0 0.0
    %5671 = vmatprep.subr.mxu0 0.0
    %5672 = vmatpush1.msra.mxu0 0.0
    %5673 = vmatprep.subr.mxu0 0.0
    %5674 = vmatpush1.msra.mxu0 0.0
    %5675 = vmatprep.subr.mxu0 0.0
    %5676 = vmatpush1.msra.mxu0 0.0
    %5677 = vmatprep.subr.mxu0 0.0
    %5678 = vmatpush1.msra.mxu0 0.0
    %5679 = vmatprep.subr.mxu0 0.0
    %5680 = vmatpush1.msra.mxu0 0.0
    %5681 = vmatprep.subr.mxu0 0.0
    %5682 = vmatpush1.msra.mxu0 0.0
    %5683 = vmatprep.subr.mxu0 0.0
    %5684 = vmatpush1.msra.mxu0 0.0
    %5685 = vmatprep.subr.mxu0 0.0
    %5686 = vmatpush1.msra.mxu0 0.0
    %5687 = vmatprep.subr.mxu0 0.0
    %5688 = vmatpush1.msra.mxu0 0.0
    %5689 = vmatprep.subr.mxu0 0.0
    %5690 = vmatpush1.msra.mxu0 0.0
    %5691 = vmatprep.subr.mxu0 0.0
    %5692 = vmatpush1.msra.mxu0 0.0
    %5693 = vmatprep.mubr.f32.mxu0 0.0
    %5694 = vmatmul.mubr.f32.gmra.mrb[0].mxu0 %v4881
    %v5695 = vpop.f32.mrb[0].mxu0
    %v5696 = vadd.f32 0.0, %v5695
    %v5697 = vpop.f32.mrb[0].mxu0
    %5698 = vdwg.mxu0
    %v5699 = vadd.f32 %v5626, %v5696
    %v5700 = vadd.f32 %v5699, %v2278
    %v5701 = vxor.u32 %v5700, 2147483648
    %v5702 = vmul.f32 %v5701, 1.442695
    %v5703 = vpow.pop %v5702
    %v5704 = vadd.f32 %v5703, 1.0
    %v5705 = vrcp.pop %v5704
    %v5706 = vmul.f32 1.0, %v5705
    %v5707 = vtanh.pop %v5700
    %v5708 = vmul.f32 %v5706, %v4870
    %5710 = vrot.lane.b32.xlu0 %v5707, 64
    %v5711 = vpop.permute.xlu0 %5710
    %v5713 = vmul.f32 %v5706, %v5711
    %5715 = vrot.lane.b32.xlu0 %v5713, 32
    %v5716 = vpop.permute.xlu0 %5715
    %v5718 = vadd.f32 %v5708, %v5716
    %v5719 = vtanh.pop %v5718
    %5721 = vrot.lane.b32.xlu0 %v5719, 64
    %v5722 = vpop.permute.xlu0 %5721
    %v5724 = vmul.f32 %v5706, %v5722
    %v5725 = vadd.f32 %v1166, %v2306
    %5727 = vrot.lane.b32.xlu0 %v5724, 32
    %v5728 = vpop.permute.xlu0 %5727
    %v5729 = vsel %vm658, %v5728, 0
    %5731 = vmatprep.subr.mxu0 0.0
    %5732 = vmatpush1.msra.mxu0 %v1186
    %5733 = vmatprep.subr.mxu0 0.0
    %5734 = vmatpush1.msra.mxu0 %v1187
    %5735 = vmatprep.subr.mxu0 0.0
    %5736 = vmatpush1.msra.mxu0 %v1188
    %5737 = vmatprep.subr.mxu0 0.0
    %5738 = vmatpush1.msra.mxu0 %v1189
    %5739 = vmatprep.subr.mxu0 0.0
    %5740 = vmatpush1.msra.mxu0 0.0
    %5741 = vmatprep.subr.mxu0 0.0
    %5742 = vmatpush1.msra.mxu0 0.0
    %5743 = vmatprep.subr.mxu0 0.0
    %5744 = vmatpush1.msra.mxu0 0.0
    %5745 = vmatprep.subr.mxu0 0.0
    %5746 = vmatpush1.msra.mxu0 0.0
    %5747 = vmatprep.subr.mxu0 0.0
    %5748 = vmatpush1.msra.mxu0 0.0
    %5749 = vmatprep.subr.mxu0 0.0
    %5750 = vmatpush1.msra.mxu0 0.0
    %5751 = vmatprep.subr.mxu0 0.0
    %5752 = vmatpush1.msra.mxu0 0.0
    %5753 = vmatprep.subr.mxu0 0.0
    %5754 = vmatpush1.msra.mxu0 0.0
    %5755 = vmatprep.subr.mxu0 0.0
    %5756 = vmatpush1.msra.mxu0 0.0
    %5757 = vmatprep.subr.mxu0 0.0
    %5758 = vmatpush1.msra.mxu0 0.0
    %5759 = vmatprep.subr.mxu0 0.0
    %5760 = vmatpush1.msra.mxu0 0.0
    %5761 = vmatprep.subr.mxu0 0.0
    %5762 = vmatpush1.msra.mxu0 0.0
    %5763 = vmatprep.subr.mxu0 0.0
    %5764 = vmatpush1.msra.mxu0 0.0
    %5765 = vmatprep.subr.mxu0 0.0
    %5766 = vmatpush1.msra.mxu0 0.0
    %5767 = vmatprep.subr.mxu0 0.0
    %5768 = vmatpush1.msra.mxu0 0.0
    %5769 = vmatprep.subr.mxu0 0.0
    %5770 = vmatpush1.msra.mxu0 0.0
    %5771 = vmatprep.subr.mxu0 0.0
    %5772 = vmatpush1.msra.mxu0 0.0
    %5773 = vmatprep.subr.mxu0 0.0
    %5774 = vmatpush1.msra.mxu0 0.0
    %5775 = vmatprep.subr.mxu0 0.0
    %5776 = vmatpush1.msra.mxu0 0.0
    %5777 = vmatprep.subr.mxu0 0.0
    %5778 = vmatpush1.msra.mxu0 0.0
    %5779 = vmatprep.subr.mxu0 0.0
    %5780 = vmatpush1.msra.mxu0 0.0
    %5781 = vmatprep.subr.mxu0 0.0
    %5782 = vmatpush1.msra.mxu0 0.0
    %5783 = vmatprep.subr.mxu0 0.0
    %5784 = vmatpush1.msra.mxu0 0.0
    %5785 = vmatprep.subr.mxu0 0.0
    %5786 = vmatpush1.msra.mxu0 0.0
    %5787 = vmatprep.subr.mxu0 0.0
    %5788 = vmatpush1.msra.mxu0 0.0
    %5789 = vmatprep.subr.mxu0 0.0
    %5790 = vmatpush1.msra.mxu0 0.0
    %5791 = vmatprep.subr.mxu0 0.0
    %5792 = vmatpush1.msra.mxu0 0.0
    %5793 = vmatprep.subr.mxu0 0.0
    %5794 = vmatpush1.msra.mxu0 0.0
    %5795 = vmatprep.mubr.f32.mxu0 0.0
    %5796 = vmatmul.mubr.f32.gmra.mrb[0].mxu0 %v5729
    %v5797 = vpop.f32.mrb[0].mxu0
    %v5798 = vadd.f32 0.0, %v5797
    %v5799 = vpop.f32.mrb[0].mxu0
    %5800 = vdwg.mxu0
    %v5802 = vrot.slane %v5798, 6
    %v5804 = vadd.f32 %v5725, %v5802
    %5805 = vmatprep.subr.mxu0 0.0
    %5806 = vmatpush1.msra.mxu0 %v1190
    %5807 = vmatprep.subr.mxu0 0.0
    %5808 = vmatpush1.msra.mxu0 %v1191
    %5809 = vmatprep.subr.mxu0 0.0
    %5810 = vmatpush1.msra.mxu0 %v1192
    %5811 = vmatprep.subr.mxu0 0.0
    %5812 = vmatpush1.msra.mxu0 %v1193
    %5813 = vmatprep.subr.mxu0 0.0
    %5814 = vmatpush1.msra.mxu0 0.0
    %5815 = vmatprep.subr.mxu0 0.0
    %5816 = vmatpush1.msra.mxu0 0.0
    %5817 = vmatprep.subr.mxu0 0.0
    %5818 = vmatpush1.msra.mxu0 0.0
    %5819 = vmatprep.subr.mxu0 0.0
    %5820 = vmatpush1.msra.mxu0 0.0
    %5821 = vmatprep.subr.mxu0 0.0
    %5822 = vmatpush1.msra.mxu0 0.0
    %5823 = vmatprep.subr.mxu0 0.0
    %5824 = vmatpush1.msra.mxu0 0.0
    %5825 = vmatprep.subr.mxu0 0.0
    %5826 = vmatpush1.msra.mxu0 0.0
    %5827 = vmatprep.subr.mxu0 0.0
    %5828 = vmatpush1.msra.mxu0 0.0
    %5829 = vmatprep.subr.mxu0 0.0
    %5830 = vmatpush1.msra.mxu0 0.0
    %5831 = vmatprep.subr.mxu0 0.0
    %5832 = vmatpush1.msra.mxu0 0.0
    %5833 = vmatprep.subr.mxu0 0.0
    %5834 = vmatpush1.msra.mxu0 0.0
    %5835 = vmatprep.subr.mxu0 0.0
    %5836 = vmatpush1.msra.mxu0 0.0
    %5837 = vmatprep.subr.mxu0 0.0
    %5838 = vmatpush1.msra.mxu0 0.0
    %5839 = vmatprep.subr.mxu0 0.0
    %5840 = vmatpush1.msra.mxu0 0.0
    %5841 = vmatprep.subr.mxu0 0.0
    %5842 = vmatpush1.msra.mxu0 0.0
    %5843 = vmatprep.subr.mxu0 0.0
    %5844 = vmatpush1.msra.mxu0 0.0
    %5845 = vmatprep.subr.mxu0 0.0
    %5846 = vmatpush1.msra.mxu0 0.0
    %5847 = vmatprep.subr.mxu0 0.0
    %5848 = vmatpush1.msra.mxu0 0.0
    %5849 = vmatprep.subr.mxu0 0.0
    %5850 = vmatpush1.msra.mxu0 0.0
    %5851 = vmatprep.subr.mxu0 0.0
    %5852 = vmatpush1.msra.mxu0 0.0
    %5853 = vmatprep.subr.mxu0 0.0
    %5854 = vmatpush1.msra.mxu0 0.0
    %5855 = vmatprep.subr.mxu0 0.0
    %5856 = vmatpush1.msra.mxu0 0.0
    %5857 = vmatprep.subr.mxu0 0.0
    %5858 = vmatpush1.msra.mxu0 0.0
    %5859 = vmatprep.subr.mxu0 0.0
    %5860 = vmatpush1.msra.mxu0 0.0
    %5861 = vmatprep.subr.mxu0 0.0
    %5862 = vmatpush1.msra.mxu0 0.0
    %5863 = vmatprep.subr.mxu0 0.0
    %5864 = vmatpush1.msra.mxu0 0.0
    %5865 = vmatprep.subr.mxu0 0.0
    %5866 = vmatpush1.msra.mxu0 0.0
    %5867 = vmatprep.subr.mxu0 0.0
    %5868 = vmatpush1.msra.mxu0 0.0
    %5869 = vmatprep.mubr.f32.mxu0 0.0
    %5870 = vmatmul.mubr.f32.gmra.mrb[0].mxu0 %v5055
    %v5871 = vpop.f32.mrb[0].mxu0
    %v5872 = vadd.f32 0.0, %v5871
    %v5873 = vpop.f32.mrb[0].mxu0
    %5874 = vdwg.mxu0
    %v5876 = vrot.slane %v5872, 6
    %v5878 = vadd.f32 %v5804, %v5876
    %v5879 = vxor.u32 %v5878, 2147483648
    %v5880 = vmul.f32 %v5879, 1.442695
    %v5881 = vpow.pop %v5880
    %v5882 = vadd.f32 %v5881, 1.0
    %v5883 = vrcp.pop %v5882
    %v5884 = vmul.f32 1.0, %v5883
    %v5885 = vtanh.pop %v5878
    %v5887 = vrot.slane %v5045, 6
    %v5889 = vmul.f32 %v5884, %v5887
    %5891 = vrot.lane.b32.xlu0 %v5885, 64
    %v5892 = vpop.permute.xlu0 %5891
    %v5894 = vmul.f32 %v5884, %v5892
    %5896 = vrot.lane.b32.xlu0 %v5894, 32
    %v5897 = vpop.permute.xlu0 %5896
    %v5899 = vadd.f32 %v5889, %v5897
    %v5900 = vtanh.pop %v5899
    %5902 = vrot.lane.b32.xlu0 %v5900, 64
    %v5903 = vpop.permute.xlu0 %5902
    %v5905 = vmul.f32 %v5884, %v5903
    %v5907 = vrot.slane %v5905, 2
    %5908 = vrot.lane.b32.xlu0 %v5907, 32
    %v5909 = vpop.permute.xlu0 %5908
    %v5910 = vsel %vm658, %v5909, 0
    %5912 = vmatprep.subr.mxu0 0.0
    %5913 = vmatpush1.msra.mxu0 %v1207
    %5914 = vmatprep.subr.mxu0 0.0
    %5915 = vmatpush1.msra.mxu0 %v1208
    %5916 = vmatprep.subr.mxu0 0.0
    %5917 = vmatpush1.msra.mxu0 %v1209
    %5918 = vmatprep.subr.mxu0 0.0
    %5919 = vmatpush1.msra.mxu0 %v1210
    %5920 = vmatprep.subr.mxu0 0.0
    %5921 = vmatpush1.msra.mxu0 0.0
    %5922 = vmatprep.subr.mxu0 0.0
    %5923 = vmatpush1.msra.mxu0 0.0
    %5924 = vmatprep.subr.mxu0 0.0
    %5925 = vmatpush1.msra.mxu0 0.0
    %5926 = vmatprep.subr.mxu0 0.0
    %5927 = vmatpush1.msra.mxu0 0.0
    %5928 = vmatprep.subr.mxu0 0.0
    %5929 = vmatpush1.msra.mxu0 0.0
    %5930 = vmatprep.subr.mxu0 0.0
    %5931 = vmatpush1.msra.mxu0 0.0
    %5932 = vmatprep.subr.mxu0 0.0
    %5933 = vmatpush1.msra.mxu0 0.0
    %5934 = vmatprep.subr.mxu0 0.0
    %5935 = vmatpush1.msra.mxu0 0.0
    %5936 = vmatprep.subr.mxu0 0.0
    %5937 = vmatpush1.msra.mxu0 0.0
    %5938 = vmatprep.subr.mxu0 0.0
    %5939 = vmatpush1.msra.mxu0 0.0
    %5940 = vmatprep.subr.mxu0 0.0
    %5941 = vmatpush1.msra.mxu0 0.0
    %5942 = vmatprep.subr.mxu0 0.0
    %5943 = vmatpush1.msra.mxu0 0.0
    %5944 = vmatprep.subr.mxu0 0.0
    %5945 = vmatpush1.msra.mxu0 0.0
    %5946 = vmatprep.subr.mxu0 0.0
    %5947 = vmatpush1.msra.mxu0 0.0
    %5948 = vmatprep.subr.mxu0 0.0
    %5949 = vmatpush1.msra.mxu0 0.0
    %5950 = vmatprep.subr.mxu0 0.0
    %5951 = vmatpush1.msra.mxu0 0.0
    %5952 = vmatprep.subr.mxu0 0.0
    %5953 = vmatpush1.msra.mxu0 0.0
    %5954 = vmatprep.subr.mxu0 0.0
    %5955 = vmatpush1.msra.mxu0 0.0
    %5956 = vmatprep.subr.mxu0 0.0
    %5957 = vmatpush1.msra.mxu0 0.0
    %5958 = vmatprep.subr.mxu0 0.0
    %5959 = vmatpush1.msra.mxu0 0.0
    %5960 = vmatprep.subr.mxu0 0.0
    %5961 = vmatpush1.msra.mxu0 0.0
    %5962 = vmatprep.subr.mxu0 0.0
    %5963 = vmatpush1.msra.mxu0 0.0
    %5964 = vmatprep.subr.mxu0 0.0
    %5965 = vmatpush1.msra.mxu0 0.0
    %5966 = vmatprep.subr.mxu0 0.0
    %5967 = vmatpush1.msra.mxu0 0.0
    %5968 = vmatprep.subr.mxu0 0.0
    %5969 = vmatpush1.msra.mxu0 0.0
    %5970 = vmatprep.subr.mxu0 0.0
    %5971 = vmatpush1.msra.mxu0 0.0
    %5972 = vmatprep.subr.mxu0 0.0
    %5973 = vmatpush1.msra.mxu0 0.0
    %5974 = vmatprep.subr.mxu0 0.0
    %5975 = vmatpush1.msra.mxu0 0.0
    %5976 = vmatprep.mubr.f32.mxu0 0.0
    %5977 = vmatmul.mubr.f32.gmra.mrb[0].mxu0 %v5910
    %v5978 = vpop.f32.mrb[0].mxu0
    %v5979 = vadd.f32 %v1386, %v5978
    %v5980 = vpop.f32.mrb[0].mxu0
    %5981 = vdwg.mxu0
    %v5984 = vunpack.c.l.s4 1966171168
    %v5985 = vunpack.c.0.s8 %v5984
    %v5986 = vlaneseq
    %v5987 = vshrl.u32 %v5986, 7
    %v5988 = vsub.s32 %v5985, %v5987
    %v5989 = vrot.slane %v5979, %v5988
    %v5990 = vcombine.high %v5989, %v5989
    %v5992 = vunpack.c.l.s4 1966171168
    %v5993 = vunpack.c.0.s8 %v5992
    %v5994 = vlaneseq
    %v5995 = vshrl.u32 %v5994, 7
    %v5996 = vsub.s32 %v5993, %v5995
    %v5997 = vrot.slane %v5989, %v5996
    %v5999 = vunpack.c.l.s4 1966171168
    %v6000 = vunpack.c.0.s8 %v5999
    %v6001 = vlaneseq
    %v6002 = vshrl.u32 %v6001, 7
    %v6003 = vsub.s32 %v6000, %v6002
    %v6004 = vrot.slane %v5990, %v6003
    %v6005 = vlaneseq
    %v6006 = vshrl.u32 %v6005, 7
    %v6007 = vsub.s32 0, %v6006
    %v6008 = vrot.slane %v5997, %v6007
    %v6009 = vlaneseq
    %v6010 = vshrl.u32 %v6009, 7
    %v6011 = vsub.s32 0, %v6010
    %v6012 = vrot.slane %v6004, %v6011
    %v6015 = vadd.f32 %v6008, %v1544
    %v6016 = vadd.f32 %v6008, %v1592
    %v6017 = vadd.f32 %v6012, %v1641
    %v6018 = vadd.f32 %v6012, %v1689
    %v6019 = vtanh.pop %v6015
    %v6020 = vtanh.pop %v6016
    %v6021 = vtanh.pop %v6017
    %v6022 = vtanh.pop %v6018
    %v6023 = vmul.f32 %v6019, %v1179
    %v6024 = vmul.f32 %v6020, %v1179
    %v6025 = vmul.f32 %v6021, %v1179
    %v6026 = vmul.f32 %v6022, %v1179
    %v6027 = vsel %vm658, %v6023, 0.0
    %6028 = vadd.xlane.f32.xlu0 %v6027
    %v6029 = vpop.xlane.xlu0 %6028
    %v6030 = vsel %vm1709, %v6024, 0.0
    %6031 = vadd.xlane.f32.xlu0 %v6030
    %v6032 = vpop.xlane.xlu0 %6031
    %v6033 = vsel %vm658, %v6025, 0.0
    %6034 = vadd.xlane.f32.xlu0 %v6033
    %v6035 = vpop.xlane.xlu0 %6034
    %v6036 = vsel %vm1709, %v6026, 0.0
    %6037 = vadd.xlane.f32.xlu0 %v6036
    %v6038 = vpop.xlane.xlu0 %6037
    %v6039 = vadd.f32 %v6029, %v1726
    %v6040 = vadd.f32 %v6032, %v1730
    %v6041 = vadd.f32 %v6035, %v1737
    %v6042 = vadd.f32 %v6038, %v1741
    %6047 = vset.pattern.permute.xlu0 0
    %6048 = vperm.xlu0 %6047, %v6039
    %v6049 = vpop.permute.xlu0 %6048
    %6050 = vset.pattern.permute.xlu0 0
    %6051 = vperm.xlu0 %6050, %v6040
    %v6052 = vpop.permute.xlu0 %6051
    %6053 = vset.pattern.permute.xlu0 0
    %6054 = vperm.xlu0 %6053, %v6041
    %v6055 = vpop.permute.xlu0 %6054
    %6056 = vset.pattern.permute.xlu0 0
    %6057 = vperm.xlu0 %6056, %v6042
    %v6058 = vpop.permute.xlu0 %6057
    %v6059 = vlaneseq
    %v6060 = vshrl.u32 %v6059, 7
    %v6061 = vsub.s32 %v1767, %v6060
    %v6062 = vrot.slane %v6049, %v6061
    %v6063 = vlaneseq
    %v6064 = vshrl.u32 %v6063, 7
    %v6065 = vsub.s32 %v1772, %v6064
    %v6066 = vrot.slane %v6052, %v6065
    %v6067 = vsel %vm1777, %v6066, %v6062
    %v6068 = vlaneseq
    %v6069 = vshrl.u32 %v6068, 7
    %v6070 = vsub.s32 %v1767, %v6069
    %v6071 = vrot.slane %v6055, %v6070
    %v6072 = vlaneseq
    %v6073 = vshrl.u32 %v6072, 7
    %v6074 = vsub.s32 %v1772, %v6073
    %v6075 = vrot.slane %v6058, %v6074
    %v6076 = vsel %vm1777, %v6075, %v6071
    %v6077 = vsel %vm1788, %v6076, %v6067
    %v6079 = vsel %vm1791, %v6077, -inf
    %6080 = vmax.xlane.f32.xlu0 %v6079
    %v6081 = vpop.xlane.xlu0 %6080
    %v6083 = vlaneseq
    %v6084 = vshrl.u32 %v6083, 7
    %v6085 = vsub.s32 0, %v6084
    %v6086 = vrot.slane %v6081, %v6085
    %v6087 = vlaneseq
    %v6088 = vshrl.u32 %v6087, 7
    %v6089 = vsub.s32 1, %v6088
    %v6090 = vrot.slane %v6081, %v6089
    %v6093 = vsub.f32 %v6039, %v6086
    %v6094 = vsub.f32 %v6040, %v6086
    %v6095 = vsub.f32 %v6041, %v6090
    %v6096 = vsub.f32 %v6042, %v6090
    %v6097 = vmul.f32 %v6093, 1.442695
    %v6098 = vpow.pop %v6097
    %v6099 = vmul.f32 %v6094, 1.442695
    %v6100 = vpow.pop %v6099
    %v6101 = vmul.f32 %v6095, 1.442695
    %v6102 = vpow.pop %v6101
    %v6103 = vmul.f32 %v6096, 1.442695
    %v6104 = vpow.pop %v6103
    %6109 = vset.pattern.permute.xlu0 0
    %6110 = vperm.xlu0 %6109, %v6098
    %v6111 = vpop.permute.xlu0 %6110
    %6112 = vset.pattern.permute.xlu0 0
    %6113 = vperm.xlu0 %6112, %v6100
    %v6114 = vpop.permute.xlu0 %6113
    %6115 = vset.pattern.permute.xlu0 0
    %6116 = vperm.xlu0 %6115, %v6102
    %v6117 = vpop.permute.xlu0 %6116
    %6118 = vset.pattern.permute.xlu0 0
    %6119 = vperm.xlu0 %6118, %v6104
    %v6120 = vpop.permute.xlu0 %6119
    %v6121 = vlaneseq
    %v6122 = vshrl.u32 %v6121, 7
    %v6123 = vsub.s32 %v1767, %v6122
    %v6124 = vrot.slane %v6111, %v6123
    %v6125 = vlaneseq
    %v6126 = vshrl.u32 %v6125, 7
    %v6127 = vsub.s32 %v1772, %v6126
    %v6128 = vrot.slane %v6114, %v6127
    %v6129 = vsel %vm1777, %v6128, %v6124
    %v6130 = vlaneseq
    %v6131 = vshrl.u32 %v6130, 7
    %v6132 = vsub.s32 %v1767, %v6131
    %v6133 = vrot.slane %v6117, %v6132
    %v6134 = vlaneseq
    %v6135 = vshrl.u32 %v6134, 7
    %v6136 = vsub.s32 %v1772, %v6135
    %v6137 = vrot.slane %v6120, %v6136
    %v6138 = vsel %vm1777, %v6137, %v6133
    %v6139 = vsel %vm1788, %v6138, %v6129
    %v6141 = vsel %vm1791, %v6139, 0.0
    %6142 = vadd.xlane.f32.xlu0 %v6141
    %v6143 = vpop.xlane.xlu0 %6142
    %v6144 = vrcp.pop %v6143
    %v6146 = vlaneseq
    %v6147 = vshrl.u32 %v6146, 7
    %v6148 = vsub.s32 0, %v6147
    %v6149 = vrot.slane %v6144, %v6148
    %v6150 = vlaneseq
    %v6151 = vshrl.u32 %v6150, 7
    %v6152 = vsub.s32 1, %v6151
    %v6153 = vrot.slane %v6144, %v6152
    %v6156 = vmul.f32 %v6098, %v6149
    %v6157 = vmul.f32 %v6100, %v6149
    %v6158 = vmul.f32 %v6102, %v6153
    %v6159 = vmul.f32 %v6104, %v6153
    %6162 = vset.pattern.permute.xlu0 0
    %6163 = vperm.xlu0 %6162, %v6156
    %v6164 = vpop.permute.xlu0 %6163
    %6165 = vset.pattern.permute.xlu0 0
    %6166 = vperm.xlu0 %6165, %v6157
    %v6167 = vpop.permute.xlu0 %6166
    %v6168 = vlaneseq
    %v6169 = vshrl.u32 %v6168, 7
    %v6170 = vsub.s32 %v1767, %v6169
    %v6171 = vrot.slane %v6164, %v6170
    %v6172 = vlaneseq
    %v6173 = vshrl.u32 %v6172, 7
    %v6174 = vsub.s32 %v1772, %v6173
    %v6175 = vrot.slane %v6167, %v6174
    %v6176 = vsel %vm1777, %v6175, %v6171
    %v6177 = vsel %vm1890, %v6176, 0
    %6179 = vmatprep.subr.mxu0 0.0
    %6180 = vmatpush1.msra.mxu0 %v248
    %6181 = vmatprep.subr.mxu0 0.0
    %6182 = vmatpush1.msra.mxu0 %v1894
    %6183 = vmatprep.subr.mxu0 0.0
    %6184 = vmatpush1.msra.mxu0 0.0
    %6185 = vmatprep.subr.mxu0 0.0
    %6186 = vmatpush1.msra.mxu0 0.0
    %6187 = vmatprep.subr.mxu0 0.0
    %6188 = vmatpush1.msra.mxu0 0.0
    %6189 = vmatprep.subr.mxu0 0.0
    %6190 = vmatpush1.msra.mxu0 0.0
    %6191 = vmatprep.subr.mxu0 0.0
    %6192 = vmatpush1.msra.mxu0 0.0
    %6193 = vmatprep.subr.mxu0 0.0
    %6194 = vmatpush1.msra.mxu0 0.0
    %6195 = vmatprep.subr.mxu0 0.0
    %6196 = vmatpush1.msra.mxu0 0.0
    %6197 = vmatprep.subr.mxu0 0.0
    %6198 = vmatpush1.msra.mxu0 0.0
    %6199 = vmatprep.subr.mxu0 0.0
    %6200 = vmatpush1.msra.mxu0 0.0
    %6201 = vmatprep.subr.mxu0 0.0
    %6202 = vmatpush1.msra.mxu0 0.0
    %6203 = vmatprep.subr.mxu0 0.0
    %6204 = vmatpush1.msra.mxu0 0.0
    %6205 = vmatprep.subr.mxu0 0.0
    %6206 = vmatpush1.msra.mxu0 0.0
    %6207 = vmatprep.subr.mxu0 0.0
    %6208 = vmatpush1.msra.mxu0 0.0
    %6209 = vmatprep.subr.mxu0 0.0
    %6210 = vmatpush1.msra.mxu0 0.0
    %6211 = vmatprep.subr.mxu0 0.0
    %6212 = vmatpush1.msra.mxu0 0.0
    %6213 = vmatprep.subr.mxu0 0.0
    %6214 = vmatpush1.msra.mxu0 0.0
    %6215 = vmatprep.subr.mxu0 0.0
    %6216 = vmatpush1.msra.mxu0 0.0
    %6217 = vmatprep.subr.mxu0 0.0
    %6218 = vmatpush1.msra.mxu0 0.0
    %6219 = vmatprep.subr.mxu0 0.0
    %6220 = vmatpush1.msra.mxu0 0.0
    %6221 = vmatprep.subr.mxu0 0.0
    %6222 = vmatpush1.msra.mxu0 0.0
    %6223 = vmatprep.subr.mxu0 0.0
    %6224 = vmatpush1.msra.mxu0 0.0
    %6225 = vmatprep.subr.mxu0 0.0
    %6226 = vmatpush1.msra.mxu0 0.0
    %6227 = vmatprep.subr.mxu0 0.0
    %6228 = vmatpush1.msra.mxu0 0.0
    %6229 = vmatprep.subr.mxu0 0.0
    %6230 = vmatpush1.msra.mxu0 0.0
    %6231 = vmatprep.subr.mxu0 0.0
    %6232 = vmatpush1.msra.mxu0 0.0
    %6233 = vmatprep.subr.mxu0 0.0
    %6234 = vmatpush1.msra.mxu0 0.0
    %6235 = vmatprep.subr.mxu0 0.0
    %6236 = vmatpush1.msra.mxu0 0.0
    %6237 = vmatprep.subr.mxu0 0.0
    %6238 = vmatpush1.msra.mxu0 0.0
    %6239 = vmatprep.subr.mxu0 0.0
    %6240 = vmatpush1.msra.mxu0 0.0
    %6241 = vmatprep.subr.mxu0 0.0
    %6242 = vmatpush1.msra.mxu0 0.0
    %6243 = vmatprep.mubr.f32.mxu0 0.0
    %6244 = vmatmul.mubr.f32.gmra.mrb[0].mxu0 %v6177
    %v6245 = vpop.f32.mrb[0].mxu0
    %v6246 = vadd.f32 0.0, %v6245
    %v6247 = vpop.f32.mrb[0].mxu0
    %6248 = vdwg.mxu0
    %6251 = vset.pattern.permute.xlu0 0
    %6252 = vperm.xlu0 %6251, %v6158
    %v6253 = vpop.permute.xlu0 %6252
    %6254 = vset.pattern.permute.xlu0 0
    %6255 = vperm.xlu0 %6254, %v6159
    %v6256 = vpop.permute.xlu0 %6255
    %v6257 = vlaneseq
    %v6258 = vshrl.u32 %v6257, 7
    %v6259 = vsub.s32 %v1767, %v6258
    %v6260 = vrot.slane %v6253, %v6259
    %v6261 = vlaneseq
    %v6262 = vshrl.u32 %v6261, 7
    %v6263 = vsub.s32 %v1772, %v6262
    %v6264 = vrot.slane %v6256, %v6263
    %v6265 = vsel %vm1777, %v6264, %v6260
    %v6266 = vsel %vm1890, %v6265, 0
    %6268 = vmatprep.subr.mxu0 0.0
    %6269 = vmatpush1.msra.mxu0 %v250
    %6270 = vmatprep.subr.mxu0 0.0
    %6271 = vmatpush1.msra.mxu0 %v1985
    %6272 = vmatprep.subr.mxu0 0.0
    %6273 = vmatpush1.msra.mxu0 0.0
    %6274 = vmatprep.subr.mxu0 0.0
    %6275 = vmatpush1.msra.mxu0 0.0
    %6276 = vmatprep.subr.mxu0 0.0
    %6277 = vmatpush1.msra.mxu0 0.0
    %6278 = vmatprep.subr.mxu0 0.0
    %6279 = vmatpush1.msra.mxu0 0.0
    %6280 = vmatprep.subr.mxu0 0.0
    %6281 = vmatpush1.msra.mxu0 0.0
    %6282 = vmatprep.subr.mxu0 0.0
    %6283 = vmatpush1.msra.mxu0 0.0
    %6284 = vmatprep.subr.mxu0 0.0
    %6285 = vmatpush1.msra.mxu0 0.0
    %6286 = vmatprep.subr.mxu0 0.0
    %6287 = vmatpush1.msra.mxu0 0.0
    %6288 = vmatprep.subr.mxu0 0.0
    %6289 = vmatpush1.msra.mxu0 0.0
    %6290 = vmatprep.subr.mxu0 0.0
    %6291 = vmatpush1.msra.mxu0 0.0
    %6292 = vmatprep.subr.mxu0 0.0
    %6293 = vmatpush1.msra.mxu0 0.0
    %6294 = vmatprep.subr.mxu0 0.0
    %6295 = vmatpush1.msra.mxu0 0.0
    %6296 = vmatprep.subr.mxu0 0.0
    %6297 = vmatpush1.msra.mxu0 0.0
    %6298 = vmatprep.subr.mxu0 0.0
    %6299 = vmatpush1.msra.mxu0 0.0
    %6300 = vmatprep.subr.mxu0 0.0
    %6301 = vmatpush1.msra.mxu0 0.0
    %6302 = vmatprep.subr.mxu0 0.0
    %6303 = vmatpush1.msra.mxu0 0.0
    %6304 = vmatprep.subr.mxu0 0.0
    %6305 = vmatpush1.msra.mxu0 0.0
    %6306 = vmatprep.subr.mxu0 0.0
    %6307 = vmatpush1.msra.mxu0 0.0
    %6308 = vmatprep.subr.mxu0 0.0
    %6309 = vmatpush1.msra.mxu0 0.0
    %6310 = vmatprep.subr.mxu0 0.0
    %6311 = vmatpush1.msra.mxu0 0.0
    %6312 = vmatprep.subr.mxu0 0.0
    %6313 = vmatpush1.msra.mxu0 0.0
    %6314 = vmatprep.subr.mxu0 0.0
    %6315 = vmatpush1.msra.mxu0 0.0
    %6316 = vmatprep.subr.mxu0 0.0
    %6317 = vmatpush1.msra.mxu0 0.0
    %6318 = vmatprep.subr.mxu0 0.0
    %6319 = vmatpush1.msra.mxu0 0.0
    %6320 = vmatprep.subr.mxu0 0.0
    %6321 = vmatpush1.msra.mxu0 0.0
    %6322 = vmatprep.subr.mxu0 0.0
    %6323 = vmatpush1.msra.mxu0 0.0
    %6324 = vmatprep.subr.mxu0 0.0
    %6325 = vmatpush1.msra.mxu0 0.0
    %6326 = vmatprep.subr.mxu0 0.0
    %6327 = vmatpush1.msra.mxu0 0.0
    %6328 = vmatprep.subr.mxu0 0.0
    %6329 = vmatpush1.msra.mxu0 0.0
    %6330 = vmatprep.subr.mxu0 0.0
    %6331 = vmatpush1.msra.mxu0 0.0
    %6332 = vmatprep.mubr.f32.mxu0 0.0
    %6333 = vmatmul.mubr.f32.gmra.mrb[0].mxu0 %v6266
    %v6334 = vpop.f32.mrb[0].mxu0
    %v6335 = vadd.f32 0.0, %v6334
    %v6336 = vpop.f32.mrb[0].mxu0
    %6337 = vdwg.mxu0
    %6338 = vmatprep.subr.mxu0 0.0
    %6339 = vmatpush1.msra.mxu0 %v1198
    %6340 = vmatprep.subr.mxu0 0.0
    %6341 = vmatpush1.msra.mxu0 %v1199
    %6342 = vmatprep.subr.mxu0 0.0
    %6343 = vmatpush1.msra.mxu0 %v1200
    %6344 = vmatprep.subr.mxu0 0.0
    %6345 = vmatpush1.msra.mxu0 %v1201
    %6346 = vmatprep.subr.mxu0 0.0
    %6347 = vmatpush1.msra.mxu0 0.0
    %6348 = vmatprep.subr.mxu0 0.0
    %6349 = vmatpush1.msra.mxu0 0.0
    %6350 = vmatprep.subr.mxu0 0.0
    %6351 = vmatpush1.msra.mxu0 0.0
    %6352 = vmatprep.subr.mxu0 0.0
    %6353 = vmatpush1.msra.mxu0 0.0
    %6354 = vmatprep.subr.mxu0 0.0
    %6355 = vmatpush1.msra.mxu0 0.0
    %6356 = vmatprep.subr.mxu0 0.0
    %6357 = vmatpush1.msra.mxu0 0.0
    %6358 = vmatprep.subr.mxu0 0.0
    %6359 = vmatpush1.msra.mxu0 0.0
    %6360 = vmatprep.subr.mxu0 0.0
    %6361 = vmatpush1.msra.mxu0 0.0
    %6362 = vmatprep.subr.mxu0 0.0
    %6363 = vmatpush1.msra.mxu0 0.0
    %6364 = vmatprep.subr.mxu0 0.0
    %6365 = vmatpush1.msra.mxu0 0.0
    %6366 = vmatprep.subr.mxu0 0.0
    %6367 = vmatpush1.msra.mxu0 0.0
    %6368 = vmatprep.subr.mxu0 0.0
    %6369 = vmatpush1.msra.mxu0 0.0
    %6370 = vmatprep.subr.mxu0 0.0
    %6371 = vmatpush1.msra.mxu0 0.0
    %6372 = vmatprep.subr.mxu0 0.0
    %6373 = vmatpush1.msra.mxu0 0.0
    %6374 = vmatprep.subr.mxu0 0.0
    %6375 = vmatpush1.msra.mxu0 0.0
    %6376 = vmatprep.subr.mxu0 0.0
    %6377 = vmatpush1.msra.mxu0 0.0
    %6378 = vmatprep.subr.mxu0 0.0
    %6379 = vmatpush1.msra.mxu0 0.0
    %6380 = vmatprep.subr.mxu0 0.0
    %6381 = vmatpush1.msra.mxu0 0.0
    %6382 = vmatprep.subr.mxu0 0.0
    %6383 = vmatpush1.msra.mxu0 0.0
    %6384 = vmatprep.subr.mxu0 0.0
    %6385 = vmatpush1.msra.mxu0 0.0
    %6386 = vmatprep.subr.mxu0 0.0
    %6387 = vmatpush1.msra.mxu0 0.0
    %6388 = vmatprep.subr.mxu0 0.0
    %6389 = vmatpush1.msra.mxu0 0.0
    %6390 = vmatprep.subr.mxu0 0.0
    %6391 = vmatpush1.msra.mxu0 0.0
    %6392 = vmatprep.subr.mxu0 0.0
    %6393 = vmatpush1.msra.mxu0 0.0
    %6394 = vmatprep.subr.mxu0 0.0
    %6395 = vmatpush1.msra.mxu0 0.0
    %6396 = vmatprep.subr.mxu0 0.0
    %6397 = vmatpush1.msra.mxu0 0.0
    %6398 = vmatprep.subr.mxu0 0.0
    %6399 = vmatpush1.msra.mxu0 0.0
    %6400 = vmatprep.subr.mxu0 0.0
    %6401 = vmatpush1.msra.mxu0 0.0
    %6402 = vmatprep.mubr.f32.mxu0 0.0
    %6403 = vmatmul.mubr.f32.gmra.mrb[0].mxu0 %v5910
    %v6404 = vpop.f32.mrb[0].mxu0
    %v6405 = vadd.f32 0.0, %v6404
    %v6406 = vpop.f32.mrb[0].mxu0
    %6407 = vdwg.mxu0
    %v6410 = vrot.slane %v6335, 7
    %v6411 = vsel %vm1788, %v6410, %v6246
    %v6412 = vsel %vm658, %v6411, 0
    %6414 = vmatprep.subr.mxu0 0.0
    %6415 = vmatpush1.msra.mxu0 %v1194
    %6416 = vmatprep.subr.mxu0 0.0
    %6417 = vmatpush1.msra.mxu0 %v1195
    %6418 = vmatprep.subr.mxu0 0.0
    %6419 = vmatpush1.msra.mxu0 %v1196
    %6420 = vmatprep.subr.mxu0 0.0
    %6421 = vmatpush1.msra.mxu0 %v1197
    %6422 = vmatprep.subr.mxu0 0.0
    %6423 = vmatpush1.msra.mxu0 0.0
    %6424 = vmatprep.subr.mxu0 0.0
    %6425 = vmatpush1.msra.mxu0 0.0
    %6426 = vmatprep.subr.mxu0 0.0
    %6427 = vmatpush1.msra.mxu0 0.0
    %6428 = vmatprep.subr.mxu0 0.0
    %6429 = vmatpush1.msra.mxu0 0.0
    %6430 = vmatprep.subr.mxu0 0.0
    %6431 = vmatpush1.msra.mxu0 0.0
    %6432 = vmatprep.subr.mxu0 0.0
    %6433 = vmatpush1.msra.mxu0 0.0
    %6434 = vmatprep.subr.mxu0 0.0
    %6435 = vmatpush1.msra.mxu0 0.0
    %6436 = vmatprep.subr.mxu0 0.0
    %6437 = vmatpush1.msra.mxu0 0.0
    %6438 = vmatprep.subr.mxu0 0.0
    %6439 = vmatpush1.msra.mxu0 0.0
    %6440 = vmatprep.subr.mxu0 0.0
    %6441 = vmatpush1.msra.mxu0 0.0
    %6442 = vmatprep.subr.mxu0 0.0
    %6443 = vmatpush1.msra.mxu0 0.0
    %6444 = vmatprep.subr.mxu0 0.0
    %6445 = vmatpush1.msra.mxu0 0.0
    %6446 = vmatprep.subr.mxu0 0.0
    %6447 = vmatpush1.msra.mxu0 0.0
    %6448 = vmatprep.subr.mxu0 0.0
    %6449 = vmatpush1.msra.mxu0 0.0
    %6450 = vmatprep.subr.mxu0 0.0
    %6451 = vmatpush1.msra.mxu0 0.0
    %6452 = vmatprep.subr.mxu0 0.0
    %6453 = vmatpush1.msra.mxu0 0.0
    %6454 = vmatprep.subr.mxu0 0.0
    %6455 = vmatpush1.msra.mxu0 0.0
    %6456 = vmatprep.subr.mxu0 0.0
    %6457 = vmatpush1.msra.mxu0 0.0
    %6458 = vmatprep.subr.mxu0 0.0
    %6459 = vmatpush1.msra.mxu0 0.0
    %6460 = vmatprep.subr.mxu0 0.0
    %6461 = vmatpush1.msra.mxu0 0.0
    %6462 = vmatprep.subr.mxu0 0.0
    %6463 = vmatpush1.msra.mxu0 0.0
    %6464 = vmatprep.subr.mxu0 0.0
    %6465 = vmatpush1.msra.mxu0 0.0
    %6466 = vmatprep.subr.mxu0 0.0
    %6467 = vmatpush1.msra.mxu0 0.0
    %6468 = vmatprep.subr.mxu0 0.0
    %6469 = vmatpush1.msra.mxu0 0.0
    %6470 = vmatprep.subr.mxu0 0.0
    %6471 = vmatpush1.msra.mxu0 0.0
    %6472 = vmatprep.subr.mxu0 0.0
    %6473 = vmatpush1.msra.mxu0 0.0
    %6474 = vmatprep.subr.mxu0 0.0
    %6475 = vmatpush1.msra.mxu0 0.0
    %6476 = vmatprep.subr.mxu0 0.0
    %6477 = vmatpush1.msra.mxu0 0.0
    %6478 = vmatprep.mubr.f32.mxu0 0.0
    %6479 = vmatmul.mubr.f32.gmra.mrb[0].mxu0 %v6412
    %v6480 = vpop.f32.mrb[0].mxu0
    %v6481 = vadd.f32 %v6405, %v6480
    %v6482 = vpop.f32.mrb[0].mxu0
    %6483 = vdwg.mxu0
    %6484 = vmatprep.subr.mxu0 0.0
    %6485 = vmatpush1.msra.mxu0 %v1202
    %6486 = vmatprep.subr.mxu0 0.0
    %6487 = vmatpush1.msra.mxu0 %v1203
    %6488 = vmatprep.subr.mxu0 0.0
    %6489 = vmatpush1.msra.mxu0 %v1204
    %6490 = vmatprep.subr.mxu0 0.0
    %6491 = vmatpush1.msra.mxu0 %v1205
    %6492 = vmatprep.subr.mxu0 0.0
    %6493 = vmatpush1.msra.mxu0 0.0
    %6494 = vmatprep.subr.mxu0 0.0
    %6495 = vmatpush1.msra.mxu0 0.0
    %6496 = vmatprep.subr.mxu0 0.0
    %6497 = vmatpush1.msra.mxu0 0.0
    %6498 = vmatprep.subr.mxu0 0.0
    %6499 = vmatpush1.msra.mxu0 0.0
    %6500 = vmatprep.subr.mxu0 0.0
    %6501 = vmatpush1.msra.mxu0 0.0
    %6502 = vmatprep.subr.mxu0 0.0
    %6503 = vmatpush1.msra.mxu0 0.0
    %6504 = vmatprep.subr.mxu0 0.0
    %6505 = vmatpush1.msra.mxu0 0.0
    %6506 = vmatprep.subr.mxu0 0.0
    %6507 = vmatpush1.msra.mxu0 0.0
    %6508 = vmatprep.subr.mxu0 0.0
    %6509 = vmatpush1.msra.mxu0 0.0
    %6510 = vmatprep.subr.mxu0 0.0
    %6511 = vmatpush1.msra.mxu0 0.0
    %6512 = vmatprep.subr.mxu0 0.0
    %6513 = vmatpush1.msra.mxu0 0.0
    %6514 = vmatprep.subr.mxu0 0.0
    %6515 = vmatpush1.msra.mxu0 0.0
    %6516 = vmatprep.subr.mxu0 0.0
    %6517 = vmatpush1.msra.mxu0 0.0
    %6518 = vmatprep.subr.mxu0 0.0
    %6519 = vmatpush1.msra.mxu0 0.0
    %6520 = vmatprep.subr.mxu0 0.0
    %6521 = vmatpush1.msra.mxu0 0.0
    %6522 = vmatprep.subr.mxu0 0.0
    %6523 = vmatpush1.msra.mxu0 0.0
    %6524 = vmatprep.subr.mxu0 0.0
    %6525 = vmatpush1.msra.mxu0 0.0
    %6526 = vmatprep.subr.mxu0 0.0
    %6527 = vmatpush1.msra.mxu0 0.0
    %6528 = vmatprep.subr.mxu0 0.0
    %6529 = vmatpush1.msra.mxu0 0.0
    %6530 = vmatprep.subr.mxu0 0.0
    %6531 = vmatpush1.msra.mxu0 0.0
    %6532 = vmatprep.subr.mxu0 0.0
    %6533 = vmatpush1.msra.mxu0 0.0
    %6534 = vmatprep.subr.mxu0 0.0
    %6535 = vmatpush1.msra.mxu0 0.0
    %6536 = vmatprep.subr.mxu0 0.0
    %6537 = vmatpush1.msra.mxu0 0.0
    %6538 = vmatprep.subr.mxu0 0.0
    %6539 = vmatpush1.msra.mxu0 0.0
    %6540 = vmatprep.subr.mxu0 0.0
    %6541 = vmatpush1.msra.mxu0 0.0
    %6542 = vmatprep.subr.mxu0 0.0
    %6543 = vmatpush1.msra.mxu0 0.0
    %6544 = vmatprep.subr.mxu0 0.0
    %6545 = vmatpush1.msra.mxu0 0.0
    %6546 = vmatprep.subr.mxu0 0.0
    %6547 = vmatpush1.msra.mxu0 0.0
    %6548 = vmatprep.mubr.f32.mxu0 0.0
    %6549 = vmatmul.mubr.f32.gmra.mrb[0].mxu0 %v5729
    %v6550 = vpop.f32.mrb[0].mxu0
    %v6551 = vadd.f32 0.0, %v6550
    %v6552 = vpop.f32.mrb[0].mxu0
    %6553 = vdwg.mxu0
    %v6554 = vadd.f32 %v6481, %v6551
    %v6555 = vadd.f32 %v6554, %v2278
    %v6556 = vxor.u32 %v6555, 2147483648
    %v6557 = vmul.f32 %v6556, 1.442695
    %v6558 = vpow.pop %v6557
    %v6559 = vadd.f32 %v6558, 1.0
    %v6560 = vrcp.pop %v6559
    %v6561 = vmul.f32 1.0, %v6560
    %v6562 = vtanh.pop %v6555
    %v6563 = vmul.f32 %v6561, %v5718
    %6565 = vrot.lane.b32.xlu0 %v6562, 64
    %v6566 = vpop.permute.xlu0 %6565
    %v6568 = vmul.f32 %v6561, %v6566
    %6570 = vrot.lane.b32.xlu0 %v6568, 32
    %v6571 = vpop.permute.xlu0 %6570
    %v6573 = vadd.f32 %v6563, %v6571
    %v6574 = vtanh.pop %v6573
    %6576 = vrot.lane.b32.xlu0 %v6574, 64
    %v6577 = vpop.permute.xlu0 %6576
    %v6579 = vmul.f32 %v6561, %v6577
    %v6580 = vadd.f32 %v1166, %v3163
    %6582 = vrot.lane.b32.xlu0 %v6579, 32
    %v6583 = vpop.permute.xlu0 %6582
    %v6584 = vsel %vm658, %v6583, 0
    %6586 = vmatprep.subr.mxu0 0.0
    %6587 = vmatpush1.msra.mxu0 %v1186
    %6588 = vmatprep.subr.mxu0 0.0
    %6589 = vmatpush1.msra.mxu0 %v1187
    %6590 = vmatprep.subr.mxu0 0.0
    %6591 = vmatpush1.msra.mxu0 %v1188
    %6592 = vmatprep.subr.mxu0 0.0
    %6593 = vmatpush1.msra.mxu0 %v1189
    %6594 = vmatprep.subr.mxu0 0.0
    %6595 = vmatpush1.msra.mxu0 0.0
    %6596 = vmatprep.subr.mxu0 0.0
    %6597 = vmatpush1.msra.mxu0 0.0
    %6598 = vmatprep.subr.mxu0 0.0
    %6599 = vmatpush1.msra.mxu0 0.0
    %6600 = vmatprep.subr.mxu0 0.0
    %6601 = vmatpush1.msra.mxu0 0.0
    %6602 = vmatprep.subr.mxu0 0.0
    %6603 = vmatpush1.msra.mxu0 0.0
    %6604 = vmatprep.subr.mxu0 0.0
    %6605 = vmatpush1.msra.mxu0 0.0
    %6606 = vmatprep.subr.mxu0 0.0
    %6607 = vmatpush1.msra.mxu0 0.0
    %6608 = vmatprep.subr.mxu0 0.0
    %6609 = vmatpush1.msra.mxu0 0.0
    %6610 = vmatprep.subr.mxu0 0.0
    %6611 = vmatpush1.msra.mxu0 0.0
    %6612 = vmatprep.subr.mxu0 0.0
    %6613 = vmatpush1.msra.mxu0 0.0
    %6614 = vmatprep.subr.mxu0 0.0
    %6615 = vmatpush1.msra.mxu0 0.0
    %6616 = vmatprep.subr.mxu0 0.0
    %6617 = vmatpush1.msra.mxu0 0.0
    %6618 = vmatprep.subr.mxu0 0.0
    %6619 = vmatpush1.msra.mxu0 0.0
    %6620 = vmatprep.subr.mxu0 0.0
    %6621 = vmatpush1.msra.mxu0 0.0
    %6622 = vmatprep.subr.mxu0 0.0
    %6623 = vmatpush1.msra.mxu0 0.0
    %6624 = vmatprep.subr.mxu0 0.0
    %6625 = vmatpush1.msra.mxu0 0.0
    %6626 = vmatprep.subr.mxu0 0.0
    %6627 = vmatpush1.msra.mxu0 0.0
    %6628 = vmatprep.subr.mxu0 0.0
    %6629 = vmatpush1.msra.mxu0 0.0
    %6630 = vmatprep.subr.mxu0 0.0
    %6631 = vmatpush1.msra.mxu0 0.0
    %6632 = vmatprep.subr.mxu0 0.0
    %6633 = vmatpush1.msra.mxu0 0.0
    %6634 = vmatprep.subr.mxu0 0.0
    %6635 = vmatpush1.msra.mxu0 0.0
    %6636 = vmatprep.subr.mxu0 0.0
    %6637 = vmatpush1.msra.mxu0 0.0
    %6638 = vmatprep.subr.mxu0 0.0
    %6639 = vmatpush1.msra.mxu0 0.0
    %6640 = vmatprep.subr.mxu0 0.0
    %6641 = vmatpush1.msra.mxu0 0.0
    %6642 = vmatprep.subr.mxu0 0.0
    %6643 = vmatpush1.msra.mxu0 0.0
    %6644 = vmatprep.subr.mxu0 0.0
    %6645 = vmatpush1.msra.mxu0 0.0
    %6646 = vmatprep.subr.mxu0 0.0
    %6647 = vmatpush1.msra.mxu0 0.0
    %6648 = vmatprep.subr.mxu0 0.0
    %6649 = vmatpush1.msra.mxu0 0.0
    %6650 = vmatprep.mubr.f32.mxu0 0.0
    %6651 = vmatmul.mubr.f32.gmra.mrb[0].mxu0 %v6584
    %v6652 = vpop.f32.mrb[0].mxu0
    %v6653 = vadd.f32 0.0, %v6652
    %v6654 = vpop.f32.mrb[0].mxu0
    %6655 = vdwg.mxu0
    %v6657 = vrot.slane %v6653, 4
    %v6659 = vadd.f32 %v6580, %v6657
    %6660 = vmatprep.subr.mxu0 0.0
    %6661 = vmatpush1.msra.mxu0 %v1190
    %6662 = vmatprep.subr.mxu0 0.0
    %6663 = vmatpush1.msra.mxu0 %v1191
    %6664 = vmatprep.subr.mxu0 0.0
    %6665 = vmatpush1.msra.mxu0 %v1192
    %6666 = vmatprep.subr.mxu0 0.0
    %6667 = vmatpush1.msra.mxu0 %v1193
    %6668 = vmatprep.subr.mxu0 0.0
    %6669 = vmatpush1.msra.mxu0 0.0
    %6670 = vmatprep.subr.mxu0 0.0
    %6671 = vmatpush1.msra.mxu0 0.0
    %6672 = vmatprep.subr.mxu0 0.0
    %6673 = vmatpush1.msra.mxu0 0.0
    %6674 = vmatprep.subr.mxu0 0.0
    %6675 = vmatpush1.msra.mxu0 0.0
    %6676 = vmatprep.subr.mxu0 0.0
    %6677 = vmatpush1.msra.mxu0 0.0
    %6678 = vmatprep.subr.mxu0 0.0
    %6679 = vmatpush1.msra.mxu0 0.0
    %6680 = vmatprep.subr.mxu0 0.0
    %6681 = vmatpush1.msra.mxu0 0.0
    %6682 = vmatprep.subr.mxu0 0.0
    %6683 = vmatpush1.msra.mxu0 0.0
    %6684 = vmatprep.subr.mxu0 0.0
    %6685 = vmatpush1.msra.mxu0 0.0
    %6686 = vmatprep.subr.mxu0 0.0
    %6687 = vmatpush1.msra.mxu0 0.0
    %6688 = vmatprep.subr.mxu0 0.0
    %6689 = vmatpush1.msra.mxu0 0.0
    %6690 = vmatprep.subr.mxu0 0.0
    %6691 = vmatpush1.msra.mxu0 0.0
    %6692 = vmatprep.subr.mxu0 0.0
    %6693 = vmatpush1.msra.mxu0 0.0
    %6694 = vmatprep.subr.mxu0 0.0
    %6695 = vmatpush1.msra.mxu0 0.0
    %6696 = vmatprep.subr.mxu0 0.0
    %6697 = vmatpush1.msra.mxu0 0.0
    %6698 = vmatprep.subr.mxu0 0.0
    %6699 = vmatpush1.msra.mxu0 0.0
    %6700 = vmatprep.subr.mxu0 0.0
    %6701 = vmatpush1.msra.mxu0 0.0
    %6702 = vmatprep.subr.mxu0 0.0
    %6703 = vmatpush1.msra.mxu0 0.0
    %6704 = vmatprep.subr.mxu0 0.0
    %6705 = vmatpush1.msra.mxu0 0.0
    %6706 = vmatprep.subr.mxu0 0.0
    %6707 = vmatpush1.msra.mxu0 0.0
    %6708 = vmatprep.subr.mxu0 0.0
    %6709 = vmatpush1.msra.mxu0 0.0
    %6710 = vmatprep.subr.mxu0 0.0
    %6711 = vmatpush1.msra.mxu0 0.0
    %6712 = vmatprep.subr.mxu0 0.0
    %6713 = vmatpush1.msra.mxu0 0.0
    %6714 = vmatprep.subr.mxu0 0.0
    %6715 = vmatpush1.msra.mxu0 0.0
    %6716 = vmatprep.subr.mxu0 0.0
    %6717 = vmatpush1.msra.mxu0 0.0
    %6718 = vmatprep.subr.mxu0 0.0
    %6719 = vmatpush1.msra.mxu0 0.0
    %6720 = vmatprep.subr.mxu0 0.0
    %6721 = vmatpush1.msra.mxu0 0.0
    %6722 = vmatprep.subr.mxu0 0.0
    %6723 = vmatpush1.msra.mxu0 0.0
    %6724 = vmatprep.mubr.f32.mxu0 0.0
    %6725 = vmatmul.mubr.f32.gmra.mrb[0].mxu0 %v5910
    %v6726 = vpop.f32.mrb[0].mxu0
    %v6727 = vadd.f32 0.0, %v6726
    %v6728 = vpop.f32.mrb[0].mxu0
    %6729 = vdwg.mxu0
    %v6731 = vrot.slane %v6727, 4
    %v6733 = vadd.f32 %v6659, %v6731
    %v6734 = vxor.u32 %v6733, 2147483648
    %v6735 = vmul.f32 %v6734, 1.442695
    %v6736 = vpow.pop %v6735
    %v6737 = vadd.f32 %v6736, 1.0
    %v6738 = vrcp.pop %v6737
    %v6739 = vmul.f32 1.0, %v6738
    %v6740 = vtanh.pop %v6733
    %v6742 = vrot.slane %v5899, 6
    %v6744 = vmul.f32 %v6739, %v6742
    %6746 = vrot.lane.b32.xlu0 %v6740, 64
    %v6747 = vpop.permute.xlu0 %6746
    %v6749 = vmul.f32 %v6739, %v6747
    %6751 = vrot.lane.b32.xlu0 %v6749, 32
    %v6752 = vpop.permute.xlu0 %6751
    %v6754 = vadd.f32 %v6744, %v6752
    %v6755 = vtanh.pop %v6754
    %6757 = vrot.lane.b32.xlu0 %v6755, 64
    %v6758 = vpop.permute.xlu0 %6757
    %v6760 = vmul.f32 %v6739, %v6758
    %v6762 = vrot.slane %v6760, 4
    %6763 = vrot.lane.b32.xlu0 %v6762, 32
    %v6764 = vpop.permute.xlu0 %6763
    %v6765 = vsel %vm658, %v6764, 0
    %6767 = vmatprep.subr.mxu0 0.0
    %6768 = vmatpush1.msra.mxu0 %v1207
    %6769 = vmatprep.subr.mxu0 0.0
    %6770 = vmatpush1.msra.mxu0 %v1208
    %6771 = vmatprep.subr.mxu0 0.0
    %6772 = vmatpush1.msra.mxu0 %v1209
    %6773 = vmatprep.subr.mxu0 0.0
    %6774 = vmatpush1.msra.mxu0 %v1210
    %6775 = vmatprep.subr.mxu0 0.0
    %6776 = vmatpush1.msra.mxu0 0.0
    %6777 = vmatprep.subr.mxu0 0.0
    %6778 = vmatpush1.msra.mxu0 0.0
    %6779 = vmatprep.subr.mxu0 0.0
    %6780 = vmatpush1.msra.mxu0 0.0
    %6781 = vmatprep.subr.mxu0 0.0
    %6782 = vmatpush1.msra.mxu0 0.0
    %6783 = vmatprep.subr.mxu0 0.0
    %6784 = vmatpush1.msra.mxu0 0.0
    %6785 = vmatprep.subr.mxu0 0.0
    %6786 = vmatpush1.msra.mxu0 0.0
    %6787 = vmatprep.subr.mxu0 0.0
    %6788 = vmatpush1.msra.mxu0 0.0
    %6789 = vmatprep.subr.mxu0 0.0
    %6790 = vmatpush1.msra.mxu0 0.0
    %6791 = vmatprep.subr.mxu0 0.0
    %6792 = vmatpush1.msra.mxu0 0.0
    %6793 = vmatprep.subr.mxu0 0.0
    %6794 = vmatpush1.msra.mxu0 0.0
    %6795 = vmatprep.subr.mxu0 0.0
    %6796 = vmatpush1.msra.mxu0 0.0
    %6797 = vmatprep.subr.mxu0 0.0
    %6798 = vmatpush1.msra.mxu0 0.0
    %6799 = vmatprep.subr.mxu0 0.0
    %6800 = vmatpush1.msra.mxu0 0.0
    %6801 = vmatprep.subr.mxu0 0.0
    %6802 = vmatpush1.msra.mxu0 0.0
    %6803 = vmatprep.subr.mxu0 0.0
    %6804 = vmatpush1.msra.mxu0 0.0
    %6805 = vmatprep.subr.mxu0 0.0
    %6806 = vmatpush1.msra.mxu0 0.0
    %6807 = vmatprep.subr.mxu0 0.0
    %6808 = vmatpush1.msra.mxu0 0.0
    %6809 = vmatprep.subr.mxu0 0.0
    %6810 = vmatpush1.msra.mxu0 0.0
    %6811 = vmatprep.subr.mxu0 0.0
    %6812 = vmatpush1.msra.mxu0 0.0
    %6813 = vmatprep.subr.mxu0 0.0
    %6814 = vmatpush1.msra.mxu0 0.0
    %6815 = vmatprep.subr.mxu0 0.0
    %6816 = vmatpush1.msra.mxu0 0.0
    %6817 = vmatprep.subr.mxu0 0.0
    %6818 = vmatpush1.msra.mxu0 0.0
    %6819 = vmatprep.subr.mxu0 0.0
    %6820 = vmatpush1.msra.mxu0 0.0
    %6821 = vmatprep.subr.mxu0 0.0
    %6822 = vmatpush1.msra.mxu0 0.0
    %6823 = vmatprep.subr.mxu0 0.0
    %6824 = vmatpush1.msra.mxu0 0.0
    %6825 = vmatprep.subr.mxu0 0.0
    %6826 = vmatpush1.msra.mxu0 0.0
    %6827 = vmatprep.subr.mxu0 0.0
    %6828 = vmatpush1.msra.mxu0 0.0
    %6829 = vmatprep.subr.mxu0 0.0
    %6830 = vmatpush1.msra.mxu0 0.0
    %6831 = vmatprep.mubr.f32.mxu0 0.0
    %6832 = vmatmul.mubr.f32.gmra.mrb[0].mxu0 %v6765
    %v6833 = vpop.f32.mrb[0].mxu0
    %v6834 = vadd.f32 %v1386, %v6833
    %v6835 = vpop.f32.mrb[0].mxu0
    %6836 = vdwg.mxu0
    %v6839 = vunpack.c.l.s4 1966171168
    %v6840 = vunpack.c.0.s8 %v6839
    %v6841 = vlaneseq
    %v6842 = vshrl.u32 %v6841, 7
    %v6843 = vsub.s32 %v6840, %v6842
    %v6844 = vrot.slane %v6834, %v6843
    %v6845 = vcombine.high %v6844, %v6844
    %v6847 = vunpack.c.l.s4 1966171168
    %v6848 = vunpack.c.0.s8 %v6847
    %v6849 = vlaneseq
    %v6850 = vshrl.u32 %v6849, 7
    %v6851 = vsub.s32 %v6848, %v6850
    %v6852 = vrot.slane %v6844, %v6851
    %v6854 = vunpack.c.l.s4 1966171168
    %v6855 = vunpack.c.0.s8 %v6854
    %v6856 = vlaneseq
    %v6857 = vshrl.u32 %v6856, 7
    %v6858 = vsub.s32 %v6855, %v6857
    %v6859 = vrot.slane %v6845, %v6858
    %v6860 = vlaneseq
    %v6861 = vshrl.u32 %v6860, 7
    %v6862 = vsub.s32 0, %v6861
    %v6863 = vrot.slane %v6852, %v6862
    %v6864 = vlaneseq
    %v6865 = vshrl.u32 %v6864, 7
    %v6866 = vsub.s32 0, %v6865
    %v6867 = vrot.slane %v6859, %v6866
    %v6870 = vadd.f32 %v6863, %v1544
    %v6871 = vadd.f32 %v6863, %v1592
    %v6872 = vadd.f32 %v6867, %v1641
    %v6873 = vadd.f32 %v6867, %v1689
    %v6874 = vtanh.pop %v6870
    %v6875 = vtanh.pop %v6871
    %v6876 = vtanh.pop %v6872
    %v6877 = vtanh.pop %v6873
    %v6878 = vmul.f32 %v6874, %v1179
    %v6879 = vmul.f32 %v6875, %v1179
    %v6880 = vmul.f32 %v6876, %v1179
    %v6881 = vmul.f32 %v6877, %v1179
    %v6882 = vsel %vm658, %v6878, 0.0
    %6883 = vadd.xlane.f32.xlu0 %v6882
    %v6884 = vpop.xlane.xlu0 %6883
    %v6885 = vsel %vm1709, %v6879, 0.0
    %6886 = vadd.xlane.f32.xlu0 %v6885
    %v6887 = vpop.xlane.xlu0 %6886
    %v6888 = vsel %vm658, %v6880, 0.0
    %6889 = vadd.xlane.f32.xlu0 %v6888
    %v6890 = vpop.xlane.xlu0 %6889
    %v6891 = vsel %vm1709, %v6881, 0.0
    %6892 = vadd.xlane.f32.xlu0 %v6891
    %v6893 = vpop.xlane.xlu0 %6892
    %v6894 = vadd.f32 %v6884, %v1726
    %v6895 = vadd.f32 %v6887, %v1730
    %v6896 = vadd.f32 %v6890, %v1737
    %v6897 = vadd.f32 %v6893, %v1741
    %6902 = vset.pattern.permute.xlu0 0
    %6903 = vperm.xlu0 %6902, %v6894
    %v6904 = vpop.permute.xlu0 %6903
    %6905 = vset.pattern.permute.xlu0 0
    %6906 = vperm.xlu0 %6905, %v6895
    %v6907 = vpop.permute.xlu0 %6906
    %6908 = vset.pattern.permute.xlu0 0
    %6909 = vperm.xlu0 %6908, %v6896
    %v6910 = vpop.permute.xlu0 %6909
    %6911 = vset.pattern.permute.xlu0 0
    %6912 = vperm.xlu0 %6911, %v6897
    %v6913 = vpop.permute.xlu0 %6912
    %v6914 = vlaneseq
    %v6915 = vshrl.u32 %v6914, 7
    %v6916 = vsub.s32 %v1767, %v6915
    %v6917 = vrot.slane %v6904, %v6916
    %v6918 = vlaneseq
    %v6919 = vshrl.u32 %v6918, 7
    %v6920 = vsub.s32 %v1772, %v6919
    %v6921 = vrot.slane %v6907, %v6920
    %v6922 = vsel %vm1777, %v6921, %v6917
    %v6923 = vlaneseq
    %v6924 = vshrl.u32 %v6923, 7
    %v6925 = vsub.s32 %v1767, %v6924
    %v6926 = vrot.slane %v6910, %v6925
    %v6927 = vlaneseq
    %v6928 = vshrl.u32 %v6927, 7
    %v6929 = vsub.s32 %v1772, %v6928
    %v6930 = vrot.slane %v6913, %v6929
    %v6931 = vsel %vm1777, %v6930, %v6926
    %v6932 = vsel %vm1788, %v6931, %v6922
    %v6934 = vsel %vm1791, %v6932, -inf
    %6935 = vmax.xlane.f32.xlu0 %v6934
    %v6936 = vpop.xlane.xlu0 %6935
    %v6938 = vlaneseq
    %v6939 = vshrl.u32 %v6938, 7
    %v6940 = vsub.s32 0, %v6939
    %v6941 = vrot.slane %v6936, %v6940
    %v6942 = vlaneseq
    %v6943 = vshrl.u32 %v6942, 7
    %v6944 = vsub.s32 1, %v6943
    %v6945 = vrot.slane %v6936, %v6944
    %v6948 = vsub.f32 %v6894, %v6941
    %v6949 = vsub.f32 %v6895, %v6941
    %v6950 = vsub.f32 %v6896, %v6945
    %v6951 = vsub.f32 %v6897, %v6945
    %v6952 = vmul.f32 %v6948, 1.442695
    %v6953 = vpow.pop %v6952
    %v6954 = vmul.f32 %v6949, 1.442695
    %v6955 = vpow.pop %v6954
    %v6956 = vmul.f32 %v6950, 1.442695
    %v6957 = vpow.pop %v6956
    %v6958 = vmul.f32 %v6951, 1.442695
    %v6959 = vpow.pop %v6958
    %6964 = vset.pattern.permute.xlu0 0
    %6965 = vperm.xlu0 %6964, %v6953
    %v6966 = vpop.permute.xlu0 %6965
    %6967 = vset.pattern.permute.xlu0 0
    %6968 = vperm.xlu0 %6967, %v6955
    %v6969 = vpop.permute.xlu0 %6968
    %6970 = vset.pattern.permute.xlu0 0
    %6971 = vperm.xlu0 %6970, %v6957
    %v6972 = vpop.permute.xlu0 %6971
    %6973 = vset.pattern.permute.xlu0 0
    %6974 = vperm.xlu0 %6973, %v6959
    %v6975 = vpop.permute.xlu0 %6974
    %v6976 = vlaneseq
    %v6977 = vshrl.u32 %v6976, 7
    %v6978 = vsub.s32 %v1767, %v6977
    %v6979 = vrot.slane %v6966, %v6978
    %v6980 = vlaneseq
    %v6981 = vshrl.u32 %v6980, 7
    %v6982 = vsub.s32 %v1772, %v6981
    %v6983 = vrot.slane %v6969, %v6982
    %v6984 = vsel %vm1777, %v6983, %v6979
    %v6985 = vlaneseq
    %v6986 = vshrl.u32 %v6985, 7
    %v6987 = vsub.s32 %v1767, %v6986
    %v6988 = vrot.slane %v6972, %v6987
    %v6989 = vlaneseq
    %v6990 = vshrl.u32 %v6989, 7
    %v6991 = vsub.s32 %v1772, %v6990
    %v6992 = vrot.slane %v6975, %v6991
    %v6993 = vsel %vm1777, %v6992, %v6988
    %v6994 = vsel %vm1788, %v6993, %v6984
    %v6996 = vsel %vm1791, %v6994, 0.0
    %6997 = vadd.xlane.f32.xlu0 %v6996
    %v6998 = vpop.xlane.xlu0 %6997
    %v6999 = vrcp.pop %v6998
    %v7001 = vlaneseq
    %v7002 = vshrl.u32 %v7001, 7
    %v7003 = vsub.s32 0, %v7002
    %v7004 = vrot.slane %v6999, %v7003
    %v7005 = vlaneseq
    %v7006 = vshrl.u32 %v7005, 7
    %v7007 = vsub.s32 1, %v7006
    %v7008 = vrot.slane %v6999, %v7007
    %v7011 = vmul.f32 %v6953, %v7004
    %v7012 = vmul.f32 %v6955, %v7004
    %v7013 = vmul.f32 %v6957, %v7008
    %v7014 = vmul.f32 %v6959, %v7008
    %7017 = vset.pattern.permute.xlu0 0
    %7018 = vperm.xlu0 %7017, %v7011
    %v7019 = vpop.permute.xlu0 %7018
    %7020 = vset.pattern.permute.xlu0 0
    %7021 = vperm.xlu0 %7020, %v7012
    %v7022 = vpop.permute.xlu0 %7021
    %v7023 = vlaneseq
    %v7024 = vshrl.u32 %v7023, 7
    %v7025 = vsub.s32 %v1767, %v7024
    %v7026 = vrot.slane %v7019, %v7025
    %v7027 = vlaneseq
    %v7028 = vshrl.u32 %v7027, 7
    %v7029 = vsub.s32 %v1772, %v7028
    %v7030 = vrot.slane %v7022, %v7029
    %v7031 = vsel %vm1777, %v7030, %v7026
    %v7032 = vsel %vm1890, %v7031, 0
    %7034 = vmatprep.subr.mxu0 0.0
    %7035 = vmatpush1.msra.mxu0 %v248
    %7036 = vmatprep.subr.mxu0 0.0
    %7037 = vmatpush1.msra.mxu0 %v1894
    %7038 = vmatprep.subr.mxu0 0.0
    %7039 = vmatpush1.msra.mxu0 0.0
    %7040 = vmatprep.subr.mxu0 0.0
    %7041 = vmatpush1.msra.mxu0 0.0
    %7042 = vmatprep.subr.mxu0 0.0
    %7043 = vmatpush1.msra.mxu0 0.0
    %7044 = vmatprep.subr.mxu0 0.0
    %7045 = vmatpush1.msra.mxu0 0.0
    %7046 = vmatprep.subr.mxu0 0.0
    %7047 = vmatpush1.msra.mxu0 0.0
    %7048 = vmatprep.subr.mxu0 0.0
    %7049 = vmatpush1.msra.mxu0 0.0
    %7050 = vmatprep.subr.mxu0 0.0
    %7051 = vmatpush1.msra.mxu0 0.0
    %7052 = vmatprep.subr.mxu0 0.0
    %7053 = vmatpush1.msra.mxu0 0.0
    %7054 = vmatprep.subr.mxu0 0.0
    %7055 = vmatpush1.msra.mxu0 0.0
    %7056 = vmatprep.subr.mxu0 0.0
    %7057 = vmatpush1.msra.mxu0 0.0
    %7058 = vmatprep.subr.mxu0 0.0
    %7059 = vmatpush1.msra.mxu0 0.0
    %7060 = vmatprep.subr.mxu0 0.0
    %7061 = vmatpush1.msra.mxu0 0.0
    %7062 = vmatprep.subr.mxu0 0.0
    %7063 = vmatpush1.msra.mxu0 0.0
    %7064 = vmatprep.subr.mxu0 0.0
    %7065 = vmatpush1.msra.mxu0 0.0
    %7066 = vmatprep.subr.mxu0 0.0
    %7067 = vmatpush1.msra.mxu0 0.0
    %7068 = vmatprep.subr.mxu0 0.0
    %7069 = vmatpush1.msra.mxu0 0.0
    %7070 = vmatprep.subr.mxu0 0.0
    %7071 = vmatpush1.msra.mxu0 0.0
    %7072 = vmatprep.subr.mxu0 0.0
    %7073 = vmatpush1.msra.mxu0 0.0
    %7074 = vmatprep.subr.mxu0 0.0
    %7075 = vmatpush1.msra.mxu0 0.0
    %7076 = vmatprep.subr.mxu0 0.0
    %7077 = vmatpush1.msra.mxu0 0.0
    %7078 = vmatprep.subr.mxu0 0.0
    %7079 = vmatpush1.msra.mxu0 0.0
    %7080 = vmatprep.subr.mxu0 0.0
    %7081 = vmatpush1.msra.mxu0 0.0
    %7082 = vmatprep.subr.mxu0 0.0
    %7083 = vmatpush1.msra.mxu0 0.0
    %7084 = vmatprep.subr.mxu0 0.0
    %7085 = vmatpush1.msra.mxu0 0.0
    %7086 = vmatprep.subr.mxu0 0.0
    %7087 = vmatpush1.msra.mxu0 0.0
    %7088 = vmatprep.subr.mxu0 0.0
    %7089 = vmatpush1.msra.mxu0 0.0
    %7090 = vmatprep.subr.mxu0 0.0
    %7091 = vmatpush1.msra.mxu0 0.0
    %7092 = vmatprep.subr.mxu0 0.0
    %7093 = vmatpush1.msra.mxu0 0.0
    %7094 = vmatprep.subr.mxu0 0.0
    %7095 = vmatpush1.msra.mxu0 0.0
    %7096 = vmatprep.subr.mxu0 0.0
    %7097 = vmatpush1.msra.mxu0 0.0
    %7098 = vmatprep.mubr.f32.mxu0 0.0
    %7099 = vmatmul.mubr.f32.gmra.mrb[0].mxu0 %v7032
    %v7100 = vpop.f32.mrb[0].mxu0
    %v7101 = vadd.f32 0.0, %v7100
    %v7102 = vpop.f32.mrb[0].mxu0
    %7103 = vdwg.mxu0
    %7106 = vset.pattern.permute.xlu0 0
    %7107 = vperm.xlu0 %7106, %v7013
    %v7108 = vpop.permute.xlu0 %7107
    %7109 = vset.pattern.permute.xlu0 0
    %7110 = vperm.xlu0 %7109, %v7014
    %v7111 = vpop.permute.xlu0 %7110
    %v7112 = vlaneseq
    %v7113 = vshrl.u32 %v7112, 7
    %v7114 = vsub.s32 %v1767, %v7113
    %v7115 = vrot.slane %v7108, %v7114
    %v7116 = vlaneseq
    %v7117 = vshrl.u32 %v7116, 7
    %v7118 = vsub.s32 %v1772, %v7117
    %v7119 = vrot.slane %v7111, %v7118
    %v7120 = vsel %vm1777, %v7119, %v7115
    %v7121 = vsel %vm1890, %v7120, 0
    %7123 = vmatprep.subr.mxu0 0.0
    %7124 = vmatpush1.msra.mxu0 %v250
    %7125 = vmatprep.subr.mxu0 0.0
    %7126 = vmatpush1.msra.mxu0 %v1985
    %7127 = vmatprep.subr.mxu0 0.0
    %7128 = vmatpush1.msra.mxu0 0.0
    %7129 = vmatprep.subr.mxu0 0.0
    %7130 = vmatpush1.msra.mxu0 0.0
    %7131 = vmatprep.subr.mxu0 0.0
    %7132 = vmatpush1.msra.mxu0 0.0
    %7133 = vmatprep.subr.mxu0 0.0
    %7134 = vmatpush1.msra.mxu0 0.0
    %7135 = vmatprep.subr.mxu0 0.0
    %7136 = vmatpush1.msra.mxu0 0.0
    %7137 = vmatprep.subr.mxu0 0.0
    %7138 = vmatpush1.msra.mxu0 0.0
    %7139 = vmatprep.subr.mxu0 0.0
    %7140 = vmatpush1.msra.mxu0 0.0
    %7141 = vmatprep.subr.mxu0 0.0
    %7142 = vmatpush1.msra.mxu0 0.0
    %7143 = vmatprep.subr.mxu0 0.0
    %7144 = vmatpush1.msra.mxu0 0.0
    %7145 = vmatprep.subr.mxu0 0.0
    %7146 = vmatpush1.msra.mxu0 0.0
    %7147 = vmatprep.subr.mxu0 0.0
    %7148 = vmatpush1.msra.mxu0 0.0
    %7149 = vmatprep.subr.mxu0 0.0
    %7150 = vmatpush1.msra.mxu0 0.0
    %7151 = vmatprep.subr.mxu0 0.0
    %7152 = vmatpush1.msra.mxu0 0.0
    %7153 = vmatprep.subr.mxu0 0.0
    %7154 = vmatpush1.msra.mxu0 0.0
    %7155 = vmatprep.subr.mxu0 0.0
    %7156 = vmatpush1.msra.mxu0 0.0
    %7157 = vmatprep.subr.mxu0 0.0
    %7158 = vmatpush1.msra.mxu0 0.0
    %7159 = vmatprep.subr.mxu0 0.0
    %7160 = vmatpush1.msra.mxu0 0.0
    %7161 = vmatprep.subr.mxu0 0.0
    %7162 = vmatpush1.msra.mxu0 0.0
    %7163 = vmatprep.subr.mxu0 0.0
    %7164 = vmatpush1.msra.mxu0 0.0
    %7165 = vmatprep.subr.mxu0 0.0
    %7166 = vmatpush1.msra.mxu0 0.0
    %7167 = vmatprep.subr.mxu0 0.0
    %7168 = vmatpush1.msra.mxu0 0.0
    %7169 = vmatprep.subr.mxu0 0.0
    %7170 = vmatpush1.msra.mxu0 0.0
    %7171 = vmatprep.subr.mxu0 0.0
    %7172 = vmatpush1.msra.mxu0 0.0
    %7173 = vmatprep.subr.mxu0 0.0
    %7174 = vmatpush1.msra.mxu0 0.0
    %7175 = vmatprep.subr.mxu0 0.0
    %7176 = vmatpush1.msra.mxu0 0.0
    %7177 = vmatprep.subr.mxu0 0.0
    %7178 = vmatpush1.msra.mxu0 0.0
    %7179 = vmatprep.subr.mxu0 0.0
    %7180 = vmatpush1.msra.mxu0 0.0
    %7181 = vmatprep.subr.mxu0 0.0
    %7182 = vmatpush1.msra.mxu0 0.0
    %7183 = vmatprep.subr.mxu0 0.0
    %7184 = vmatpush1.msra.mxu0 0.0
    %7185 = vmatprep.subr.mxu0 0.0
    %7186 = vmatpush1.msra.mxu0 0.0
    %7187 = vmatprep.mubr.f32.mxu0 0.0
    %7188 = vmatmul.mubr.f32.gmra.mrb[0].mxu0 %v7121
    %v7189 = vpop.f32.mrb[0].mxu0
    %v7190 = vadd.f32 0.0, %v7189
    %v7191 = vpop.f32.mrb[0].mxu0
    %7192 = vdwg.mxu0
    %7193 = vmatprep.subr.mxu0 0.0
    %7194 = vmatpush1.msra.mxu0 %v1198
    %7195 = vmatprep.subr.mxu0 0.0
    %7196 = vmatpush1.msra.mxu0 %v1199
    %7197 = vmatprep.subr.mxu0 0.0
    %7198 = vmatpush1.msra.mxu0 %v1200
    %7199 = vmatprep.subr.mxu0 0.0
    %7200 = vmatpush1.msra.mxu0 %v1201
    %7201 = vmatprep.subr.mxu0 0.0
    %7202 = vmatpush1.msra.mxu0 0.0
    %7203 = vmatprep.subr.mxu0 0.0
    %7204 = vmatpush1.msra.mxu0 0.0
    %7205 = vmatprep.subr.mxu0 0.0
    %7206 = vmatpush1.msra.mxu0 0.0
    %7207 = vmatprep.subr.mxu0 0.0
    %7208 = vmatpush1.msra.mxu0 0.0
    %7209 = vmatprep.subr.mxu0 0.0
    %7210 = vmatpush1.msra.mxu0 0.0
    %7211 = vmatprep.subr.mxu0 0.0
    %7212 = vmatpush1.msra.mxu0 0.0
    %7213 = vmatprep.subr.mxu0 0.0
    %7214 = vmatpush1.msra.mxu0 0.0
    %7215 = vmatprep.subr.mxu0 0.0
    %7216 = vmatpush1.msra.mxu0 0.0
    %7217 = vmatprep.subr.mxu0 0.0
    %7218 = vmatpush1.msra.mxu0 0.0
    %7219 = vmatprep.subr.mxu0 0.0
    %7220 = vmatpush1.msra.mxu0 0.0
    %7221 = vmatprep.subr.mxu0 0.0
    %7222 = vmatpush1.msra.mxu0 0.0
    %7223 = vmatprep.subr.mxu0 0.0
    %7224 = vmatpush1.msra.mxu0 0.0
    %7225 = vmatprep.subr.mxu0 0.0
    %7226 = vmatpush1.msra.mxu0 0.0
    %7227 = vmatprep.subr.mxu0 0.0
    %7228 = vmatpush1.msra.mxu0 0.0
    %7229 = vmatprep.subr.mxu0 0.0
    %7230 = vmatpush1.msra.mxu0 0.0
    %7231 = vmatprep.subr.mxu0 0.0
    %7232 = vmatpush1.msra.mxu0 0.0
    %7233 = vmatprep.subr.mxu0 0.0
    %7234 = vmatpush1.msra.mxu0 0.0
    %7235 = vmatprep.subr.mxu0 0.0
    %7236 = vmatpush1.msra.mxu0 0.0
    %7237 = vmatprep.subr.mxu0 0.0
    %7238 = vmatpush1.msra.mxu0 0.0
    %7239 = vmatprep.subr.mxu0 0.0
    %7240 = vmatpush1.msra.mxu0 0.0
    %7241 = vmatprep.subr.mxu0 0.0
    %7242 = vmatpush1.msra.mxu0 0.0
    %7243 = vmatprep.subr.mxu0 0.0
    %7244 = vmatpush1.msra.mxu0 0.0
    %7245 = vmatprep.subr.mxu0 0.0
    %7246 = vmatpush1.msra.mxu0 0.0
    %7247 = vmatprep.subr.mxu0 0.0
    %7248 = vmatpush1.msra.mxu0 0.0
    %7249 = vmatprep.subr.mxu0 0.0
    %7250 = vmatpush1.msra.mxu0 0.0
    %7251 = vmatprep.subr.mxu0 0.0
    %7252 = vmatpush1.msra.mxu0 0.0
    %7253 = vmatprep.subr.mxu0 0.0
    %7254 = vmatpush1.msra.mxu0 0.0
    %7255 = vmatprep.subr.mxu0 0.0
    %7256 = vmatpush1.msra.mxu0 0.0
    %7257 = vmatprep.mubr.f32.mxu0 0.0
    %7258 = vmatmul.mubr.f32.gmra.mrb[0].mxu0 %v6765
    %v7259 = vpop.f32.mrb[0].mxu0
    %v7260 = vadd.f32 0.0, %v7259
    %v7261 = vpop.f32.mrb[0].mxu0
    %7262 = vdwg.mxu0
    %v7265 = vrot.slane %v7190, 7
    %v7266 = vsel %vm1788, %v7265, %v7101
    %v7267 = vsel %vm658, %v7266, 0
    %7269 = vmatprep.subr.mxu0 0.0
    %7270 = vmatpush1.msra.mxu0 %v1194
    %7271 = vmatprep.subr.mxu0 0.0
    %7272 = vmatpush1.msra.mxu0 %v1195
    %7273 = vmatprep.subr.mxu0 0.0
    %7274 = vmatpush1.msra.mxu0 %v1196
    %7275 = vmatprep.subr.mxu0 0.0
    %7276 = vmatpush1.msra.mxu0 %v1197
    %7277 = vmatprep.subr.mxu0 0.0
    %7278 = vmatpush1.msra.mxu0 0.0
    %7279 = vmatprep.subr.mxu0 0.0
    %7280 = vmatpush1.msra.mxu0 0.0
    %7281 = vmatprep.subr.mxu0 0.0
    %7282 = vmatpush1.msra.mxu0 0.0
    %7283 = vmatprep.subr.mxu0 0.0
    %7284 = vmatpush1.msra.mxu0 0.0
    %7285 = vmatprep.subr.mxu0 0.0
    %7286 = vmatpush1.msra.mxu0 0.0
    %7287 = vmatprep.subr.mxu0 0.0
    %7288 = vmatpush1.msra.mxu0 0.0
    %7289 = vmatprep.subr.mxu0 0.0
    %7290 = vmatpush1.msra.mxu0 0.0
    %7291 = vmatprep.subr.mxu0 0.0
    %7292 = vmatpush1.msra.mxu0 0.0
    %7293 = vmatprep.subr.mxu0 0.0
    %7294 = vmatpush1.msra.mxu0 0.0
    %7295 = vmatprep.subr.mxu0 0.0
    %7296 = vmatpush1.msra.mxu0 0.0
    %7297 = vmatprep.subr.mxu0 0.0
    %7298 = vmatpush1.msra.mxu0 0.0
    %7299 = vmatprep.subr.mxu0 0.0
    %7300 = vmatpush1.msra.mxu0 0.0
    %7301 = vmatprep.subr.mxu0 0.0
    %7302 = vmatpush1.msra.mxu0 0.0
    %7303 = vmatprep.subr.mxu0 0.0
    %7304 = vmatpush1.msra.mxu0 0.0
    %7305 = vmatprep.subr.mxu0 0.0
    %7306 = vmatpush1.msra.mxu0 0.0
    %7307 = vmatprep.subr.mxu0 0.0
    %7308 = vmatpush1.msra.mxu0 0.0
    %7309 = vmatprep.subr.mxu0 0.0
    %7310 = vmatpush1.msra.mxu0 0.0
    %7311 = vmatprep.subr.mxu0 0.0
    %7312 = vmatpush1.msra.mxu0 0.0
    %7313 = vmatprep.subr.mxu0 0.0
    %7314 = vmatpush1.msra.mxu0 0.0
    %7315 = vmatprep.subr.mxu0 0.0
    %7316 = vmatpush1.msra.mxu0 0.0
    %7317 = vmatprep.subr.mxu0 0.0
    %7318 = vmatpush1.msra.mxu0 0.0
    %7319 = vmatprep.subr.mxu0 0.0
    %7320 = vmatpush1.msra.mxu0 0.0
    %7321 = vmatprep.subr.mxu0 0.0
    %7322 = vmatpush1.msra.mxu0 0.0
    %7323 = vmatprep.subr.mxu0 0.0
    %7324 = vmatpush1.msra.mxu0 0.0
    %7325 = vmatprep.subr.mxu0 0.0
    %7326 = vmatpush1.msra.mxu0 0.0
    %7327 = vmatprep.subr.mxu0 0.0
    %7328 = vmatpush1.msra.mxu0 0.0
    %7329 = vmatprep.subr.mxu0 0.0
    %7330 = vmatpush1.msra.mxu0 0.0
    %7331 = vmatprep.subr.mxu0 0.0
    %7332 = vmatpush1.msra.mxu0 0.0
    %7333 = vmatprep.mubr.f32.mxu0 0.0
    %7334 = vmatmul.mubr.f32.gmra.mrb[0].mxu0 %v7267
    %v7335 = vpop.f32.mrb[0].mxu0
    %v7336 = vadd.f32 %v7260, %v7335
    %v7337 = vpop.f32.mrb[0].mxu0
    %7338 = vdwg.mxu0
    %7339 = vmatprep.subr.mxu0 0.0
    %7340 = vmatpush1.msra.mxu0 %v1202
    %7341 = vmatprep.subr.mxu0 0.0
    %7342 = vmatpush1.msra.mxu0 %v1203
    %7343 = vmatprep.subr.mxu0 0.0
    %7344 = vmatpush1.msra.mxu0 %v1204
    %7345 = vmatprep.subr.mxu0 0.0
    %7346 = vmatpush1.msra.mxu0 %v1205
    %7347 = vmatprep.subr.mxu0 0.0
    %7348 = vmatpush1.msra.mxu0 0.0
    %7349 = vmatprep.subr.mxu0 0.0
    %7350 = vmatpush1.msra.mxu0 0.0
    %7351 = vmatprep.subr.mxu0 0.0
    %7352 = vmatpush1.msra.mxu0 0.0
    %7353 = vmatprep.subr.mxu0 0.0
    %7354 = vmatpush1.msra.mxu0 0.0
    %7355 = vmatprep.subr.mxu0 0.0
    %7356 = vmatpush1.msra.mxu0 0.0
    %7357 = vmatprep.subr.mxu0 0.0
    %7358 = vmatpush1.msra.mxu0 0.0
    %7359 = vmatprep.subr.mxu0 0.0
    %7360 = vmatpush1.msra.mxu0 0.0
    %7361 = vmatprep.subr.mxu0 0.0
    %7362 = vmatpush1.msra.mxu0 0.0
    %7363 = vmatprep.subr.mxu0 0.0
    %7364 = vmatpush1.msra.mxu0 0.0
    %7365 = vmatprep.subr.mxu0 0.0
    %7366 = vmatpush1.msra.mxu0 0.0
    %7367 = vmatprep.subr.mxu0 0.0
    %7368 = vmatpush1.msra.mxu0 0.0
    %7369 = vmatprep.subr.mxu0 0.0
    %7370 = vmatpush1.msra.mxu0 0.0
    %7371 = vmatprep.subr.mxu0 0.0
    %7372 = vmatpush1.msra.mxu0 0.0
    %7373 = vmatprep.subr.mxu0 0.0
    %7374 = vmatpush1.msra.mxu0 0.0
    %7375 = vmatprep.subr.mxu0 0.0
    %7376 = vmatpush1.msra.mxu0 0.0
    %7377 = vmatprep.subr.mxu0 0.0
    %7378 = vmatpush1.msra.mxu0 0.0
    %7379 = vmatprep.subr.mxu0 0.0
    %7380 = vmatpush1.msra.mxu0 0.0
    %7381 = vmatprep.subr.mxu0 0.0
    %7382 = vmatpush1.msra.mxu0 0.0
    %7383 = vmatprep.subr.mxu0 0.0
    %7384 = vmatpush1.msra.mxu0 0.0
    %7385 = vmatprep.subr.mxu0 0.0
    %7386 = vmatpush1.msra.mxu0 0.0
    %7387 = vmatprep.subr.mxu0 0.0
    %7388 = vmatpush1.msra.mxu0 0.0
    %7389 = vmatprep.subr.mxu0 0.0
    %7390 = vmatpush1.msra.mxu0 0.0
    %7391 = vmatprep.subr.mxu0 0.0
    %7392 = vmatpush1.msra.mxu0 0.0
    %7393 = vmatprep.subr.mxu0 0.0
    %7394 = vmatpush1.msra.mxu0 0.0
    %7395 = vmatprep.subr.mxu0 0.0
    %7396 = vmatpush1.msra.mxu0 0.0
    %7397 = vmatprep.subr.mxu0 0.0
    %7398 = vmatpush1.msra.mxu0 0.0
    %7399 = vmatprep.subr.mxu0 0.0
    %7400 = vmatpush1.msra.mxu0 0.0
    %7401 = vmatprep.subr.mxu0 0.0
    %7402 = vmatpush1.msra.mxu0 0.0
    %7403 = vmatprep.mubr.f32.mxu0 0.0
    %7404 = vmatmul.mubr.f32.gmra.mrb[0].mxu0 %v6584
    %v7405 = vpop.f32.mrb[0].mxu0
    %v7406 = vadd.f32 0.0, %v7405
    %v7407 = vpop.f32.mrb[0].mxu0
    %7408 = vdwg.mxu0
    %v7409 = vadd.f32 %v7336, %v7406
    %v7410 = vadd.f32 %v7409, %v2278
    %v7411 = vxor.u32 %v7410, 2147483648
    %v7412 = vmul.f32 %v7411, 1.442695
    %v7413 = vpow.pop %v7412
    %v7414 = vadd.f32 %v7413, 1.0
    %v7415 = vrcp.pop %v7414
    %v7416 = vmul.f32 1.0, %v7415
    %v7417 = vtanh.pop %v7410
    %v7418 = vmul.f32 %v7416, %v6573
    %7420 = vrot.lane.b32.xlu0 %v7417, 64
    %v7421 = vpop.permute.xlu0 %7420
    %v7423 = vmul.f32 %v7416, %v7421
    %7425 = vrot.lane.b32.xlu0 %v7423, 32
    %v7426 = vpop.permute.xlu0 %7425
    %v7428 = vadd.f32 %v7418, %v7426
    %v7429 = vtanh.pop %v7428
    %7431 = vrot.lane.b32.xlu0 %v7429, 64
    %v7432 = vpop.permute.xlu0 %7431
    %v7434 = vmul.f32 %v7416, %v7432
    %v7435 = vadd.f32 %v1166, %v4020
    %7437 = vrot.lane.b32.xlu0 %v7434, 32
    %v7438 = vpop.permute.xlu0 %7437
    %v7439 = vsel %vm658, %v7438, 0
    %7441 = vmatprep.subr.mxu0 0.0
    %7442 = vmatpush1.msra.mxu0 %v1186
    %7443 = vmatprep.subr.mxu0 0.0
    %7444 = vmatpush1.msra.mxu0 %v1187
    %7445 = vmatprep.subr.mxu0 0.0
    %7446 = vmatpush1.msra.mxu0 %v1188
    %7447 = vmatprep.subr.mxu0 0.0
    %7448 = vmatpush1.msra.mxu0 %v1189
    %7449 = vmatprep.subr.mxu0 0.0
    %7450 = vmatpush1.msra.mxu0 0.0
    %7451 = vmatprep.subr.mxu0 0.0
    %7452 = vmatpush1.msra.mxu0 0.0
    %7453 = vmatprep.subr.mxu0 0.0
    %7454 = vmatpush1.msra.mxu0 0.0
    %7455 = vmatprep.subr.mxu0 0.0
    %7456 = vmatpush1.msra.mxu0 0.0
    %7457 = vmatprep.subr.mxu0 0.0
    %7458 = vmatpush1.msra.mxu0 0.0
    %7459 = vmatprep.subr.mxu0 0.0
    %7460 = vmatpush1.msra.mxu0 0.0
    %7461 = vmatprep.subr.mxu0 0.0
    %7462 = vmatpush1.msra.mxu0 0.0
    %7463 = vmatprep.subr.mxu0 0.0
    %7464 = vmatpush1.msra.mxu0 0.0
    %7465 = vmatprep.subr.mxu0 0.0
    %7466 = vmatpush1.msra.mxu0 0.0
    %7467 = vmatprep.subr.mxu0 0.0
    %7468 = vmatpush1.msra.mxu0 0.0
    %7469 = vmatprep.subr.mxu0 0.0
    %7470 = vmatpush1.msra.mxu0 0.0
    %7471 = vmatprep.subr.mxu0 0.0
    %7472 = vmatpush1.msra.mxu0 0.0
    %7473 = vmatprep.subr.mxu0 0.0
    %7474 = vmatpush1.msra.mxu0 0.0
    %7475 = vmatprep.subr.mxu0 0.0
    %7476 = vmatpush1.msra.mxu0 0.0
    %7477 = vmatprep.subr.mxu0 0.0
    %7478 = vmatpush1.msra.mxu0 0.0
    %7479 = vmatprep.subr.mxu0 0.0
    %7480 = vmatpush1.msra.mxu0 0.0
    %7481 = vmatprep.subr.mxu0 0.0
    %7482 = vmatpush1.msra.mxu0 0.0
    %7483 = vmatprep.subr.mxu0 0.0
    %7484 = vmatpush1.msra.mxu0 0.0
    %7485 = vmatprep.subr.mxu0 0.0
    %7486 = vmatpush1.msra.mxu0 0.0
    %7487 = vmatprep.subr.mxu0 0.0
    %7488 = vmatpush1.msra.mxu0 0.0
    %7489 = vmatprep.subr.mxu0 0.0
    %7490 = vmatpush1.msra.mxu0 0.0
    %7491 = vmatprep.subr.mxu0 0.0
    %7492 = vmatpush1.msra.mxu0 0.0
    %7493 = vmatprep.subr.mxu0 0.0
    %7494 = vmatpush1.msra.mxu0 0.0
    %7495 = vmatprep.subr.mxu0 0.0
    %7496 = vmatpush1.msra.mxu0 0.0
    %7497 = vmatprep.subr.mxu0 0.0
    %7498 = vmatpush1.msra.mxu0 0.0
    %7499 = vmatprep.subr.mxu0 0.0
    %7500 = vmatpush1.msra.mxu0 0.0
    %7501 = vmatprep.subr.mxu0 0.0
    %7502 = vmatpush1.msra.mxu0 0.0
    %7503 = vmatprep.subr.mxu0 0.0
    %7504 = vmatpush1.msra.mxu0 0.0
    %7505 = vmatprep.mubr.f32.mxu0 0.0
    %7506 = vmatmul.mubr.f32.gmra.mrb[0].mxu0 %v7439
    %v7507 = vpop.f32.mrb[0].mxu0
    %v7508 = vadd.f32 0.0, %v7507
    %v7509 = vpop.f32.mrb[0].mxu0
    %7510 = vdwg.mxu0
    %v7512 = vrot.slane %v7508, 2
    %v7514 = vadd.f32 %v7435, %v7512
    %7515 = vmatprep.subr.mxu0 0.0
    %7516 = vmatpush1.msra.mxu0 %v1190
    %7517 = vmatprep.subr.mxu0 0.0
    %7518 = vmatpush1.msra.mxu0 %v1191
    %7519 = vmatprep.subr.mxu0 0.0
    %7520 = vmatpush1.msra.mxu0 %v1192
    %7521 = vmatprep.subr.mxu0 0.0
    %7522 = vmatpush1.msra.mxu0 %v1193
    %7523 = vmatprep.subr.mxu0 0.0
    %7524 = vmatpush1.msra.mxu0 0.0
    %7525 = vmatprep.subr.mxu0 0.0
    %7526 = vmatpush1.msra.mxu0 0.0
    %7527 = vmatprep.subr.mxu0 0.0
    %7528 = vmatpush1.msra.mxu0 0.0
    %7529 = vmatprep.subr.mxu0 0.0
    %7530 = vmatpush1.msra.mxu0 0.0
    %7531 = vmatprep.subr.mxu0 0.0
    %7532 = vmatpush1.msra.mxu0 0.0
    %7533 = vmatprep.subr.mxu0 0.0
    %7534 = vmatpush1.msra.mxu0 0.0
    %7535 = vmatprep.subr.mxu0 0.0
    %7536 = vmatpush1.msra.mxu0 0.0
    %7537 = vmatprep.subr.mxu0 0.0
    %7538 = vmatpush1.msra.mxu0 0.0
    %7539 = vmatprep.subr.mxu0 0.0
    %7540 = vmatpush1.msra.mxu0 0.0
    %7541 = vmatprep.subr.mxu0 0.0
    %7542 = vmatpush1.msra.mxu0 0.0
    %7543 = vmatprep.subr.mxu0 0.0
    %7544 = vmatpush1.msra.mxu0 0.0
    %7545 = vmatprep.subr.mxu0 0.0
    %7546 = vmatpush1.msra.mxu0 0.0
    %7547 = vmatprep.subr.mxu0 0.0
    %7548 = vmatpush1.msra.mxu0 0.0
    %7549 = vmatprep.subr.mxu0 0.0
    %7550 = vmatpush1.msra.mxu0 0.0
    %7551 = vmatprep.subr.mxu0 0.0
    %7552 = vmatpush1.msra.mxu0 0.0
    %7553 = vmatprep.subr.mxu0 0.0
    %7554 = vmatpush1.msra.mxu0 0.0
    %7555 = vmatprep.subr.mxu0 0.0
    %7556 = vmatpush1.msra.mxu0 0.0
    %7557 = vmatprep.subr.mxu0 0.0
    %7558 = vmatpush1.msra.mxu0 0.0
    %7559 = vmatprep.subr.mxu0 0.0
    %7560 = vmatpush1.msra.mxu0 0.0
    %7561 = vmatprep.subr.mxu0 0.0
    %7562 = vmatpush1.msra.mxu0 0.0
    %7563 = vmatprep.subr.mxu0 0.0
    %7564 = vmatpush1.msra.mxu0 0.0
    %7565 = vmatprep.subr.mxu0 0.0
    %7566 = vmatpush1.msra.mxu0 0.0
    %7567 = vmatprep.subr.mxu0 0.0
    %7568 = vmatpush1.msra.mxu0 0.0
    %7569 = vmatprep.subr.mxu0 0.0
    %7570 = vmatpush1.msra.mxu0 0.0
    %7571 = vmatprep.subr.mxu0 0.0
    %7572 = vmatpush1.msra.mxu0 0.0
    %7573 = vmatprep.subr.mxu0 0.0
    %7574 = vmatpush1.msra.mxu0 0.0
    %7575 = vmatprep.subr.mxu0 0.0
    %7576 = vmatpush1.msra.mxu0 0.0
    %7577 = vmatprep.subr.mxu0 0.0
    %7578 = vmatpush1.msra.mxu0 0.0
    %7579 = vmatprep.mubr.f32.mxu0 0.0
    %7580 = vmatmul.mubr.f32.gmra.mrb[0].mxu0 %v6765
    %v7581 = vpop.f32.mrb[0].mxu0
    %v7582 = vadd.f32 0.0, %v7581
    %v7583 = vpop.f32.mrb[0].mxu0
    %7584 = vdwg.mxu0
    %v7586 = vrot.slane %v7582, 2
    %v7588 = vadd.f32 %v7514, %v7586
    %v7589 = vxor.u32 %v7588, 2147483648
    %v7590 = vmul.f32 %v7589, 1.442695
    %v7591 = vpow.pop %v7590
    %v7592 = vadd.f32 %v7591, 1.0
    %v7593 = vrcp.pop %v7592
    %v7594 = vmul.f32 1.0, %v7593
    %v7595 = vtanh.pop %v7588
    %v7597 = vrot.slane %v6754, 6
    %v7599 = vmul.f32 %v7594, %v7597
    %7601 = vrot.lane.b32.xlu0 %v7595, 64
    %v7602 = vpop.permute.xlu0 %7601
    %v7604 = vmul.f32 %v7594, %v7602
    %7606 = vrot.lane.b32.xlu0 %v7604, 32
    %v7607 = vpop.permute.xlu0 %7606
    %v7609 = vadd.f32 %v7599, %v7607
    %v7610 = vtanh.pop %v7609
    %7612 = vrot.lane.b32.xlu0 %v7610, 64
    %v7613 = vpop.permute.xlu0 %7612
    %v7615 = vmul.f32 %v7594, %v7613
    %v7617 = vrot.slane %v7615, 6
    %7618 = vrot.lane.b32.xlu0 %v7617, 32
    %v7619 = vpop.permute.xlu0 %7618
    %v7620 = vsel %vm658, %v7619, 0
    %7622 = vmatprep.subr.mxu0 0.0
    %7623 = vmatpush1.msra.mxu0 %v1207
    %7624 = vmatprep.subr.mxu0 0.0
    %7625 = vmatpush1.msra.mxu0 %v1208
    %7626 = vmatprep.subr.mxu0 0.0
    %7627 = vmatpush1.msra.mxu0 %v1209
    %7628 = vmatprep.subr.mxu0 0.0
    %7629 = vmatpush1.msra.mxu0 %v1210
    %7630 = vmatprep.subr.mxu0 0.0
    %7631 = vmatpush1.msra.mxu0 0.0
    %7632 = vmatprep.subr.mxu0 0.0
    %7633 = vmatpush1.msra.mxu0 0.0
    %7634 = vmatprep.subr.mxu0 0.0
    %7635 = vmatpush1.msra.mxu0 0.0
    %7636 = vmatprep.subr.mxu0 0.0
    %7637 = vmatpush1.msra.mxu0 0.0
    %7638 = vmatprep.subr.mxu0 0.0
    %7639 = vmatpush1.msra.mxu0 0.0
    %7640 = vmatprep.subr.mxu0 0.0
    %7641 = vmatpush1.msra.mxu0 0.0
    %7642 = vmatprep.subr.mxu0 0.0
    %7643 = vmatpush1.msra.mxu0 0.0
    %7644 = vmatprep.subr.mxu0 0.0
    %7645 = vmatpush1.msra.mxu0 0.0
    %7646 = vmatprep.subr.mxu0 0.0
    %7647 = vmatpush1.msra.mxu0 0.0
    %7648 = vmatprep.subr.mxu0 0.0
    %7649 = vmatpush1.msra.mxu0 0.0
    %7650 = vmatprep.subr.mxu0 0.0
    %7651 = vmatpush1.msra.mxu0 0.0
    %7652 = vmatprep.subr.mxu0 0.0
    %7653 = vmatpush1.msra.mxu0 0.0
    %7654 = vmatprep.subr.mxu0 0.0
    %7655 = vmatpush1.msra.mxu0 0.0
    %7656 = vmatprep.subr.mxu0 0.0
    %7657 = vmatpush1.msra.mxu0 0.0
    %7658 = vmatprep.subr.mxu0 0.0
    %7659 = vmatpush1.msra.mxu0 0.0
    %7660 = vmatprep.subr.mxu0 0.0
    %7661 = vmatpush1.msra.mxu0 0.0
    %7662 = vmatprep.subr.mxu0 0.0
    %7663 = vmatpush1.msra.mxu0 0.0
    %7664 = vmatprep.subr.mxu0 0.0
    %7665 = vmatpush1.msra.mxu0 0.0
    %7666 = vmatprep.subr.mxu0 0.0
    %7667 = vmatpush1.msra.mxu0 0.0
    %7668 = vmatprep.subr.mxu0 0.0
    %7669 = vmatpush1.msra.mxu0 0.0
    %7670 = vmatprep.subr.mxu0 0.0
    %7671 = vmatpush1.msra.mxu0 0.0
    %7672 = vmatprep.subr.mxu0 0.0
    %7673 = vmatpush1.msra.mxu0 0.0
    %7674 = vmatprep.subr.mxu0 0.0
    %7675 = vmatpush1.msra.mxu0 0.0
    %7676 = vmatprep.subr.mxu0 0.0
    %7677 = vmatpush1.msra.mxu0 0.0
    %7678 = vmatprep.subr.mxu0 0.0
    %7679 = vmatpush1.msra.mxu0 0.0
    %7680 = vmatprep.subr.mxu0 0.0
    %7681 = vmatpush1.msra.mxu0 0.0
    %7682 = vmatprep.subr.mxu0 0.0
    %7683 = vmatpush1.msra.mxu0 0.0
    %7684 = vmatprep.subr.mxu0 0.0
    %7685 = vmatpush1.msra.mxu0 0.0
    %7686 = vmatprep.mubr.f32.mxu0 0.0
    %7687 = vmatmul.mubr.f32.gmra.mrb[0].mxu0 %v7620
    %v7688 = vpop.f32.mrb[0].mxu0
    %v7689 = vadd.f32 %v1386, %v7688
    %v7690 = vpop.f32.mrb[0].mxu0
    %7691 = vdwg.mxu0
    %v7694 = vunpack.c.l.s4 1966171168
    %v7695 = vunpack.c.0.s8 %v7694
    %v7696 = vlaneseq
    %v7697 = vshrl.u32 %v7696, 7
    %v7698 = vsub.s32 %v7695, %v7697
    %v7699 = vrot.slane %v7689, %v7698
    %v7700 = vcombine.high %v7699, %v7699
    %v7702 = vunpack.c.l.s4 1966171168
    %v7703 = vunpack.c.0.s8 %v7702
    %v7704 = vlaneseq
    %v7705 = vshrl.u32 %v7704, 7
    %v7706 = vsub.s32 %v7703, %v7705
    %v7707 = vrot.slane %v7699, %v7706
    %v7709 = vunpack.c.l.s4 1966171168
    %v7710 = vunpack.c.0.s8 %v7709
    %v7711 = vlaneseq
    %v7712 = vshrl.u32 %v7711, 7
    %v7713 = vsub.s32 %v7710, %v7712
    %v7714 = vrot.slane %v7700, %v7713
    %v7715 = vlaneseq
    %v7716 = vshrl.u32 %v7715, 7
    %v7717 = vsub.s32 0, %v7716
    %v7718 = vrot.slane %v7707, %v7717
    %v7719 = vlaneseq
    %v7720 = vshrl.u32 %v7719, 7
    %v7721 = vsub.s32 0, %v7720
    %v7722 = vrot.slane %v7714, %v7721
    %v7725 = vadd.f32 %v7718, %v1544
    %v7726 = vadd.f32 %v7718, %v1592
    %v7727 = vadd.f32 %v7722, %v1641
    %v7728 = vadd.f32 %v7722, %v1689
    %v7729 = vtanh.pop %v7725
    %v7730 = vtanh.pop %v7726
    %v7731 = vtanh.pop %v7727
    %v7732 = vtanh.pop %v7728
    %v7733 = vmul.f32 %v7729, %v1179
    %v7734 = vmul.f32 %v7730, %v1179
    %v7735 = vmul.f32 %v7731, %v1179
    %v7736 = vmul.f32 %v7732, %v1179
    %v7737 = vsel %vm658, %v7733, 0.0
    %7738 = vadd.xlane.f32.xlu0 %v7737
    %v7739 = vpop.xlane.xlu0 %7738
    %v7740 = vsel %vm1709, %v7734, 0.0
    %7741 = vadd.xlane.f32.xlu0 %v7740
    %v7742 = vpop.xlane.xlu0 %7741
    %v7743 = vsel %vm658, %v7735, 0.0
    %7744 = vadd.xlane.f32.xlu0 %v7743
    %v7745 = vpop.xlane.xlu0 %7744
    %v7746 = vsel %vm1709, %v7736, 0.0
    %7747 = vadd.xlane.f32.xlu0 %v7746
    %v7748 = vpop.xlane.xlu0 %7747
    %v7749 = vadd.f32 %v7739, %v1726
    %v7750 = vadd.f32 %v7742, %v1730
    %v7751 = vadd.f32 %v7745, %v1737
    %v7752 = vadd.f32 %v7748, %v1741
    %7757 = vset.pattern.permute.xlu0 0
    %7758 = vperm.xlu0 %7757, %v7749
    %v7759 = vpop.permute.xlu0 %7758
    %7760 = vset.pattern.permute.xlu0 0
    %7761 = vperm.xlu0 %7760, %v7750
    %v7762 = vpop.permute.xlu0 %7761
    %7763 = vset.pattern.permute.xlu0 0
    %7764 = vperm.xlu0 %7763, %v7751
    %v7765 = vpop.permute.xlu0 %7764
    %7766 = vset.pattern.permute.xlu0 0
    %7767 = vperm.xlu0 %7766, %v7752
    %v7768 = vpop.permute.xlu0 %7767
    %v7769 = vlaneseq
    %v7770 = vshrl.u32 %v7769, 7
    %v7771 = vsub.s32 %v1767, %v7770
    %v7772 = vrot.slane %v7759, %v7771
    %v7773 = vlaneseq
    %v7774 = vshrl.u32 %v7773, 7
    %v7775 = vsub.s32 %v1772, %v7774
    %v7776 = vrot.slane %v7762, %v7775
    %v7777 = vsel %vm1777, %v7776, %v7772
    %v7778 = vlaneseq
    %v7779 = vshrl.u32 %v7778, 7
    %v7780 = vsub.s32 %v1767, %v7779
    %v7781 = vrot.slane %v7765, %v7780
    %v7782 = vlaneseq
    %v7783 = vshrl.u32 %v7782, 7
    %v7784 = vsub.s32 %v1772, %v7783
    %v7785 = vrot.slane %v7768, %v7784
    %v7786 = vsel %vm1777, %v7785, %v7781
    %v7787 = vsel %vm1788, %v7786, %v7777
    %v7789 = vsel %vm1791, %v7787, -inf
    %7790 = vmax.xlane.f32.xlu0 %v7789
    %v7791 = vpop.xlane.xlu0 %7790
    %v7793 = vlaneseq
    %v7794 = vshrl.u32 %v7793, 7
    %v7795 = vsub.s32 0, %v7794
    %v7796 = vrot.slane %v7791, %v7795
    %v7797 = vlaneseq
    %v7798 = vshrl.u32 %v7797, 7
    %v7799 = vsub.s32 1, %v7798
    %v7800 = vrot.slane %v7791, %v7799
    %v7803 = vsub.f32 %v7749, %v7796
    %v7804 = vsub.f32 %v7750, %v7796
    %v7805 = vsub.f32 %v7751, %v7800
    %v7806 = vsub.f32 %v7752, %v7800
    %v7807 = vmul.f32 %v7803, 1.442695
    %v7808 = vpow.pop %v7807
    %v7809 = vmul.f32 %v7804, 1.442695
    %v7810 = vpow.pop %v7809
    %v7811 = vmul.f32 %v7805, 1.442695
    %v7812 = vpow.pop %v7811
    %v7813 = vmul.f32 %v7806, 1.442695
    %v7814 = vpow.pop %v7813
    %7819 = vset.pattern.permute.xlu0 0
    %7820 = vperm.xlu0 %7819, %v7808
    %v7821 = vpop.permute.xlu0 %7820
    %7822 = vset.pattern.permute.xlu0 0
    %7823 = vperm.xlu0 %7822, %v7810
    %v7824 = vpop.permute.xlu0 %7823
    %7825 = vset.pattern.permute.xlu0 0
    %7826 = vperm.xlu0 %7825, %v7812
    %v7827 = vpop.permute.xlu0 %7826
    %7828 = vset.pattern.permute.xlu0 0
    %7829 = vperm.xlu0 %7828, %v7814
    %v7830 = vpop.permute.xlu0 %7829
    %v7831 = vlaneseq
    %v7832 = vshrl.u32 %v7831, 7
    %v7833 = vsub.s32 %v1767, %v7832
    %v7834 = vrot.slane %v7821, %v7833
    %v7835 = vlaneseq
    %v7836 = vshrl.u32 %v7835, 7
    %v7837 = vsub.s32 %v1772, %v7836
    %v7838 = vrot.slane %v7824, %v7837
    %v7839 = vsel %vm1777, %v7838, %v7834
    %v7840 = vlaneseq
    %v7841 = vshrl.u32 %v7840, 7
    %v7842 = vsub.s32 %v1767, %v7841
    %v7843 = vrot.slane %v7827, %v7842
    %v7844 = vlaneseq
    %v7845 = vshrl.u32 %v7844, 7
    %v7846 = vsub.s32 %v1772, %v7845
    %v7847 = vrot.slane %v7830, %v7846
    %v7848 = vsel %vm1777, %v7847, %v7843
    %v7849 = vsel %vm1788, %v7848, %v7839
    %v7851 = vsel %vm1791, %v7849, 0.0
    %7852 = vadd.xlane.f32.xlu0 %v7851
    %v7853 = vpop.xlane.xlu0 %7852
    %v7854 = vrcp.pop %v7853
    %v7856 = vlaneseq
    %v7857 = vshrl.u32 %v7856, 7
    %v7858 = vsub.s32 0, %v7857
    %v7859 = vrot.slane %v7854, %v7858
    %v7860 = vlaneseq
    %v7861 = vshrl.u32 %v7860, 7
    %v7862 = vsub.s32 1, %v7861
    %v7863 = vrot.slane %v7854, %v7862
    %v7866 = vmul.f32 %v7808, %v7859
    %v7867 = vmul.f32 %v7810, %v7859
    %v7868 = vmul.f32 %v7812, %v7863
    %v7869 = vmul.f32 %v7814, %v7863
    %7872 = vset.pattern.permute.xlu0 0
    %7873 = vperm.xlu0 %7872, %v7866
    %v7874 = vpop.permute.xlu0 %7873
    %7875 = vset.pattern.permute.xlu0 0
    %7876 = vperm.xlu0 %7875, %v7867
    %v7877 = vpop.permute.xlu0 %7876
    %v7878 = vlaneseq
    %v7879 = vshrl.u32 %v7878, 7
    %v7880 = vsub.s32 %v1767, %v7879
    %v7881 = vrot.slane %v7874, %v7880
    %v7882 = vlaneseq
    %v7883 = vshrl.u32 %v7882, 7
    %v7884 = vsub.s32 %v1772, %v7883
    %v7885 = vrot.slane %v7877, %v7884
    %v7886 = vsel %vm1777, %v7885, %v7881
    %v7887 = vsel %vm1890, %v7886, 0
    %7889 = vmatprep.subr.mxu0 0.0
    %7890 = vmatpush1.msra.mxu0 %v248
    %7891 = vmatprep.subr.mxu0 0.0
    %7892 = vmatpush1.msra.mxu0 %v1894
    %7893 = vmatprep.subr.mxu0 0.0
    %7894 = vmatpush1.msra.mxu0 0.0
    %7895 = vmatprep.subr.mxu0 0.0
    %7896 = vmatpush1.msra.mxu0 0.0
    %7897 = vmatprep.subr.mxu0 0.0
    %7898 = vmatpush1.msra.mxu0 0.0
    %7899 = vmatprep.subr.mxu0 0.0
    %7900 = vmatpush1.msra.mxu0 0.0
    %7901 = vmatprep.subr.mxu0 0.0
    %7902 = vmatpush1.msra.mxu0 0.0
    %7903 = vmatprep.subr.mxu0 0.0
    %7904 = vmatpush1.msra.mxu0 0.0
    %7905 = vmatprep.subr.mxu0 0.0
    %7906 = vmatpush1.msra.mxu0 0.0
    %7907 = vmatprep.subr.mxu0 0.0
    %7908 = vmatpush1.msra.mxu0 0.0
    %7909 = vmatprep.subr.mxu0 0.0
    %7910 = vmatpush1.msra.mxu0 0.0
    %7911 = vmatprep.subr.mxu0 0.0
    %7912 = vmatpush1.msra.mxu0 0.0
    %7913 = vmatprep.subr.mxu0 0.0
    %7914 = vmatpush1.msra.mxu0 0.0
    %7915 = vmatprep.subr.mxu0 0.0
    %7916 = vmatpush1.msra.mxu0 0.0
    %7917 = vmatprep.subr.mxu0 0.0
    %7918 = vmatpush1.msra.mxu0 0.0
    %7919 = vmatprep.subr.mxu0 0.0
    %7920 = vmatpush1.msra.mxu0 0.0
    %7921 = vmatprep.subr.mxu0 0.0
    %7922 = vmatpush1.msra.mxu0 0.0
    %7923 = vmatprep.subr.mxu0 0.0
    %7924 = vmatpush1.msra.mxu0 0.0
    %7925 = vmatprep.subr.mxu0 0.0
    %7926 = vmatpush1.msra.mxu0 0.0
    %7927 = vmatprep.subr.mxu0 0.0
    %7928 = vmatpush1.msra.mxu0 0.0
    %7929 = vmatprep.subr.mxu0 0.0
    %7930 = vmatpush1.msra.mxu0 0.0
    %7931 = vmatprep.subr.mxu0 0.0
    %7932 = vmatpush1.msra.mxu0 0.0
    %7933 = vmatprep.subr.mxu0 0.0
    %7934 = vmatpush1.msra.mxu0 0.0
    %7935 = vmatprep.subr.mxu0 0.0
    %7936 = vmatpush1.msra.mxu0 0.0
    %7937 = vmatprep.subr.mxu0 0.0
    %7938 = vmatpush1.msra.mxu0 0.0
    %7939 = vmatprep.subr.mxu0 0.0
    %7940 = vmatpush1.msra.mxu0 0.0
    %7941 = vmatprep.subr.mxu0 0.0
    %7942 = vmatpush1.msra.mxu0 0.0
    %7943 = vmatprep.subr.mxu0 0.0
    %7944 = vmatpush1.msra.mxu0 0.0
    %7945 = vmatprep.subr.mxu0 0.0
    %7946 = vmatpush1.msra.mxu0 0.0
    %7947 = vmatprep.subr.mxu0 0.0
    %7948 = vmatpush1.msra.mxu0 0.0
    %7949 = vmatprep.subr.mxu0 0.0
    %7950 = vmatpush1.msra.mxu0 0.0
    %7951 = vmatprep.subr.mxu0 0.0
    %7952 = vmatpush1.msra.mxu0 0.0
    %7953 = vmatprep.mubr.f32.mxu0 0.0
    %7954 = vmatmul.mubr.f32.gmra.mrb[0].mxu0 %v7887
    %v7955 = vpop.f32.mrb[0].mxu0
    %v7956 = vadd.f32 0.0, %v7955
    %v7957 = vpop.f32.mrb[0].mxu0
    %7958 = vdwg.mxu0
    %7961 = vset.pattern.permute.xlu0 0
    %7962 = vperm.xlu0 %7961, %v7868
    %v7963 = vpop.permute.xlu0 %7962
    %7964 = vset.pattern.permute.xlu0 0
    %7965 = vperm.xlu0 %7964, %v7869
    %v7966 = vpop.permute.xlu0 %7965
    %v7967 = vlaneseq
    %v7968 = vshrl.u32 %v7967, 7
    %v7969 = vsub.s32 %v1767, %v7968
    %v7970 = vrot.slane %v7963, %v7969
    %v7971 = vlaneseq
    %v7972 = vshrl.u32 %v7971, 7
    %v7973 = vsub.s32 %v1772, %v7972
    %v7974 = vrot.slane %v7966, %v7973
    %v7975 = vsel %vm1777, %v7974, %v7970
    %v7976 = vsel %vm1890, %v7975, 0
    %7978 = vmatprep.subr.mxu0 0.0
    %7979 = vmatpush1.msra.mxu0 %v250
    %7980 = vmatprep.subr.mxu0 0.0
    %7981 = vmatpush1.msra.mxu0 %v1985
    %7982 = vmatprep.subr.mxu0 0.0
    %7983 = vmatpush1.msra.mxu0 0.0
    %7984 = vmatprep.subr.mxu0 0.0
    %7985 = vmatpush1.msra.mxu0 0.0
    %7986 = vmatprep.subr.mxu0 0.0
    %7987 = vmatpush1.msra.mxu0 0.0
    %7988 = vmatprep.subr.mxu0 0.0
    %7989 = vmatpush1.msra.mxu0 0.0
    %7990 = vmatprep.subr.mxu0 0.0
    %7991 = vmatpush1.msra.mxu0 0.0
    %7992 = vmatprep.subr.mxu0 0.0
    %7993 = vmatpush1.msra.mxu0 0.0
    %7994 = vmatprep.subr.mxu0 0.0
    %7995 = vmatpush1.msra.mxu0 0.0
    %7996 = vmatprep.subr.mxu0 0.0
    %7997 = vmatpush1.msra.mxu0 0.0
    %7998 = vmatprep.subr.mxu0 0.0
    %7999 = vmatpush1.msra.mxu0 0.0
    %8000 = vmatprep.subr.mxu0 0.0
    %8001 = vmatpush1.msra.mxu0 0.0
    %8002 = vmatprep.subr.mxu0 0.0
    %8003 = vmatpush1.msra.mxu0 0.0
    %8004 = vmatprep.subr.mxu0 0.0
    %8005 = vmatpush1.msra.mxu0 0.0
    %8006 = vmatprep.subr.mxu0 0.0
    %8007 = vmatpush1.msra.mxu0 0.0
    %8008 = vmatprep.subr.mxu0 0.0
    %8009 = vmatpush1.msra.mxu0 0.0
    %8010 = vmatprep.subr.mxu0 0.0
    %8011 = vmatpush1.msra.mxu0 0.0
    %8012 = vmatprep.subr.mxu0 0.0
    %8013 = vmatpush1.msra.mxu0 0.0
    %8014 = vmatprep.subr.mxu0 0.0
    %8015 = vmatpush1.msra.mxu0 0.0
    %8016 = vmatprep.subr.mxu0 0.0
    %8017 = vmatpush1.msra.mxu0 0.0
    %8018 = vmatprep.subr.mxu0 0.0
    %8019 = vmatpush1.msra.mxu0 0.0
    %8020 = vmatprep.subr.mxu0 0.0
    %8021 = vmatpush1.msra.mxu0 0.0
    %8022 = vmatprep.subr.mxu0 0.0
    %8023 = vmatpush1.msra.mxu0 0.0
    %8024 = vmatprep.subr.mxu0 0.0
    %8025 = vmatpush1.msra.mxu0 0.0
    %8026 = vmatprep.subr.mxu0 0.0
    %8027 = vmatpush1.msra.mxu0 0.0
    %8028 = vmatprep.subr.mxu0 0.0
    %8029 = vmatpush1.msra.mxu0 0.0
    %8030 = vmatprep.subr.mxu0 0.0
    %8031 = vmatpush1.msra.mxu0 0.0
    %8032 = vmatprep.subr.mxu0 0.0
    %8033 = vmatpush1.msra.mxu0 0.0
    %8034 = vmatprep.subr.mxu0 0.0
    %8035 = vmatpush1.msra.mxu0 0.0
    %8036 = vmatprep.subr.mxu0 0.0
    %8037 = vmatpush1.msra.mxu0 0.0
    %8038 = vmatprep.subr.mxu0 0.0
    %8039 = vmatpush1.msra.mxu0 0.0
    %8040 = vmatprep.subr.mxu0 0.0
    %8041 = vmatpush1.msra.mxu0 0.0
    %8042 = vmatprep.mubr.f32.mxu0 0.0
    %8043 = vmatmul.mubr.f32.gmra.mrb[0].mxu0 %v7976
    %v8044 = vpop.f32.mrb[0].mxu0
    %v8045 = vadd.f32 0.0, %v8044
    %v8046 = vpop.f32.mrb[0].mxu0
    %8047 = vdwg.mxu0
    %8048 = vmatprep.subr.mxu0 0.0
    %8049 = vmatpush1.msra.mxu0 %v1198
    %8050 = vmatprep.subr.mxu0 0.0
    %8051 = vmatpush1.msra.mxu0 %v1199
    %8052 = vmatprep.subr.mxu0 0.0
    %8053 = vmatpush1.msra.mxu0 %v1200
    %8054 = vmatprep.subr.mxu0 0.0
    %8055 = vmatpush1.msra.mxu0 %v1201
    %8056 = vmatprep.subr.mxu0 0.0
    %8057 = vmatpush1.msra.mxu0 0.0
    %8058 = vmatprep.subr.mxu0 0.0
    %8059 = vmatpush1.msra.mxu0 0.0
    %8060 = vmatprep.subr.mxu0 0.0
    %8061 = vmatpush1.msra.mxu0 0.0
    %8062 = vmatprep.subr.mxu0 0.0
    %8063 = vmatpush1.msra.mxu0 0.0
    %8064 = vmatprep.subr.mxu0 0.0
    %8065 = vmatpush1.msra.mxu0 0.0
    %8066 = vmatprep.subr.mxu0 0.0
    %8067 = vmatpush1.msra.mxu0 0.0
    %8068 = vmatprep.subr.mxu0 0.0
    %8069 = vmatpush1.msra.mxu0 0.0
    %8070 = vmatprep.subr.mxu0 0.0
    %8071 = vmatpush1.msra.mxu0 0.0
    %8072 = vmatprep.subr.mxu0 0.0
    %8073 = vmatpush1.msra.mxu0 0.0
    %8074 = vmatprep.subr.mxu0 0.0
    %8075 = vmatpush1.msra.mxu0 0.0
    %8076 = vmatprep.subr.mxu0 0.0
    %8077 = vmatpush1.msra.mxu0 0.0
    %8078 = vmatprep.subr.mxu0 0.0
    %8079 = vmatpush1.msra.mxu0 0.0
    %8080 = vmatprep.subr.mxu0 0.0
    %8081 = vmatpush1.msra.mxu0 0.0
    %8082 = vmatprep.subr.mxu0 0.0
    %8083 = vmatpush1.msra.mxu0 0.0
    %8084 = vmatprep.subr.mxu0 0.0
    %8085 = vmatpush1.msra.mxu0 0.0
    %8086 = vmatprep.subr.mxu0 0.0
    %8087 = vmatpush1.msra.mxu0 0.0
    %8088 = vmatprep.subr.mxu0 0.0
    %8089 = vmatpush1.msra.mxu0 0.0
    %8090 = vmatprep.subr.mxu0 0.0
    %8091 = vmatpush1.msra.mxu0 0.0
    %8092 = vmatprep.subr.mxu0 0.0
    %8093 = vmatpush1.msra.mxu0 0.0
    %8094 = vmatprep.subr.mxu0 0.0
    %8095 = vmatpush1.msra.mxu0 0.0
    %8096 = vmatprep.subr.mxu0 0.0
    %8097 = vmatpush1.msra.mxu0 0.0
    %8098 = vmatprep.subr.mxu0 0.0
    %8099 = vmatpush1.msra.mxu0 0.0
    %8100 = vmatprep.subr.mxu0 0.0
    %8101 = vmatpush1.msra.mxu0 0.0
    %8102 = vmatprep.subr.mxu0 0.0
    %8103 = vmatpush1.msra.mxu0 0.0
    %8104 = vmatprep.subr.mxu0 0.0
    %8105 = vmatpush1.msra.mxu0 0.0
    %8106 = vmatprep.subr.mxu0 0.0
    %8107 = vmatpush1.msra.mxu0 0.0
    %8108 = vmatprep.subr.mxu0 0.0
    %8109 = vmatpush1.msra.mxu0 0.0
    %8110 = vmatprep.subr.mxu0 0.0
    %8111 = vmatpush1.msra.mxu0 0.0
    %8112 = vmatprep.mubr.f32.mxu0 0.0
    %8113 = vmatmul.mubr.f32.gmra.mrb[0].mxu0 %v7620
    %v8114 = vpop.f32.mrb[0].mxu0
    %v8115 = vadd.f32 0.0, %v8114
    %v8116 = vpop.f32.mrb[0].mxu0
    %8117 = vdwg.mxu0
    %v8120 = vrot.slane %v8045, 7
    %v8121 = vsel %vm1788, %v8120, %v7956
    %v8122 = vsel %vm658, %v8121, 0
    %8124 = vmatprep.subr.mxu0 0.0
    %8125 = vmatpush1.msra.mxu0 %v1194
    %8126 = vmatprep.subr.mxu0 0.0
    %8127 = vmatpush1.msra.mxu0 %v1195
    %8128 = vmatprep.subr.mxu0 0.0
    %8129 = vmatpush1.msra.mxu0 %v1196
    %8130 = vmatprep.subr.mxu0 0.0
    %8131 = vmatpush1.msra.mxu0 %v1197
    %8132 = vmatprep.subr.mxu0 0.0
    %8133 = vmatpush1.msra.mxu0 0.0
    %8134 = vmatprep.subr.mxu0 0.0
    %8135 = vmatpush1.msra.mxu0 0.0
    %8136 = vmatprep.subr.mxu0 0.0
    %8137 = vmatpush1.msra.mxu0 0.0
    %8138 = vmatprep.subr.mxu0 0.0
    %8139 = vmatpush1.msra.mxu0 0.0
    %8140 = vmatprep.subr.mxu0 0.0
    %8141 = vmatpush1.msra.mxu0 0.0
    %8142 = vmatprep.subr.mxu0 0.0
    %8143 = vmatpush1.msra.mxu0 0.0
    %8144 = vmatprep.subr.mxu0 0.0
    %8145 = vmatpush1.msra.mxu0 0.0
    %8146 = vmatprep.subr.mxu0 0.0
    %8147 = vmatpush1.msra.mxu0 0.0
    %8148 = vmatprep.subr.mxu0 0.0
    %8149 = vmatpush1.msra.mxu0 0.0
    %8150 = vmatprep.subr.mxu0 0.0
    %8151 = vmatpush1.msra.mxu0 0.0
    %8152 = vmatprep.subr.mxu0 0.0
    %8153 = vmatpush1.msra.mxu0 0.0
    %8154 = vmatprep.subr.mxu0 0.0
    %8155 = vmatpush1.msra.mxu0 0.0
    %8156 = vmatprep.subr.mxu0 0.0
    %8157 = vmatpush1.msra.mxu0 0.0
    %8158 = vmatprep.subr.mxu0 0.0
    %8159 = vmatpush1.msra.mxu0 0.0
    %8160 = vmatprep.subr.mxu0 0.0
    %8161 = vmatpush1.msra.mxu0 0.0
    %8162 = vmatprep.subr.mxu0 0.0
    %8163 = vmatpush1.msra.mxu0 0.0
    %8164 = vmatprep.subr.mxu0 0.0
    %8165 = vmatpush1.msra.mxu0 0.0
    %8166 = vmatprep.subr.mxu0 0.0
    %8167 = vmatpush1.msra.mxu0 0.0
    %8168 = vmatprep.subr.mxu0 0.0
    %8169 = vmatpush1.msra.mxu0 0.0
    %8170 = vmatprep.subr.mxu0 0.0
    %8171 = vmatpush1.msra.mxu0 0.0
    %8172 = vmatprep.subr.mxu0 0.0
    %8173 = vmatpush1.msra.mxu0 0.0
    %8174 = vmatprep.subr.mxu0 0.0
    %8175 = vmatpush1.msra.mxu0 0.0
    %8176 = vmatprep.subr.mxu0 0.0
    %8177 = vmatpush1.msra.mxu0 0.0
    %8178 = vmatprep.subr.mxu0 0.0
    %8179 = vmatpush1.msra.mxu0 0.0
    %8180 = vmatprep.subr.mxu0 0.0
    %8181 = vmatpush1.msra.mxu0 0.0
    %8182 = vmatprep.subr.mxu0 0.0
    %8183 = vmatpush1.msra.mxu0 0.0
    %8184 = vmatprep.subr.mxu0 0.0
    %8185 = vmatpush1.msra.mxu0 0.0
    %8186 = vmatprep.subr.mxu0 0.0
    %8187 = vmatpush1.msra.mxu0 0.0
    %8188 = vmatprep.mubr.f32.mxu0 0.0
    %8189 = vmatmul.mubr.f32.gmra.mrb[0].mxu0 %v8122
    %v8190 = vpop.f32.mrb[0].mxu0
    %v8191 = vadd.f32 %v8115, %v8190
    %v8192 = vpop.f32.mrb[0].mxu0
    %8193 = vdwg.mxu0
    %8194 = vmatprep.subr.mxu0 0.0
    %8195 = vmatpush1.msra.mxu0 %v1202
    %8196 = vmatprep.subr.mxu0 0.0
    %8197 = vmatpush1.msra.mxu0 %v1203
    %8198 = vmatprep.subr.mxu0 0.0
    %8199 = vmatpush1.msra.mxu0 %v1204
    %8200 = vmatprep.subr.mxu0 0.0
    %8201 = vmatpush1.msra.mxu0 %v1205
    %8202 = vmatprep.subr.mxu0 0.0
    %8203 = vmatpush1.msra.mxu0 0.0
    %8204 = vmatprep.subr.mxu0 0.0
    %8205 = vmatpush1.msra.mxu0 0.0
    %8206 = vmatprep.subr.mxu0 0.0
    %8207 = vmatpush1.msra.mxu0 0.0
    %8208 = vmatprep.subr.mxu0 0.0
    %8209 = vmatpush1.msra.mxu0 0.0
    %8210 = vmatprep.subr.mxu0 0.0
    %8211 = vmatpush1.msra.mxu0 0.0
    %8212 = vmatprep.subr.mxu0 0.0
    %8213 = vmatpush1.msra.mxu0 0.0
    %8214 = vmatprep.subr.mxu0 0.0
    %8215 = vmatpush1.msra.mxu0 0.0
    %8216 = vmatprep.subr.mxu0 0.0
    %8217 = vmatpush1.msra.mxu0 0.0
    %8218 = vmatprep.subr.mxu0 0.0
    %8219 = vmatpush1.msra.mxu0 0.0
    %8220 = vmatprep.subr.mxu0 0.0
    %8221 = vmatpush1.msra.mxu0 0.0
    %8222 = vmatprep.subr.mxu0 0.0
    %8223 = vmatpush1.msra.mxu0 0.0
    %8224 = vmatprep.subr.mxu0 0.0
    %8225 = vmatpush1.msra.mxu0 0.0
    %8226 = vmatprep.subr.mxu0 0.0
    %8227 = vmatpush1.msra.mxu0 0.0
    %8228 = vmatprep.subr.mxu0 0.0
    %8229 = vmatpush1.msra.mxu0 0.0
    %8230 = vmatprep.subr.mxu0 0.0
    %8231 = vmatpush1.msra.mxu0 0.0
    %8232 = vmatprep.subr.mxu0 0.0
    %8233 = vmatpush1.msra.mxu0 0.0
    %8234 = vmatprep.subr.mxu0 0.0
    %8235 = vmatpush1.msra.mxu0 0.0
    %8236 = vmatprep.subr.mxu0 0.0
    %8237 = vmatpush1.msra.mxu0 0.0
    %8238 = vmatprep.subr.mxu0 0.0
    %8239 = vmatpush1.msra.mxu0 0.0
    %8240 = vmatprep.subr.mxu0 0.0
    %8241 = vmatpush1.msra.mxu0 0.0
    %8242 = vmatprep.subr.mxu0 0.0
    %8243 = vmatpush1.msra.mxu0 0.0
    %8244 = vmatprep.subr.mxu0 0.0
    %8245 = vmatpush1.msra.mxu0 0.0
    %8246 = vmatprep.subr.mxu0 0.0
    %8247 = vmatpush1.msra.mxu0 0.0
    %8248 = vmatprep.subr.mxu0 0.0
    %8249 = vmatpush1.msra.mxu0 0.0
    %8250 = vmatprep.subr.mxu0 0.0
    %8251 = vmatpush1.msra.mxu0 0.0
    %8252 = vmatprep.subr.mxu0 0.0
    %8253 = vmatpush1.msra.mxu0 0.0
    %8254 = vmatprep.subr.mxu0 0.0
    %8255 = vmatpush1.msra.mxu0 0.0
    %8256 = vmatprep.subr.mxu0 0.0
    %8257 = vmatpush1.msra.mxu0 0.0
    %8258 = vmatprep.mubr.f32.mxu0 0.0
    %8259 = vmatmul.mubr.f32.gmra.mrb[0].mxu0 %v7439
    %v8260 = vpop.f32.mrb[0].mxu0
    %v8261 = vadd.f32 0.0, %v8260
    %v8262 = vpop.f32.mrb[0].mxu0
    %8263 = vdwg.mxu0
    %v8264 = vadd.f32 %v8191, %v8261
    %v8265 = vadd.f32 %v8264, %v2278
    %v8266 = vxor.u32 %v8265, 2147483648
    %v8267 = vmul.f32 %v8266, 1.442695
    %v8268 = vpow.pop %v8267
    %v8269 = vadd.f32 %v8268, 1.0
    %v8270 = vrcp.pop %v8269
    %v8271 = vmul.f32 1.0, %v8270
    %v8272 = vtanh.pop %v8265
    %v8273 = vmul.f32 %v8271, %v7428
    %8275 = vrot.lane.b32.xlu0 %v8272, 64
    %v8276 = vpop.permute.xlu0 %8275
    %v8278 = vmul.f32 %v8271, %v8276
    %8280 = vrot.lane.b32.xlu0 %v8278, 32
    %v8281 = vpop.permute.xlu0 %8280
    %v8283 = vadd.f32 %v8273, %v8281
    %v8284 = vtanh.pop %v8283
    %8286 = vrot.lane.b32.xlu0 %v8284, 64
    %v8287 = vpop.permute.xlu0 %8286
    %v8289 = vmul.f32 %v8271, %v8287
    %v8290 = vadd.f32 %v1171, %v1031
    %8292 = vrot.lane.b32.xlu0 %v8289, 32
    %v8293 = vpop.permute.xlu0 %8292
    %v8294 = vsel %vm658, %v8293, 0
    %8296 = vmatprep.subr.mxu0 0.0
    %8297 = vmatpush1.msra.mxu0 %v1186
    %8298 = vmatprep.subr.mxu0 0.0
    %8299 = vmatpush1.msra.mxu0 %v1187
    %8300 = vmatprep.subr.mxu0 0.0
    %8301 = vmatpush1.msra.mxu0 %v1188
    %8302 = vmatprep.subr.mxu0 0.0
    %8303 = vmatpush1.msra.mxu0 %v1189
    %8304 = vmatprep.subr.mxu0 0.0
    %8305 = vmatpush1.msra.mxu0 0.0
    %8306 = vmatprep.subr.mxu0 0.0
    %8307 = vmatpush1.msra.mxu0 0.0
    %8308 = vmatprep.subr.mxu0 0.0
    %8309 = vmatpush1.msra.mxu0 0.0
    %8310 = vmatprep.subr.mxu0 0.0
    %8311 = vmatpush1.msra.mxu0 0.0
    %8312 = vmatprep.subr.mxu0 0.0
    %8313 = vmatpush1.msra.mxu0 0.0
    %8314 = vmatprep.subr.mxu0 0.0
    %8315 = vmatpush1.msra.mxu0 0.0
    %8316 = vmatprep.subr.mxu0 0.0
    %8317 = vmatpush1.msra.mxu0 0.0
    %8318 = vmatprep.subr.mxu0 0.0
    %8319 = vmatpush1.msra.mxu0 0.0
    %8320 = vmatprep.subr.mxu0 0.0
    %8321 = vmatpush1.msra.mxu0 0.0
    %8322 = vmatprep.subr.mxu0 0.0
    %8323 = vmatpush1.msra.mxu0 0.0
    %8324 = vmatprep.subr.mxu0 0.0
    %8325 = vmatpush1.msra.mxu0 0.0
    %8326 = vmatprep.subr.mxu0 0.0
    %8327 = vmatpush1.msra.mxu0 0.0
    %8328 = vmatprep.subr.mxu0 0.0
    %8329 = vmatpush1.msra.mxu0 0.0
    %8330 = vmatprep.subr.mxu0 0.0
    %8331 = vmatpush1.msra.mxu0 0.0
    %8332 = vmatprep.subr.mxu0 0.0
    %8333 = vmatpush1.msra.mxu0 0.0
    %8334 = vmatprep.subr.mxu0 0.0
    %8335 = vmatpush1.msra.mxu0 0.0
    %8336 = vmatprep.subr.mxu0 0.0
    %8337 = vmatpush1.msra.mxu0 0.0
    %8338 = vmatprep.subr.mxu0 0.0
    %8339 = vmatpush1.msra.mxu0 0.0
    %8340 = vmatprep.subr.mxu0 0.0
    %8341 = vmatpush1.msra.mxu0 0.0
    %8342 = vmatprep.subr.mxu0 0.0
    %8343 = vmatpush1.msra.mxu0 0.0
    %8344 = vmatprep.subr.mxu0 0.0
    %8345 = vmatpush1.msra.mxu0 0.0
    %8346 = vmatprep.subr.mxu0 0.0
    %8347 = vmatpush1.msra.mxu0 0.0
    %8348 = vmatprep.subr.mxu0 0.0
    %8349 = vmatpush1.msra.mxu0 0.0
    %8350 = vmatprep.subr.mxu0 0.0
    %8351 = vmatpush1.msra.mxu0 0.0
    %8352 = vmatprep.subr.mxu0 0.0
    %8353 = vmatpush1.msra.mxu0 0.0
    %8354 = vmatprep.subr.mxu0 0.0
    %8355 = vmatpush1.msra.mxu0 0.0
    %8356 = vmatprep.subr.mxu0 0.0
    %8357 = vmatpush1.msra.mxu0 0.0
    %8358 = vmatprep.subr.mxu0 0.0
    %8359 = vmatpush1.msra.mxu0 0.0
    %8360 = vmatprep.mubr.f32.mxu0 0.0
    %8361 = vmatmul.mubr.f32.gmra.mrb[0].mxu0 %v8294
    %v8362 = vpop.f32.mrb[0].mxu0
    %v8363 = vadd.f32 0.0, %v8362
    %v8364 = vpop.f32.mrb[0].mxu0
    %8365 = vdwg.mxu0
    %v8366 = vadd.f32 %v8290, %v8363
    %8367 = vmatprep.subr.mxu0 0.0
    %8368 = vmatpush1.msra.mxu0 %v1190
    %8369 = vmatprep.subr.mxu0 0.0
    %8370 = vmatpush1.msra.mxu0 %v1191
    %8371 = vmatprep.subr.mxu0 0.0
    %8372 = vmatpush1.msra.mxu0 %v1192
    %8373 = vmatprep.subr.mxu0 0.0
    %8374 = vmatpush1.msra.mxu0 %v1193
    %8375 = vmatprep.subr.mxu0 0.0
    %8376 = vmatpush1.msra.mxu0 0.0
    %8377 = vmatprep.subr.mxu0 0.0
    %8378 = vmatpush1.msra.mxu0 0.0
    %8379 = vmatprep.subr.mxu0 0.0
    %8380 = vmatpush1.msra.mxu0 0.0
    %8381 = vmatprep.subr.mxu0 0.0
    %8382 = vmatpush1.msra.mxu0 0.0
    %8383 = vmatprep.subr.mxu0 0.0
    %8384 = vmatpush1.msra.mxu0 0.0
    %8385 = vmatprep.subr.mxu0 0.0
    %8386 = vmatpush1.msra.mxu0 0.0
    %8387 = vmatprep.subr.mxu0 0.0
    %8388 = vmatpush1.msra.mxu0 0.0
    %8389 = vmatprep.subr.mxu0 0.0
    %8390 = vmatpush1.msra.mxu0 0.0
    %8391 = vmatprep.subr.mxu0 0.0
    %8392 = vmatpush1.msra.mxu0 0.0
    %8393 = vmatprep.subr.mxu0 0.0
    %8394 = vmatpush1.msra.mxu0 0.0
    %8395 = vmatprep.subr.mxu0 0.0
    %8396 = vmatpush1.msra.mxu0 0.0
    %8397 = vmatprep.subr.mxu0 0.0
    %8398 = vmatpush1.msra.mxu0 0.0
    %8399 = vmatprep.subr.mxu0 0.0
    %8400 = vmatpush1.msra.mxu0 0.0
    %8401 = vmatprep.subr.mxu0 0.0
    %8402 = vmatpush1.msra.mxu0 0.0
    %8403 = vmatprep.subr.mxu0 0.0
    %8404 = vmatpush1.msra.mxu0 0.0
    %8405 = vmatprep.subr.mxu0 0.0
    %8406 = vmatpush1.msra.mxu0 0.0
    %8407 = vmatprep.subr.mxu0 0.0
    %8408 = vmatpush1.msra.mxu0 0.0
    %8409 = vmatprep.subr.mxu0 0.0
    %8410 = vmatpush1.msra.mxu0 0.0
    %8411 = vmatprep.subr.mxu0 0.0
    %8412 = vmatpush1.msra.mxu0 0.0
    %8413 = vmatprep.subr.mxu0 0.0
    %8414 = vmatpush1.msra.mxu0 0.0
    %8415 = vmatprep.subr.mxu0 0.0
    %8416 = vmatpush1.msra.mxu0 0.0
    %8417 = vmatprep.subr.mxu0 0.0
    %8418 = vmatpush1.msra.mxu0 0.0
    %8419 = vmatprep.subr.mxu0 0.0
    %8420 = vmatpush1.msra.mxu0 0.0
    %8421 = vmatprep.subr.mxu0 0.0
    %8422 = vmatpush1.msra.mxu0 0.0
    %8423 = vmatprep.subr.mxu0 0.0
    %8424 = vmatpush1.msra.mxu0 0.0
    %8425 = vmatprep.subr.mxu0 0.0
    %8426 = vmatpush1.msra.mxu0 0.0
    %8427 = vmatprep.subr.mxu0 0.0
    %8428 = vmatpush1.msra.mxu0 0.0
    %8429 = vmatprep.subr.mxu0 0.0
    %8430 = vmatpush1.msra.mxu0 0.0
    %8431 = vmatprep.mubr.f32.mxu0 0.0
    %8432 = vmatmul.mubr.f32.gmra.mrb[0].mxu0 %v7620
    %v8433 = vpop.f32.mrb[0].mxu0
    %v8434 = vadd.f32 0.0, %v8433
    %v8435 = vpop.f32.mrb[0].mxu0
    %8436 = vdwg.mxu0
    %v8437 = vadd.f32 %v8366, %v8434
    %v8438 = vxor.u32 %v8437, 2147483648
    %v8439 = vmul.f32 %v8438, 1.442695
    %v8440 = vpow.pop %v8439
    %v8441 = vadd.f32 %v8440, 1.0
    %v8442 = vrcp.pop %v8441
    %v8443 = vmul.f32 1.0, %v8442
    %v8444 = vtanh.pop %v8437
    %v8446 = vrot.slane %v7609, 6
    %v8448 = vmul.f32 %v8443, %v8446
    %8450 = vrot.lane.b32.xlu0 %v8444, 64
    %v8451 = vpop.permute.xlu0 %8450
    %v8453 = vmul.f32 %v8443, %v8451
    %8455 = vrot.lane.b32.xlu0 %v8453, 32
    %v8456 = vpop.permute.xlu0 %8455
    %v8458 = vadd.f32 %v8448, %v8456
    %v8459 = vtanh.pop %v8458
    %8461 = vrot.lane.b32.xlu0 %v8459, 64
    %v8462 = vpop.permute.xlu0 %8461
    %v8464 = vmul.f32 %v8443, %v8462
    %8466 = vrot.lane.b32.xlu0 %v8464, 32
    %v8467 = vpop.permute.xlu0 %8466
    %v8468 = vsel %vm658, %v8467, 0
    %8470 = vmatprep.subr.mxu0 0.0
    %8471 = vmatpush1.msra.mxu0 %v1207
    %8472 = vmatprep.subr.mxu0 0.0
    %8473 = vmatpush1.msra.mxu0 %v1208
    %8474 = vmatprep.subr.mxu0 0.0
    %8475 = vmatpush1.msra.mxu0 %v1209
    %8476 = vmatprep.subr.mxu0 0.0
    %8477 = vmatpush1.msra.mxu0 %v1210
    %8478 = vmatprep.subr.mxu0 0.0
    %8479 = vmatpush1.msra.mxu0 0.0
    %8480 = vmatprep.subr.mxu0 0.0
    %8481 = vmatpush1.msra.mxu0 0.0
    %8482 = vmatprep.subr.mxu0 0.0
    %8483 = vmatpush1.msra.mxu0 0.0
    %8484 = vmatprep.subr.mxu0 0.0
    %8485 = vmatpush1.msra.mxu0 0.0
    %8486 = vmatprep.subr.mxu0 0.0
    %8487 = vmatpush1.msra.mxu0 0.0
    %8488 = vmatprep.subr.mxu0 0.0
    %8489 = vmatpush1.msra.mxu0 0.0
    %8490 = vmatprep.subr.mxu0 0.0
    %8491 = vmatpush1.msra.mxu0 0.0
    %8492 = vmatprep.subr.mxu0 0.0
    %8493 = vmatpush1.msra.mxu0 0.0
    %8494 = vmatprep.subr.mxu0 0.0
    %8495 = vmatpush1.msra.mxu0 0.0
    %8496 = vmatprep.subr.mxu0 0.0
    %8497 = vmatpush1.msra.mxu0 0.0
    %8498 = vmatprep.subr.mxu0 0.0
    %8499 = vmatpush1.msra.mxu0 0.0
    %8500 = vmatprep.subr.mxu0 0.0
    %8501 = vmatpush1.msra.mxu0 0.0
    %8502 = vmatprep.subr.mxu0 0.0
    %8503 = vmatpush1.msra.mxu0 0.0
    %8504 = vmatprep.subr.mxu0 0.0
    %8505 = vmatpush1.msra.mxu0 0.0
    %8506 = vmatprep.subr.mxu0 0.0
    %8507 = vmatpush1.msra.mxu0 0.0
    %8508 = vmatprep.subr.mxu0 0.0
    %8509 = vmatpush1.msra.mxu0 0.0
    %8510 = vmatprep.subr.mxu0 0.0
    %8511 = vmatpush1.msra.mxu0 0.0
    %8512 = vmatprep.subr.mxu0 0.0
    %8513 = vmatpush1.msra.mxu0 0.0
    %8514 = vmatprep.subr.mxu0 0.0
    %8515 = vmatpush1.msra.mxu0 0.0
    %8516 = vmatprep.subr.mxu0 0.0
    %8517 = vmatpush1.msra.mxu0 0.0
    %8518 = vmatprep.subr.mxu0 0.0
    %8519 = vmatpush1.msra.mxu0 0.0
    %8520 = vmatprep.subr.mxu0 0.0
    %8521 = vmatpush1.msra.mxu0 0.0
    %8522 = vmatprep.subr.mxu0 0.0
    %8523 = vmatpush1.msra.mxu0 0.0
    %8524 = vmatprep.subr.mxu0 0.0
    %8525 = vmatpush1.msra.mxu0 0.0
    %8526 = vmatprep.subr.mxu0 0.0
    %8527 = vmatpush1.msra.mxu0 0.0
    %8528 = vmatprep.subr.mxu0 0.0
    %8529 = vmatpush1.msra.mxu0 0.0
    %8530 = vmatprep.subr.mxu0 0.0
    %8531 = vmatpush1.msra.mxu0 0.0
    %8532 = vmatprep.subr.mxu0 0.0
    %8533 = vmatpush1.msra.mxu0 0.0
    %8534 = vmatprep.mubr.f32.mxu0 0.0
    %8535 = vmatmul.mubr.f32.gmra.mrb[0].mxu0 %v8468
    %v8536 = vpop.f32.mrb[0].mxu0
    %v8537 = vadd.f32 %v1386, %v8536
    %v8538 = vpop.f32.mrb[0].mxu0
    %8539 = vdwg.mxu0
    %v8542 = vunpack.c.l.s4 1966171168
    %v8543 = vunpack.c.0.s8 %v8542
    %v8544 = vlaneseq
    %v8545 = vshrl.u32 %v8544, 7
    %v8546 = vsub.s32 %v8543, %v8545
    %v8547 = vrot.slane %v8537, %v8546
    %v8548 = vcombine.high %v8547, %v8547
    %v8550 = vunpack.c.l.s4 1966171168
    %v8551 = vunpack.c.0.s8 %v8550
    %v8552 = vlaneseq
    %v8553 = vshrl.u32 %v8552, 7
    %v8554 = vsub.s32 %v8551, %v8553
    %v8555 = vrot.slane %v8547, %v8554
    %v8557 = vunpack.c.l.s4 1966171168
    %v8558 = vunpack.c.0.s8 %v8557
    %v8559 = vlaneseq
    %v8560 = vshrl.u32 %v8559, 7
    %v8561 = vsub.s32 %v8558, %v8560
    %v8562 = vrot.slane %v8548, %v8561
    %v8563 = vlaneseq
    %v8564 = vshrl.u32 %v8563, 7
    %v8565 = vsub.s32 0, %v8564
    %v8566 = vrot.slane %v8555, %v8565
    %v8567 = vlaneseq
    %v8568 = vshrl.u32 %v8567, 7
    %v8569 = vsub.s32 0, %v8568
    %v8570 = vrot.slane %v8562, %v8569
    %v8573 = vadd.f32 %v8566, %v1544
    %v8574 = vadd.f32 %v8566, %v1592
    %v8575 = vadd.f32 %v8570, %v1641
    %v8576 = vadd.f32 %v8570, %v1689
    %v8577 = vtanh.pop %v8573
    %v8578 = vtanh.pop %v8574
    %v8579 = vtanh.pop %v8575
    %v8580 = vtanh.pop %v8576
    %v8581 = vmul.f32 %v8577, %v1179
    %v8582 = vmul.f32 %v8578, %v1179
    %v8583 = vmul.f32 %v8579, %v1179
    %v8584 = vmul.f32 %v8580, %v1179
    %v8585 = vsel %vm658, %v8581, 0.0
    %8586 = vadd.xlane.f32.xlu0 %v8585
    %v8587 = vpop.xlane.xlu0 %8586
    %v8588 = vsel %vm1709, %v8582, 0.0
    %8589 = vadd.xlane.f32.xlu0 %v8588
    %v8590 = vpop.xlane.xlu0 %8589
    %v8591 = vsel %vm658, %v8583, 0.0
    %8592 = vadd.xlane.f32.xlu0 %v8591
    %v8593 = vpop.xlane.xlu0 %8592
    %v8594 = vsel %vm1709, %v8584, 0.0
    %8595 = vadd.xlane.f32.xlu0 %v8594
    %v8596 = vpop.xlane.xlu0 %8595
    %v8597 = vadd.f32 %v8587, %v1726
    %v8598 = vadd.f32 %v8590, %v1730
    %v8599 = vadd.f32 %v8593, %v1737
    %v8600 = vadd.f32 %v8596, %v1741
    %8605 = vset.pattern.permute.xlu0 0
    %8606 = vperm.xlu0 %8605, %v8597
    %v8607 = vpop.permute.xlu0 %8606
    %8608 = vset.pattern.permute.xlu0 0
    %8609 = vperm.xlu0 %8608, %v8598
    %v8610 = vpop.permute.xlu0 %8609
    %8611 = vset.pattern.permute.xlu0 0
    %8612 = vperm.xlu0 %8611, %v8599
    %v8613 = vpop.permute.xlu0 %8612
    %8614 = vset.pattern.permute.xlu0 0
    %8615 = vperm.xlu0 %8614, %v8600
    %v8616 = vpop.permute.xlu0 %8615
    %v8617 = vlaneseq
    %v8618 = vshrl.u32 %v8617, 7
    %v8619 = vsub.s32 %v1767, %v8618
    %v8620 = vrot.slane %v8607, %v8619
    %v8621 = vlaneseq
    %v8622 = vshrl.u32 %v8621, 7
    %v8623 = vsub.s32 %v1772, %v8622
    %v8624 = vrot.slane %v8610, %v8623
    %v8625 = vsel %vm1777, %v8624, %v8620
    %v8626 = vlaneseq
    %v8627 = vshrl.u32 %v8626, 7
    %v8628 = vsub.s32 %v1767, %v8627
    %v8629 = vrot.slane %v8613, %v8628
    %v8630 = vlaneseq
    %v8631 = vshrl.u32 %v8630, 7
    %v8632 = vsub.s32 %v1772, %v8631
    %v8633 = vrot.slane %v8616, %v8632
    %v8634 = vsel %vm1777, %v8633, %v8629
    %v8635 = vsel %vm1788, %v8634, %v8625
    %v8637 = vsel %vm1791, %v8635, -inf
    %8638 = vmax.xlane.f32.xlu0 %v8637
    %v8639 = vpop.xlane.xlu0 %8638
    %v8641 = vlaneseq
    %v8642 = vshrl.u32 %v8641, 7
    %v8643 = vsub.s32 0, %v8642
    %v8644 = vrot.slane %v8639, %v8643
    %v8645 = vlaneseq
    %v8646 = vshrl.u32 %v8645, 7
    %v8647 = vsub.s32 1, %v8646
    %v8648 = vrot.slane %v8639, %v8647
    %v8651 = vsub.f32 %v8597, %v8644
    %v8652 = vsub.f32 %v8598, %v8644
    %v8653 = vsub.f32 %v8599, %v8648
    %v8654 = vsub.f32 %v8600, %v8648
    %v8655 = vmul.f32 %v8651, 1.442695
    %v8656 = vpow.pop %v8655
    %v8657 = vmul.f32 %v8652, 1.442695
    %v8658 = vpow.pop %v8657
    %v8659 = vmul.f32 %v8653, 1.442695
    %v8660 = vpow.pop %v8659
    %v8661 = vmul.f32 %v8654, 1.442695
    %v8662 = vpow.pop %v8661
    %8667 = vset.pattern.permute.xlu0 0
    %8668 = vperm.xlu0 %8667, %v8656
    %v8669 = vpop.permute.xlu0 %8668
    %8670 = vset.pattern.permute.xlu0 0
    %8671 = vperm.xlu0 %8670, %v8658
    %v8672 = vpop.permute.xlu0 %8671
    %8673 = vset.pattern.permute.xlu0 0
    %8674 = vperm.xlu0 %8673, %v8660
    %v8675 = vpop.permute.xlu0 %8674
    %8676 = vset.pattern.permute.xlu0 0
    %8677 = vperm.xlu0 %8676, %v8662
    %v8678 = vpop.permute.xlu0 %8677
    %v8679 = vlaneseq
    %v8680 = vshrl.u32 %v8679, 7
    %v8681 = vsub.s32 %v1767, %v8680
    %v8682 = vrot.slane %v8669, %v8681
    %v8683 = vlaneseq
    %v8684 = vshrl.u32 %v8683, 7
    %v8685 = vsub.s32 %v1772, %v8684
    %v8686 = vrot.slane %v8672, %v8685
    %v8687 = vsel %vm1777, %v8686, %v8682
    %v8688 = vlaneseq
    %v8689 = vshrl.u32 %v8688, 7
    %v8690 = vsub.s32 %v1767, %v8689
    %v8691 = vrot.slane %v8675, %v8690
    %v8692 = vlaneseq
    %v8693 = vshrl.u32 %v8692, 7
    %v8694 = vsub.s32 %v1772, %v8693
    %v8695 = vrot.slane %v8678, %v8694
    %v8696 = vsel %vm1777, %v8695, %v8691
    %v8697 = vsel %vm1788, %v8696, %v8687
    %v8699 = vsel %vm1791, %v8697, 0.0
    %8700 = vadd.xlane.f32.xlu0 %v8699
    %v8701 = vpop.xlane.xlu0 %8700
    %v8702 = vrcp.pop %v8701
    %v8704 = vlaneseq
    %v8705 = vshrl.u32 %v8704, 7
    %v8706 = vsub.s32 0, %v8705
    %v8707 = vrot.slane %v8702, %v8706
    %v8708 = vlaneseq
    %v8709 = vshrl.u32 %v8708, 7
    %v8710 = vsub.s32 1, %v8709
    %v8711 = vrot.slane %v8702, %v8710
    %v8714 = vmul.f32 %v8656, %v8707
    %v8715 = vmul.f32 %v8658, %v8707
    %v8716 = vmul.f32 %v8660, %v8711
    %v8717 = vmul.f32 %v8662, %v8711
    %8720 = vset.pattern.permute.xlu0 0
    %8721 = vperm.xlu0 %8720, %v8714
    %v8722 = vpop.permute.xlu0 %8721
    %8723 = vset.pattern.permute.xlu0 0
    %8724 = vperm.xlu0 %8723, %v8715
    %v8725 = vpop.permute.xlu0 %8724
    %v8726 = vlaneseq
    %v8727 = vshrl.u32 %v8726, 7
    %v8728 = vsub.s32 %v1767, %v8727
    %v8729 = vrot.slane %v8722, %v8728
    %v8730 = vlaneseq
    %v8731 = vshrl.u32 %v8730, 7
    %v8732 = vsub.s32 %v1772, %v8731
    %v8733 = vrot.slane %v8725, %v8732
    %v8734 = vsel %vm1777, %v8733, %v8729
    %v8735 = vsel %vm1890, %v8734, 0
    %8737 = vmatprep.subr.mxu0 0.0
    %8738 = vmatpush1.msra.mxu0 %v248
    %8739 = vmatprep.subr.mxu0 0.0
    %8740 = vmatpush1.msra.mxu0 %v1894
    %8741 = vmatprep.subr.mxu0 0.0
    %8742 = vmatpush1.msra.mxu0 0.0
    %8743 = vmatprep.subr.mxu0 0.0
    %8744 = vmatpush1.msra.mxu0 0.0
    %8745 = vmatprep.subr.mxu0 0.0
    %8746 = vmatpush1.msra.mxu0 0.0
    %8747 = vmatprep.subr.mxu0 0.0
    %8748 = vmatpush1.msra.mxu0 0.0
    %8749 = vmatprep.subr.mxu0 0.0
    %8750 = vmatpush1.msra.mxu0 0.0
    %8751 = vmatprep.subr.mxu0 0.0
    %8752 = vmatpush1.msra.mxu0 0.0
    %8753 = vmatprep.subr.mxu0 0.0
    %8754 = vmatpush1.msra.mxu0 0.0
    %8755 = vmatprep.subr.mxu0 0.0
    %8756 = vmatpush1.msra.mxu0 0.0
    %8757 = vmatprep.subr.mxu0 0.0
    %8758 = vmatpush1.msra.mxu0 0.0
    %8759 = vmatprep.subr.mxu0 0.0
    %8760 = vmatpush1.msra.mxu0 0.0
    %8761 = vmatprep.subr.mxu0 0.0
    %8762 = vmatpush1.msra.mxu0 0.0
    %8763 = vmatprep.subr.mxu0 0.0
    %8764 = vmatpush1.msra.mxu0 0.0
    %8765 = vmatprep.subr.mxu0 0.0
    %8766 = vmatpush1.msra.mxu0 0.0
    %8767 = vmatprep.subr.mxu0 0.0
    %8768 = vmatpush1.msra.mxu0 0.0
    %8769 = vmatprep.subr.mxu0 0.0
    %8770 = vmatpush1.msra.mxu0 0.0
    %8771 = vmatprep.subr.mxu0 0.0
    %8772 = vmatpush1.msra.mxu0 0.0
    %8773 = vmatprep.subr.mxu0 0.0
    %8774 = vmatpush1.msra.mxu0 0.0
    %8775 = vmatprep.subr.mxu0 0.0
    %8776 = vmatpush1.msra.mxu0 0.0
    %8777 = vmatprep.subr.mxu0 0.0
    %8778 = vmatpush1.msra.mxu0 0.0
    %8779 = vmatprep.subr.mxu0 0.0
    %8780 = vmatpush1.msra.mxu0 0.0
    %8781 = vmatprep.subr.mxu0 0.0
    %8782 = vmatpush1.msra.mxu0 0.0
    %8783 = vmatprep.subr.mxu0 0.0
    %8784 = vmatpush1.msra.mxu0 0.0
    %8785 = vmatprep.subr.mxu0 0.0
    %8786 = vmatpush1.msra.mxu0 0.0
    %8787 = vmatprep.subr.mxu0 0.0
    %8788 = vmatpush1.msra.mxu0 0.0
    %8789 = vmatprep.subr.mxu0 0.0
    %8790 = vmatpush1.msra.mxu0 0.0
    %8791 = vmatprep.subr.mxu0 0.0
    %8792 = vmatpush1.msra.mxu0 0.0
    %8793 = vmatprep.subr.mxu0 0.0
    %8794 = vmatpush1.msra.mxu0 0.0
    %8795 = vmatprep.subr.mxu0 0.0
    %8796 = vmatpush1.msra.mxu0 0.0
    %8797 = vmatprep.subr.mxu0 0.0
    %8798 = vmatpush1.msra.mxu0 0.0
    %8799 = vmatprep.subr.mxu0 0.0
    %8800 = vmatpush1.msra.mxu0 0.0
    %8801 = vmatprep.mubr.f32.mxu0 0.0
    %8802 = vmatmul.mubr.f32.gmra.mrb[0].mxu0 %v8735
    %v8803 = vpop.f32.mrb[0].mxu0
    %v8804 = vadd.f32 0.0, %v8803
    %v8805 = vpop.f32.mrb[0].mxu0
    %8806 = vdwg.mxu0
    %8809 = vset.pattern.permute.xlu0 0
    %8810 = vperm.xlu0 %8809, %v8716
    %v8811 = vpop.permute.xlu0 %8810
    %8812 = vset.pattern.permute.xlu0 0
    %8813 = vperm.xlu0 %8812, %v8717
    %v8814 = vpop.permute.xlu0 %8813
    %v8815 = vlaneseq
    %v8816 = vshrl.u32 %v8815, 7
    %v8817 = vsub.s32 %v1767, %v8816
    %v8818 = vrot.slane %v8811, %v8817
    %v8819 = vlaneseq
    %v8820 = vshrl.u32 %v8819, 7
    %v8821 = vsub.s32 %v1772, %v8820
    %v8822 = vrot.slane %v8814, %v8821
    %v8823 = vsel %vm1777, %v8822, %v8818
    %v8824 = vsel %vm1890, %v8823, 0
    %8826 = vmatprep.subr.mxu0 0.0
    %8827 = vmatpush1.msra.mxu0 %v250
    %8828 = vmatprep.subr.mxu0 0.0
    %8829 = vmatpush1.msra.mxu0 %v1985
    %8830 = vmatprep.subr.mxu0 0.0
    %8831 = vmatpush1.msra.mxu0 0.0
    %8832 = vmatprep.subr.mxu0 0.0
    %8833 = vmatpush1.msra.mxu0 0.0
    %8834 = vmatprep.subr.mxu0 0.0
    %8835 = vmatpush1.msra.mxu0 0.0
    %8836 = vmatprep.subr.mxu0 0.0
    %8837 = vmatpush1.msra.mxu0 0.0
    %8838 = vmatprep.subr.mxu0 0.0
    %8839 = vmatpush1.msra.mxu0 0.0
    %8840 = vmatprep.subr.mxu0 0.0
    %8841 = vmatpush1.msra.mxu0 0.0
    %8842 = vmatprep.subr.mxu0 0.0
    %8843 = vmatpush1.msra.mxu0 0.0
    %8844 = vmatprep.subr.mxu0 0.0
    %8845 = vmatpush1.msra.mxu0 0.0
    %8846 = vmatprep.subr.mxu0 0.0
    %8847 = vmatpush1.msra.mxu0 0.0
    %8848 = vmatprep.subr.mxu0 0.0
    %8849 = vmatpush1.msra.mxu0 0.0
    %8850 = vmatprep.subr.mxu0 0.0
    %8851 = vmatpush1.msra.mxu0 0.0
    %8852 = vmatprep.subr.mxu0 0.0
    %8853 = vmatpush1.msra.mxu0 0.0
    %8854 = vmatprep.subr.mxu0 0.0
    %8855 = vmatpush1.msra.mxu0 0.0
    %8856 = vmatprep.subr.mxu0 0.0
    %8857 = vmatpush1.msra.mxu0 0.0
    %8858 = vmatprep.subr.mxu0 0.0
    %8859 = vmatpush1.msra.mxu0 0.0
    %8860 = vmatprep.subr.mxu0 0.0
    %8861 = vmatpush1.msra.mxu0 0.0
    %8862 = vmatprep.subr.mxu0 0.0
    %8863 = vmatpush1.msra.mxu0 0.0
    %8864 = vmatprep.subr.mxu0 0.0
    %8865 = vmatpush1.msra.mxu0 0.0
    %8866 = vmatprep.subr.mxu0 0.0
    %8867 = vmatpush1.msra.mxu0 0.0
    %8868 = vmatprep.subr.mxu0 0.0
    %8869 = vmatpush1.msra.mxu0 0.0
    %8870 = vmatprep.subr.mxu0 0.0
    %8871 = vmatpush1.msra.mxu0 0.0
    %8872 = vmatprep.subr.mxu0 0.0
    %8873 = vmatpush1.msra.mxu0 0.0
    %8874 = vmatprep.subr.mxu0 0.0
    %8875 = vmatpush1.msra.mxu0 0.0
    %8876 = vmatprep.subr.mxu0 0.0
    %8877 = vmatpush1.msra.mxu0 0.0
    %8878 = vmatprep.subr.mxu0 0.0
    %8879 = vmatpush1.msra.mxu0 0.0
    %8880 = vmatprep.subr.mxu0 0.0
    %8881 = vmatpush1.msra.mxu0 0.0
    %8882 = vmatprep.subr.mxu0 0.0
    %8883 = vmatpush1.msra.mxu0 0.0
    %8884 = vmatprep.subr.mxu0 0.0
    %8885 = vmatpush1.msra.mxu0 0.0
    %8886 = vmatprep.subr.mxu0 0.0
    %8887 = vmatpush1.msra.mxu0 0.0
    %8888 = vmatprep.subr.mxu0 0.0
    %8889 = vmatpush1.msra.mxu0 0.0
    %8890 = vmatprep.mubr.f32.mxu0 0.0
    %8891 = vmatmul.mubr.f32.gmra.mrb[0].mxu0 %v8824
    %v8892 = vpop.f32.mrb[0].mxu0
    %v8893 = vadd.f32 0.0, %v8892
    %v8894 = vpop.f32.mrb[0].mxu0
    %8895 = vdwg.mxu0
    %8896 = vmatprep.subr.mxu0 0.0
    %8897 = vmatpush1.msra.mxu0 %v1198
    %8898 = vmatprep.subr.mxu0 0.0
    %8899 = vmatpush1.msra.mxu0 %v1199
    %8900 = vmatprep.subr.mxu0 0.0
    %8901 = vmatpush1.msra.mxu0 %v1200
    %8902 = vmatprep.subr.mxu0 0.0
    %8903 = vmatpush1.msra.mxu0 %v1201
    %8904 = vmatprep.subr.mxu0 0.0
    %8905 = vmatpush1.msra.mxu0 0.0
    %8906 = vmatprep.subr.mxu0 0.0
    %8907 = vmatpush1.msra.mxu0 0.0
    %8908 = vmatprep.subr.mxu0 0.0
    %8909 = vmatpush1.msra.mxu0 0.0
    %8910 = vmatprep.subr.mxu0 0.0
    %8911 = vmatpush1.msra.mxu0 0.0
    %8912 = vmatprep.subr.mxu0 0.0
    %8913 = vmatpush1.msra.mxu0 0.0
    %8914 = vmatprep.subr.mxu0 0.0
    %8915 = vmatpush1.msra.mxu0 0.0
    %8916 = vmatprep.subr.mxu0 0.0
    %8917 = vmatpush1.msra.mxu0 0.0
    %8918 = vmatprep.subr.mxu0 0.0
    %8919 = vmatpush1.msra.mxu0 0.0
    %8920 = vmatprep.subr.mxu0 0.0
    %8921 = vmatpush1.msra.mxu0 0.0
    %8922 = vmatprep.subr.mxu0 0.0
    %8923 = vmatpush1.msra.mxu0 0.0
    %8924 = vmatprep.subr.mxu0 0.0
    %8925 = vmatpush1.msra.mxu0 0.0
    %8926 = vmatprep.subr.mxu0 0.0
    %8927 = vmatpush1.msra.mxu0 0.0
    %8928 = vmatprep.subr.mxu0 0.0
    %8929 = vmatpush1.msra.mxu0 0.0
    %8930 = vmatprep.subr.mxu0 0.0
    %8931 = vmatpush1.msra.mxu0 0.0
    %8932 = vmatprep.subr.mxu0 0.0
    %8933 = vmatpush1.msra.mxu0 0.0
    %8934 = vmatprep.subr.mxu0 0.0
    %8935 = vmatpush1.msra.mxu0 0.0
    %8936 = vmatprep.subr.mxu0 0.0
    %8937 = vmatpush1.msra.mxu0 0.0
    %8938 = vmatprep.subr.mxu0 0.0
    %8939 = vmatpush1.msra.mxu0 0.0
    %8940 = vmatprep.subr.mxu0 0.0
    %8941 = vmatpush1.msra.mxu0 0.0
    %8942 = vmatprep.subr.mxu0 0.0
    %8943 = vmatpush1.msra.mxu0 0.0
    %8944 = vmatprep.subr.mxu0 0.0
    %8945 = vmatpush1.msra.mxu0 0.0
    %8946 = vmatprep.subr.mxu0 0.0
    %8947 = vmatpush1.msra.mxu0 0.0
    %8948 = vmatprep.subr.mxu0 0.0
    %8949 = vmatpush1.msra.mxu0 0.0
    %8950 = vmatprep.subr.mxu0 0.0
    %8951 = vmatpush1.msra.mxu0 0.0
    %8952 = vmatprep.subr.mxu0 0.0
    %8953 = vmatpush1.msra.mxu0 0.0
    %8954 = vmatprep.subr.mxu0 0.0
    %8955 = vmatpush1.msra.mxu0 0.0
    %8956 = vmatprep.subr.mxu0 0.0
    %8957 = vmatpush1.msra.mxu0 0.0
    %8958 = vmatprep.subr.mxu0 0.0
    %8959 = vmatpush1.msra.mxu0 0.0
    %8960 = vmatprep.mubr.f32.mxu0 0.0
    %8961 = vmatmul.mubr.f32.gmra.mrb[0].mxu0 %v8468
    %v8962 = vpop.f32.mrb[0].mxu0
    %v8963 = vadd.f32 0.0, %v8962
    %v8964 = vpop.f32.mrb[0].mxu0
    %8965 = vdwg.mxu0
    %v8968 = vrot.slane %v8893, 7
    %v8969 = vsel %vm1788, %v8968, %v8804
    %v8970 = vsel %vm658, %v8969, 0
    %8972 = vmatprep.subr.mxu0 0.0
    %8973 = vmatpush1.msra.mxu0 %v1194
    %8974 = vmatprep.subr.mxu0 0.0
    %8975 = vmatpush1.msra.mxu0 %v1195
    %8976 = vmatprep.subr.mxu0 0.0
    %8977 = vmatpush1.msra.mxu0 %v1196
    %8978 = vmatprep.subr.mxu0 0.0
    %8979 = vmatpush1.msra.mxu0 %v1197
    %8980 = vmatprep.subr.mxu0 0.0
    %8981 = vmatpush1.msra.mxu0 0.0
    %8982 = vmatprep.subr.mxu0 0.0
    %8983 = vmatpush1.msra.mxu0 0.0
    %8984 = vmatprep.subr.mxu0 0.0
    %8985 = vmatpush1.msra.mxu0 0.0
    %8986 = vmatprep.subr.mxu0 0.0
    %8987 = vmatpush1.msra.mxu0 0.0
    %8988 = vmatprep.subr.mxu0 0.0
    %8989 = vmatpush1.msra.mxu0 0.0
    %8990 = vmatprep.subr.mxu0 0.0
    %8991 = vmatpush1.msra.mxu0 0.0
    %8992 = vmatprep.subr.mxu0 0.0
    %8993 = vmatpush1.msra.mxu0 0.0
    %8994 = vmatprep.subr.mxu0 0.0
    %8995 = vmatpush1.msra.mxu0 0.0
    %8996 = vmatprep.subr.mxu0 0.0
    %8997 = vmatpush1.msra.mxu0 0.0
    %8998 = vmatprep.subr.mxu0 0.0
    %8999 = vmatpush1.msra.mxu0 0.0
    %9000 = vmatprep.subr.mxu0 0.0
    %9001 = vmatpush1.msra.mxu0 0.0
    %9002 = vmatprep.subr.mxu0 0.0
    %9003 = vmatpush1.msra.mxu0 0.0
    %9004 = vmatprep.subr.mxu0 0.0
    %9005 = vmatpush1.msra.mxu0 0.0
    %9006 = vmatprep.subr.mxu0 0.0
    %9007 = vmatpush1.msra.mxu0 0.0
    %9008 = vmatprep.subr.mxu0 0.0
    %9009 = vmatpush1.msra.mxu0 0.0
    %9010 = vmatprep.subr.mxu0 0.0
    %9011 = vmatpush1.msra.mxu0 0.0
    %9012 = vmatprep.subr.mxu0 0.0
    %9013 = vmatpush1.msra.mxu0 0.0
    %9014 = vmatprep.subr.mxu0 0.0
    %9015 = vmatpush1.msra.mxu0 0.0
    %9016 = vmatprep.subr.mxu0 0.0
    %9017 = vmatpush1.msra.mxu0 0.0
    %9018 = vmatprep.subr.mxu0 0.0
    %9019 = vmatpush1.msra.mxu0 0.0
    %9020 = vmatprep.subr.mxu0 0.0
    %9021 = vmatpush1.msra.mxu0 0.0
    %9022 = vmatprep.subr.mxu0 0.0
    %9023 = vmatpush1.msra.mxu0 0.0
    %9024 = vmatprep.subr.mxu0 0.0
    %9025 = vmatpush1.msra.mxu0 0.0
    %9026 = vmatprep.subr.mxu0 0.0
    %9027 = vmatpush1.msra.mxu0 0.0
    %9028 = vmatprep.subr.mxu0 0.0
    %9029 = vmatpush1.msra.mxu0 0.0
    %9030 = vmatprep.subr.mxu0 0.0
    %9031 = vmatpush1.msra.mxu0 0.0
    %9032 = vmatprep.subr.mxu0 0.0
    %9033 = vmatpush1.msra.mxu0 0.0
    %9034 = vmatprep.subr.mxu0 0.0
    %9035 = vmatpush1.msra.mxu0 0.0
    %9036 = vmatprep.mubr.f32.mxu0 0.0
    %9037 = vmatmul.mubr.f32.gmra.mrb[0].mxu0 %v8970
    %v9038 = vpop.f32.mrb[0].mxu0
    %v9039 = vadd.f32 %v8963, %v9038
    %v9040 = vpop.f32.mrb[0].mxu0
    %9041 = vdwg.mxu0
    %9042 = vmatprep.subr.mxu0 0.0
    %9043 = vmatpush1.msra.mxu0 %v1202
    %9044 = vmatprep.subr.mxu0 0.0
    %9045 = vmatpush1.msra.mxu0 %v1203
    %9046 = vmatprep.subr.mxu0 0.0
    %9047 = vmatpush1.msra.mxu0 %v1204
    %9048 = vmatprep.subr.mxu0 0.0
    %9049 = vmatpush1.msra.mxu0 %v1205
    %9050 = vmatprep.subr.mxu0 0.0
    %9051 = vmatpush1.msra.mxu0 0.0
    %9052 = vmatprep.subr.mxu0 0.0
    %9053 = vmatpush1.msra.mxu0 0.0
    %9054 = vmatprep.subr.mxu0 0.0
    %9055 = vmatpush1.msra.mxu0 0.0
    %9056 = vmatprep.subr.mxu0 0.0
    %9057 = vmatpush1.msra.mxu0 0.0
    %9058 = vmatprep.subr.mxu0 0.0
    %9059 = vmatpush1.msra.mxu0 0.0
    %9060 = vmatprep.subr.mxu0 0.0
    %9061 = vmatpush1.msra.mxu0 0.0
    %9062 = vmatprep.subr.mxu0 0.0
    %9063 = vmatpush1.msra.mxu0 0.0
    %9064 = vmatprep.subr.mxu0 0.0
    %9065 = vmatpush1.msra.mxu0 0.0
    %9066 = vmatprep.subr.mxu0 0.0
    %9067 = vmatpush1.msra.mxu0 0.0
    %9068 = vmatprep.subr.mxu0 0.0
    %9069 = vmatpush1.msra.mxu0 0.0
    %9070 = vmatprep.subr.mxu0 0.0
    %9071 = vmatpush1.msra.mxu0 0.0
    %9072 = vmatprep.subr.mxu0 0.0
    %9073 = vmatpush1.msra.mxu0 0.0
    %9074 = vmatprep.subr.mxu0 0.0
    %9075 = vmatpush1.msra.mxu0 0.0
    %9076 = vmatprep.subr.mxu0 0.0
    %9077 = vmatpush1.msra.mxu0 0.0
    %9078 = vmatprep.subr.mxu0 0.0
    %9079 = vmatpush1.msra.mxu0 0.0
    %9080 = vmatprep.subr.mxu0 0.0
    %9081 = vmatpush1.msra.mxu0 0.0
    %9082 = vmatprep.subr.mxu0 0.0
    %9083 = vmatpush1.msra.mxu0 0.0
    %9084 = vmatprep.subr.mxu0 0.0
    %9085 = vmatpush1.msra.mxu0 0.0
    %9086 = vmatprep.subr.mxu0 0.0
    %9087 = vmatpush1.msra.mxu0 0.0
    %9088 = vmatprep.subr.mxu0 0.0
    %9089 = vmatpush1.msra.mxu0 0.0
    %9090 = vmatprep.subr.mxu0 0.0
    %9091 = vmatpush1.msra.mxu0 0.0
    %9092 = vmatprep.subr.mxu0 0.0
    %9093 = vmatpush1.msra.mxu0 0.0
    %9094 = vmatprep.subr.mxu0 0.0
    %9095 = vmatpush1.msra.mxu0 0.0
    %9096 = vmatprep.subr.mxu0 0.0
    %9097 = vmatpush1.msra.mxu0 0.0
    %9098 = vmatprep.subr.mxu0 0.0
    %9099 = vmatpush1.msra.mxu0 0.0
    %9100 = vmatprep.subr.mxu0 0.0
    %9101 = vmatpush1.msra.mxu0 0.0
    %9102 = vmatprep.subr.mxu0 0.0
    %9103 = vmatpush1.msra.mxu0 0.0
    %9104 = vmatprep.subr.mxu0 0.0
    %9105 = vmatpush1.msra.mxu0 0.0
    %9106 = vmatprep.mubr.f32.mxu0 0.0
    %9107 = vmatmul.mubr.f32.gmra.mrb[0].mxu0 %v8294
    %v9108 = vpop.f32.mrb[0].mxu0
    %v9109 = vadd.f32 0.0, %v9108
    %v9110 = vpop.f32.mrb[0].mxu0
    %9111 = vdwg.mxu0
    %v9112 = vadd.f32 %v9039, %v9109
    %v9113 = vadd.f32 %v9112, %v2278
    %v9114 = vxor.u32 %v9113, 2147483648
    %v9115 = vmul.f32 %v9114, 1.442695
    %v9116 = vpow.pop %v9115
    %v9117 = vadd.f32 %v9116, 1.0
    %v9118 = vrcp.pop %v9117
    %v9119 = vmul.f32 1.0, %v9118
    %v9120 = vtanh.pop %v9113
    %v9121 = vmul.f32 %v9119, %v8283
    %9123 = vrot.lane.b32.xlu0 %v9120, 64
    %v9124 = vpop.permute.xlu0 %9123
    %v9126 = vmul.f32 %v9119, %v9124
    %9128 = vrot.lane.b32.xlu0 %v9126, 32
    %v9129 = vpop.permute.xlu0 %9128
    %v9131 = vadd.f32 %v9121, %v9129
    %v9132 = vtanh.pop %v9131
    %9134 = vrot.lane.b32.xlu0 %v9132, 64
    %v9135 = vpop.permute.xlu0 %9134
    %v9137 = vmul.f32 %v9119, %v9135
    %v9139 = vunpack.c.l.s4 1966171168
    %v9140 = vunpack.c.0.s8 %v9139
    %v9141 = vlaneseq
    %v9142 = vshrl.u32 %v9141, 7
    %v9143 = vsub.s32 %v9140, %v9142
    %v9144 = vrot.slane %v2304, %v9143
    %v9145 = vcombine.high %v9144, %v9144
    %v9147 = vunpack.c.l.s4 1966171168
    %v9148 = vunpack.c.0.s8 %v9147
    %v9149 = vlaneseq
    %v9150 = vshrl.u32 %v9149, 7
    %v9151 = vsub.s32 %v9148, %v9150
    %v9152 = vrot.slane %v9144, %v9151
    %v9154 = vunpack.c.l.s4 1966171168
    %v9155 = vunpack.c.0.s8 %v9154
    %v9156 = vlaneseq
    %v9157 = vshrl.u32 %v9156, 7
    %v9158 = vsub.s32 %v9155, %v9157
    %v9159 = vrot.slane %v9145, %v9158
    %v9163 = vunpack.c.l.s4 1966171168
    %v9164 = vunpack.c.0.s8 %v9163
    %v9165 = vlaneseq
    %v9166 = vshrl.u32 %v9165, 7
    %v9167 = vsub.s32 %v9164, %v9166
    %v9168 = vrot.slane %v3162, %v9167
    %v9169 = vcombine.high %v9168, %v9168
    %v9171 = vunpack.c.l.s4 1966171168
    %v9172 = vunpack.c.0.s8 %v9171
    %v9173 = vlaneseq
    %v9174 = vshrl.u32 %v9173, 7
    %v9175 = vsub.s32 %v9172, %v9174
    %v9176 = vrot.slane %v9168, %v9175
    %v9178 = vunpack.c.l.s4 1966171168
    %v9179 = vunpack.c.0.s8 %v9178
    %v9180 = vlaneseq
    %v9181 = vshrl.u32 %v9180, 7
    %v9182 = vsub.s32 %v9179, %v9181
    %v9183 = vrot.slane %v9169, %v9182
    %v9185 = vunpack.c.l.s4 1966171168
    %v9186 = vunpack.c.0.s8 %v9185
    %v9187 = vlaneseq
    %v9188 = vshrl.u32 %v9187, 7
    %v9189 = vsub.s32 %v9186, %v9188
    %v9190 = vrot.slane %v4019, %v9189
    %v9191 = vcombine.high %v9190, %v9190
    %v9193 = vunpack.c.l.s4 1966171168
    %v9194 = vunpack.c.0.s8 %v9193
    %v9195 = vlaneseq
    %v9196 = vshrl.u32 %v9195, 7
    %v9197 = vsub.s32 %v9194, %v9196
    %v9198 = vrot.slane %v9190, %v9197
    %v9200 = vunpack.c.l.s4 1966171168
    %v9201 = vunpack.c.0.s8 %v9200
    %v9202 = vlaneseq
    %v9203 = vshrl.u32 %v9202, 7
    %v9204 = vsub.s32 %v9201, %v9203
    %v9205 = vrot.slane %v9191, %v9204
    %v9207 = vunpack.c.l.s4 1966171168
    %v9208 = vunpack.c.0.s8 %v9207
    %v9209 = vlaneseq
    %v9210 = vshrl.u32 %v9209, 7
    %v9211 = vsub.s32 %v9208, %v9210
    %v9212 = vrot.slane %v4876, %v9211
    %v9213 = vcombine.high %v9212, %v9212
    %v9215 = vunpack.c.l.s4 1966171168
    %v9216 = vunpack.c.0.s8 %v9215
    %v9217 = vlaneseq
    %v9218 = vshrl.u32 %v9217, 7
    %v9219 = vsub.s32 %v9216, %v9218
    %v9220 = vrot.slane %v9212, %v9219
    %v9222 = vunpack.c.l.s4 1966171168
    %v9223 = vunpack.c.0.s8 %v9222
    %v9224 = vlaneseq
    %v9225 = vshrl.u32 %v9224, 7
    %v9226 = vsub.s32 %v9223, %v9225
    %v9227 = vrot.slane %v9213, %v9226
    %v9229 = vunpack.c.l.s4 1966171168
    %v9230 = vunpack.c.0.s8 %v9229
    %v9231 = vlaneseq
    %v9232 = vshrl.u32 %v9231, 7
    %v9233 = vsub.s32 %v9230, %v9232
    %v9234 = vrot.slane %v5724, %v9233
    %v9235 = vcombine.high %v9234, %v9234
    %v9237 = vunpack.c.l.s4 1966171168
    %v9238 = vunpack.c.0.s8 %v9237
    %v9239 = vlaneseq
    %v9240 = vshrl.u32 %v9239, 7
    %v9241 = vsub.s32 %v9238, %v9240
    %v9242 = vrot.slane %v9234, %v9241
    %v9244 = vunpack.c.l.s4 1966171168
    %v9245 = vunpack.c.0.s8 %v9244
    %v9246 = vlaneseq
    %v9247 = vshrl.u32 %v9246, 7
    %v9248 = vsub.s32 %v9245, %v9247
    %v9249 = vrot.slane %v9235, %v9248
    %v9251 = vunpack.c.l.s4 1966171168
    %v9252 = vunpack.c.0.s8 %v9251
    %v9253 = vlaneseq
    %v9254 = vshrl.u32 %v9253, 7
    %v9255 = vsub.s32 %v9252, %v9254
    %v9256 = vrot.slane %v6579, %v9255
    %v9257 = vcombine.high %v9256, %v9256
    %v9259 = vunpack.c.l.s4 1966171168
    %v9260 = vunpack.c.0.s8 %v9259
    %v9261 = vlaneseq
    %v9262 = vshrl.u32 %v9261, 7
    %v9263 = vsub.s32 %v9260, %v9262
    %v9264 = vrot.slane %v9256, %v9263
    %v9266 = vunpack.c.l.s4 1966171168
    %v9267 = vunpack.c.0.s8 %v9266
    %v9268 = vlaneseq
    %v9269 = vshrl.u32 %v9268, 7
    %v9270 = vsub.s32 %v9267, %v9269
    %v9271 = vrot.slane %v9257, %v9270
    %v9273 = vunpack.c.l.s4 1966171168
    %v9274 = vunpack.c.0.s8 %v9273
    %v9275 = vlaneseq
    %v9276 = vshrl.u32 %v9275, 7
    %v9277 = vsub.s32 %v9274, %v9276
    %v9278 = vrot.slane %v7434, %v9277
    %v9279 = vcombine.high %v9278, %v9278
    %v9281 = vunpack.c.l.s4 1966171168
    %v9282 = vunpack.c.0.s8 %v9281
    %v9283 = vlaneseq
    %v9284 = vshrl.u32 %v9283, 7
    %v9285 = vsub.s32 %v9282, %v9284
    %v9286 = vrot.slane %v9278, %v9285
    %v9288 = vunpack.c.l.s4 1966171168
    %v9289 = vunpack.c.0.s8 %v9288
    %v9290 = vlaneseq
    %v9291 = vshrl.u32 %v9290, 7
    %v9292 = vsub.s32 %v9289, %v9291
    %v9293 = vrot.slane %v9279, %v9292
    %v9295 = vunpack.c.l.s4 1966171168
    %v9296 = vunpack.c.0.s8 %v9295
    %v9297 = vlaneseq
    %v9298 = vshrl.u32 %v9297, 7
    %v9299 = vsub.s32 %v9296, %v9298
    %v9300 = vrot.slane %v8289, %v9299
    %v9301 = vcombine.high %v9300, %v9300
    %v9303 = vunpack.c.l.s4 1966171168
    %v9304 = vunpack.c.0.s8 %v9303
    %v9305 = vlaneseq
    %v9306 = vshrl.u32 %v9305, 7
    %v9307 = vsub.s32 %v9304, %v9306
    %v9308 = vrot.slane %v9300, %v9307
    %v9310 = vunpack.c.l.s4 1966171168
    %v9311 = vunpack.c.0.s8 %v9310
    %v9312 = vlaneseq
    %v9313 = vshrl.u32 %v9312, 7
    %v9314 = vsub.s32 %v9311, %v9313
    %v9315 = vrot.slane %v9301, %v9314
    %v9318 = vunpack.c.l.s4 1966171168
    %v9319 = vunpack.c.0.s8 %v9318
    %v9320 = vlaneseq
    %v9321 = vshrl.u32 %v9320, 7
    %v9322 = vsub.s32 %v9319, %v9321
    %v9323 = vrot.slane %v9137, %v9322
    %v9324 = vcombine.high %v9323, %v9323
    %v9326 = vunpack.c.l.s4 1966171168
    %v9327 = vunpack.c.0.s8 %v9326
    %v9328 = vlaneseq
    %v9329 = vshrl.u32 %v9328, 7
    %v9330 = vsub.s32 %v9327, %v9329
    %v9331 = vrot.slane %v9323, %v9330
    %v9333 = vunpack.c.l.s4 1966171168
    %v9334 = vunpack.c.0.s8 %v9333
    %v9335 = vlaneseq
    %v9336 = vshrl.u32 %v9335, 7
    %v9337 = vsub.s32 %v9334, %v9336
    %v9338 = vrot.slane %v9324, %v9337
    %v9339 = vlaneseq
    %v9340 = vshrl.u32 %v9339, 7
    %v9341 = vsub.s32 0, %v9340
    %v9342 = vrot.slane %v9176, %v9341
    %v9343 = vlaneseq
    %v9344 = vshrl.u32 %v9343, 7
    %v9345 = vsub.s32 0, %v9344
    %v9346 = vrot.slane %v9183, %v9345
    %v9349 = vlaneseq
    %v9350 = vshrl.u32 %v9349, 7
    %v9351 = vsub.s32 0, %v9350
    %v9352 = vrot.slane %v9198, %v9351
    %v9353 = vlaneseq
    %v9354 = vshrl.u32 %v9353, 7
    %v9355 = vsub.s32 0, %v9354
    %v9356 = vrot.slane %v9205, %v9355
    %v9359 = vlaneseq
    %v9360 = vshrl.u32 %v9359, 7
    %v9361 = vsub.s32 0, %v9360
    %v9362 = vrot.slane %v9220, %v9361
    %v9363 = vlaneseq
    %v9364 = vshrl.u32 %v9363, 7
    %v9365 = vsub.s32 0, %v9364
    %v9366 = vrot.slane %v9227, %v9365
    %v9369 = vlaneseq
    %v9370 = vshrl.u32 %v9369, 7
    %v9371 = vsub.s32 0, %v9370
    %v9372 = vrot.slane %v9242, %v9371
    %v9373 = vlaneseq
    %v9374 = vshrl.u32 %v9373, 7
    %v9375 = vsub.s32 0, %v9374
    %v9376 = vrot.slane %v9249, %v9375
    %v9379 = vlaneseq
    %v9380 = vshrl.u32 %v9379, 7
    %v9381 = vsub.s32 0, %v9380
    %v9382 = vrot.slane %v9264, %v9381
    %v9383 = vlaneseq
    %v9384 = vshrl.u32 %v9383, 7
    %v9385 = vsub.s32 0, %v9384
    %v9386 = vrot.slane %v9271, %v9385
    %v9389 = vlaneseq
    %v9390 = vshrl.u32 %v9389, 7
    %v9391 = vsub.s32 0, %v9390
    %v9392 = vrot.slane %v9286, %v9391
    %v9393 = vlaneseq
    %v9394 = vshrl.u32 %v9393, 7
    %v9395 = vsub.s32 0, %v9394
    %v9396 = vrot.slane %v9293, %v9395
    %v9399 = vlaneseq
    %v9400 = vshrl.u32 %v9399, 7
    %v9401 = vsub.s32 0, %v9400
    %v9402 = vrot.slane %v9308, %v9401
    %v9403 = vlaneseq
    %v9404 = vshrl.u32 %v9403, 7
    %v9405 = vsub.s32 0, %v9404
    %v9406 = vrot.slane %v9315, %v9405
    %vm9409 = vcmask 1040384
    %v9410 = vsel %vm9409, %v9152, %v9342
    %v9411 = vsel %vm9409, %v9159, %v9346
    %vm9412 = vcmask 1041408
    %v9413 = vsel %vm9412, %v9410, %v9352
    %v9414 = vsel %vm9412, %v9411, %v9356
    %vm9415 = vcmask 1042432
    %v9416 = vsel %vm9415, %v9413, %v9362
    %v9417 = vsel %vm9415, %v9414, %v9366
    %vm9418 = vcmask 1043456
    %v9419 = vsel %vm9418, %v9416, %v9372
    %v9420 = vsel %vm9418, %v9417, %v9376
    %vm9421 = vcmask 1044480
    %v9422 = vsel %vm9421, %v9419, %v9382
    %v9423 = vsel %vm9421, %v9420, %v9386
    %vm9424 = vcmask 1045504
    %v9425 = vsel %vm9424, %v9422, %v9392
    %v9426 = vsel %vm9424, %v9423, %v9396
    %v9427 = vsel %vm1893, %v9425, %v9402
    %v9428 = vsel %vm1893, %v9426, %v9406
    %9431 = vrot.lane.b32.xlu0 %v9427, 32
    %v9432 = vpop.permute.xlu0 %9431
    %9433 = vrot.lane.b32.xlu0 %v9331, 32
    %v9434 = vpop.permute.xlu0 %9433
    %9435 = vrot.lane.b32.xlu0 %v9428, 32
    %v9436 = vpop.permute.xlu0 %9435
    %9437 = vrot.lane.b32.xlu0 %v9338, 32
    %v9438 = vpop.permute.xlu0 %9437
    %9443 = vst.msk [vmem:[%s24] sm:$0xff] %vm658, %v9432
    %vm9444 = vcmask 253952
    %9445 = vst.msk [vmem:[%s24 + $0x8] sm:$0x1] %vm9444, %v9434
    %9446 = vst.msk [vmem:[%s24 + $0x10] sm:$0xff] %vm658, %v9436
    %9447 = vst.msk [vmem:[%s24 + $0x18] sm:$0x1] %vm9444, %v9438
    %v9448 = vld [vmem:[%s19] sm:$0xff]
    %v9449 = vld [vmem:[%s19 + $0x8] sm:$0xff]
    %v9450 = vld [vmem:[%s19 + $0x10] sm:$0xff]
    %v9451 = vld [vmem:[%s19 + $0x18] sm:$0xff]
    %v9452 = vld [vmem:[%s20] sm:$0x1]
    %v9454 = vlaneseq
    %v9455 = vshrl.u32 %v9454, 7
    %v9456 = vsub.s32 0, %v9455
    %v9457 = vrot.slane %v9452, %v9456
    %9459 = vmatprep.subr.mxu0 0.0
    %9460 = vmatpush1.msra.mxu0 %v9448
    %9461 = vmatprep.subr.mxu0 0.0
    %9462 = vmatpush1.msra.mxu0 %v9449
    %9463 = vmatprep.subr.mxu0 0.0
    %9464 = vmatpush1.msra.mxu0 %v9450
    %9465 = vmatprep.subr.mxu0 0.0
    %9466 = vmatpush1.msra.mxu0 %v9451
    %9467 = vmatprep.subr.mxu0 0.0
    %9468 = vmatpush1.msra.mxu0 0.0
    %9469 = vmatprep.subr.mxu0 0.0
    %9470 = vmatpush1.msra.mxu0 0.0
    %9471 = vmatprep.subr.mxu0 0.0
    %9472 = vmatpush1.msra.mxu0 0.0
    %9473 = vmatprep.subr.mxu0 0.0
    %9474 = vmatpush1.msra.mxu0 0.0
    %9475 = vmatprep.subr.mxu0 0.0
    %9476 = vmatpush1.msra.mxu0 0.0
    %9477 = vmatprep.subr.mxu0 0.0
    %9478 = vmatpush1.msra.mxu0 0.0
    %9479 = vmatprep.subr.mxu0 0.0
    %9480 = vmatpush1.msra.mxu0 0.0
    %9481 = vmatprep.subr.mxu0 0.0
    %9482 = vmatpush1.msra.mxu0 0.0
    %9483 = vmatprep.subr.mxu0 0.0
    %9484 = vmatpush1.msra.mxu0 0.0
    %9485 = vmatprep.subr.mxu0 0.0
    %9486 = vmatpush1.msra.mxu0 0.0
    %9487 = vmatprep.subr.mxu0 0.0
    %9488 = vmatpush1.msra.mxu0 0.0
    %9489 = vmatprep.subr.mxu0 0.0
    %9490 = vmatpush1.msra.mxu0 0.0
    %9491 = vmatprep.subr.mxu0 0.0
    %9492 = vmatpush1.msra.mxu0 0.0
    %9493 = vmatprep.subr.mxu0 0.0
    %9494 = vmatpush1.msra.mxu0 0.0
    %9495 = vmatprep.subr.mxu0 0.0
    %9496 = vmatpush1.msra.mxu0 0.0
    %9497 = vmatprep.subr.mxu0 0.0
    %9498 = vmatpush1.msra.mxu0 0.0
    %9499 = vmatprep.subr.mxu0 0.0
    %9500 = vmatpush1.msra.mxu0 0.0
    %9501 = vmatprep.subr.mxu0 0.0
    %9502 = vmatpush1.msra.mxu0 0.0
    %9503 = vmatprep.subr.mxu0 0.0
    %9504 = vmatpush1.msra.mxu0 0.0
    %9505 = vmatprep.subr.mxu0 0.0
    %9506 = vmatpush1.msra.mxu0 0.0
    %9507 = vmatprep.subr.mxu0 0.0
    %9508 = vmatpush1.msra.mxu0 0.0
    %9509 = vmatprep.subr.mxu0 0.0
    %9510 = vmatpush1.msra.mxu0 0.0
    %9511 = vmatprep.subr.mxu0 0.0
    %9512 = vmatpush1.msra.mxu0 0.0
    %9513 = vmatprep.subr.mxu0 0.0
    %9514 = vmatpush1.msra.mxu0 0.0
    %9515 = vmatprep.subr.mxu0 0.0
    %9516 = vmatpush1.msra.mxu0 0.0
    %9517 = vmatprep.subr.mxu0 0.0
    %9518 = vmatpush1.msra.mxu0 0.0
    %9519 = vmatprep.subr.mxu0 0.0
    %9520 = vmatpush1.msra.mxu0 0.0
    %9521 = vmatprep.subr.mxu0 0.0
    %9522 = vmatpush1.msra.mxu0 0.0
    %9523 = vmatprep.mubr.f32.mxu0 0.0
    %9524 = vmatmul.mubr.f32.gmra.mrb[0].mxu0 %v659
    %v9525 = vpop.f32.mrb[0].mxu0
    %v9526 = vadd.f32 %v9457, %v9525
    %v9527 = vpop.f32.mrb[0].mxu0
    %9528 = vmatprep.mubr.f32.mxu0 0.0
    %9529 = vmatmul.mubr.f32.gmra.mrb[0].mxu0 %v661
    %v9530 = vpop.f32.mrb[0].mxu0
    %v9531 = vadd.f32 %v9457, %v9530
    %v9532 = vpop.f32.mrb[0].mxu0
    %9533 = vmatprep.mubr.f32.mxu0 0.0
    %9534 = vmatmul.mubr.f32.gmra.mrb[0].mxu0 %v663
    %v9535 = vpop.f32.mrb[0].mxu0
    %v9536 = vadd.f32 %v9457, %v9535
    %v9537 = vpop.f32.mrb[0].mxu0
    %9538 = vmatprep.mubr.f32.mxu0 0.0
    %9539 = vmatmul.mubr.f32.gmra.mrb[0].mxu0 %v665
    %v9540 = vpop.f32.mrb[0].mxu0
    %v9541 = vadd.f32 %v9457, %v9540
    %v9542 = vpop.f32.mrb[0].mxu0
    %9543 = vdwg.mxu0
    %v9548 = vcombine.high %v9526, %v9526
    %v9550 = vunpack.c.l.s4 1966171168
    %v9551 = vunpack.c.0.s8 %v9550
    %v9552 = vlaneseq
    %v9553 = vshrl.u32 %v9552, 7
    %v9554 = vsub.s32 %v9551, %v9553
    %v9555 = vrot.slane %v9526, %v9554
    %v9557 = vunpack.c.l.s4 1966171168
    %v9558 = vunpack.c.0.s8 %v9557
    %v9559 = vlaneseq
    %v9560 = vshrl.u32 %v9559, 7
    %v9561 = vsub.s32 %v9558, %v9560
    %v9562 = vrot.slane %v9548, %v9561
    %v9563 = vcombine.high %v9555, %v9555
    %v9564 = vcombine.high %v9562, %v9562
    %v9566 = vunpack.c.l.s4 1966171168
    %v9567 = vunpack.c.0.s8 %v9566
    %v9568 = vlaneseq
    %v9569 = vshrl.u32 %v9568, 7
    %v9570 = vsub.s32 %v9567, %v9569
    %v9571 = vrot.slane %v9555, %v9570
    %v9573 = vunpack.c.l.s4 1966171168
    %v9574 = vunpack.c.0.s8 %v9573
    %v9575 = vlaneseq
    %v9576 = vshrl.u32 %v9575, 7
    %v9577 = vsub.s32 %v9574, %v9576
    %v9578 = vrot.slane %v9562, %v9577
    %v9580 = vunpack.c.l.s4 1966171168
    %v9581 = vunpack.c.0.s8 %v9580
    %v9582 = vlaneseq
    %v9583 = vshrl.u32 %v9582, 7
    %v9584 = vsub.s32 %v9581, %v9583
    %v9585 = vrot.slane %v9563, %v9584
    %v9587 = vunpack.c.l.s4 1966171168
    %v9588 = vunpack.c.0.s8 %v9587
    %v9589 = vlaneseq
    %v9590 = vshrl.u32 %v9589, 7
    %v9591 = vsub.s32 %v9588, %v9590
    %v9592 = vrot.slane %v9564, %v9591
    %v9593 = vcombine.high %v9571, %v9571
    %v9594 = vcombine.high %v9578, %v9578
    %v9595 = vcombine.high %v9585, %v9585
    %v9596 = vcombine.high %v9592, %v9592
    %v9597 = vcombine.high %v9531, %v9531
    %v9599 = vunpack.c.l.s4 1966171168
    %v9600 = vunpack.c.0.s8 %v9599
    %v9601 = vlaneseq
    %v9602 = vshrl.u32 %v9601, 7
    %v9603 = vsub.s32 %v9600, %v9602
    %v9604 = vrot.slane %v9531, %v9603
    %v9606 = vunpack.c.l.s4 1966171168
    %v9607 = vunpack.c.0.s8 %v9606
    %v9608 = vlaneseq
    %v9609 = vshrl.u32 %v9608, 7
    %v9610 = vsub.s32 %v9607, %v9609
    %v9611 = vrot.slane %v9597, %v9610
    %v9612 = vcombine.high %v9604, %v9604
    %v9613 = vcombine.high %v9611, %v9611
    %v9615 = vunpack.c.l.s4 1966171168
    %v9616 = vunpack.c.0.s8 %v9615
    %v9617 = vlaneseq
    %v9618 = vshrl.u32 %v9617, 7
    %v9619 = vsub.s32 %v9616, %v9618
    %v9620 = vrot.slane %v9604, %v9619
    %v9622 = vunpack.c.l.s4 1966171168
    %v9623 = vunpack.c.0.s8 %v9622
    %v9624 = vlaneseq
    %v9625 = vshrl.u32 %v9624, 7
    %v9626 = vsub.s32 %v9623, %v9625
    %v9627 = vrot.slane %v9611, %v9626
    %v9629 = vunpack.c.l.s4 1966171168
    %v9630 = vunpack.c.0.s8 %v9629
    %v9631 = vlaneseq
    %v9632 = vshrl.u32 %v9631, 7
    %v9633 = vsub.s32 %v9630, %v9632
    %v9634 = vrot.slane %v9612, %v9633
    %v9636 = vunpack.c.l.s4 1966171168
    %v9637 = vunpack.c.0.s8 %v9636
    %v9638 = vlaneseq
    %v9639 = vshrl.u32 %v9638, 7
    %v9640 = vsub.s32 %v9637, %v9639
    %v9641 = vrot.slane %v9613, %v9640
    %v9642 = vcombine.high %v9620, %v9620
    %v9643 = vcombine.high %v9627, %v9627
    %v9644 = vcombine.high %v9634, %v9634
    %v9645 = vcombine.high %v9641, %v9641
    %v9646 = vcombine.high %v9536, %v9536
    %v9648 = vunpack.c.l.s4 1966171168
    %v9649 = vunpack.c.0.s8 %v9648
    %v9650 = vlaneseq
    %v9651 = vshrl.u32 %v9650, 7
    %v9652 = vsub.s32 %v9649, %v9651
    %v9653 = vrot.slane %v9536, %v9652
    %v9655 = vunpack.c.l.s4 1966171168
    %v9656 = vunpack.c.0.s8 %v9655
    %v9657 = vlaneseq
    %v9658 = vshrl.u32 %v9657, 7
    %v9659 = vsub.s32 %v9656, %v9658
    %v9660 = vrot.slane %v9646, %v9659
    %v9661 = vcombine.high %v9653, %v9653
    %v9662 = vcombine.high %v9660, %v9660
    %v9664 = vunpack.c.l.s4 1966171168
    %v9665 = vunpack.c.0.s8 %v9664
    %v9666 = vlaneseq
    %v9667 = vshrl.u32 %v9666, 7
    %v9668 = vsub.s32 %v9665, %v9667
    %v9669 = vrot.slane %v9653, %v9668
    %v9671 = vunpack.c.l.s4 1966171168
    %v9672 = vunpack.c.0.s8 %v9671
    %v9673 = vlaneseq
    %v9674 = vshrl.u32 %v9673, 7
    %v9675 = vsub.s32 %v9672, %v9674
    %v9676 = vrot.slane %v9660, %v9675
    %v9678 = vunpack.c.l.s4 1966171168
    %v9679 = vunpack.c.0.s8 %v9678
    %v9680 = vlaneseq
    %v9681 = vshrl.u32 %v9680, 7
    %v9682 = vsub.s32 %v9679, %v9681
    %v9683 = vrot.slane %v9661, %v9682
    %v9685 = vunpack.c.l.s4 1966171168
    %v9686 = vunpack.c.0.s8 %v9685
    %v9687 = vlaneseq
    %v9688 = vshrl.u32 %v9687, 7
    %v9689 = vsub.s32 %v9686, %v9688
    %v9690 = vrot.slane %v9662, %v9689
    %v9691 = vcombine.high %v9669, %v9669
    %v9692 = vcombine.high %v9676, %v9676
    %v9693 = vcombine.high %v9683, %v9683
    %v9694 = vcombine.high %v9690, %v9690
    %v9695 = vcombine.high %v9541, %v9541
    %v9697 = vunpack.c.l.s4 1966171168
    %v9698 = vunpack.c.0.s8 %v9697
    %v9699 = vlaneseq
    %v9700 = vshrl.u32 %v9699, 7
    %v9701 = vsub.s32 %v9698, %v9700
    %v9702 = vrot.slane %v9541, %v9701
    %v9704 = vunpack.c.l.s4 1966171168
    %v9705 = vunpack.c.0.s8 %v9704
    %v9706 = vlaneseq
    %v9707 = vshrl.u32 %v9706, 7
    %v9708 = vsub.s32 %v9705, %v9707
    %v9709 = vrot.slane %v9695, %v9708
    %v9710 = vcombine.high %v9702, %v9702
    %v9711 = vcombine.high %v9709, %v9709
    %v9713 = vunpack.c.l.s4 1966171168
    %v9714 = vunpack.c.0.s8 %v9713
    %v9715 = vlaneseq
    %v9716 = vshrl.u32 %v9715, 7
    %v9717 = vsub.s32 %v9714, %v9716
    %v9718 = vrot.slane %v9702, %v9717
    %v9720 = vunpack.c.l.s4 1966171168
    %v9721 = vunpack.c.0.s8 %v9720
    %v9722 = vlaneseq
    %v9723 = vshrl.u32 %v9722, 7
    %v9724 = vsub.s32 %v9721, %v9723
    %v9725 = vrot.slane %v9709, %v9724
    %v9727 = vunpack.c.l.s4 1966171168
    %v9728 = vunpack.c.0.s8 %v9727
    %v9729 = vlaneseq
    %v9730 = vshrl.u32 %v9729, 7
    %v9731 = vsub.s32 %v9728, %v9730
    %v9732 = vrot.slane %v9710, %v9731
    %v9734 = vunpack.c.l.s4 1966171168
    %v9735 = vunpack.c.0.s8 %v9734
    %v9736 = vlaneseq
    %v9737 = vshrl.u32 %v9736, 7
    %v9738 = vsub.s32 %v9735, %v9737
    %v9739 = vrot.slane %v9711, %v9738
    %v9740 = vcombine.high %v9718, %v9718
    %v9741 = vcombine.high %v9732, %v9732
    %v9742 = vld [vmem:[%s23] sm:$0x1]
    %v9743 = vcombine.low %v9571, %v9571
    %v9744 = vcombine.low %v9585, %v9593
    %v9745 = vcombine.low %v9595, %v9578
    %v9746 = vcombine.low %v9592, %v9594
    %v9748 = vunpack.c.l.s4 1966171168
    %v9749 = vunpack.c.0.s8 %v9748
    %v9750 = vlaneseq
    %v9751 = vshrl.u32 %v9750, 7
    %v9752 = vsub.s32 %v9749, %v9751
    %v9753 = vrot.slane %v9743, %v9752
    %v9755 = vunpack.c.l.s4 1966171168
    %v9756 = vunpack.c.0.s8 %v9755
    %v9757 = vlaneseq
    %v9758 = vshrl.u32 %v9757, 7
    %v9759 = vsub.s32 %v9756, %v9758
    %v9760 = vrot.slane %v9744, %v9759
    %v9762 = vunpack.c.l.s4 1966171168
    %v9763 = vunpack.c.0.s8 %v9762
    %v9764 = vlaneseq
    %v9765 = vshrl.u32 %v9764, 7
    %v9766 = vsub.s32 %v9763, %v9765
    %v9767 = vrot.slane %v9745, %v9766
    %v9769 = vunpack.c.l.s4 1966171168
    %v9770 = vunpack.c.0.s8 %v9769
    %v9771 = vlaneseq
    %v9772 = vshrl.u32 %v9771, 7
    %v9773 = vsub.s32 %v9770, %v9772
    %v9774 = vrot.slane %v9746, %v9773
    %v9775 = vcombine.low %v9753, %v9760
    %v9776 = vcombine.low %v9767, %v9774
    %v9778 = vunpack.c.l.s4 1966171168
    %v9779 = vunpack.c.0.s8 %v9778
    %v9780 = vlaneseq
    %v9781 = vshrl.u32 %v9780, 7
    %v9782 = vsub.s32 %v9779, %v9781
    %v9783 = vrot.slane %v9775, %v9782
    %v9785 = vunpack.c.l.s4 1966171168
    %v9786 = vunpack.c.0.s8 %v9785
    %v9787 = vlaneseq
    %v9788 = vshrl.u32 %v9787, 7
    %v9789 = vsub.s32 %v9786, %v9788
    %v9790 = vrot.slane %v9776, %v9789
    %v9791 = vcombine.low %v9783, %v9790
    %v9792 = vcombine.low %v9596, %v9620
    %v9793 = vcombine.low %v9634, %v9642
    %v9794 = vcombine.low %v9644, %v9627
    %v9795 = vcombine.low %v9641, %v9643
    %v9797 = vunpack.c.l.s4 1966171168
    %v9798 = vunpack.c.0.s8 %v9797
    %v9799 = vlaneseq
    %v9800 = vshrl.u32 %v9799, 7
    %v9801 = vsub.s32 %v9798, %v9800
    %v9802 = vrot.slane %v9792, %v9801
    %v9804 = vunpack.c.l.s4 1966171168
    %v9805 = vunpack.c.0.s8 %v9804
    %v9806 = vlaneseq
    %v9807 = vshrl.u32 %v9806, 7
    %v9808 = vsub.s32 %v9805, %v9807
    %v9809 = vrot.slane %v9793, %v9808
    %v9811 = vunpack.c.l.s4 1966171168
    %v9812 = vunpack.c.0.s8 %v9811
    %v9813 = vlaneseq
    %v9814 = vshrl.u32 %v9813, 7
    %v9815 = vsub.s32 %v9812, %v9814
    %v9816 = vrot.slane %v9794, %v9815
    %v9818 = vunpack.c.l.s4 1966171168
    %v9819 = vunpack.c.0.s8 %v9818
    %v9820 = vlaneseq
    %v9821 = vshrl.u32 %v9820, 7
    %v9822 = vsub.s32 %v9819, %v9821
    %v9823 = vrot.slane %v9795, %v9822
    %v9824 = vcombine.low %v9802, %v9809
    %v9825 = vcombine.low %v9816, %v9823
    %v9827 = vunpack.c.l.s4 1966171168
    %v9828 = vunpack.c.0.s8 %v9827
    %v9829 = vlaneseq
    %v9830 = vshrl.u32 %v9829, 7
    %v9831 = vsub.s32 %v9828, %v9830
    %v9832 = vrot.slane %v9824, %v9831
    %v9834 = vunpack.c.l.s4 1966171168
    %v9835 = vunpack.c.0.s8 %v9834
    %v9836 = vlaneseq
    %v9837 = vshrl.u32 %v9836, 7
    %v9838 = vsub.s32 %v9835, %v9837
    %v9839 = vrot.slane %v9825, %v9838
    %v9840 = vcombine.low %v9832, %v9839
    %v9841 = vcombine.low %v9645, %v9645
    %v9842 = vcombine.low %v9669, %v9683
    %v9843 = vcombine.low %v9691, %v9693
    %v9844 = vcombine.low %v9676, %v9690
    %v9846 = vunpack.c.l.s4 1966171168
    %v9847 = vunpack.c.0.s8 %v9846
    %v9848 = vlaneseq
    %v9849 = vshrl.u32 %v9848, 7
    %v9850 = vsub.s32 %v9847, %v9849
    %v9851 = vrot.slane %v9841, %v9850
    %v9853 = vunpack.c.l.s4 1966171168
    %v9854 = vunpack.c.0.s8 %v9853
    %v9855 = vlaneseq
    %v9856 = vshrl.u32 %v9855, 7
    %v9857 = vsub.s32 %v9854, %v9856
    %v9858 = vrot.slane %v9842, %v9857
    %v9860 = vunpack.c.l.s4 1966171168
    %v9861 = vunpack.c.0.s8 %v9860
    %v9862 = vlaneseq
    %v9863 = vshrl.u32 %v9862, 7
    %v9864 = vsub.s32 %v9861, %v9863
    %v9865 = vrot.slane %v9843, %v9864
    %v9867 = vunpack.c.l.s4 1966171168
    %v9868 = vunpack.c.0.s8 %v9867
    %v9869 = vlaneseq
    %v9870 = vshrl.u32 %v9869, 7
    %v9871 = vsub.s32 %v9868, %v9870
    %v9872 = vrot.slane %v9844, %v9871
    %v9873 = vcombine.low %v9851, %v9858
    %v9874 = vcombine.low %v9865, %v9872
    %v9876 = vunpack.c.l.s4 1966171168
    %v9877 = vunpack.c.0.s8 %v9876
    %v9878 = vlaneseq
    %v9879 = vshrl.u32 %v9878, 7
    %v9880 = vsub.s32 %v9877, %v9879
    %v9881 = vrot.slane %v9873, %v9880
    %v9883 = vunpack.c.l.s4 1966171168
    %v9884 = vunpack.c.0.s8 %v9883
    %v9885 = vlaneseq
    %v9886 = vshrl.u32 %v9885, 7
    %v9887 = vsub.s32 %v9884, %v9886
    %v9888 = vrot.slane %v9874, %v9887
    %v9889 = vcombine.low %v9881, %v9888
    %v9890 = vcombine.low %v9692, %v9694
    %v9891 = vcombine.low %v9718, %v9732
    %v9892 = vcombine.low %v9740, %v9741
    %v9893 = vcombine.low %v9725, %v9739
    %v9895 = vunpack.c.l.s4 1966171168
    %v9896 = vunpack.c.0.s8 %v9895
    %v9897 = vlaneseq
    %v9898 = vshrl.u32 %v9897, 7
    %v9899 = vsub.s32 %v9896, %v9898
    %v9900 = vrot.slane %v9890, %v9899
    %v9902 = vunpack.c.l.s4 1966171168
    %v9903 = vunpack.c.0.s8 %v9902
    %v9904 = vlaneseq
    %v9905 = vshrl.u32 %v9904, 7
    %v9906 = vsub.s32 %v9903, %v9905
    %v9907 = vrot.slane %v9891, %v9906
    %v9909 = vunpack.c.l.s4 1966171168
    %v9910 = vunpack.c.0.s8 %v9909
    %v9911 = vlaneseq
    %v9912 = vshrl.u32 %v9911, 7
    %v9913 = vsub.s32 %v9910, %v9912
    %v9914 = vrot.slane %v9892, %v9913
    %v9916 = vunpack.c.l.s4 1966171168
    %v9917 = vunpack.c.0.s8 %v9916
    %v9918 = vlaneseq
    %v9919 = vshrl.u32 %v9918, 7
    %v9920 = vsub.s32 %v9917, %v9919
    %v9921 = vrot.slane %v9893, %v9920
    %v9922 = vcombine.low %v9900, %v9907
    %v9923 = vcombine.low %v9914, %v9921
    %v9925 = vunpack.c.l.s4 1966171168
    %v9926 = vunpack.c.0.s8 %v9925
    %v9927 = vlaneseq
    %v9928 = vshrl.u32 %v9927, 7
    %v9929 = vsub.s32 %v9926, %v9928
    %v9930 = vrot.slane %v9922, %v9929
    %v9932 = vunpack.c.l.s4 1966171168
    %v9933 = vunpack.c.0.s8 %v9932
    %v9934 = vlaneseq
    %v9935 = vshrl.u32 %v9934, 7
    %v9936 = vsub.s32 %v9933, %v9935
    %v9937 = vrot.slane %v9923, %v9936
    %v9938 = vcombine.low %v9930, %v9937
    %v9941 = vsel %vm9409, %v9742, %v9791
    %v9942 = vsel %vm9409, %v9742, %v9889
    %v9943 = vcombine.high %v9427, %v9427
    %v9945 = vunpack.c.l.s4 1966171168
    %v9946 = vunpack.c.0.s8 %v9945
    %v9947 = vlaneseq
    %v9948 = vshrl.u32 %v9947, 7
    %v9949 = vsub.s32 %v9946, %v9948
    %v9950 = vrot.slane %v9427, %v9949
    %v9952 = vunpack.c.l.s4 1966171168
    %v9953 = vunpack.c.0.s8 %v9952
    %v9954 = vlaneseq
    %v9955 = vshrl.u32 %v9954, 7
    %v9956 = vsub.s32 %v9953, %v9955
    %v9957 = vrot.slane %v9943, %v9956
    %v9958 = vcombine.high %v9950, %v9950
    %v9959 = vcombine.high %v9957, %v9957
    %v9961 = vunpack.c.l.s4 1966171168
    %v9962 = vunpack.c.0.s8 %v9961
    %v9963 = vlaneseq
    %v9964 = vshrl.u32 %v9963, 7
    %v9965 = vsub.s32 %v9962, %v9964
    %v9966 = vrot.slane %v9950, %v9965
    %v9968 = vunpack.c.l.s4 1966171168
    %v9969 = vunpack.c.0.s8 %v9968
    %v9970 = vlaneseq
    %v9971 = vshrl.u32 %v9970, 7
    %v9972 = vsub.s32 %v9969, %v9971
    %v9973 = vrot.slane %v9957, %v9972
    %v9975 = vunpack.c.l.s4 1966171168
    %v9976 = vunpack.c.0.s8 %v9975
    %v9977 = vlaneseq
    %v9978 = vshrl.u32 %v9977, 7
    %v9979 = vsub.s32 %v9976, %v9978
    %v9980 = vrot.slane %v9958, %v9979
    %v9982 = vunpack.c.l.s4 1966171168
    %v9983 = vunpack.c.0.s8 %v9982
    %v9984 = vlaneseq
    %v9985 = vshrl.u32 %v9984, 7
    %v9986 = vsub.s32 %v9983, %v9985
    %v9987 = vrot.slane %v9959, %v9986
    %v9988 = vcombine.high %v9966, %v9966
    %v9989 = vcombine.high %v9973, %v9973
    %v9990 = vcombine.high %v9980, %v9980
    %v9991 = vcombine.high %v9987, %v9987
    %v9993 = vunpack.c.l.s4 1966171168
    %v9994 = vunpack.c.0.s8 %v9993
    %v9995 = vlaneseq
    %v9996 = vshrl.u32 %v9995, 7
    %v9997 = vsub.s32 %v9994, %v9996
    %v9998 = vrot.slane %v9331, %v9997
    %v10000 = vunpack.c.l.s4 1966171168
    %v10001 = vunpack.c.0.s8 %v10000
    %v10002 = vlaneseq
    %v10003 = vshrl.u32 %v10002, 7
    %v10004 = vsub.s32 %v10001, %v10003
    %v10005 = vrot.slane %v9998, %v10004
    %v10006 = vcombine.high %v9428, %v9428
    %v10008 = vunpack.c.l.s4 1966171168
    %v10009 = vunpack.c.0.s8 %v10008
    %v10010 = vlaneseq
    %v10011 = vshrl.u32 %v10010, 7
    %v10012 = vsub.s32 %v10009, %v10011
    %v10013 = vrot.slane %v9428, %v10012
    %v10015 = vunpack.c.l.s4 1966171168
    %v10016 = vunpack.c.0.s8 %v10015
    %v10017 = vlaneseq
    %v10018 = vshrl.u32 %v10017, 7
    %v10019 = vsub.s32 %v10016, %v10018
    %v10020 = vrot.slane %v10006, %v10019
    %v10021 = vcombine.high %v10013, %v10013
    %v10022 = vcombine.high %v10020, %v10020
    %v10024 = vunpack.c.l.s4 1966171168
    %v10025 = vunpack.c.0.s8 %v10024
    %v10026 = vlaneseq
    %v10027 = vshrl.u32 %v10026, 7
    %v10028 = vsub.s32 %v10025, %v10027
    %v10029 = vrot.slane %v10013, %v10028
    %v10031 = vunpack.c.l.s4 1966171168
    %v10032 = vunpack.c.0.s8 %v10031
    %v10033 = vlaneseq
    %v10034 = vshrl.u32 %v10033, 7
    %v10035 = vsub.s32 %v10032, %v10034
    %v10036 = vrot.slane %v10020, %v10035
    %v10038 = vunpack.c.l.s4 1966171168
    %v10039 = vunpack.c.0.s8 %v10038
    %v10040 = vlaneseq
    %v10041 = vshrl.u32 %v10040, 7
    %v10042 = vsub.s32 %v10039, %v10041
    %v10043 = vrot.slane %v10021, %v10042
    %v10045 = vunpack.c.l.s4 1966171168
    %v10046 = vunpack.c.0.s8 %v10045
    %v10047 = vlaneseq
    %v10048 = vshrl.u32 %v10047, 7
    %v10049 = vsub.s32 %v10046, %v10048
    %v10050 = vrot.slane %v10022, %v10049
    %v10051 = vcombine.high %v10029, %v10029
    %v10052 = vcombine.high %v10036, %v10036
    %v10053 = vcombine.high %v10043, %v10043
    %v10054 = vcombine.high %v10050, %v10050
    %v10056 = vunpack.c.l.s4 1966171168
    %v10057 = vunpack.c.0.s8 %v10056
    %v10058 = vlaneseq
    %v10059 = vshrl.u32 %v10058, 7
    %v10060 = vsub.s32 %v10057, %v10059
    %v10061 = vrot.slane %v9338, %v10060
    %v10063 = vunpack.c.l.s4 1966171168
    %v10064 = vunpack.c.0.s8 %v10063
    %v10065 = vlaneseq
    %v10066 = vshrl.u32 %v10065, 7
    %v10067 = vsub.s32 %v10064, %v10066
    %v10068 = vrot.slane %v10061, %v10067
    %v10069 = vld [vmem:[#allocation22] sm:$0xff]
    %v10070 = vld [vmem:[#allocation22 + $0x8] sm:$0xff]
    %v10071 = vld [vmem:[#allocation22 + $0x10] sm:$0xff]
    %v10072 = vld [vmem:[#allocation22 + $0x18] sm:$0xff]
    %v10073 = vld [vmem:[%s22] sm:$0x1]
    %v10075 = vlaneseq
    %v10076 = vshrl.u32 %v10075, 7
    %v10077 = vsub.s32 0, %v10076
    %v10078 = vrot.slane %v10073, %v10077
    %v10080 = vcombine.low %v9966, %v9980
    %v10081 = vcombine.low %v9988, %v9990
    %v10082 = vcombine.low %v9973, %v9987
    %v10083 = vcombine.low %v9989, %v9991
    %v10085 = vunpack.c.l.s4 1966171168
    %v10086 = vunpack.c.0.s8 %v10085
    %v10087 = vlaneseq
    %v10088 = vshrl.u32 %v10087, 7
    %v10089 = vsub.s32 %v10086, %v10088
    %v10090 = vrot.slane %v10080, %v10089
    %v10092 = vunpack.c.l.s4 1966171168
    %v10093 = vunpack.c.0.s8 %v10092
    %v10094 = vlaneseq
    %v10095 = vshrl.u32 %v10094, 7
    %v10096 = vsub.s32 %v10093, %v10095
    %v10097 = vrot.slane %v10081, %v10096
    %v10099 = vunpack.c.l.s4 1966171168
    %v10100 = vunpack.c.0.s8 %v10099
    %v10101 = vlaneseq
    %v10102 = vshrl.u32 %v10101, 7
    %v10103 = vsub.s32 %v10100, %v10102
    %v10104 = vrot.slane %v10082, %v10103
    %v10106 = vunpack.c.l.s4 1966171168
    %v10107 = vunpack.c.0.s8 %v10106
    %v10108 = vlaneseq
    %v10109 = vshrl.u32 %v10108, 7
    %v10110 = vsub.s32 %v10107, %v10109
    %v10111 = vrot.slane %v10083, %v10110
    %v10112 = vcombine.low %v10090, %v10097
    %v10113 = vcombine.low %v10104, %v10111
    %v10115 = vunpack.c.l.s4 1966171168
    %v10116 = vunpack.c.0.s8 %v10115
    %v10117 = vlaneseq
    %v10118 = vshrl.u32 %v10117, 7
    %v10119 = vsub.s32 %v10116, %v10118
    %v10120 = vrot.slane %v10112, %v10119
    %v10122 = vunpack.c.l.s4 1966171168
    %v10123 = vunpack.c.0.s8 %v10122
    %v10124 = vlaneseq
    %v10125 = vshrl.u32 %v10124, 7
    %v10126 = vsub.s32 %v10123, %v10125
    %v10127 = vrot.slane %v10113, %v10126
    %v10128 = vcombine.low %v10120, %v10127
    %v10129 = vcombine.low %v10005, %v10029
    %v10130 = vcombine.low %v10043, %v10051
    %v10131 = vcombine.low %v10053, %v10036
    %v10132 = vcombine.low %v10050, %v10052
    %v10134 = vunpack.c.l.s4 1966171168
    %v10135 = vunpack.c.0.s8 %v10134
    %v10136 = vlaneseq
    %v10137 = vshrl.u32 %v10136, 7
    %v10138 = vsub.s32 %v10135, %v10137
    %v10139 = vrot.slane %v10129, %v10138
    %v10141 = vunpack.c.l.s4 1966171168
    %v10142 = vunpack.c.0.s8 %v10141
    %v10143 = vlaneseq
    %v10144 = vshrl.u32 %v10143, 7
    %v10145 = vsub.s32 %v10142, %v10144
    %v10146 = vrot.slane %v10130, %v10145
    %v10148 = vunpack.c.l.s4 1966171168
    %v10149 = vunpack.c.0.s8 %v10148
    %v10150 = vlaneseq
    %v10151 = vshrl.u32 %v10150, 7
    %v10152 = vsub.s32 %v10149, %v10151
    %v10153 = vrot.slane %v10131, %v10152
    %v10155 = vunpack.c.l.s4 1966171168
    %v10156 = vunpack.c.0.s8 %v10155
    %v10157 = vlaneseq
    %v10158 = vshrl.u32 %v10157, 7
    %v10159 = vsub.s32 %v10156, %v10158
    %v10160 = vrot.slane %v10132, %v10159
    %v10161 = vcombine.low %v10139, %v10146
    %v10162 = vcombine.low %v10153, %v10160
    %v10164 = vunpack.c.l.s4 1966171168
    %v10165 = vunpack.c.0.s8 %v10164
    %v10166 = vlaneseq
    %v10167 = vshrl.u32 %v10166, 7
    %v10168 = vsub.s32 %v10165, %v10167
    %v10169 = vrot.slane %v10161, %v10168
    %v10171 = vunpack.c.l.s4 1966171168
    %v10172 = vunpack.c.0.s8 %v10171
    %v10173 = vlaneseq
    %v10174 = vshrl.u32 %v10173, 7
    %v10175 = vsub.s32 %v10172, %v10174
    %v10176 = vrot.slane %v10162, %v10175
    %v10177 = vcombine.low %v10169, %v10176
    %v10178 = vcombine.low %v10054, %v10068
    %v10180 = vunpack.c.l.s4 1966171168
    %v10181 = vunpack.c.0.s8 %v10180
    %v10182 = vlaneseq
    %v10183 = vshrl.u32 %v10182, 7
    %v10184 = vsub.s32 %v10181, %v10183
    %v10185 = vrot.slane %v10178, %v10184
    %v10187 = vunpack.c.l.s4 1966171168
    %v10188 = vunpack.c.0.s8 %v10187
    %v10189 = vlaneseq
    %v10190 = vshrl.u32 %v10189, 7
    %v10191 = vsub.s32 %v10188, %v10190
    %v10192 = vrot.slane %v10185, %v10191
    %10193 = vrot.lane.b32.xlu0 %v10128, 32
    %v10194 = vpop.permute.xlu0 %10193
    %10195 = vrot.lane.b32.xlu0 %v10177, 32
    %v10196 = vpop.permute.xlu0 %10195
    %10197 = vrot.lane.b32.xlu0 %v10192, 32
    %v10198 = vpop.permute.xlu0 %10197
    %v10199 = vsel %vm658, %v10194, 0
    %v10201 = vsel %vm658, %v10196, 0
    %v10203 = vsel %vm658, %v10198, 0
    %10205 = vmatprep.subr.mxu0 0.0
    %10206 = vmatpush1.msra.mxu0 %v10069
    %10207 = vmatprep.subr.mxu0 0.0
    %10208 = vmatpush1.msra.mxu0 %v10070
    %10209 = vmatprep.subr.mxu0 0.0
    %10210 = vmatpush1.msra.mxu0 %v10071
    %10211 = vmatprep.subr.mxu0 0.0
    %10212 = vmatpush1.msra.mxu0 %v10072
    %10213 = vmatprep.subr.mxu0 0.0
    %10214 = vmatpush1.msra.mxu0 0.0
    %10215 = vmatprep.subr.mxu0 0.0
    %10216 = vmatpush1.msra.mxu0 0.0
    %10217 = vmatprep.subr.mxu0 0.0
    %10218 = vmatpush1.msra.mxu0 0.0
    %10219 = vmatprep.subr.mxu0 0.0
    %10220 = vmatpush1.msra.mxu0 0.0
    %10221 = vmatprep.subr.mxu0 0.0
    %10222 = vmatpush1.msra.mxu0 0.0
    %10223 = vmatprep.subr.mxu0 0.0
    %10224 = vmatpush1.msra.mxu0 0.0
    %10225 = vmatprep.subr.mxu0 0.0
    %10226 = vmatpush1.msra.mxu0 0.0
    %10227 = vmatprep.subr.mxu0 0.0
    %10228 = vmatpush1.msra.mxu0 0.0
    %10229 = vmatprep.subr.mxu0 0.0
    %10230 = vmatpush1.msra.mxu0 0.0
    %10231 = vmatprep.subr.mxu0 0.0
    %10232 = vmatpush1.msra.mxu0 0.0
    %10233 = vmatprep.subr.mxu0 0.0
    %10234 = vmatpush1.msra.mxu0 0.0
    %10235 = vmatprep.subr.mxu0 0.0
    %10236 = vmatpush1.msra.mxu0 0.0
    %10237 = vmatprep.subr.mxu0 0.0
    %10238 = vmatpush1.msra.mxu0 0.0
    %10239 = vmatprep.subr.mxu0 0.0
    %10240 = vmatpush1.msra.mxu0 0.0
    %10241 = vmatprep.subr.mxu0 0.0
    %10242 = vmatpush1.msra.mxu0 0.0
    %10243 = vmatprep.subr.mxu0 0.0
    %10244 = vmatpush1.msra.mxu0 0.0
    %10245 = vmatprep.subr.mxu0 0.0
    %10246 = vmatpush1.msra.mxu0 0.0
    %10247 = vmatprep.subr.mxu0 0.0
    %10248 = vmatpush1.msra.mxu0 0.0
    %10249 = vmatprep.subr.mxu0 0.0
    %10250 = vmatpush1.msra.mxu0 0.0
    %10251 = vmatprep.subr.mxu0 0.0
    %10252 = vmatpush1.msra.mxu0 0.0
    %10253 = vmatprep.subr.mxu0 0.0
    %10254 = vmatpush1.msra.mxu0 0.0
    %10255 = vmatprep.subr.mxu0 0.0
    %10256 = vmatpush1.msra.mxu0 0.0
    %10257 = vmatprep.subr.mxu0 0.0
    %10258 = vmatpush1.msra.mxu0 0.0
    %10259 = vmatprep.subr.mxu0 0.0
    %10260 = vmatpush1.msra.mxu0 0.0
    %10261 = vmatprep.subr.mxu0 0.0
    %10262 = vmatpush1.msra.mxu0 0.0
    %10263 = vmatprep.subr.mxu0 0.0
    %10264 = vmatpush1.msra.mxu0 0.0
    %10265 = vmatprep.subr.mxu0 0.0
    %10266 = vmatpush1.msra.mxu0 0.0
    %10267 = vmatprep.subr.mxu0 0.0
    %10268 = vmatpush1.msra.mxu0 0.0
    %10269 = vmatprep.mubr.f32.mxu0 0.0
    %10270 = vmatmul.mubr.f32.gmra.mrb[0].mxu0 %v10199
    %v10271 = vpop.f32.mrb[0].mxu0
    %v10272 = vadd.f32 %v10078, %v10271
    %v10273 = vpop.f32.mrb[0].mxu0
    %10274 = vmatprep.mubr.f32.mxu0 0.0
    %10275 = vmatmul.mubr.f32.gmra.mrb[0].mxu0 %v10201
    %v10276 = vpop.f32.mrb[0].mxu0
    %v10277 = vadd.f32 %v10078, %v10276
    %v10278 = vpop.f32.mrb[0].mxu0
    %10279 = vmatprep.mubr.f32.mxu0 0.0
    %10280 = vmatmul.mubr.f32.gmra.mrb[0].mxu0 %v10203
    %v10281 = vpop.f32.mrb[0].mxu0
    %v10282 = vadd.f32 %v10078, %v10281
    %v10283 = vpop.f32.mrb[0].mxu0
    %10284 = vdwg.mxu0
    %v10288 = vcombine.high %v10272, %v10272
    %v10290 = vunpack.c.l.s4 1966171168
    %v10291 = vunpack.c.0.s8 %v10290
    %v10292 = vlaneseq
    %v10293 = vshrl.u32 %v10292, 7
    %v10294 = vsub.s32 %v10291, %v10293
    %v10295 = vrot.slane %v10272, %v10294
    %v10297 = vunpack.c.l.s4 1966171168
    %v10298 = vunpack.c.0.s8 %v10297
    %v10299 = vlaneseq
    %v10300 = vshrl.u32 %v10299, 7
    %v10301 = vsub.s32 %v10298, %v10300
    %v10302 = vrot.slane %v10288, %v10301
    %v10303 = vcombine.high %v10295, %v10295
    %v10304 = vcombine.high %v10302, %v10302
    %v10306 = vunpack.c.l.s4 1966171168
    %v10307 = vunpack.c.0.s8 %v10306
    %v10308 = vlaneseq
    %v10309 = vshrl.u32 %v10308, 7
    %v10310 = vsub.s32 %v10307, %v10309
    %v10311 = vrot.slane %v10295, %v10310
    %v10313 = vunpack.c.l.s4 1966171168
    %v10314 = vunpack.c.0.s8 %v10313
    %v10315 = vlaneseq
    %v10316 = vshrl.u32 %v10315, 7
    %v10317 = vsub.s32 %v10314, %v10316
    %v10318 = vrot.slane %v10302, %v10317
    %v10320 = vunpack.c.l.s4 1966171168
    %v10321 = vunpack.c.0.s8 %v10320
    %v10322 = vlaneseq
    %v10323 = vshrl.u32 %v10322, 7
    %v10324 = vsub.s32 %v10321, %v10323
    %v10325 = vrot.slane %v10303, %v10324
    %v10327 = vunpack.c.l.s4 1966171168
    %v10328 = vunpack.c.0.s8 %v10327
    %v10329 = vlaneseq
    %v10330 = vshrl.u32 %v10329, 7
    %v10331 = vsub.s32 %v10328, %v10330
    %v10332 = vrot.slane %v10304, %v10331
    %v10333 = vcombine.high %v10311, %v10311
    %v10334 = vcombine.high %v10318, %v10318
    %v10335 = vcombine.high %v10325, %v10325
    %v10336 = vcombine.high %v10332, %v10332
    %v10337 = vcombine.high %v10277, %v10277
    %v10339 = vunpack.c.l.s4 1966171168
    %v10340 = vunpack.c.0.s8 %v10339
    %v10341 = vlaneseq
    %v10342 = vshrl.u32 %v10341, 7
    %v10343 = vsub.s32 %v10340, %v10342
    %v10344 = vrot.slane %v10277, %v10343
    %v10346 = vunpack.c.l.s4 1966171168
    %v10347 = vunpack.c.0.s8 %v10346
    %v10348 = vlaneseq
    %v10349 = vshrl.u32 %v10348, 7
    %v10350 = vsub.s32 %v10347, %v10349
    %v10351 = vrot.slane %v10337, %v10350
    %v10352 = vcombine.high %v10344, %v10344
    %v10353 = vcombine.high %v10351, %v10351
    %v10355 = vunpack.c.l.s4 1966171168
    %v10356 = vunpack.c.0.s8 %v10355
    %v10357 = vlaneseq
    %v10358 = vshrl.u32 %v10357, 7
    %v10359 = vsub.s32 %v10356, %v10358
    %v10360 = vrot.slane %v10344, %v10359
    %v10362 = vunpack.c.l.s4 1966171168
    %v10363 = vunpack.c.0.s8 %v10362
    %v10364 = vlaneseq
    %v10365 = vshrl.u32 %v10364, 7
    %v10366 = vsub.s32 %v10363, %v10365
    %v10367 = vrot.slane %v10351, %v10366
    %v10369 = vunpack.c.l.s4 1966171168
    %v10370 = vunpack.c.0.s8 %v10369
    %v10371 = vlaneseq
    %v10372 = vshrl.u32 %v10371, 7
    %v10373 = vsub.s32 %v10370, %v10372
    %v10374 = vrot.slane %v10352, %v10373
    %v10376 = vunpack.c.l.s4 1966171168
    %v10377 = vunpack.c.0.s8 %v10376
    %v10378 = vlaneseq
    %v10379 = vshrl.u32 %v10378, 7
    %v10380 = vsub.s32 %v10377, %v10379
    %v10381 = vrot.slane %v10353, %v10380
    %v10382 = vcombine.high %v10360, %v10360
    %v10383 = vcombine.high %v10367, %v10367
    %v10384 = vcombine.high %v10374, %v10374
    %v10385 = vcombine.high %v10381, %v10381
    %v10387 = vunpack.c.l.s4 1966171168
    %v10388 = vunpack.c.0.s8 %v10387
    %v10389 = vlaneseq
    %v10390 = vshrl.u32 %v10389, 7
    %v10391 = vsub.s32 %v10388, %v10390
    %v10392 = vrot.slane %v10282, %v10391
    %v10393 = vcombine.high %v10392, %v10392
    %v10395 = vunpack.c.l.s4 1966171168
    %v10396 = vunpack.c.0.s8 %v10395
    %v10397 = vlaneseq
    %v10398 = vshrl.u32 %v10397, 7
    %v10399 = vsub.s32 %v10396, %v10398
    %v10400 = vrot.slane %v10392, %v10399
    %v10402 = vunpack.c.l.s4 1966171168
    %v10403 = vunpack.c.0.s8 %v10402
    %v10404 = vlaneseq
    %v10405 = vshrl.u32 %v10404, 7
    %v10406 = vsub.s32 %v10403, %v10405
    %v10407 = vrot.slane %v10393, %v10406
    %v10408 = vcombine.low %v10311, %v10325
    %v10409 = vcombine.low %v10333, %v10335
    %v10410 = vcombine.low %v10318, %v10332
    %v10411 = vcombine.low %v10334, %v10336
    %v10413 = vunpack.c.l.s4 1966171168
    %v10414 = vunpack.c.0.s8 %v10413
    %v10415 = vlaneseq
    %v10416 = vshrl.u32 %v10415, 7
    %v10417 = vsub.s32 %v10414, %v10416
    %v10418 = vrot.slane %v10408, %v10417
    %v10420 = vunpack.c.l.s4 1966171168
    %v10421 = vunpack.c.0.s8 %v10420
    %v10422 = vlaneseq
    %v10423 = vshrl.u32 %v10422, 7
    %v10424 = vsub.s32 %v10421, %v10423
    %v10425 = vrot.slane %v10409, %v10424
    %v10427 = vunpack.c.l.s4 1966171168
    %v10428 = vunpack.c.0.s8 %v10427
    %v10429 = vlaneseq
    %v10430 = vshrl.u32 %v10429, 7
    %v10431 = vsub.s32 %v10428, %v10430
    %v10432 = vrot.slane %v10410, %v10431
    %v10434 = vunpack.c.l.s4 1966171168
    %v10435 = vunpack.c.0.s8 %v10434
    %v10436 = vlaneseq
    %v10437 = vshrl.u32 %v10436, 7
    %v10438 = vsub.s32 %v10435, %v10437
    %v10439 = vrot.slane %v10411, %v10438
    %v10440 = vcombine.low %v10418, %v10425
    %v10441 = vcombine.low %v10432, %v10439
    %v10443 = vunpack.c.l.s4 1966171168
    %v10444 = vunpack.c.0.s8 %v10443
    %v10445 = vlaneseq
    %v10446 = vshrl.u32 %v10445, 7
    %v10447 = vsub.s32 %v10444, %v10446
    %v10448 = vrot.slane %v10440, %v10447
    %v10450 = vunpack.c.l.s4 1966171168
    %v10451 = vunpack.c.0.s8 %v10450
    %v10452 = vlaneseq
    %v10453 = vshrl.u32 %v10452, 7
    %v10454 = vsub.s32 %v10451, %v10453
    %v10455 = vrot.slane %v10441, %v10454
    %v10456 = vcombine.low %v10448, %v10455
    %v10458 = vunpack.c.l.s4 1966171168
    %v10459 = vunpack.c.0.s8 %v10458
    %v10460 = vlaneseq
    %v10461 = vshrl.u32 %v10460, 7
    %v10462 = vsub.s32 %v10459, %v10461
    %v10463 = vrot.slane %v10360, %v10462
    %v10465 = vunpack.c.l.s4 1966171168
    %v10466 = vunpack.c.0.s8 %v10465
    %v10467 = vlaneseq
    %v10468 = vshrl.u32 %v10467, 7
    %v10469 = vsub.s32 %v10466, %v10468
    %v10470 = vrot.slane %v10463, %v10469
    %v10471 = vsel %vm658, %v10456, 0
    %v10473 = vsel %vm658, %v10470, 0
    %v10476 = vsel %vm658, %v9941, 0
    %v10478 = vsel %vm658, %v9840, 0
    %10480 = vmatprep.subr.mxu0 0.0
    %10481 = vmatpush1.xpose.msra.mxu0 %v10476
    %10482 = vmatprep.subr.mxu0 0.0
    %10483 = vmatpush1.xpose.msra.mxu0 %v10478
    %10484 = vmatprep.subr.mxu0 0.0
    %10485 = vmatpush1.xpose.msra.mxu0 0.0
    %10486 = vmatprep.subr.mxu0 0.0
    %10487 = vmatpush1.xpose.msra.mxu0 0.0
    %10488 = vmatprep.subr.mxu0 0.0
    %10489 = vmatpush1.xpose.msra.mxu0 0.0
    %10490 = vmatprep.subr.mxu0 0.0
    %10491 = vmatpush1.xpose.msra.mxu0 0.0
    %10492 = vmatprep.subr.mxu0 0.0
    %10493 = vmatpush1.xpose.msra.mxu0 0.0
    %10494 = vmatprep.subr.mxu0 0.0
    %10495 = vmatpush1.xpose.msra.mxu0 0.0
    %10496 = vmatprep.subr.mxu0 0.0
    %10497 = vmatpush1.xpose.msra.mxu0 0.0
    %10498 = vmatprep.subr.mxu0 0.0
    %10499 = vmatpush1.xpose.msra.mxu0 0.0
    %10500 = vmatprep.subr.mxu0 0.0
    %10501 = vmatpush1.xpose.msra.mxu0 0.0
    %10502 = vmatprep.subr.mxu0 0.0
    %10503 = vmatpush1.xpose.msra.mxu0 0.0
    %10504 = vmatprep.subr.mxu0 0.0
    %10505 = vmatpush1.xpose.msra.mxu0 0.0
    %10506 = vmatprep.subr.mxu0 0.0
    %10507 = vmatpush1.xpose.msra.mxu0 0.0
    %10508 = vmatprep.subr.mxu0 0.0
    %10509 = vmatpush1.xpose.msra.mxu0 0.0
    %10510 = vmatprep.subr.mxu0 0.0
    %10511 = vmatpush1.xpose.msra.mxu0 0.0
    %10512 = vmatprep.subr.mxu0 0.0
    %10513 = vmatpush1.xpose.msra.mxu0 0.0
    %10514 = vmatprep.subr.mxu0 0.0
    %10515 = vmatpush1.xpose.msra.mxu0 0.0
    %10516 = vmatprep.subr.mxu0 0.0
    %10517 = vmatpush1.xpose.msra.mxu0 0.0
    %10518 = vmatprep.subr.mxu0 0.0
    %10519 = vmatpush1.xpose.msra.mxu0 0.0
    %10520 = vmatprep.subr.mxu0 0.0
    %10521 = vmatpush1.xpose.msra.mxu0 0.0
    %10522 = vmatprep.subr.mxu0 0.0
    %10523 = vmatpush1.xpose.msra.mxu0 0.0
    %10524 = vmatprep.subr.mxu0 0.0
    %10525 = vmatpush1.xpose.msra.mxu0 0.0
    %10526 = vmatprep.subr.mxu0 0.0
    %10527 = vmatpush1.xpose.msra.mxu0 0.0
    %10528 = vmatprep.subr.mxu0 0.0
    %10529 = vmatpush1.xpose.msra.mxu0 0.0
    %10530 = vmatprep.subr.mxu0 0.0
    %10531 = vmatpush1.xpose.msra.mxu0 0.0
    %10532 = vmatprep.subr.mxu0 0.0
    %10533 = vmatpush1.xpose.msra.mxu0 0.0
    %10534 = vmatprep.subr.mxu0 0.0
    %10535 = vmatpush1.xpose.msra.mxu0 0.0
    %10536 = vmatprep.subr.mxu0 0.0
    %10537 = vmatpush1.xpose.msra.mxu0 0.0
    %10538 = vmatprep.subr.mxu0 0.0
    %10539 = vmatpush1.xpose.msra.mxu0 0.0
    %10540 = vmatprep.subr.mxu0 0.0
    %10541 = vmatpush1.xpose.msra.mxu0 0.0
    %10542 = vmatprep.subr.mxu0 0.0
    %10543 = vmatpush1.xpose.msra.mxu0 0.0
    %10544 = vmatprep.mubr.f32.mxu0 0.0
    %10545 = vmatmul.mubr.f32.gmra.mrb[0].mxu0 %v10471
    %v10546 = vpop.f32.mrb[0].mxu0
    %v10547 = vadd.f32 0.0, %v10546
    %v10548 = vpop.f32.mrb[0].mxu0
    %10549 = vmatprep.mubr.f32.mxu0 0.0
    %10550 = vmatmul.mubr.f32.gmra.mrb[0].mxu0 %v10473
    %v10551 = vpop.f32.mrb[0].mxu0
    %v10552 = vadd.f32 0.0, %v10551
    %v10553 = vpop.f32.mrb[0].mxu0
    %10554 = vdwg.mxu0
    %v10555 = vcombine.low %v10374, %v10382
    %v10556 = vcombine.low %v10384, %v10367
    %v10557 = vcombine.low %v10381, %v10383
    %v10558 = vcombine.low %v10385, %v10400
    %v10560 = vunpack.c.l.s4 1966171168
    %v10561 = vunpack.c.0.s8 %v10560
    %v10562 = vlaneseq
    %v10563 = vshrl.u32 %v10562, 7
    %v10564 = vsub.s32 %v10561, %v10563
    %v10565 = vrot.slane %v10555, %v10564
    %v10567 = vunpack.c.l.s4 1966171168
    %v10568 = vunpack.c.0.s8 %v10567
    %v10569 = vlaneseq
    %v10570 = vshrl.u32 %v10569, 7
    %v10571 = vsub.s32 %v10568, %v10570
    %v10572 = vrot.slane %v10556, %v10571
    %v10574 = vunpack.c.l.s4 1966171168
    %v10575 = vunpack.c.0.s8 %v10574
    %v10576 = vlaneseq
    %v10577 = vshrl.u32 %v10576, 7
    %v10578 = vsub.s32 %v10575, %v10577
    %v10579 = vrot.slane %v10557, %v10578
    %v10581 = vunpack.c.l.s4 1966171168
    %v10582 = vunpack.c.0.s8 %v10581
    %v10583 = vlaneseq
    %v10584 = vshrl.u32 %v10583, 7
    %v10585 = vsub.s32 %v10582, %v10584
    %v10586 = vrot.slane %v10558, %v10585
    %v10587 = vcombine.low %v10565, %v10572
    %v10588 = vcombine.low %v10579, %v10586
    %v10590 = vunpack.c.l.s4 1966171168
    %v10591 = vunpack.c.0.s8 %v10590
    %v10592 = vlaneseq
    %v10593 = vshrl.u32 %v10592, 7
    %v10594 = vsub.s32 %v10591, %v10593
    %v10595 = vrot.slane %v10587, %v10594
    %v10597 = vunpack.c.l.s4 1966171168
    %v10598 = vunpack.c.0.s8 %v10597
    %v10599 = vlaneseq
    %v10600 = vshrl.u32 %v10599, 7
    %v10601 = vsub.s32 %v10598, %v10600
    %v10602 = vrot.slane %v10588, %v10601
    %v10603 = vcombine.low %v10595, %v10602
    %v10605 = vunpack.c.l.s4 1966171168
    %v10606 = vunpack.c.0.s8 %v10605
    %v10607 = vlaneseq
    %v10608 = vshrl.u32 %v10607, 7
    %v10609 = vsub.s32 %v10606, %v10608
    %v10610 = vrot.slane %v10407, %v10609
    %v10612 = vunpack.c.l.s4 1966171168
    %v10613 = vunpack.c.0.s8 %v10612
    %v10614 = vlaneseq
    %v10615 = vshrl.u32 %v10614, 7
    %v10616 = vsub.s32 %v10613, %v10615
    %v10617 = vrot.slane %v10610, %v10616
    %v10618 = vsel %vm658, %v10603, 0
    %v10620 = vsel %vm658, %v10617, 0
    %v10623 = vsel %vm658, %v9942, 0
    %v10625 = vsel %vm658, %v9938, 0
    %10627 = vmatprep.subr.mxu0 0.0
    %10628 = vmatpush1.xpose.msra.mxu0 %v10623
    %10629 = vmatprep.subr.mxu0 0.0
    %10630 = vmatpush1.xpose.msra.mxu0 %v10625
    %10631 = vmatprep.subr.mxu0 0.0
    %10632 = vmatpush1.xpose.msra.mxu0 0.0
    %10633 = vmatprep.subr.mxu0 0.0
    %10634 = vmatpush1.xpose.msra.mxu0 0.0
    %10635 = vmatprep.subr.mxu0 0.0
    %10636 = vmatpush1.xpose.msra.mxu0 0.0
    %10637 = vmatprep.subr.mxu0 0.0
    %10638 = vmatpush1.xpose.msra.mxu0 0.0
    %10639 = vmatprep.subr.mxu0 0.0
    %10640 = vmatpush1.xpose.msra.mxu0 0.0
    %10641 = vmatprep.subr.mxu0 0.0
    %10642 = vmatpush1.xpose.msra.mxu0 0.0
    %10643 = vmatprep.subr.mxu0 0.0
    %10644 = vmatpush1.xpose.msra.mxu0 0.0
    %10645 = vmatprep.subr.mxu0 0.0
    %10646 = vmatpush1.xpose.msra.mxu0 0.0
    %10647 = vmatprep.subr.mxu0 0.0
    %10648 = vmatpush1.xpose.msra.mxu0 0.0
    %10649 = vmatprep.subr.mxu0 0.0
    %10650 = vmatpush1.xpose.msra.mxu0 0.0
    %10651 = vmatprep.subr.mxu0 0.0
    %10652 = vmatpush1.xpose.msra.mxu0 0.0
    %10653 = vmatprep.subr.mxu0 0.0
    %10654 = vmatpush1.xpose.msra.mxu0 0.0
    %10655 = vmatprep.subr.mxu0 0.0
    %10656 = vmatpush1.xpose.msra.mxu0 0.0
    %10657 = vmatprep.subr.mxu0 0.0
    %10658 = vmatpush1.xpose.msra.mxu0 0.0
    %10659 = vmatprep.subr.mxu0 0.0
    %10660 = vmatpush1.xpose.msra.mxu0 0.0
    %10661 = vmatprep.subr.mxu0 0.0
    %10662 = vmatpush1.xpose.msra.mxu0 0.0
    %10663 = vmatprep.subr.mxu0 0.0
    %10664 = vmatpush1.xpose.msra.mxu0 0.0
    %10665 = vmatprep.subr.mxu0 0.0
    %10666 = vmatpush1.xpose.msra.mxu0 0.0
    %10667 = vmatprep.subr.mxu0 0.0
    %10668 = vmatpush1.xpose.msra.mxu0 0.0
    %10669 = vmatprep.subr.mxu0 0.0
    %10670 = vmatpush1.xpose.msra.mxu0 0.0
    %10671 = vmatprep.subr.mxu0 0.0
    %10672 = vmatpush1.xpose.msra.mxu0 0.0
    %10673 = vmatprep.subr.mxu0 0.0
    %10674 = vmatpush1.xpose.msra.mxu0 0.0
    %10675 = vmatprep.subr.mxu0 0.0
    %10676 = vmatpush1.xpose.msra.mxu0 0.0
    %10677 = vmatprep.subr.mxu0 0.0
    %10678 = vmatpush1.xpose.msra.mxu0 0.0
    %10679 = vmatprep.subr.mxu0 0.0
    %10680 = vmatpush1.xpose.msra.mxu0 0.0
    %10681 = vmatprep.subr.mxu0 0.0
    %10682 = vmatpush1.xpose.msra.mxu0 0.0
    %10683 = vmatprep.subr.mxu0 0.0
    %10684 = vmatpush1.xpose.msra.mxu0 0.0
    %10685 = vmatprep.subr.mxu0 0.0
    %10686 = vmatpush1.xpose.msra.mxu0 0.0
    %10687 = vmatprep.subr.mxu0 0.0
    %10688 = vmatpush1.xpose.msra.mxu0 0.0
    %10689 = vmatprep.subr.mxu0 0.0
    %10690 = vmatpush1.xpose.msra.mxu0 0.0
    %10691 = vmatprep.mubr.f32.mxu0 0.0
    %10692 = vmatmul.mubr.f32.gmra.mrb[0].mxu0 %v10618
    %v10693 = vpop.f32.mrb[0].mxu0
    %v10694 = vadd.f32 0.0, %v10693
    %v10695 = vpop.f32.mrb[0].mxu0
    %10696 = vmatprep.mubr.f32.mxu0 0.0
    %10697 = vmatmul.mubr.f32.gmra.mrb[0].mxu0 %v10620
    %v10698 = vpop.f32.mrb[0].mxu0
    %v10699 = vadd.f32 0.0, %v10698
    %v10700 = vpop.f32.mrb[0].mxu0
    %10701 = vdwg.mxu0
    %vm10702 = vcmask 130048
    %10703 = vst.msk [vmem:[%s25] sm:$0xff] %vm10702, %v10547
    %vm10704 = vcmask 122880
    %10705 = vst.msk [vmem:[%s25 + $0x8] sm:$0x1] %vm10704, %v10552
    %10706 = vst.msk [vmem:[%s25 + $0x10] sm:$0xff] %vm10702, %v10694
    %10707 = vst.msk [vmem:[%s25 + $0x18] sm:$0x1] %vm10704, %v10699
    // Predicated region
    $region150: #{tpu_custom_call.1} parent=1 // pred_check
      _
    $region151: #{tpu_custom_call.1} parent=1 // pred_check_branch
      %10709 = sbr.rel (0) target = $region153
    $region152: #{tpu_custom_call.1} parent=1 // pred_region
      _
    $region153: #{tpu_custom_call.1} parent=1 // pred_fallthru
      _
    // Predicated region
    $region154: #{tpu_custom_call.1} parent=1 // pred_check
      _
    $region155: #{tpu_custom_call.1} parent=1 // pred_check_branch
      %10711 = sbr.rel (0) target = $region157
    $region156: #{tpu_custom_call.1} parent=1 // pred_region
      _
    $region157: #{tpu_custom_call.1} parent=1 // pred_fallthru
      _
    // Predicated region
    $region158: #{tpu_custom_call.1} parent=1 // pred_check
      _
    $region159: #{tpu_custom_call.1} parent=1 // pred_check_branch
      %10713 = sbr.rel (0) target = $region161
    $region160: #{tpu_custom_call.1} parent=1 // pred_region
      _
    $region161: #{tpu_custom_call.1} parent=1 // pred_fallthru
      _
    // Predicated region
    $region162: #{tpu_custom_call.1} parent=1 // pred_check
      _
    $region163: #{tpu_custom_call.1} parent=1 // pred_check_branch
      %10715 = sbr.rel (0) target = $region165
    $region164: #{tpu_custom_call.1} parent=1 // pred_region
      _
    $region165: #{tpu_custom_call.1} parent=1 // pred_fallthru
      _
    %10716 = vsyncpa [#allocation4], 1
    %10717 = vsyncpa [#allocation6], 1
    %10718 = vsyncpa [#allocation9], 1
    %10719 = vsyncpa [#allocation12], 1
    %10720 = vsyncpa [#allocation15], 1
    %10721 = vsyncpa [#allocation18], 1
    %10722 = vsyncpa [#allocation21], 1

</llo_original>
